<compile_context>
chip_gen: v7x
topology: tpu7x:2x2x1
jax: 0.10.0
libtpu: 0.0.40
codegen_flags: <defaults>
</compile_context>

<pallas_src>
import functools

import jax
import jax.numpy as jnp
from jax.experimental import pallas as pl
from jax.experimental.pallas import tpu as pltpu

EPS = 1e-5
VMEM_LIMIT = 48 * 1024 * 1024      # safe on v5e/v6e (128 MiB) and v7x (64 MiB)


def _cparams():
    return pltpu.CompilerParams(dimension_semantics=("parallel",),
                                vmem_limit_bytes=VMEM_LIMIT)


def _silu(x):
    return x * jax.nn.sigmoid(x)


def _round_up(x, m):
    return ((x + m - 1) // m) * m


def _pad_rows(a, rows):
    if a.shape[0] == rows:
        return a
    return jnp.pad(a, ((0, rows - a.shape[0]), (0, 0)))


# ---------------------------------------------------------------------------
# Kernels
# ---------------------------------------------------------------------------
def _head_kernel(x_ref, w1_ref, b1_ref, w2_ref, wb_ref, bb_ref,
                 y2_ref, t_ref):
    """x1 = SiLU(x@W1+b1); y2 = x1@W2 (cv2 branch); t = SiLU(x1@Wb+bb)."""
    x = x_ref[...]                                       # bf16 tile (tm, C1)
    x1 = jnp.dot(x, w1_ref[...], preferred_element_type=jnp.float32)
    x1 = _silu(x1 + b1_ref[...])                         # f32 SiLU (v5e-safe)
    x1b = x1.astype(jnp.bfloat16)
    y2 = jnp.dot(x1b, w2_ref[...], preferred_element_type=jnp.float32)
    y2_ref[...] = y2.astype(y2_ref.dtype)
    t = jnp.dot(x1b, wb_ref[...], preferred_element_type=jnp.float32)
    t_ref[...] = _silu(t + bb_ref[...]).astype(t_ref.dtype)


def _mm_kernel(x_ref, w_ref, b_ref, o_ref, *, act):
    """y = [SiLU](x @ W + b) -- generic fused 1x1 conv (BN folded into W,b)."""
    y = jnp.dot(x_ref[...], w_ref[...], preferred_element_type=jnp.float32)
    y = y + b_ref[...]
    if act:
        y = _silu(y)
    o_ref[...] = y.astype(o_ref.dtype)


def _conv3x3_kernel(x_ref, w_ref, b_ref, o_ref, *, H, W):
    """3x3 conv (pad=1) + bias + SiLU via 9 shifted matmuls, all in VMEM."""
    xp = x_ref[0]                                        # (H+2, W+2, Cin) bf16
    cin = xp.shape[-1]
    cout = w_ref.shape[-1]
    acc = jnp.zeros((H * W, cout), jnp.float32)
    for t, (dy, dx) in enumerate([(i, j) for i in range(3) for j in range(3)]):
        xs = xp[dy:dy + H, dx:dx + W, :].reshape(H * W, cin)
        acc = acc + jnp.dot(xs, w_ref[t], preferred_element_type=jnp.float32)
    o_ref[...] = _silu(acc + b_ref[...]).astype(o_ref.dtype)


def _tail_kernel(y1_ref, y2_ref, s1_ref, b1_ref, s2_ref, b2_ref,
                 wt_ref, wb_ref, b3_ref, o_ref):
    """out = SiLU( SiLU(BN(y1))@W3_top + SiLU(BN(y2))@W3_bot + b3 ).

    Implements act(bn(cat(y1,y2))) -> cv3 without materializing the concat."""
    a1 = _silu(y1_ref[...].astype(jnp.float32) * s1_ref[...] + b1_ref[...])
    a2 = _silu(y2_ref[...].astype(jnp.float32) * s2_ref[...] + b2_ref[...])
    z = jnp.dot(a1.astype(jnp.bfloat16), wt_ref[...],
                preferred_element_type=jnp.float32)
    z = z + jnp.dot(a2.astype(jnp.bfloat16), wb_ref[...],
                    preferred_element_type=jnp.float32)
    o_ref[...] = _silu(z + b3_ref[...]).astype(o_ref.dtype)


# ---------------------------------------------------------------------------
# pallas_call wrappers
# ---------------------------------------------------------------------------
def _call_head(x2d, w1, b1, w2, wb, bb, tm, c_):
    Mp, C1 = x2d.shape
    return pl.pallas_call(
        _head_kernel,
        out_shape=(jax.ShapeDtypeStruct((Mp, c_), jnp.bfloat16),   # y2
                   jax.ShapeDtypeStruct((Mp, c_), jnp.bfloat16)),  # t
        grid_spec=pltpu.PrefetchScalarGridSpec(
            num_scalar_prefetch=0,
            grid=(Mp // tm,),
            in_specs=[
                pl.BlockSpec((tm, C1), lambda i: (i, 0)),
                pl.BlockSpec((C1, c_), lambda i: (0, 0)),
                pl.BlockSpec((1, c_), lambda i: (0, 0)),
                pl.BlockSpec((c_, c_), lambda i: (0, 0)),
                pl.BlockSpec((c_, c_), lambda i: (0, 0)),
                pl.BlockSpec((1, c_), lambda i: (0, 0)),
            ],
            out_specs=(pl.BlockSpec((tm, c_), lambda i: (i, 0)),
                       pl.BlockSpec((tm, c_), lambda i: (i, 0))),
        ),
        compiler_params=_cparams(),
    )(x2d, w1, b1, w2, wb, bb)


def _call_mm(x2d, w, b, tm, *, act, out_dtype=jnp.bfloat16):
    Mp, K = x2d.shape
    Cout = w.shape[1]
    kernel = functools.partial(_mm_kernel, act=act)
    return pl.pallas_call(
        kernel,
        out_shape=jax.ShapeDtypeStruct((Mp, Cout), out_dtype),
        grid_spec=pltpu.PrefetchScalarGridSpec(
            num_scalar_prefetch=0,
            grid=(Mp // tm,),
            in_specs=[
                pl.BlockSpec((tm, K), lambda i: (i, 0)),
                pl.BlockSpec((K, Cout), lambda i: (0, 0)),
                pl.BlockSpec((1, Cout), lambda i: (0, 0)),
            ],
            out_specs=pl.BlockSpec((tm, Cout), lambda i: (i, 0)),
        ),
        compiler_params=_cparams(),
    )(x2d, w, b)


def _call_conv3x3(t2d, w9, b, N, H, W, c_in, c_out):
    """t2d: (N*H*W, c_in) bf16 flat activations -> (N*H*W, c_out) bf16."""
    timg = t2d.reshape(N, H, W, c_in)
    tpad = jnp.pad(timg, ((0, 0), (1, 1), (1, 1), (0, 0)))   # 1-pixel halo only
    kernel = functools.partial(_conv3x3_kernel, H=H, W=W)
    return pl.pallas_call(
        kernel,
        out_shape=jax.ShapeDtypeStruct((N * H * W, c_out), jnp.bfloat16),
        grid_spec=pltpu.PrefetchScalarGridSpec(
            num_scalar_prefetch=0,
            grid=(N,),
            in_specs=[
                pl.BlockSpec((1, H + 2, W + 2, c_in), lambda n: (n, 0, 0, 0)),
                pl.BlockSpec((9, c_in, c_out), lambda n: (0, 0, 0)),
                pl.BlockSpec((1, c_out), lambda n: (0, 0)),
            ],
            out_specs=pl.BlockSpec((H * W, c_out), lambda n: (n, 0)),
        ),
        compiler_params=_cparams(),
    )(tpad, w9, b)


def _call_tail(y1, y2, s1, b1, s2, b2, wt, wb, b3, tm, c2):
    Mp, c_ = y1.shape
    return pl.pallas_call(
        _tail_kernel,
        out_shape=jax.ShapeDtypeStruct((Mp, c2), jnp.float32),
        grid_spec=pltpu.PrefetchScalarGridSpec(
            num_scalar_prefetch=0,
            grid=(Mp // tm,),
            in_specs=[
                pl.BlockSpec((tm, c_), lambda i: (i, 0)),
                pl.BlockSpec((tm, c_), lambda i: (i, 0)),
                pl.BlockSpec((1, c_), lambda i: (0, 0)),
                pl.BlockSpec((1, c_), lambda i: (0, 0)),
                pl.BlockSpec((1, c_), lambda i: (0, 0)),
                pl.BlockSpec((1, c_), lambda i: (0, 0)),
                pl.BlockSpec((c_, c2), lambda i: (0, 0)),
                pl.BlockSpec((c_, c2), lambda i: (0, 0)),
                pl.BlockSpec((1, c2), lambda i: (0, 0)),
            ],
            out_specs=pl.BlockSpec((tm, c2), lambda i: (i, 0)),
        ),
        compiler_params=_cparams(),
    )(y1, y2, s1, b1, s2, b2, wt, wb, b3)


# ---------------------------------------------------------------------------
# Parameter folding (plain JAX, done once)
# ---------------------------------------------------------------------------
def _bn_scale_bias(bn):
    gamma, beta, mean, var = bn
    s = gamma / jnp.sqrt(var + EPS)
    return s, beta - mean * s


def _fold_1x1(w, bn=None):
    """torch (Cout, Cin, 1, 1) -> bf16 (Cin, Cout) with BN scale folded in."""
    cout = w.shape[0]
    w2 = jnp.transpose(w[:, :, 0, 0], (1, 0))
    if bn is None:
        bias = jnp.zeros((1, cout), jnp.float32)
    else:
        s, b = _bn_scale_bias(bn)
        w2 = w2 * s[None, :]
        bias = b[None, :]
    return w2.astype(jnp.bfloat16), bias


def _fold_3x3(w, bn):
    """torch (Cout, Cin, 3, 3) -> bf16 (9, Cin, Cout) + f32 bias, BN folded."""
    cout, cin = w.shape[0], w.shape[1]
    s, b = _bn_scale_bias(bn)
    w9 = jnp.transpose(w, (2, 3, 1, 0)).reshape(9, cin, cout) * s[None, None, :]
    return w9.astype(jnp.bfloat16), b[None, :]


# ---------------------------------------------------------------------------
# BottleneckCSP2 forward (Pallas path)
# ---------------------------------------------------------------------------
def bottleneck_csp2_pallas(x_nchw, p, *, tm_max=1024):
    N, C1, H, W = x_nchw.shape
    c_ = p["cv1"]["w"].shape[0]
    c2 = p["cv3"]["w"].shape[0]
    M = N * H * W

    # Row tile: as large as fits (feedback: 512-2048); pad rows instead of
    # asserting divisibility.  (In a full network the NCHW<->NHWC transposes
    # below would be hoisted to the model boundary.)
    tm = min(tm_max, _round_up(M, 8))
    Mp = _round_up(M, tm)

    x2d = jnp.transpose(x_nchw, (0, 2, 3, 1)).reshape(M, C1)
    x2d = _pad_rows(x2d.astype(jnp.bfloat16), Mp)

    w1, b1 = _fold_1x1(p["cv1"]["w"], p["cv1"]["bn"])          # cv1 (+BN)
    w2, b2z = _fold_1x1(p["cv2_w"], None)                      # cv2 (plain)
    n = len(p["m"])

    if n >= 1:
        # Fused head: cv1 + cv2-branch + first Bottleneck cv1 (x1 stays in VMEM)
        bp0 = p["m"][0]
        wb0, bb0 = _fold_1x1(bp0["cv1"]["w"], bp0["cv1"]["bn"])
        y2, t = _call_head(x2d, w1, b1, w2, wb0, bb0, tm, c_)

        w9, b9 = _fold_3x3(bp0["cv2"]["w"], bp0["cv2"]["bn"])
        y = _call_conv3x3(t[:M], w9, b9, N, H, W, c_, c_)      # (M, c_) bf16

        for bp in p["m"][1:]:                                  # remaining blocks
            wa, ba = _fold_1x1(bp["cv1"]["w"], bp["cv1"]["bn"])
            tmid = _call_mm(_pad_rows(y, Mp), wa, ba, tm, act=True)
            w9, b9 = _fold_3x3(bp["cv2"]["w"], bp["cv2"]["bn"])
            y = _call_conv3x3(tmid[:M], w9, b9, N, H, W, c_, c_)
        y1 = _pad_rows(y, Mp)
    else:
        # n == 0: m is identity -> y1 = x1
        x1 = _call_mm(x2d, w1, b1, tm, act=True)
        y2 = _call_mm(x1, w2, b2z, tm, act=False)
        y1 = x1

    # Tail: BN(2c_) + SiLU + cv3 (+BN+SiLU), concat fused inside the kernel.
    s_cat, b_cat = _bn_scale_bias(p["bn"])
    s3, b3 = _bn_scale_bias(p["cv3"]["bn"])
    w3 = jnp.transpose(p["cv3"]["w"][:, :, 0, 0], (1, 0)) * s3[None, :]
    w3 = w3.astype(jnp.bfloat16)

    out2d = _call_tail(
        y1, y2,
        s_cat[None, :c_], b_cat[None, :c_],
        s_cat[None, c_:], b_cat[None, c_:],
        w3[:c_], w3[c_:], b3[None, :],
        tm, c2)

    out2d = out2d[:M]
    return jnp.transpose(out2d.reshape(N, H, W, c2), (0, 3, 1, 2))


# ---------------------------------------------------------------------------
# Pure-JAX f32 reference (mirrors the PyTorch module in eval mode)
# ---------------------------------------------------------------------------
def bottleneck_csp2_ref(x, p):
    def conv(x, w, pad):
        return jax.lax.conv_general_dilated(
            x, w, window_strides=(1, 1), padding=[(pad, pad), (pad, pad)],
            dimension_numbers=("NCHW", "OIHW", "NCHW"))

    def bn(x, g, b, m, v):
        return ((x - m[None, :, None, None])
                / jnp.sqrt(v[None, :, None, None] + EPS)
                * g[None, :, None, None] + b[None, :, None, None])

    def silu(x):
        return x * jax.nn.sigmoid(x)

    x1 = silu(bn(conv(x, p["cv1"]["w"], 0), *p["cv1"]["bn"]))
    y = x1
    for bp in p["m"]:
        t = silu(bn(conv(y, bp["cv1"]["w"], 0), *bp["cv1"]["bn"]))
        y = silu(bn(conv(t, bp["cv2"]["w"], 1), *bp["cv2"]["bn"]))
    y2 = conv(x1, p["cv2_w"], 0)
    cat = jnp.concatenate([y, y2], axis=1)
    z = silu(bn(cat, *p["bn"]))
    return silu(bn(conv(z, p["cv3"]["w"], 0), *p["cv3"]["bn"]))


# ---------------------------------------------------------------------------
# Deterministic parameter construction
# ---------------------------------------------------------------------------
def make_params(key, c1, c2, n=1):
    c_ = int(c2)

    def conv_w(key, cout, cin, k):
        return 0.1 * jax.random.normal(key, (cout, cin, k, k), jnp.float32)

    def bn_params(key, c):
        k1, k2, k3, k4 = jax.random.split(key, 4)
        gamma = jax.random.uniform(k1, (c,), jnp.float32, 0.5, 1.5)
        beta = 0.1 * jax.random.normal(k2, (c,), jnp.float32)
        mean = 0.1 * jax.random.normal(k3, (c,), jnp.float32)
        var = jax.random.uniform(k4, (c,), jnp.float32, 0.5, 1.5)
        return (gamma, beta, mean, var)

    keys = jax.random.split(key, 8 + 4 * n)
    p = {
        "cv1": {"w": conv_w(keys[0], c_, c1, 1), "bn": bn_params(keys[1], c_)},
        "cv2_w": conv_w(keys[2], c_, c_, 1),
        "cv3": {"w": conv_w(keys[3], c2, 2 * c_, 1),
                "bn": bn_params(keys[4], c2)},
        "bn": bn_params(keys[5], 2 * c_),
        "m": [],
    }
    for i in range(n):
        kk = keys[8 + 4 * i: 8 + 4 * (i + 1)]
        p["m"].append({
            "cv1": {"w": conv_w(kk[0], c_, c_, 1), "bn": bn_params(kk[1], c_)},
            "cv2": {"w": conv_w(kk[2], c_, c_, 3), "bn": bn_params(kk[3], c_)},
        })
    return p


# ---------------------------------------------------------------------------
if __name__ == "__main__":
    key = jax.random.PRNGKey(0)
    k_x, k_p = jax.random.split(key)

    N, C1, H, W = 2, 4, 16, 16
    C2, n_blocks = 4, 1

    x = jax.random.normal(k_x, (N, C1, H, W), jnp.float32)
    params = make_params(k_p, C1, C2, n=n_blocks)

    out = jax.jit(bottleneck_csp2_pallas)(x, params)
    out = jax.block_until_ready(out)

    ref = bottleneck_csp2_ref(x, params)
    assert out.shape == (N, C2, H, W), out.shape
    # bf16 activations/weights (f32 accumulation) -> looser tolerance than f32.
    assert jnp.allclose(out, ref, rtol=3e-2, atol=3e-2), (
        float(jnp.max(jnp.abs(out - ref))))

    print("KERNEL_OK")
</pallas_src>

<mosaic_0001>
module attributes {stable_mosaic.version = 11 : i64} {
  func.func @_head_kernel(%arg0: i32, %arg1: memref<512x4xbf16, #tpu.memory_space<vmem>>, %arg2: memref<4x4xbf16, #tpu.memory_space<vmem>>, %arg3: memref<1x4xf32, #tpu.memory_space<vmem>>, %arg4: memref<4x4xbf16, #tpu.memory_space<vmem>>, %arg5: memref<4x4xbf16, #tpu.memory_space<vmem>>, %arg6: memref<1x4xf32, #tpu.memory_space<vmem>>, %arg7: memref<512x4xbf16, #tpu.memory_space<vmem>>, %arg8: memref<512x4xbf16, #tpu.memory_space<vmem>>) attributes {dimension_semantics = [#tpu.dimension_semantics<parallel>], iteration_bounds = array<i64: 1>, scalar_prefetch = 0 : i64, scratch_operands = 0 : i64, tpu.core_type = #tpu.core_type<tc>, window_params = [{transform_indices = @transform_0, window_bounds = array<i64: 512, 4>}, {pipeline_mode = #tpu.pipeline_mode<synchronous>, transform_indices = @transform_1, window_bounds = array<i64: 4, 4>}, {pipeline_mode = #tpu.pipeline_mode<synchronous>, transform_indices = @transform_2, window_bounds = array<i64: 1, 4>}, {pipeline_mode = #tpu.pipeline_mode<synchronous>, transform_indices = @transform_3, window_bounds = array<i64: 4, 4>}, {pipeline_mode = #tpu.pipeline_mode<synchronous>, transform_indices = @transform_4, window_bounds = array<i64: 4, 4>}, {pipeline_mode = #tpu.pipeline_mode<synchronous>, transform_indices = @transform_5, window_bounds = array<i64: 1, 4>}, {transform_indices = @transform_6, window_bounds = array<i64: 512, 4>}, {transform_indices = @transform_7, window_bounds = array<i64: 512, 4>}]} {
    %c0 = arith.constant 0 : index
    %c0_0 = arith.constant 0 : index
    %0 = vector.load %arg1[%c0, %c0_0] : memref<512x4xbf16, #tpu.memory_space<vmem>>, vector<512x4xbf16>
    %c0_1 = arith.constant 0 : index
    %c0_2 = arith.constant 0 : index
    %1 = vector.load %arg2[%c0_1, %c0_2] : memref<4x4xbf16, #tpu.memory_space<vmem>>, vector<4x4xbf16>
    %cst = arith.constant dense<0.000000e+00> : vector<512x4xf32>
    %2 = tpu.matmul %0, %1, %cst {dimension_numbers = #tpu.dot_dimension_numbers<[1], [0], [0], [1], [0, 0, 1, 1], [], []>} : vector<512x4xbf16>, vector<4x4xbf16>, vector<512x4xf32> -> vector<512x4xf32>
    %c0_3 = arith.constant 0 : index
    %c0_4 = arith.constant 0 : index
    %3 = vector.load %arg3[%c0_3, %c0_4] : memref<1x4xf32, #tpu.memory_space<vmem>>, vector<1x4xf32>
    %4 = vector.broadcast %3 : vector<1x4xf32> to vector<512x4xf32>
    %5 = arith.addf %2, %4 : vector<512x4xf32>
    %6 = arith.negf %5 : vector<512x4xf32>
    %7 = math.exp %6 : vector<512x4xf32>
    %cst_5 = arith.constant 1.000000e+00 : f32
    %8 = vector.broadcast %cst_5 : f32 to vector<512x4xf32>
    %9 = arith.addf %8, %7 : vector<512x4xf32>
    %10 = arith.divf %8, %9 : vector<512x4xf32>
    %11 = arith.mulf %5, %10 : vector<512x4xf32>
    %12 = arith.truncf %11 : vector<512x4xf32> to vector<512x4xbf16>
    %c0_6 = arith.constant 0 : index
    %c0_7 = arith.constant 0 : index
    %13 = vector.load %arg4[%c0_6, %c0_7] : memref<4x4xbf16, #tpu.memory_space<vmem>>, vector<4x4xbf16>
    %cst_8 = arith.constant dense<0.000000e+00> : vector<512x4xf32>
    %14 = tpu.matmul %12, %13, %cst_8 {dimension_numbers = #tpu.dot_dimension_numbers<[1], [0], [0], [1], [0, 0, 1, 1], [], []>} : vector<512x4xbf16>, vector<4x4xbf16>, vector<512x4xf32> -> vector<512x4xf32>
    %15 = arith.truncf %14 : vector<512x4xf32> to vector<512x4xbf16>
    %c0_9 = arith.constant 0 : index
    %c0_10 = arith.constant 0 : index
    %16 = vector.load %arg7[%c0_9, %c0_10] : memref<512x4xbf16, #tpu.memory_space<vmem>>, vector<512x4xbf16>
    tpu.vector_store %arg7[%c0_9, %c0_10], %15 {strides = array<i32>} : memref<512x4xbf16, #tpu.memory_space<vmem>>, vector<512x4xbf16>,
    %c0_11 = arith.constant 0 : index
    %c0_12 = arith.constant 0 : index
    %17 = vector.load %arg5[%c0_11, %c0_12] : memref<4x4xbf16, #tpu.memory_space<vmem>>, vector<4x4xbf16>
    %cst_13 = arith.constant dense<0.000000e+00> : vector<512x4xf32>
    %18 = tpu.matmul %12, %17, %cst_13 {dimension_numbers = #tpu.dot_dimension_numbers<[1], [0], [0], [1], [0, 0, 1, 1], [], []>} : vector<512x4xbf16>, vector<4x4xbf16>, vector<512x4xf32> -> vector<512x4xf32>
    %c0_14 = arith.constant 0 : index
    %c0_15 = arith.constant 0 : index
    %19 = vector.load %arg6[%c0_14, %c0_15] : memref<1x4xf32, #tpu.memory_space<vmem>>, vector<1x4xf32>
    %20 = vector.broadcast %19 : vector<1x4xf32> to vector<512x4xf32>
    %21 = arith.addf %18, %20 : vector<512x4xf32>
    %22 = arith.negf %21 : vector<512x4xf32>
    %23 = math.exp %22 : vector<512x4xf32>
    %cst_16 = arith.constant 1.000000e+00 : f32
    %24 = vector.broadcast %cst_16 : f32 to vector<512x4xf32>
    %25 = arith.addf %24, %23 : vector<512x4xf32>
    %26 = arith.divf %24, %25 : vector<512x4xf32>
    %27 = arith.mulf %21, %26 : vector<512x4xf32>
    %28 = arith.truncf %27 : vector<512x4xf32> to vector<512x4xbf16>
    %c0_17 = arith.constant 0 : index
    %c0_18 = arith.constant 0 : index
    %29 = vector.load %arg8[%c0_17, %c0_18] : memref<512x4xbf16, #tpu.memory_space<vmem>>, vector<512x4xbf16>
    tpu.vector_store %arg8[%c0_17, %c0_18], %28 {strides = array<i32>} : memref<512x4xbf16, #tpu.memory_space<vmem>>, vector<512x4xbf16>,
    return
  }
  func.func @transform_0(%arg0: i32) -> (i32, i32) {
    %c0_i32 = arith.constant 0 : i32
    %c0_i32_0 = arith.constant 0 : i32
    return %arg0, %c0_i32 : i32, i32
  }
  func.func @transform_1(%arg0: i32) -> (i32, i32) {
    %c0_i32 = arith.constant 0 : i32
    %c0_i32_0 = arith.constant 0 : i32
    %c0_i32_1 = arith.constant 0 : i32
    return %c0_i32, %c0_i32_0 : i32, i32
  }
  func.func @transform_2(%arg0: i32) -> (i32, i32) {
    %c0_i32 = arith.constant 0 : i32
    %c0_i32_0 = arith.constant 0 : i32
    %c0_i32_1 = arith.constant 0 : i32
    return %c0_i32, %c0_i32_0 : i32, i32
  }
  func.func @transform_3(%arg0: i32) -> (i32, i32) {
    %c0_i32 = arith.constant 0 : i32
    %c0_i32_0 = arith.constant 0 : i32
    %c0_i32_1 = arith.constant 0 : i32
    return %c0_i32, %c0_i32_0 : i32, i32
  }
  func.func @transform_4(%arg0: i32) -> (i32, i32) {
    %c0_i32 = arith.constant 0 : i32
    %c0_i32_0 = arith.constant 0 : i32
    %c0_i32_1 = arith.constant 0 : i32
    return %c0_i32, %c0_i32_0 : i32, i32
  }
  func.func @transform_5(%arg0: i32) -> (i32, i32) {
    %c0_i32 = arith.constant 0 : i32
    %c0_i32_0 = arith.constant 0 : i32
    %c0_i32_1 = arith.constant 0 : i32
    return %c0_i32, %c0_i32_0 : i32, i32
  }
  func.func @transform_6(%arg0: i32) -> (i32, i32) {
    %c0_i32 = arith.constant 0 : i32
    %c0_i32_0 = arith.constant 0 : i32
    return %arg0, %c0_i32 : i32, i32
  }
  func.func @transform_7(%arg0: i32) -> (i32, i32) {
    %c0_i32 = arith.constant 0 : i32
    %c0_i32_0 = arith.constant 0 : i32
    return %arg0, %c0_i32 : i32, i32
  }
}

module attributes {stable_mosaic.version = 11 : i64} {
  func.func @_conv3x3_kernel(%arg0: i32, %arg1: memref<1x18x18x4xbf16, #tpu.memory_space<vmem>>, %arg2: memref<9x4x4xbf16, #tpu.memory_space<vmem>>, %arg3: memref<1x4xf32, #tpu.memory_space<vmem>>, %arg4: memref<256x4xbf16, #tpu.memory_space<vmem>>) attributes {dimension_semantics = [#tpu.dimension_semantics<parallel>], iteration_bounds = array<i64: 2>, scalar_prefetch = 0 : i64, scratch_operands = 0 : i64, tpu.core_type = #tpu.core_type<tc>, window_params = [{transform_indices = @transform_0, window_bounds = array<i64: 1, 18, 18, 4>}, {pipeline_mode = #tpu.pipeline_mode<synchronous>, transform_indices = @transform_1, window_bounds = array<i64: 9, 4, 4>}, {pipeline_mode = #tpu.pipeline_mode<synchronous>, transform_indices = @transform_2, window_bounds = array<i64: 1, 4>}, {transform_indices = @transform_3, window_bounds = array<i64: 256, 4>}]} {
    %c0 = arith.constant 0 : index
    %c0_0 = arith.constant 0 : index
    %c0_1 = arith.constant 0 : index
    %c0_2 = arith.constant 0 : index
    %0 = vector.load %arg1[%c0, %c0_0, %c0_1, %c0_2] : memref<1x18x18x4xbf16, #tpu.memory_space<vmem>>, vector<1x18x18x4xbf16>
    %1 = vector.shape_cast %0 : vector<1x18x18x4xbf16> to vector<18x18x4xbf16>
    %cst = arith.constant 0.000000e+00 : f32
    %2 = vector.broadcast %cst : f32 to vector<256x4xf32>
    %3 = vector.extract_strided_slice %1 {offsets = [0, 0, 0], sizes = [16, 16, 4], strides = [1, 1, 1]} : vector<18x18x4xbf16> to vector<16x16x4xbf16>
    %4 = vector.shape_cast %3 : vector<16x16x4xbf16> to vector<256x4xbf16>
    %c0_3 = arith.constant 0 : index
    %c0_4 = arith.constant 0 : index
    %c0_5 = arith.constant 0 : index
    %5 = vector.load %arg2[%c0_3, %c0_4, %c0_5] : memref<9x4x4xbf16, #tpu.memory_space<vmem>>, vector<1x4x4xbf16>
    %6 = vector.shape_cast %5 : vector<1x4x4xbf16> to vector<4x4xbf16>
    %cst_6 = arith.constant dense<0.000000e+00> : vector<256x4xf32>
    %7 = tpu.matmul %4, %6, %cst_6 {dimension_numbers = #tpu.dot_dimension_numbers<[1], [0], [0], [1], [0, 0, 1, 1], [], []>} : vector<256x4xbf16>, vector<4x4xbf16>, vector<256x4xf32> -> vector<256x4xf32>
    %8 = arith.addf %2, %7 : vector<256x4xf32>
    %9 = vector.extract_strided_slice %1 {offsets = [0, 1, 0], sizes = [16, 16, 4], strides = [1, 1, 1]} : vector<18x18x4xbf16> to vector<16x16x4xbf16>
    %10 = vector.shape_cast %9 : vector<16x16x4xbf16> to vector<256x4xbf16>
    %c1 = arith.constant 1 : index
    %c0_7 = arith.constant 0 : index
    %c0_8 = arith.constant 0 : index
    %11 = vector.load %arg2[%c1, %c0_7, %c0_8] : memref<9x4x4xbf16, #tpu.memory_space<vmem>>, vector<1x4x4xbf16>
    %12 = vector.shape_cast %11 : vector<1x4x4xbf16> to vector<4x4xbf16>
    %cst_9 = arith.constant dense<0.000000e+00> : vector<256x4xf32>
    %13 = tpu.matmul %10, %12, %cst_9 {dimension_numbers = #tpu.dot_dimension_numbers<[1], [0], [0], [1], [0, 0, 1, 1], [], []>} : vector<256x4xbf16>, vector<4x4xbf16>, vector<256x4xf32> -> vector<256x4xf32>
    %14 = arith.addf %8, %13 : vector<256x4xf32>
    %15 = vector.extract_strided_slice %1 {offsets = [0, 2, 0], sizes = [16, 16, 4], strides = [1, 1, 1]} : vector<18x18x4xbf16> to vector<16x16x4xbf16>
    %16 = vector.shape_cast %15 : vector<16x16x4xbf16> to vector<256x4xbf16>
    %c2 = arith.constant 2 : index
    %c0_10 = arith.constant 0 : index
    %c0_11 = arith.constant 0 : index
    %17 = vector.load %arg2[%c2, %c0_10, %c0_11] : memref<9x4x4xbf16, #tpu.memory_space<vmem>>, vector<1x4x4xbf16>
    %18 = vector.shape_cast %17 : vector<1x4x4xbf16> to vector<4x4xbf16>
    %cst_12 = arith.constant dense<0.000000e+00> : vector<256x4xf32>
    %19 = tpu.matmul %16, %18, %cst_12 {dimension_numbers = #tpu.dot_dimension_numbers<[1], [0], [0], [1], [0, 0, 1, 1], [], []>} : vector<256x4xbf16>, vector<4x4xbf16>, vector<256x4xf32> -> vector<256x4xf32>
    %20 = arith.addf %14, %19 : vector<256x4xf32>
    %21 = vector.extract_strided_slice %1 {offsets = [1, 0, 0], sizes = [16, 16, 4], strides = [1, 1, 1]} : vector<18x18x4xbf16> to vector<16x16x4xbf16>
    %22 = vector.shape_cast %21 : vector<16x16x4xbf16> to vector<256x4xbf16>
    %c3 = arith.constant 3 : index
    %c0_13 = arith.constant 0 : index
    %c0_14 = arith.constant 0 : index
    %23 = vector.load %arg2[%c3, %c0_13, %c0_14] : memref<9x4x4xbf16, #tpu.memory_space<vmem>>, vector<1x4x4xbf16>
    %24 = vector.shape_cast %23 : vector<1x4x4xbf16> to vector<4x4xbf16>
    %cst_15 = arith.constant dense<0.000000e+00> : vector<256x4xf32>
    %25 = tpu.matmul %22, %24, %cst_15 {dimension_numbers = #tpu.dot_dimension_numbers<[1], [0], [0], [1], [0, 0, 1, 1], [], []>} : vector<256x4xbf16>, vector<4x4xbf16>, vector<256x4xf32> -> vector<256x4xf32>
    %26 = arith.addf %20, %25 : vector<256x4xf32>
    %27 = vector.extract_strided_slice %1 {offsets = [1, 1, 0], sizes = [16, 16, 4], strides = [1, 1, 1]} : vector<18x18x4xbf16> to vector<16x16x4xbf16>
    %28 = vector.shape_cast %27 : vector<16x16x4xbf16> to vector<256x4xbf16>
    %c4 = arith.constant 4 : index
    %c0_16 = arith.constant 0 : index
    %c0_17 = arith.constant 0 : index
    %29 = vector.load %arg2[%c4, %c0_16, %c0_17] : memref<9x4x4xbf16, #tpu.memory_space<vmem>>, vector<1x4x4xbf16>
    %30 = vector.shape_cast %29 : vector<1x4x4xbf16> to vector<4x4xbf16>
    %cst_18 = arith.constant dense<0.000000e+00> : vector<256x4xf32>
    %31 = tpu.matmul %28, %30, %cst_18 {dimension_numbers = #tpu.dot_dimension_numbers<[1], [0], [0], [1], [0, 0, 1, 1], [], []>} : vector<256x4xbf16>, vector<4x4xbf16>, vector<256x4xf32> -> vector<256x4xf32>
    %32 = arith.addf %26, %31 : vector<256x4xf32>
    %33 = vector.extract_strided_slice %1 {offsets = [1, 2, 0], sizes = [16, 16, 4], strides = [1, 1, 1]} : vector<18x18x4xbf16> to vector<16x16x4xbf16>
    %34 = vector.shape_cast %33 : vector<16x16x4xbf16> to vector<256x4xbf16>
    %c5 = arith.constant 5 : index
    %c0_19 = arith.constant 0 : index
    %c0_20 = arith.constant 0 : index
    %35 = vector.load %arg2[%c5, %c0_19, %c0_20] : memref<9x4x4xbf16, #tpu.memory_space<vmem>>, vector<1x4x4xbf16>
    %36 = vector.shape_cast %35 : vector<1x4x4xbf16> to vector<4x4xbf16>
    %cst_21 = arith.constant dense<0.000000e+00> : vector<256x4xf32>
    %37 = tpu.matmul %34, %36, %cst_21 {dimension_numbers = #tpu.dot_dimension_numbers<[1], [0], [0], [1], [0, 0, 1, 1], [], []>} : vector<256x4xbf16>, vector<4x4xbf16>, vector<256x4xf32> -> vector<256x4xf32>
    %38 = arith.addf %32, %37 : vector<256x4xf32>
    %39 = vector.extract_strided_slice %1 {offsets = [2, 0, 0], sizes = [16, 16, 4], strides = [1, 1, 1]} : vector<18x18x4xbf16> to vector<16x16x4xbf16>
    %40 = vector.shape_cast %39 : vector<16x16x4xbf16> to vector<256x4xbf16>
    %c6 = arith.constant 6 : index
    %c0_22 = arith.constant 0 : index
    %c0_23 = arith.constant 0 : index
    %41 = vector.load %arg2[%c6, %c0_22, %c0_23] : memref<9x4x4xbf16, #tpu.memory_space<vmem>>, vector<1x4x4xbf16>
    %42 = vector.shape_cast %41 : vector<1x4x4xbf16> to vector<4x4xbf16>
    %cst_24 = arith.constant dense<0.000000e+00> : vector<256x4xf32>
    %43 = tpu.matmul %40, %42, %cst_24 {dimension_numbers = #tpu.dot_dimension_numbers<[1], [0], [0], [1], [0, 0, 1, 1], [], []>} : vector<256x4xbf16>, vector<4x4xbf16>, vector<256x4xf32> -> vector<256x4xf32>
    %44 = arith.addf %38, %43 : vector<256x4xf32>
    %45 = vector.extract_strided_slice %1 {offsets = [2, 1, 0], sizes = [16, 16, 4], strides = [1, 1, 1]} : vector<18x18x4xbf16> to vector<16x16x4xbf16>
    %46 = vector.shape_cast %45 : vector<16x16x4xbf16> to vector<256x4xbf16>
    %c7 = arith.constant 7 : index
    %c0_25 = arith.constant 0 : index
    %c0_26 = arith.constant 0 : index
    %47 = vector.load %arg2[%c7, %c0_25, %c0_26] : memref<9x4x4xbf16, #tpu.memory_space<vmem>>, vector<1x4x4xbf16>
    %48 = vector.shape_cast %47 : vector<1x4x4xbf16> to vector<4x4xbf16>
    %cst_27 = arith.constant dense<0.000000e+00> : vector<256x4xf32>
    %49 = tpu.matmul %46, %48, %cst_27 {dimension_numbers = #tpu.dot_dimension_numbers<[1], [0], [0], [1], [0, 0, 1, 1], [], []>} : vector<256x4xbf16>, vector<4x4xbf16>, vector<256x4xf32> -> vector<256x4xf32>
    %50 = arith.addf %44, %49 : vector<256x4xf32>
    %51 = vector.extract_strided_slice %1 {offsets = [2, 2, 0], sizes = [16, 16, 4], strides = [1, 1, 1]} : vector<18x18x4xbf16> to vector<16x16x4xbf16>
    %52 = vector.shape_cast %51 : vector<16x16x4xbf16> to vector<256x4xbf16>
    %c8 = arith.constant 8 : index
    %c0_28 = arith.constant 0 : index
    %c0_29 = arith.constant 0 : index
    %53 = vector.load %arg2[%c8, %c0_28, %c0_29] : memref<9x4x4xbf16, #tpu.memory_space<vmem>>, vector<1x4x4xbf16>
    %54 = vector.shape_cast %53 : vector<1x4x4xbf16> to vector<4x4xbf16>
    %cst_30 = arith.constant dense<0.000000e+00> : vector<256x4xf32>
    %55 = tpu.matmul %52, %54, %cst_30 {dimension_numbers = #tpu.dot_dimension_numbers<[1], [0], [0], [1], [0, 0, 1, 1], [], []>} : vector<256x4xbf16>, vector<4x4xbf16>, vector<256x4xf32> -> vector<256x4xf32>
    %56 = arith.addf %50, %55 : vector<256x4xf32>
    %c0_31 = arith.constant 0 : index
    %c0_32 = arith.constant 0 : index
    %57 = vector.load %arg3[%c0_31, %c0_32] : memref<1x4xf32, #tpu.memory_space<vmem>>, vector<1x4xf32>
    %58 = vector.broadcast %57 : vector<1x4xf32> to vector<256x4xf32>
    %59 = arith.addf %56, %58 : vector<256x4xf32>
    %60 = arith.negf %59 : vector<256x4xf32>
    %61 = math.exp %60 : vector<256x4xf32>
    %cst_33 = arith.constant 1.000000e+00 : f32
    %62 = vector.broadcast %cst_33 : f32 to vector<256x4xf32>
    %63 = arith.addf %62, %61 : vector<256x4xf32>
    %64 = arith.divf %62, %63 : vector<256x4xf32>
    %65 = arith.mulf %59, %64 : vector<256x4xf32>
    %66 = arith.truncf %65 : vector<256x4xf32> to vector<256x4xbf16>
    %c0_34 = arith.constant 0 : index
    %c0_35 = arith.constant 0 : index
    %67 = vector.load %arg4[%c0_34, %c0_35] : memref<256x4xbf16, #tpu.memory_space<vmem>>, vector<256x4xbf16>
    tpu.vector_store %arg4[%c0_34, %c0_35], %66 {strides = array<i32>} : memref<256x4xbf16, #tpu.memory_space<vmem>>, vector<256x4xbf16>,
    return
  }
  func.func @transform_0(%arg0: i32) -> (i32, i32, i32, i32) {
    %c0_i32 = arith.constant 0 : i32
    %c0_i32_0 = arith.constant 0 : i32
    %c0_i32_1 = arith.constant 0 : i32
    %c0_i32_2 = arith.constant 0 : i32
    return %arg0, %c0_i32, %c0_i32_0, %c0_i32_1 : i32, i32, i32, i32
  }
  func.func @transform_1(%arg0: i32) -> (i32, i32, i32) {
    %c0_i32 = arith.constant 0 : i32
    %c0_i32_0 = arith.constant 0 : i32
    %c0_i32_1 = arith.constant 0 : i32
    %c0_i32_2 = arith.constant 0 : i32
    return %c0_i32, %c0_i32_0, %c0_i32_1 : i32, i32, i32
  }
  func.func @transform_2(%arg0: i32) -> (i32, i32) {
    %c0_i32 = arith.constant 0 : i32
    %c0_i32_0 = arith.constant 0 : i32
    %c0_i32_1 = arith.constant 0 : i32
    return %c0_i32, %c0_i32_0 : i32, i32
  }
  func.func @transform_3(%arg0: i32) -> (i32, i32) {
    %c0_i32 = arith.constant 0 : i32
    %c0_i32_0 = arith.constant 0 : i32
    return %arg0, %c0_i32 : i32, i32
  }
}

module attributes {stable_mosaic.version = 11 : i64} {
  func.func @_tail_kernel(%arg0: i32, %arg1: memref<512x4xbf16, #tpu.memory_space<vmem>>, %arg2: memref<512x4xbf16, #tpu.memory_space<vmem>>, %arg3: memref<1x4xf32, #tpu.memory_space<vmem>>, %arg4: memref<1x4xf32, #tpu.memory_space<vmem>>, %arg5: memref<1x4xf32, #tpu.memory_space<vmem>>, %arg6: memref<1x4xf32, #tpu.memory_space<vmem>>, %arg7: memref<4x4xbf16, #tpu.memory_space<vmem>>, %arg8: memref<4x4xbf16, #tpu.memory_space<vmem>>, %arg9: memref<1x4xf32, #tpu.memory_space<vmem>>, %arg10: memref<512x4xf32, #tpu.memory_space<vmem>>) attributes {dimension_semantics = [#tpu.dimension_semantics<parallel>], iteration_bounds = array<i64: 1>, scalar_prefetch = 0 : i64, scratch_operands = 0 : i64, tpu.core_type = #tpu.core_type<tc>, window_params = [{transform_indices = @transform_0, window_bounds = array<i64: 512, 4>}, {transform_indices = @transform_1, window_bounds = array<i64: 512, 4>}, {pipeline_mode = #tpu.pipeline_mode<synchronous>, transform_indices = @transform_2, window_bounds = array<i64: 1, 4>}, {pipeline_mode = #tpu.pipeline_mode<synchronous>, transform_indices = @transform_3, window_bounds = array<i64: 1, 4>}, {pipeline_mode = #tpu.pipeline_mode<synchronous>, transform_indices = @transform_4, window_bounds = array<i64: 1, 4>}, {pipeline_mode = #tpu.pipeline_mode<synchronous>, transform_indices = @transform_5, window_bounds = array<i64: 1, 4>}, {pipeline_mode = #tpu.pipeline_mode<synchronous>, transform_indices = @transform_6, window_bounds = array<i64: 4, 4>}, {pipeline_mode = #tpu.pipeline_mode<synchronous>, transform_indices = @transform_7, window_bounds = array<i64: 4, 4>}, {pipeline_mode = #tpu.pipeline_mode<synchronous>, transform_indices = @transform_8, window_bounds = array<i64: 1, 4>}, {transform_indices = @transform_9, window_bounds = array<i64: 512, 4>}]} {
    %c0 = arith.constant 0 : index
    %c0_0 = arith.constant 0 : index
    %0 = vector.load %arg1[%c0, %c0_0] : memref<512x4xbf16, #tpu.memory_space<vmem>>, vector<512x4xbf16>
    %1 = arith.extf %0 : vector<512x4xbf16> to vector<512x4xf32>
    %c0_1 = arith.constant 0 : index
    %c0_2 = arith.constant 0 : index
    %2 = vector.load %arg3[%c0_1, %c0_2] : memref<1x4xf32, #tpu.memory_space<vmem>>, vector<1x4xf32>
    %3 = vector.broadcast %2 : vector<1x4xf32> to vector<512x4xf32>
    %4 = arith.mulf %1, %3 : vector<512x4xf32>
    %c0_3 = arith.constant 0 : index
    %c0_4 = arith.constant 0 : index
    %5 = vector.load %arg4[%c0_3, %c0_4] : memref<1x4xf32, #tpu.memory_space<vmem>>, vector<1x4xf32>
    %6 = vector.broadcast %5 : vector<1x4xf32> to vector<512x4xf32>
    %7 = arith.addf %4, %6 : vector<512x4xf32>
    %8 = arith.negf %7 : vector<512x4xf32>
    %9 = math.exp %8 : vector<512x4xf32>
    %cst = arith.constant 1.000000e+00 : f32
    %10 = vector.broadcast %cst : f32 to vector<512x4xf32>
    %11 = arith.addf %10, %9 : vector<512x4xf32>
    %12 = arith.divf %10, %11 : vector<512x4xf32>
    %13 = arith.mulf %7, %12 : vector<512x4xf32>
    %c0_5 = arith.constant 0 : index
    %c0_6 = arith.constant 0 : index
    %14 = vector.load %arg2[%c0_5, %c0_6] : memref<512x4xbf16, #tpu.memory_space<vmem>>, vector<512x4xbf16>
    %15 = arith.extf %14 : vector<512x4xbf16> to vector<512x4xf32>
    %c0_7 = arith.constant 0 : index
    %c0_8 = arith.constant 0 : index
    %16 = vector.load %arg5[%c0_7, %c0_8] : memref<1x4xf32, #tpu.memory_space<vmem>>, vector<1x4xf32>
    %17 = vector.broadcast %16 : vector<1x4xf32> to vector<512x4xf32>
    %18 = arith.mulf %15, %17 : vector<512x4xf32>
    %c0_9 = arith.constant 0 : index
    %c0_10 = arith.constant 0 : index
    %19 = vector.load %arg6[%c0_9, %c0_10] : memref<1x4xf32, #tpu.memory_space<vmem>>, vector<1x4xf32>
    %20 = vector.broadcast %19 : vector<1x4xf32> to vector<512x4xf32>
    %21 = arith.addf %18, %20 : vector<512x4xf32>
    %22 = arith.negf %21 : vector<512x4xf32>
    %23 = math.exp %22 : vector<512x4xf32>
    %cst_11 = arith.constant 1.000000e+00 : f32
    %24 = vector.broadcast %cst_11 : f32 to vector<512x4xf32>
    %25 = arith.addf %24, %23 : vector<512x4xf32>
    %26 = arith.divf %24, %25 : vector<512x4xf32>
    %27 = arith.mulf %21, %26 : vector<512x4xf32>
    %28 = arith.truncf %13 : vector<512x4xf32> to vector<512x4xbf16>
    %c0_12 = arith.constant 0 : index
    %c0_13 = arith.constant 0 : index
    %29 = vector.load %arg7[%c0_12, %c0_13] : memref<4x4xbf16, #tpu.memory_space<vmem>>, vector<4x4xbf16>
    %cst_14 = arith.constant dense<0.000000e+00> : vector<512x4xf32>
    %30 = tpu.matmul %28, %29, %cst_14 {dimension_numbers = #tpu.dot_dimension_numbers<[1], [0], [0], [1], [0, 0, 1, 1], [], []>} : vector<512x4xbf16>, vector<4x4xbf16>, vector<512x4xf32> -> vector<512x4xf32>
    %31 = arith.truncf %27 : vector<512x4xf32> to vector<512x4xbf16>
    %c0_15 = arith.constant 0 : index
    %c0_16 = arith.constant 0 : index
    %32 = vector.load %arg8[%c0_15, %c0_16] : memref<4x4xbf16, #tpu.memory_space<vmem>>, vector<4x4xbf16>
    %cst_17 = arith.constant dense<0.000000e+00> : vector<512x4xf32>
    %33 = tpu.matmul %31, %32, %cst_17 {dimension_numbers = #tpu.dot_dimension_numbers<[1], [0], [0], [1], [0, 0, 1, 1], [], []>} : vector<512x4xbf16>, vector<4x4xbf16>, vector<512x4xf32> -> vector<512x4xf32>
    %34 = arith.addf %30, %33 : vector<512x4xf32>
    %c0_18 = arith.constant 0 : index
    %c0_19 = arith.constant 0 : index
    %35 = vector.load %arg9[%c0_18, %c0_19] : memref<1x4xf32, #tpu.memory_space<vmem>>, vector<1x4xf32>
    %36 = vector.broadcast %35 : vector<1x4xf32> to vector<512x4xf32>
    %37 = arith.addf %34, %36 : vector<512x4xf32>
    %38 = arith.negf %37 : vector<512x4xf32>
    %39 = math.exp %38 : vector<512x4xf32>
    %cst_20 = arith.constant 1.000000e+00 : f32
    %40 = vector.broadcast %cst_20 : f32 to vector<512x4xf32>
    %41 = arith.addf %40, %39 : vector<512x4xf32>
    %42 = arith.divf %40, %41 : vector<512x4xf32>
    %43 = arith.mulf %37, %42 : vector<512x4xf32>
    %c0_21 = arith.constant 0 : index
    %c0_22 = arith.constant 0 : index
    %44 = vector.load %arg10[%c0_21, %c0_22] : memref<512x4xf32, #tpu.memory_space<vmem>>, vector<512x4xf32>
    tpu.vector_store %arg10[%c0_21, %c0_22], %43 {strides = array<i32>} : memref<512x4xf32, #tpu.memory_space<vmem>>, vector<512x4xf32>,
    return
  }
  func.func @transform_0(%arg0: i32) -> (i32, i32) {
    %c0_i32 = arith.constant 0 : i32
    %c0_i32_0 = arith.constant 0 : i32
    return %arg0, %c0_i32 : i32, i32
  }
  func.func @transform_1(%arg0: i32) -> (i32, i32) {
    %c0_i32 = arith.constant 0 : i32
    %c0_i32_0 = arith.constant 0 : i32
    return %arg0, %c0_i32 : i32, i32
  }
  func.func @transform_2(%arg0: i32) -> (i32, i32) {
    %c0_i32 = arith.constant 0 : i32
    %c0_i32_0 = arith.constant 0 : i32
    %c0_i32_1 = arith.constant 0 : i32
    return %c0_i32, %c0_i32_0 : i32, i32
  }
  func.func @transform_3(%arg0: i32) -> (i32, i32) {
    %c0_i32 = arith.constant 0 : i32
    %c0_i32_0 = arith.constant 0 : i32
    %c0_i32_1 = arith.constant 0 : i32
    return %c0_i32, %c0_i32_0 : i32, i32
  }
  func.func @transform_4(%arg0: i32) -> (i32, i32) {
    %c0_i32 = arith.constant 0 : i32
    %c0_i32_0 = arith.constant 0 : i32
    %c0_i32_1 = arith.constant 0 : i32
    return %c0_i32, %c0_i32_0 : i32, i32
  }
  func.func @transform_5(%arg0: i32) -> (i32, i32) {
    %c0_i32 = arith.constant 0 : i32
    %c0_i32_0 = arith.constant 0 : i32
    %c0_i32_1 = arith.constant 0 : i32
    return %c0_i32, %c0_i32_0 : i32, i32
  }
  func.func @transform_6(%arg0: i32) -> (i32, i32) {
    %c0_i32 = arith.constant 0 : i32
    %c0_i32_0 = arith.constant 0 : i32
    %c0_i32_1 = arith.constant 0 : i32
    return %c0_i32, %c0_i32_0 : i32, i32
  }
  func.func @transform_7(%arg0: i32) -> (i32, i32) {
    %c0_i32 = arith.constant 0 : i32
    %c0_i32_0 = arith.constant 0 : i32
    %c0_i32_1 = arith.constant 0 : i32
    return %c0_i32, %c0_i32_0 : i32, i32
  }
  func.func @transform_8(%arg0: i32) -> (i32, i32) {
    %c0_i32 = arith.constant 0 : i32
    %c0_i32_0 = arith.constant 0 : i32
    %c0_i32_1 = arith.constant 0 : i32
    return %c0_i32, %c0_i32_0 : i32, i32
  }
  func.func @transform_9(%arg0: i32) -> (i32, i32) {
    %c0_i32 = arith.constant 0 : i32
    %c0_i32_0 = arith.constant 0 : i32
    return %arg0, %c0_i32 : i32, i32
  }
}

</mosaic_0001>

<llo_original>
// kernel: bottleneck_csp2_pallas.5
$region0: #{bottleneck_csp2_pallas.5}
  #allocation0 [shape = 'u32[]', space=smem, size = 0x4, offset = 0x4, fixed_abs, tag = 'smem constant byte address 0x4 - core index']
  #allocation1 [shape = 'u32[144,128]{1,0:T(1,128)}', space=vmem, size = 0x12000, scoped, tag = 'internal scratch']
  %s0 = inlined_call_operand.vmem [shape: bf16[512,4], index: 0, kind: input, shape index: {}]
  %s1 = inlined_call_operand.vmem [shape: bf16[512,4], index: 1, kind: input, shape index: {}]
  %s2 = inlined_call_operand.vmem [shape: f32[1,4], index: 2, kind: input, shape index: {}]
  %s3 = inlined_call_operand.vmem [shape: f32[1,4], index: 3, kind: input, shape index: {}]
  %s4 = inlined_call_operand.vmem [shape: f32[1,4], index: 4, kind: input, shape index: {}]
  %s5 = inlined_call_operand.vmem [shape: f32[1,4], index: 5, kind: input, shape index: {}]
  %s6 = inlined_call_operand.vmem [shape: bf16[4,4], index: 6, kind: input, shape index: {}]
  %s7 = inlined_call_operand.vmem [shape: bf16[4,4], index: 7, kind: input, shape index: {}]
  %s8 = inlined_call_operand.vmem [shape: f32[1,4], index: 8, kind: input, shape index: {}]
  %s9 = inlined_call_operand.vmem [shape: f32[512,4], index: 9, kind: output, shape index: {}]
  %s10 = sld [smem:[#allocation0]]
  $region46: #{bottleneck_csp2_pallas.5} parent=0
    _
  %s12 = ssub.s32 1, %s10
  %s13 = scalar_select 0, %s12, %s10
  // Predicated region
  $region2: #{bottleneck_csp2_pallas.5} parent=0 // pred_check
    _
  $region3: #{bottleneck_csp2_pallas.5} parent=0 // pred_check_branch
    %15 = sbr.rel (0) target = $region5
  $region4: #{bottleneck_csp2_pallas.5} parent=0 // pred_region
    _
  $region5: #{bottleneck_csp2_pallas.5} parent=0 // pred_fallthru
    _
  // Predicated region
  $region6: #{bottleneck_csp2_pallas.5} parent=0 // pred_check
    _
  $region7: #{bottleneck_csp2_pallas.5} parent=0 // pred_check_branch
    %17 = sbr.rel (0) target = $region9
  $region8: #{bottleneck_csp2_pallas.5} parent=0 // pred_region
    _
  $region9: #{bottleneck_csp2_pallas.5} parent=0 // pred_fallthru
    _
  // Predicated region
  $region10: #{bottleneck_csp2_pallas.5} parent=0 // pred_check
    _
  $region11: #{bottleneck_csp2_pallas.5} parent=0 // pred_check_branch
    %19 = sbr.rel (0) target = $region13
  $region12: #{bottleneck_csp2_pallas.5} parent=0 // pred_region
    _
  $region13: #{bottleneck_csp2_pallas.5} parent=0 // pred_fallthru
    _
  // Predicated region
  $region14: #{bottleneck_csp2_pallas.5} parent=0 // pred_check
    _
  $region15: #{bottleneck_csp2_pallas.5} parent=0 // pred_check_branch
    %21 = sbr.rel (0) target = $region17
  $region16: #{bottleneck_csp2_pallas.5} parent=0 // pred_region
    _
  $region17: #{bottleneck_csp2_pallas.5} parent=0 // pred_fallthru
    _
  // Predicated region
  $region18: #{bottleneck_csp2_pallas.5} parent=0 // pred_check
    _
  $region19: #{bottleneck_csp2_pallas.5} parent=0 // pred_check_branch
    %23 = sbr.rel (0) target = $region21
  $region20: #{bottleneck_csp2_pallas.5} parent=0 // pred_region
    _
  $region21: #{bottleneck_csp2_pallas.5} parent=0 // pred_fallthru
    _
  // Predicated region
  $region22: #{bottleneck_csp2_pallas.5} parent=0 // pred_check
    _
  $region23: #{bottleneck_csp2_pallas.5} parent=0 // pred_check_branch
    %25 = sbr.rel (0) target = $region25
  $region24: #{bottleneck_csp2_pallas.5} parent=0 // pred_region
    _
  $region25: #{bottleneck_csp2_pallas.5} parent=0 // pred_fallthru
    _
  // Predicated region
  $region26: #{bottleneck_csp2_pallas.5} parent=0 // pred_check
    _
  $region27: #{bottleneck_csp2_pallas.5} parent=0 // pred_check_branch
    %27 = sbr.rel (0) target = $region29
  $region28: #{bottleneck_csp2_pallas.5} parent=0 // pred_region
    _
  $region29: #{bottleneck_csp2_pallas.5} parent=0 // pred_fallthru
    _
  // Predicated region
  $region30: #{bottleneck_csp2_pallas.5} parent=0 // pred_check
    _
  $region31: #{bottleneck_csp2_pallas.5} parent=0 // pred_check_branch
    %29 = sbr.rel (0) target = $region33
  $region32: #{bottleneck_csp2_pallas.5} parent=0 // pred_region
    _
  $region33: #{bottleneck_csp2_pallas.5} parent=0 // pred_fallthru
    _
  // Predicated region
  $region34: #{bottleneck_csp2_pallas.5} parent=0 // pred_check
    _
  $region35: #{bottleneck_csp2_pallas.5} parent=0 // pred_check_branch
    %31 = sbr.rel (0) target = $region37
  $region36: #{bottleneck_csp2_pallas.5} parent=0 // pred_region
    _
  $region37: #{bottleneck_csp2_pallas.5} parent=0 // pred_fallthru
    _
  %v33 = vld [vmem:[%s0] sm:$0xf]
  %v34 = vld [vmem:[%s0 + $0x4] sm:$0xf]
  %v35 = vld [vmem:[%s0 + $0x8] sm:$0xf]
  %v36 = vld [vmem:[%s0 + $0xc] sm:$0xf]
  %v37 = vld [vmem:[%s0 + $0x10] sm:$0xf]
  %v38 = vld [vmem:[%s0 + $0x14] sm:$0xf]
  %v39 = vld [vmem:[%s0 + $0x18] sm:$0xf]
  %v40 = vld [vmem:[%s0 + $0x1c] sm:$0xf]
  %v41 = vld [vmem:[%s0 + $0x20] sm:$0xf]
  %v42 = vld [vmem:[%s0 + $0x24] sm:$0xf]
  %v43 = vld [vmem:[%s0 + $0x28] sm:$0xf]
  %v44 = vld [vmem:[%s0 + $0x2c] sm:$0xf]
  %v45 = vld [vmem:[%s0 + $0x30] sm:$0xf]
  %v46 = vld [vmem:[%s0 + $0x34] sm:$0xf]
  %v47 = vld [vmem:[%s0 + $0x38] sm:$0xf]
  %v48 = vld [vmem:[%s0 + $0x3c] sm:$0xf]
  %v49 = vld [vmem:[%s0 + $0x40] sm:$0xf]
  %v50 = vld [vmem:[%s0 + $0x44] sm:$0xf]
  %v51 = vld [vmem:[%s0 + $0x48] sm:$0xf]
  %v52 = vld [vmem:[%s0 + $0x4c] sm:$0xf]
  %v53 = vld [vmem:[%s0 + $0x50] sm:$0xf]
  %v54 = vld [vmem:[%s0 + $0x54] sm:$0xf]
  %v55 = vld [vmem:[%s0 + $0x58] sm:$0xf]
  %v56 = vld [vmem:[%s0 + $0x5c] sm:$0xf]
  %v57 = vld [vmem:[%s0 + $0x60] sm:$0xf]
  %v58 = vld [vmem:[%s0 + $0x64] sm:$0xf]
  %v59 = vld [vmem:[%s0 + $0x68] sm:$0xf]
  %v60 = vld [vmem:[%s0 + $0x6c] sm:$0xf]
  %v61 = vld [vmem:[%s0 + $0x70] sm:$0xf]
  %v62 = vld [vmem:[%s0 + $0x74] sm:$0xf]
  %v63 = vld [vmem:[%s0 + $0x78] sm:$0xf]
  %v64 = vld [vmem:[%s0 + $0x7c] sm:$0xf]
  %v65 = vld [vmem:[%s0 + $0x80] sm:$0xf]
  %v66 = vld [vmem:[%s0 + $0x84] sm:$0xf]
  %v67 = vld [vmem:[%s0 + $0x88] sm:$0xf]
  %v68 = vld [vmem:[%s0 + $0x8c] sm:$0xf]
  %v69 = vld [vmem:[%s0 + $0x90] sm:$0xf]
  %v70 = vld [vmem:[%s0 + $0x94] sm:$0xf]
  %v71 = vld [vmem:[%s0 + $0x98] sm:$0xf]
  %v72 = vld [vmem:[%s0 + $0x9c] sm:$0xf]
  %v73 = vld [vmem:[%s0 + $0xa0] sm:$0xf]
  %v74 = vld [vmem:[%s0 + $0xa4] sm:$0xf]
  %v75 = vld [vmem:[%s0 + $0xa8] sm:$0xf]
  %v76 = vld [vmem:[%s0 + $0xac] sm:$0xf]
  %v77 = vld [vmem:[%s0 + $0xb0] sm:$0xf]
  %v78 = vld [vmem:[%s0 + $0xb4] sm:$0xf]
  %v79 = vld [vmem:[%s0 + $0xb8] sm:$0xf]
  %v80 = vld [vmem:[%s0 + $0xbc] sm:$0xf]
  %v81 = vld [vmem:[%s0 + $0xc0] sm:$0xf]
  %v82 = vld [vmem:[%s0 + $0xc4] sm:$0xf]
  %v83 = vld [vmem:[%s0 + $0xc8] sm:$0xf]
  %v84 = vld [vmem:[%s0 + $0xcc] sm:$0xf]
  %v85 = vld [vmem:[%s0 + $0xd0] sm:$0xf]
  %v86 = vld [vmem:[%s0 + $0xd4] sm:$0xf]
  %v87 = vld [vmem:[%s0 + $0xd8] sm:$0xf]
  %v88 = vld [vmem:[%s0 + $0xdc] sm:$0xf]
  %v89 = vld [vmem:[%s0 + $0xe0] sm:$0xf]
  %v90 = vld [vmem:[%s0 + $0xe4] sm:$0xf]
  %v91 = vld [vmem:[%s0 + $0xe8] sm:$0xf]
  %v92 = vld [vmem:[%s0 + $0xec] sm:$0xf]
  %v93 = vld [vmem:[%s0 + $0xf0] sm:$0xf]
  %v94 = vld [vmem:[%s0 + $0xf4] sm:$0xf]
  %v95 = vld [vmem:[%s0 + $0xf8] sm:$0xf]
  %v96 = vld [vmem:[%s0 + $0xfc] sm:$0xf]
  %v97 = vunpack.c.l.bf16 %v33
  %v98 = vunpack.c.l.bf16 %v34
  %v99 = vunpack.c.l.bf16 %v35
  %v100 = vunpack.c.l.bf16 %v36
  %v101 = vunpack.c.l.bf16 %v37
  %v102 = vunpack.c.l.bf16 %v38
  %v103 = vunpack.c.l.bf16 %v39
  %v104 = vunpack.c.l.bf16 %v40
  %v105 = vunpack.c.l.bf16 %v41
  %v106 = vunpack.c.l.bf16 %v42
  %v107 = vunpack.c.l.bf16 %v43
  %v108 = vunpack.c.l.bf16 %v44
  %v109 = vunpack.c.l.bf16 %v45
  %v110 = vunpack.c.l.bf16 %v46
  %v111 = vunpack.c.l.bf16 %v47
  %v112 = vunpack.c.l.bf16 %v48
  %v113 = vunpack.c.l.bf16 %v49
  %v114 = vunpack.c.l.bf16 %v50
  %v115 = vunpack.c.l.bf16 %v51
  %v116 = vunpack.c.l.bf16 %v52
  %v117 = vunpack.c.l.bf16 %v53
  %v118 = vunpack.c.l.bf16 %v54
  %v119 = vunpack.c.l.bf16 %v55
  %v120 = vunpack.c.l.bf16 %v56
  %v121 = vunpack.c.l.bf16 %v57
  %v122 = vunpack.c.l.bf16 %v58
  %v123 = vunpack.c.l.bf16 %v59
  %v124 = vunpack.c.l.bf16 %v60
  %v125 = vunpack.c.l.bf16 %v61
  %v126 = vunpack.c.l.bf16 %v62
  %v127 = vunpack.c.l.bf16 %v63
  %v128 = vunpack.c.l.bf16 %v64
  %v129 = vunpack.c.l.bf16 %v65
  %v130 = vunpack.c.l.bf16 %v66
  %v131 = vunpack.c.l.bf16 %v67
  %v132 = vunpack.c.l.bf16 %v68
  %v133 = vunpack.c.l.bf16 %v69
  %v134 = vunpack.c.l.bf16 %v70
  %v135 = vunpack.c.l.bf16 %v71
  %v136 = vunpack.c.l.bf16 %v72
  %v137 = vunpack.c.l.bf16 %v73
  %v138 = vunpack.c.l.bf16 %v74
  %v139 = vunpack.c.l.bf16 %v75
  %v140 = vunpack.c.l.bf16 %v76
  %v141 = vunpack.c.l.bf16 %v77
  %v142 = vunpack.c.l.bf16 %v78
  %v143 = vunpack.c.l.bf16 %v79
  %v144 = vunpack.c.l.bf16 %v80
  %v145 = vunpack.c.l.bf16 %v81
  %v146 = vunpack.c.l.bf16 %v82
  %v147 = vunpack.c.l.bf16 %v83
  %v148 = vunpack.c.l.bf16 %v84
  %v149 = vunpack.c.l.bf16 %v85
  %v150 = vunpack.c.l.bf16 %v86
  %v151 = vunpack.c.l.bf16 %v87
  %v152 = vunpack.c.l.bf16 %v88
  %v153 = vunpack.c.l.bf16 %v89
  %v154 = vunpack.c.l.bf16 %v90
  %v155 = vunpack.c.l.bf16 %v91
  %v156 = vunpack.c.l.bf16 %v92
  %v157 = vunpack.c.l.bf16 %v93
  %v158 = vunpack.c.l.bf16 %v94
  %v159 = vunpack.c.l.bf16 %v95
  %v160 = vunpack.c.l.bf16 %v96
  %v161 = vld [vmem:[%s2] sm:$0x1]
  %v163 = vlaneseq
  %v164 = vshrl.u32 %v163, 7
  %v165 = vsub.s32 0, %v164
  %v166 = vrot.slane %v161, %v165
  %v168 = vmul.f32 %v97, %v166
  %v169 = vmul.f32 %v98, %v166
  %v170 = vmul.f32 %v99, %v166
  %v171 = vmul.f32 %v100, %v166
  %v172 = vmul.f32 %v101, %v166
  %v173 = vmul.f32 %v102, %v166
  %v174 = vmul.f32 %v103, %v166
  %v175 = vmul.f32 %v104, %v166
  %v176 = vmul.f32 %v105, %v166
  %v177 = vmul.f32 %v106, %v166
  %v178 = vmul.f32 %v107, %v166
  %v179 = vmul.f32 %v108, %v166
  %v180 = vmul.f32 %v109, %v166
  %v181 = vmul.f32 %v110, %v166
  %v182 = vmul.f32 %v111, %v166
  %v183 = vmul.f32 %v112, %v166
  %v184 = vmul.f32 %v113, %v166
  %v185 = vmul.f32 %v114, %v166
  %v186 = vmul.f32 %v115, %v166
  %v187 = vmul.f32 %v116, %v166
  %v188 = vmul.f32 %v117, %v166
  %v189 = vmul.f32 %v118, %v166
  %v190 = vmul.f32 %v119, %v166
  %v191 = vmul.f32 %v120, %v166
  %v192 = vmul.f32 %v121, %v166
  %v193 = vmul.f32 %v122, %v166
  %v194 = vmul.f32 %v123, %v166
  %v195 = vmul.f32 %v124, %v166
  %v196 = vmul.f32 %v125, %v166
  %v197 = vmul.f32 %v126, %v166
  %v198 = vmul.f32 %v127, %v166
  %v199 = vmul.f32 %v128, %v166
  %v200 = vmul.f32 %v129, %v166
  %v201 = vmul.f32 %v130, %v166
  %v202 = vmul.f32 %v131, %v166
  %v203 = vmul.f32 %v132, %v166
  %v204 = vmul.f32 %v133, %v166
  %v205 = vmul.f32 %v134, %v166
  %v206 = vmul.f32 %v135, %v166
  %v207 = vmul.f32 %v136, %v166
  %v208 = vmul.f32 %v137, %v166
  %v209 = vmul.f32 %v138, %v166
  %v210 = vmul.f32 %v139, %v166
  %v211 = vmul.f32 %v140, %v166
  %v212 = vmul.f32 %v141, %v166
  %v213 = vmul.f32 %v142, %v166
  %v214 = vmul.f32 %v143, %v166
  %v215 = vmul.f32 %v144, %v166
  %v216 = vmul.f32 %v145, %v166
  %v217 = vmul.f32 %v146, %v166
  %v218 = vmul.f32 %v147, %v166
  %v219 = vmul.f32 %v148, %v166
  %v220 = vmul.f32 %v149, %v166
  %v221 = vmul.f32 %v150, %v166
  %v222 = vmul.f32 %v151, %v166
  %v223 = vmul.f32 %v152, %v166
  %v224 = vmul.f32 %v153, %v166
  %v225 = vmul.f32 %v154, %v166
  %v226 = vmul.f32 %v155, %v166
  %v227 = vmul.f32 %v156, %v166
  %v228 = vmul.f32 %v157, %v166
  %v229 = vmul.f32 %v158, %v166
  %v230 = vmul.f32 %v159, %v166
  %v231 = vmul.f32 %v160, %v166
  %v232 = vld [vmem:[%s3] sm:$0x1]
  %v234 = vlaneseq
  %v235 = vshrl.u32 %v234, 7
  %v236 = vsub.s32 0, %v235
  %v237 = vrot.slane %v232, %v236
  %v239 = vadd.f32 %v168, %v237
  %v240 = vadd.f32 %v169, %v237
  %v241 = vadd.f32 %v170, %v237
  %v242 = vadd.f32 %v171, %v237
  %v243 = vadd.f32 %v172, %v237
  %v244 = vadd.f32 %v173, %v237
  %v245 = vadd.f32 %v174, %v237
  %v246 = vadd.f32 %v175, %v237
  %v247 = vadd.f32 %v176, %v237
  %v248 = vadd.f32 %v177, %v237
  %v249 = vadd.f32 %v178, %v237
  %v250 = vadd.f32 %v179, %v237
  %v251 = vadd.f32 %v180, %v237
  %v252 = vadd.f32 %v181, %v237
  %v253 = vadd.f32 %v182, %v237
  %v254 = vadd.f32 %v183, %v237
  %v255 = vadd.f32 %v184, %v237
  %v256 = vadd.f32 %v185, %v237
  %v257 = vadd.f32 %v186, %v237
  %v258 = vadd.f32 %v187, %v237
  %v259 = vadd.f32 %v188, %v237
  %v260 = vadd.f32 %v189, %v237
  %v261 = vadd.f32 %v190, %v237
  %v262 = vadd.f32 %v191, %v237
  %v263 = vadd.f32 %v192, %v237
  %v264 = vadd.f32 %v193, %v237
  %v265 = vadd.f32 %v194, %v237
  %v266 = vadd.f32 %v195, %v237
  %v267 = vadd.f32 %v196, %v237
  %v268 = vadd.f32 %v197, %v237
  %v269 = vadd.f32 %v198, %v237
  %v270 = vadd.f32 %v199, %v237
  %v271 = vadd.f32 %v200, %v237
  %v272 = vadd.f32 %v201, %v237
  %v273 = vadd.f32 %v202, %v237
  %v274 = vadd.f32 %v203, %v237
  %v275 = vadd.f32 %v204, %v237
  %v276 = vadd.f32 %v205, %v237
  %v277 = vadd.f32 %v206, %v237
  %v278 = vadd.f32 %v207, %v237
  %v279 = vadd.f32 %v208, %v237
  %v280 = vadd.f32 %v209, %v237
  %v281 = vadd.f32 %v210, %v237
  %v282 = vadd.f32 %v211, %v237
  %v283 = vadd.f32 %v212, %v237
  %v284 = vadd.f32 %v213, %v237
  %v285 = vadd.f32 %v214, %v237
  %v286 = vadd.f32 %v215, %v237
  %v287 = vadd.f32 %v216, %v237
  %v288 = vadd.f32 %v217, %v237
  %v289 = vadd.f32 %v218, %v237
  %v290 = vadd.f32 %v219, %v237
  %v291 = vadd.f32 %v220, %v237
  %v292 = vadd.f32 %v221, %v237
  %v293 = vadd.f32 %v222, %v237
  %v294 = vadd.f32 %v223, %v237
  %v295 = vadd.f32 %v224, %v237
  %v296 = vadd.f32 %v225, %v237
  %v297 = vadd.f32 %v226, %v237
  %v298 = vadd.f32 %v227, %v237
  %v299 = vadd.f32 %v228, %v237
  %v300 = vadd.f32 %v229, %v237
  %v301 = vadd.f32 %v230, %v237
  %v302 = vadd.f32 %v231, %v237
  %v303 = vxor.u32 %v239, 2147483648
  %v304 = vxor.u32 %v240, 2147483648
  %v305 = vxor.u32 %v241, 2147483648
  %v306 = vxor.u32 %v242, 2147483648
  %v307 = vxor.u32 %v243, 2147483648
  %v308 = vxor.u32 %v244, 2147483648
  %v309 = vxor.u32 %v245, 2147483648
  %v310 = vxor.u32 %v246, 2147483648
  %v311 = vxor.u32 %v247, 2147483648
  %v312 = vxor.u32 %v248, 2147483648
  %v313 = vxor.u32 %v249, 2147483648
  %v314 = vxor.u32 %v250, 2147483648
  %v315 = vxor.u32 %v251, 2147483648
  %v316 = vxor.u32 %v252, 2147483648
  %v317 = vxor.u32 %v253, 2147483648
  %v318 = vxor.u32 %v254, 2147483648
  %v319 = vxor.u32 %v255, 2147483648
  %v320 = vxor.u32 %v256, 2147483648
  %v321 = vxor.u32 %v257, 2147483648
  %v322 = vxor.u32 %v258, 2147483648
  %v323 = vxor.u32 %v259, 2147483648
  %v324 = vxor.u32 %v260, 2147483648
  %v325 = vxor.u32 %v261, 2147483648
  %v326 = vxor.u32 %v262, 2147483648
  %v327 = vxor.u32 %v263, 2147483648
  %v328 = vxor.u32 %v264, 2147483648
  %v329 = vxor.u32 %v265, 2147483648
  %v330 = vxor.u32 %v266, 2147483648
  %v331 = vxor.u32 %v267, 2147483648
  %v332 = vxor.u32 %v268, 2147483648
  %v333 = vxor.u32 %v269, 2147483648
  %v334 = vxor.u32 %v270, 2147483648
  %v335 = vxor.u32 %v271, 2147483648
  %v336 = vxor.u32 %v272, 2147483648
  %v337 = vxor.u32 %v273, 2147483648
  %v338 = vxor.u32 %v274, 2147483648
  %v339 = vxor.u32 %v275, 2147483648
  %v340 = vxor.u32 %v276, 2147483648
  %v341 = vxor.u32 %v277, 2147483648
  %v342 = vxor.u32 %v278, 2147483648
  %v343 = vxor.u32 %v279, 2147483648
  %v344 = vxor.u32 %v280, 2147483648
  %v345 = vxor.u32 %v281, 2147483648
  %v346 = vxor.u32 %v282, 2147483648
  %v347 = vxor.u32 %v283, 2147483648
  %v348 = vxor.u32 %v284, 2147483648
  %v349 = vxor.u32 %v285, 2147483648
  %v350 = vxor.u32 %v286, 2147483648
  %v351 = vxor.u32 %v287, 2147483648
  %v352 = vxor.u32 %v288, 2147483648
  %v353 = vxor.u32 %v289, 2147483648
  %v354 = vxor.u32 %v290, 2147483648
  %v355 = vxor.u32 %v291, 2147483648
  %v356 = vxor.u32 %v292, 2147483648
  %v357 = vxor.u32 %v293, 2147483648
  %v358 = vxor.u32 %v294, 2147483648
  %v359 = vxor.u32 %v295, 2147483648
  %v360 = vxor.u32 %v296, 2147483648
  %v361 = vxor.u32 %v297, 2147483648
  %v362 = vxor.u32 %v298, 2147483648
  %v363 = vxor.u32 %v299, 2147483648
  %v364 = vxor.u32 %v300, 2147483648
  %v365 = vxor.u32 %v301, 2147483648
  %v366 = vxor.u32 %v302, 2147483648
  %v367 = vmul.f32 %v303, 1.442695
  %v368 = vpow.pop %v367
  %v369 = vmul.f32 %v304, 1.442695
  %v370 = vpow.pop %v369
  %v371 = vmul.f32 %v305, 1.442695
  %v372 = vpow.pop %v371
  %v373 = vmul.f32 %v306, 1.442695
  %v374 = vpow.pop %v373
  %v375 = vmul.f32 %v307, 1.442695
  %v376 = vpow.pop %v375
  %v377 = vmul.f32 %v308, 1.442695
  %v378 = vpow.pop %v377
  %v379 = vmul.f32 %v309, 1.442695
  %v380 = vpow.pop %v379
  %v381 = vmul.f32 %v310, 1.442695
  %v382 = vpow.pop %v381
  %v383 = vmul.f32 %v311, 1.442695
  %v384 = vpow.pop %v383
  %v385 = vmul.f32 %v312, 1.442695
  %v386 = vpow.pop %v385
  %v387 = vmul.f32 %v313, 1.442695
  %v388 = vpow.pop %v387
  %v389 = vmul.f32 %v314, 1.442695
  %v390 = vpow.pop %v389
  %v391 = vmul.f32 %v315, 1.442695
  %v392 = vpow.pop %v391
  %v393 = vmul.f32 %v316, 1.442695
  %v394 = vpow.pop %v393
  %v395 = vmul.f32 %v317, 1.442695
  %v396 = vpow.pop %v395
  %v397 = vmul.f32 %v318, 1.442695
  %v398 = vpow.pop %v397
  %v399 = vmul.f32 %v319, 1.442695
  %v400 = vpow.pop %v399
  %v401 = vmul.f32 %v320, 1.442695
  %v402 = vpow.pop %v401
  %v403 = vmul.f32 %v321, 1.442695
  %v404 = vpow.pop %v403
  %v405 = vmul.f32 %v322, 1.442695
  %v406 = vpow.pop %v405
  %v407 = vmul.f32 %v323, 1.442695
  %v408 = vpow.pop %v407
  %v409 = vmul.f32 %v324, 1.442695
  %v410 = vpow.pop %v409
  %v411 = vmul.f32 %v325, 1.442695
  %v412 = vpow.pop %v411
  %v413 = vmul.f32 %v326, 1.442695
  %v414 = vpow.pop %v413
  %v415 = vmul.f32 %v327, 1.442695
  %v416 = vpow.pop %v415
  %v417 = vmul.f32 %v328, 1.442695
  %v418 = vpow.pop %v417
  %v419 = vmul.f32 %v329, 1.442695
  %v420 = vpow.pop %v419
  %v421 = vmul.f32 %v330, 1.442695
  %v422 = vpow.pop %v421
  %v423 = vmul.f32 %v331, 1.442695
  %v424 = vpow.pop %v423
  %v425 = vmul.f32 %v332, 1.442695
  %v426 = vpow.pop %v425
  %v427 = vmul.f32 %v333, 1.442695
  %v428 = vpow.pop %v427
  %v429 = vmul.f32 %v334, 1.442695
  %v430 = vpow.pop %v429
  %v431 = vmul.f32 %v335, 1.442695
  %v432 = vpow.pop %v431
  %v433 = vmul.f32 %v336, 1.442695
  %v434 = vpow.pop %v433
  %v435 = vmul.f32 %v337, 1.442695
  %v436 = vpow.pop %v435
  %v437 = vmul.f32 %v338, 1.442695
  %v438 = vpow.pop %v437
  %v439 = vmul.f32 %v339, 1.442695
  %v440 = vpow.pop %v439
  %v441 = vmul.f32 %v340, 1.442695
  %v442 = vpow.pop %v441
  %v443 = vmul.f32 %v341, 1.442695
  %v444 = vpow.pop %v443
  %v445 = vmul.f32 %v342, 1.442695
  %v446 = vpow.pop %v445
  %v447 = vmul.f32 %v343, 1.442695
  %v448 = vpow.pop %v447
  %v449 = vmul.f32 %v344, 1.442695
  %v450 = vpow.pop %v449
  %v451 = vmul.f32 %v345, 1.442695
  %v452 = vpow.pop %v451
  %v453 = vmul.f32 %v346, 1.442695
  %v454 = vpow.pop %v453
  %v455 = vmul.f32 %v347, 1.442695
  %v456 = vpow.pop %v455
  %v457 = vmul.f32 %v348, 1.442695
  %v458 = vpow.pop %v457
  %v459 = vmul.f32 %v349, 1.442695
  %v460 = vpow.pop %v459
  %v461 = vmul.f32 %v350, 1.442695
  %v462 = vpow.pop %v461
  %v463 = vmul.f32 %v351, 1.442695
  %v464 = vpow.pop %v463
  %v465 = vmul.f32 %v352, 1.442695
  %v466 = vpow.pop %v465
  %v467 = vmul.f32 %v353, 1.442695
  %v468 = vpow.pop %v467
  %v469 = vmul.f32 %v354, 1.442695
  %v470 = vpow.pop %v469
  %v471 = vmul.f32 %v355, 1.442695
  %v472 = vpow.pop %v471
  %v473 = vmul.f32 %v356, 1.442695
  %v474 = vpow.pop %v473
  %v475 = vmul.f32 %v357, 1.442695
  %v476 = vpow.pop %v475
  %v477 = vmul.f32 %v358, 1.442695
  %v478 = vpow.pop %v477
  %v479 = vmul.f32 %v359, 1.442695
  %v480 = vpow.pop %v479
  %v481 = vmul.f32 %v360, 1.442695
  %v482 = vpow.pop %v481
  %v483 = vmul.f32 %v361, 1.442695
  %v484 = vpow.pop %v483
  %v485 = vmul.f32 %v362, 1.442695
  %v486 = vpow.pop %v485
  %v487 = vmul.f32 %v363, 1.442695
  %v488 = vpow.pop %v487
  %v489 = vmul.f32 %v364, 1.442695
  %v490 = vpow.pop %v489
  %v491 = vmul.f32 %v365, 1.442695
  %v492 = vpow.pop %v491
  %v493 = vmul.f32 %v366, 1.442695
  %v494 = vpow.pop %v493
  %v495 = vadd.f32 %v368, 1.0
  %v496 = vadd.f32 %v370, 1.0
  %v497 = vadd.f32 %v372, 1.0
  %v498 = vadd.f32 %v374, 1.0
  %v499 = vadd.f32 %v376, 1.0
  %v500 = vadd.f32 %v378, 1.0
  %v501 = vadd.f32 %v380, 1.0
  %v502 = vadd.f32 %v382, 1.0
  %v503 = vadd.f32 %v384, 1.0
  %v504 = vadd.f32 %v386, 1.0
  %v505 = vadd.f32 %v388, 1.0
  %v506 = vadd.f32 %v390, 1.0
  %v507 = vadd.f32 %v392, 1.0
  %v508 = vadd.f32 %v394, 1.0
  %v509 = vadd.f32 %v396, 1.0
  %v510 = vadd.f32 %v398, 1.0
  %v511 = vadd.f32 %v400, 1.0
  %v512 = vadd.f32 %v402, 1.0
  %v513 = vadd.f32 %v404, 1.0
  %v514 = vadd.f32 %v406, 1.0
  %v515 = vadd.f32 %v408, 1.0
  %v516 = vadd.f32 %v410, 1.0
  %v517 = vadd.f32 %v412, 1.0
  %v518 = vadd.f32 %v414, 1.0
  %v519 = vadd.f32 %v416, 1.0
  %v520 = vadd.f32 %v418, 1.0
  %v521 = vadd.f32 %v420, 1.0
  %v522 = vadd.f32 %v422, 1.0
  %v523 = vadd.f32 %v424, 1.0
  %v524 = vadd.f32 %v426, 1.0
  %v525 = vadd.f32 %v428, 1.0
  %v526 = vadd.f32 %v430, 1.0
  %v527 = vadd.f32 %v432, 1.0
  %v528 = vadd.f32 %v434, 1.0
  %v529 = vadd.f32 %v436, 1.0
  %v530 = vadd.f32 %v438, 1.0
  %v531 = vadd.f32 %v440, 1.0
  %v532 = vadd.f32 %v442, 1.0
  %v533 = vadd.f32 %v444, 1.0
  %v534 = vadd.f32 %v446, 1.0
  %v535 = vadd.f32 %v448, 1.0
  %v536 = vadd.f32 %v450, 1.0
  %v537 = vadd.f32 %v452, 1.0
  %v538 = vadd.f32 %v454, 1.0
  %v539 = vadd.f32 %v456, 1.0
  %v540 = vadd.f32 %v458, 1.0
  %v541 = vadd.f32 %v460, 1.0
  %v542 = vadd.f32 %v462, 1.0
  %v543 = vadd.f32 %v464, 1.0
  %v544 = vadd.f32 %v466, 1.0
  %v545 = vadd.f32 %v468, 1.0
  %v546 = vadd.f32 %v470, 1.0
  %v547 = vadd.f32 %v472, 1.0
  %v548 = vadd.f32 %v474, 1.0
  %v549 = vadd.f32 %v476, 1.0
  %v550 = vadd.f32 %v478, 1.0
  %v551 = vadd.f32 %v480, 1.0
  %v552 = vadd.f32 %v482, 1.0
  %v553 = vadd.f32 %v484, 1.0
  %v554 = vadd.f32 %v486, 1.0
  %v555 = vadd.f32 %v488, 1.0
  %v556 = vadd.f32 %v490, 1.0
  %v557 = vadd.f32 %v492, 1.0
  %v558 = vadd.f32 %v494, 1.0
  %v559 = vrcp.pop %v495
  %v560 = vmul.f32 1.0, %v559
  %v561 = vrcp.pop %v496
  %v562 = vmul.f32 1.0, %v561
  %v563 = vrcp.pop %v497
  %v564 = vmul.f32 1.0, %v563
  %v565 = vrcp.pop %v498
  %v566 = vmul.f32 1.0, %v565
  %v567 = vrcp.pop %v499
  %v568 = vmul.f32 1.0, %v567
  %v569 = vrcp.pop %v500
  %v570 = vmul.f32 1.0, %v569
  %v571 = vrcp.pop %v501
  %v572 = vmul.f32 1.0, %v571
  %v573 = vrcp.pop %v502
  %v574 = vmul.f32 1.0, %v573
  %v575 = vrcp.pop %v503
  %v576 = vmul.f32 1.0, %v575
  %v577 = vrcp.pop %v504
  %v578 = vmul.f32 1.0, %v577
  %v579 = vrcp.pop %v505
  %v580 = vmul.f32 1.0, %v579
  %v581 = vrcp.pop %v506
  %v582 = vmul.f32 1.0, %v581
  %v583 = vrcp.pop %v507
  %v584 = vmul.f32 1.0, %v583
  %v585 = vrcp.pop %v508
  %v586 = vmul.f32 1.0, %v585
  %v587 = vrcp.pop %v509
  %v588 = vmul.f32 1.0, %v587
  %v589 = vrcp.pop %v510
  %v590 = vmul.f32 1.0, %v589
  %v591 = vrcp.pop %v511
  %v592 = vmul.f32 1.0, %v591
  %v593 = vrcp.pop %v512
  %v594 = vmul.f32 1.0, %v593
  %v595 = vrcp.pop %v513
  %v596 = vmul.f32 1.0, %v595
  %v597 = vrcp.pop %v514
  %v598 = vmul.f32 1.0, %v597
  %v599 = vrcp.pop %v515
  %v600 = vmul.f32 1.0, %v599
  %v601 = vrcp.pop %v516
  %v602 = vmul.f32 1.0, %v601
  %v603 = vrcp.pop %v517
  %v604 = vmul.f32 1.0, %v603
  %v605 = vrcp.pop %v518
  %v606 = vmul.f32 1.0, %v605
  %v607 = vrcp.pop %v519
  %v608 = vmul.f32 1.0, %v607
  %v609 = vrcp.pop %v520
  %v610 = vmul.f32 1.0, %v609
  %v611 = vrcp.pop %v521
  %v612 = vmul.f32 1.0, %v611
  %v613 = vrcp.pop %v522
  %v614 = vmul.f32 1.0, %v613
  %v615 = vrcp.pop %v523
  %v616 = vmul.f32 1.0, %v615
  %v617 = vrcp.pop %v524
  %v618 = vmul.f32 1.0, %v617
  %v619 = vrcp.pop %v525
  %v620 = vmul.f32 1.0, %v619
  %v621 = vrcp.pop %v526
  %v622 = vmul.f32 1.0, %v621
  %v623 = vrcp.pop %v527
  %v624 = vmul.f32 1.0, %v623
  %v625 = vrcp.pop %v528
  %v626 = vmul.f32 1.0, %v625
  %v627 = vrcp.pop %v529
  %v628 = vmul.f32 1.0, %v627
  %v629 = vrcp.pop %v530
  %v630 = vmul.f32 1.0, %v629
  %v631 = vrcp.pop %v531
  %v632 = vmul.f32 1.0, %v631
  %v633 = vrcp.pop %v532
  %v634 = vmul.f32 1.0, %v633
  %v635 = vrcp.pop %v533
  %v636 = vmul.f32 1.0, %v635
  %v637 = vrcp.pop %v534
  %v638 = vmul.f32 1.0, %v637
  %v639 = vrcp.pop %v535
  %v640 = vmul.f32 1.0, %v639
  %v641 = vrcp.pop %v536
  %v642 = vmul.f32 1.0, %v641
  %v643 = vrcp.pop %v537
  %v644 = vmul.f32 1.0, %v643
  %v645 = vrcp.pop %v538
  %v646 = vmul.f32 1.0, %v645
  %v647 = vrcp.pop %v539
  %v648 = vmul.f32 1.0, %v647
  %v649 = vrcp.pop %v540
  %v650 = vmul.f32 1.0, %v649
  %v651 = vrcp.pop %v541
  %v652 = vmul.f32 1.0, %v651
  %v653 = vrcp.pop %v542
  %v654 = vmul.f32 1.0, %v653
  %v655 = vrcp.pop %v543
  %v656 = vmul.f32 1.0, %v655
  %v657 = vrcp.pop %v544
  %v658 = vmul.f32 1.0, %v657
  %v659 = vrcp.pop %v545
  %v660 = vmul.f32 1.0, %v659
  %v661 = vrcp.pop %v546
  %v662 = vmul.f32 1.0, %v661
  %v663 = vrcp.pop %v547
  %v664 = vmul.f32 1.0, %v663
  %v665 = vrcp.pop %v548
  %v666 = vmul.f32 1.0, %v665
  %v667 = vrcp.pop %v549
  %v668 = vmul.f32 1.0, %v667
  %v669 = vrcp.pop %v550
  %v670 = vmul.f32 1.0, %v669
  %v671 = vrcp.pop %v551
  %v672 = vmul.f32 1.0, %v671
  %v673 = vrcp.pop %v552
  %v674 = vmul.f32 1.0, %v673
  %v675 = vrcp.pop %v553
  %v676 = vmul.f32 1.0, %v675
  %v677 = vrcp.pop %v554
  %v678 = vmul.f32 1.0, %v677
  %v679 = vrcp.pop %v555
  %v680 = vmul.f32 1.0, %v679
  %v681 = vrcp.pop %v556
  %v682 = vmul.f32 1.0, %v681
  %v683 = vrcp.pop %v557
  %v684 = vmul.f32 1.0, %v683
  %v685 = vrcp.pop %v558
  %v686 = vmul.f32 1.0, %v685
  %v687 = vmul.f32 %v239, %v560
  %v688 = vmul.f32 %v240, %v562
  %v689 = vmul.f32 %v241, %v564
  %v690 = vmul.f32 %v242, %v566
  %v691 = vmul.f32 %v243, %v568
  %v692 = vmul.f32 %v244, %v570
  %v693 = vmul.f32 %v245, %v572
  %v694 = vmul.f32 %v246, %v574
  %v695 = vmul.f32 %v247, %v576
  %v696 = vmul.f32 %v248, %v578
  %v697 = vmul.f32 %v249, %v580
  %v698 = vmul.f32 %v250, %v582
  %v699 = vmul.f32 %v251, %v584
  %v700 = vmul.f32 %v252, %v586
  %v701 = vmul.f32 %v253, %v588
  %v702 = vmul.f32 %v254, %v590
  %v703 = vmul.f32 %v255, %v592
  %v704 = vmul.f32 %v256, %v594
  %v705 = vmul.f32 %v257, %v596
  %v706 = vmul.f32 %v258, %v598
  %v707 = vmul.f32 %v259, %v600
  %v708 = vmul.f32 %v260, %v602
  %v709 = vmul.f32 %v261, %v604
  %v710 = vmul.f32 %v262, %v606
  %v711 = vmul.f32 %v263, %v608
  %v712 = vmul.f32 %v264, %v610
  %v713 = vmul.f32 %v265, %v612
  %v714 = vmul.f32 %v266, %v614
  %v715 = vmul.f32 %v267, %v616
  %v716 = vmul.f32 %v268, %v618
  %v717 = vmul.f32 %v269, %v620
  %v718 = vmul.f32 %v270, %v622
  %v719 = vmul.f32 %v271, %v624
  %v720 = vmul.f32 %v272, %v626
  %v721 = vmul.f32 %v273, %v628
  %v722 = vmul.f32 %v274, %v630
  %v723 = vmul.f32 %v275, %v632
  %v724 = vmul.f32 %v276, %v634
  %v725 = vmul.f32 %v277, %v636
  %v726 = vmul.f32 %v278, %v638
  %v727 = vmul.f32 %v279, %v640
  %v728 = vmul.f32 %v280, %v642
  %v729 = vmul.f32 %v281, %v644
  %v730 = vmul.f32 %v282, %v646
  %v731 = vmul.f32 %v283, %v648
  %v732 = vmul.f32 %v284, %v650
  %v733 = vmul.f32 %v285, %v652
  %v734 = vmul.f32 %v286, %v654
  %v735 = vmul.f32 %v287, %v656
  %v736 = vmul.f32 %v288, %v658
  %v737 = vmul.f32 %v289, %v660
  %v738 = vmul.f32 %v290, %v662
  %v739 = vmul.f32 %v291, %v664
  %v740 = vmul.f32 %v292, %v666
  %v741 = vmul.f32 %v293, %v668
  %v742 = vmul.f32 %v294, %v670
  %v743 = vmul.f32 %v295, %v672
  %v744 = vmul.f32 %v296, %v674
  %v745 = vmul.f32 %v297, %v676
  %v746 = vmul.f32 %v298, %v678
  %v747 = vmul.f32 %v299, %v680
  %v748 = vmul.f32 %v300, %v682
  %v749 = vmul.f32 %v301, %v684
  %v750 = vmul.f32 %v302, %v686
  %v751 = vld [vmem:[%s1] sm:$0xf]
  %v752 = vld [vmem:[%s1 + $0x4] sm:$0xf]
  %v753 = vld [vmem:[%s1 + $0x8] sm:$0xf]
  %v754 = vld [vmem:[%s1 + $0xc] sm:$0xf]
  %v755 = vld [vmem:[%s1 + $0x10] sm:$0xf]
  %v756 = vld [vmem:[%s1 + $0x14] sm:$0xf]
  %v757 = vld [vmem:[%s1 + $0x18] sm:$0xf]
  %v758 = vld [vmem:[%s1 + $0x1c] sm:$0xf]
  %v759 = vld [vmem:[%s1 + $0x20] sm:$0xf]
  %v760 = vld [vmem:[%s1 + $0x24] sm:$0xf]
  %v761 = vld [vmem:[%s1 + $0x28] sm:$0xf]
  %v762 = vld [vmem:[%s1 + $0x2c] sm:$0xf]
  %v763 = vld [vmem:[%s1 + $0x30] sm:$0xf]
  %v764 = vld [vmem:[%s1 + $0x34] sm:$0xf]
  %v765 = vld [vmem:[%s1 + $0x38] sm:$0xf]
  %v766 = vld [vmem:[%s1 + $0x3c] sm:$0xf]
  %v767 = vld [vmem:[%s1 + $0x40] sm:$0xf]
  %v768 = vld [vmem:[%s1 + $0x44] sm:$0xf]
  %v769 = vld [vmem:[%s1 + $0x48] sm:$0xf]
  %v770 = vld [vmem:[%s1 + $0x4c] sm:$0xf]
  %v771 = vld [vmem:[%s1 + $0x50] sm:$0xf]
  %v772 = vld [vmem:[%s1 + $0x54] sm:$0xf]
  %v773 = vld [vmem:[%s1 + $0x58] sm:$0xf]
  %v774 = vld [vmem:[%s1 + $0x5c] sm:$0xf]
  %v775 = vld [vmem:[%s1 + $0x60] sm:$0xf]
  %v776 = vld [vmem:[%s1 + $0x64] sm:$0xf]
  %v777 = vld [vmem:[%s1 + $0x68] sm:$0xf]
  %v778 = vld [vmem:[%s1 + $0x6c] sm:$0xf]
  %v779 = vld [vmem:[%s1 + $0x70] sm:$0xf]
  %v780 = vld [vmem:[%s1 + $0x74] sm:$0xf]
  %v781 = vld [vmem:[%s1 + $0x78] sm:$0xf]
  %v782 = vld [vmem:[%s1 + $0x7c] sm:$0xf]
  %v783 = vld [vmem:[%s1 + $0x80] sm:$0xf]
  %v784 = vld [vmem:[%s1 + $0x84] sm:$0xf]
  %v785 = vld [vmem:[%s1 + $0x88] sm:$0xf]
  %v786 = vld [vmem:[%s1 + $0x8c] sm:$0xf]
  %v787 = vld [vmem:[%s1 + $0x90] sm:$0xf]
  %v788 = vld [vmem:[%s1 + $0x94] sm:$0xf]
  %v789 = vld [vmem:[%s1 + $0x98] sm:$0xf]
  %v790 = vld [vmem:[%s1 + $0x9c] sm:$0xf]
  %v791 = vld [vmem:[%s1 + $0xa0] sm:$0xf]
  %v792 = vld [vmem:[%s1 + $0xa4] sm:$0xf]
  %v793 = vld [vmem:[%s1 + $0xa8] sm:$0xf]
  %v794 = vld [vmem:[%s1 + $0xac] sm:$0xf]
  %v795 = vld [vmem:[%s1 + $0xb0] sm:$0xf]
  %v796 = vld [vmem:[%s1 + $0xb4] sm:$0xf]
  %v797 = vld [vmem:[%s1 + $0xb8] sm:$0xf]
  %v798 = vld [vmem:[%s1 + $0xbc] sm:$0xf]
  %v799 = vld [vmem:[%s1 + $0xc0] sm:$0xf]
  %v800 = vld [vmem:[%s1 + $0xc4] sm:$0xf]
  %v801 = vld [vmem:[%s1 + $0xc8] sm:$0xf]
  %v802 = vld [vmem:[%s1 + $0xcc] sm:$0xf]
  %v803 = vld [vmem:[%s1 + $0xd0] sm:$0xf]
  %v804 = vld [vmem:[%s1 + $0xd4] sm:$0xf]
  %v805 = vld [vmem:[%s1 + $0xd8] sm:$0xf]
  %v806 = vld [vmem:[%s1 + $0xdc] sm:$0xf]
  %v807 = vld [vmem:[%s1 + $0xe0] sm:$0xf]
  %v808 = vld [vmem:[%s1 + $0xe4] sm:$0xf]
  %v809 = vld [vmem:[%s1 + $0xe8] sm:$0xf]
  %v810 = vld [vmem:[%s1 + $0xec] sm:$0xf]
  %v811 = vld [vmem:[%s1 + $0xf0] sm:$0xf]
  %v812 = vld [vmem:[%s1 + $0xf4] sm:$0xf]
  %v813 = vld [vmem:[%s1 + $0xf8] sm:$0xf]
  %v814 = vld [vmem:[%s1 + $0xfc] sm:$0xf]
  %v815 = vunpack.c.l.bf16 %v751
  %v816 = vunpack.c.l.bf16 %v752
  %v817 = vunpack.c.l.bf16 %v753
  %v818 = vunpack.c.l.bf16 %v754
  %v819 = vunpack.c.l.bf16 %v755
  %v820 = vunpack.c.l.bf16 %v756
  %v821 = vunpack.c.l.bf16 %v757
  %v822 = vunpack.c.l.bf16 %v758
  %v823 = vunpack.c.l.bf16 %v759
  %v824 = vunpack.c.l.bf16 %v760
  %v825 = vunpack.c.l.bf16 %v761
  %v826 = vunpack.c.l.bf16 %v762
  %v827 = vunpack.c.l.bf16 %v763
  %v828 = vunpack.c.l.bf16 %v764
  %v829 = vunpack.c.l.bf16 %v765
  %v830 = vunpack.c.l.bf16 %v766
  %v831 = vunpack.c.l.bf16 %v767
  %v832 = vunpack.c.l.bf16 %v768
  %v833 = vunpack.c.l.bf16 %v769
  %v834 = vunpack.c.l.bf16 %v770
  %v835 = vunpack.c.l.bf16 %v771
  %v836 = vunpack.c.l.bf16 %v772
  %v837 = vunpack.c.l.bf16 %v773
  %v838 = vunpack.c.l.bf16 %v774
  %v839 = vunpack.c.l.bf16 %v775
  %v840 = vunpack.c.l.bf16 %v776
  %v841 = vunpack.c.l.bf16 %v777
  %v842 = vunpack.c.l.bf16 %v778
  %v843 = vunpack.c.l.bf16 %v779
  %v844 = vunpack.c.l.bf16 %v780
  %v845 = vunpack.c.l.bf16 %v781
  %v846 = vunpack.c.l.bf16 %v782
  %v847 = vunpack.c.l.bf16 %v783
  %v848 = vunpack.c.l.bf16 %v784
  %v849 = vunpack.c.l.bf16 %v785
  %v850 = vunpack.c.l.bf16 %v786
  %v851 = vunpack.c.l.bf16 %v787
  %v852 = vunpack.c.l.bf16 %v788
  %v853 = vunpack.c.l.bf16 %v789
  %v854 = vunpack.c.l.bf16 %v790
  %v855 = vunpack.c.l.bf16 %v791
  %v856 = vunpack.c.l.bf16 %v792
  %v857 = vunpack.c.l.bf16 %v793
  %v858 = vunpack.c.l.bf16 %v794
  %v859 = vunpack.c.l.bf16 %v795
  %v860 = vunpack.c.l.bf16 %v796
  %v861 = vunpack.c.l.bf16 %v797
  %v862 = vunpack.c.l.bf16 %v798
  %v863 = vunpack.c.l.bf16 %v799
  %v864 = vunpack.c.l.bf16 %v800
  %v865 = vunpack.c.l.bf16 %v801
  %v866 = vunpack.c.l.bf16 %v802
  %v867 = vunpack.c.l.bf16 %v803
  %v868 = vunpack.c.l.bf16 %v804
  %v869 = vunpack.c.l.bf16 %v805
  %v870 = vunpack.c.l.bf16 %v806
  %v871 = vunpack.c.l.bf16 %v807
  %v872 = vunpack.c.l.bf16 %v808
  %v873 = vunpack.c.l.bf16 %v809
  %v874 = vunpack.c.l.bf16 %v810
  %v875 = vunpack.c.l.bf16 %v811
  %v876 = vunpack.c.l.bf16 %v812
  %v877 = vunpack.c.l.bf16 %v813
  %v878 = vunpack.c.l.bf16 %v814
  %v879 = vld [vmem:[%s4] sm:$0x1]
  %v881 = vlaneseq
  %v882 = vshrl.u32 %v881, 7
  %v883 = vsub.s32 0, %v882
  %v884 = vrot.slane %v879, %v883
  %v886 = vmul.f32 %v815, %v884
  %v887 = vmul.f32 %v816, %v884
  %v888 = vmul.f32 %v817, %v884
  %v889 = vmul.f32 %v818, %v884
  %v890 = vmul.f32 %v819, %v884
  %v891 = vmul.f32 %v820, %v884
  %v892 = vmul.f32 %v821, %v884
  %v893 = vmul.f32 %v822, %v884
  %v894 = vmul.f32 %v823, %v884
  %v895 = vmul.f32 %v824, %v884
  %v896 = vmul.f32 %v825, %v884
  %v897 = vmul.f32 %v826, %v884
  %v898 = vmul.f32 %v827, %v884
  %v899 = vmul.f32 %v828, %v884
  %v900 = vmul.f32 %v829, %v884
  %v901 = vmul.f32 %v830, %v884
  %v902 = vmul.f32 %v831, %v884
  %v903 = vmul.f32 %v832, %v884
  %v904 = vmul.f32 %v833, %v884
  %v905 = vmul.f32 %v834, %v884
  %v906 = vmul.f32 %v835, %v884
  %v907 = vmul.f32 %v836, %v884
  %v908 = vmul.f32 %v837, %v884
  %v909 = vmul.f32 %v838, %v884
  %v910 = vmul.f32 %v839, %v884
  %v911 = vmul.f32 %v840, %v884
  %v912 = vmul.f32 %v841, %v884
  %v913 = vmul.f32 %v842, %v884
  %v914 = vmul.f32 %v843, %v884
  %v915 = vmul.f32 %v844, %v884
  %v916 = vmul.f32 %v845, %v884
  %v917 = vmul.f32 %v846, %v884
  %v918 = vmul.f32 %v847, %v884
  %v919 = vmul.f32 %v848, %v884
  %v920 = vmul.f32 %v849, %v884
  %v921 = vmul.f32 %v850, %v884
  %v922 = vmul.f32 %v851, %v884
  %v923 = vmul.f32 %v852, %v884
  %v924 = vmul.f32 %v853, %v884
  %v925 = vmul.f32 %v854, %v884
  %v926 = vmul.f32 %v855, %v884
  %v927 = vmul.f32 %v856, %v884
  %v928 = vmul.f32 %v857, %v884
  %v929 = vmul.f32 %v858, %v884
  %v930 = vmul.f32 %v859, %v884
  %v931 = vmul.f32 %v860, %v884
  %v932 = vmul.f32 %v861, %v884
  %v933 = vmul.f32 %v862, %v884
  %v934 = vmul.f32 %v863, %v884
  %v935 = vmul.f32 %v864, %v884
  %v936 = vmul.f32 %v865, %v884
  %v937 = vmul.f32 %v866, %v884
  %v938 = vmul.f32 %v867, %v884
  %v939 = vmul.f32 %v868, %v884
  %v940 = vmul.f32 %v869, %v884
  %v941 = vmul.f32 %v870, %v884
  %v942 = vmul.f32 %v871, %v884
  %v943 = vmul.f32 %v872, %v884
  %v944 = vmul.f32 %v873, %v884
  %v945 = vmul.f32 %v874, %v884
  %v946 = vmul.f32 %v875, %v884
  %v947 = vmul.f32 %v876, %v884
  %v948 = vmul.f32 %v877, %v884
  %v949 = vmul.f32 %v878, %v884
  %v950 = vld [vmem:[%s5] sm:$0x1]
  %v952 = vlaneseq
  %v953 = vshrl.u32 %v952, 7
  %v954 = vsub.s32 0, %v953
  %v955 = vrot.slane %v950, %v954
  %v957 = vadd.f32 %v886, %v955
  %v958 = vadd.f32 %v887, %v955
  %v959 = vadd.f32 %v888, %v955
  %v960 = vadd.f32 %v889, %v955
  %v961 = vadd.f32 %v890, %v955
  %v962 = vadd.f32 %v891, %v955
  %v963 = vadd.f32 %v892, %v955
  %v964 = vadd.f32 %v893, %v955
  %v965 = vadd.f32 %v894, %v955
  %v966 = vadd.f32 %v895, %v955
  %v967 = vadd.f32 %v896, %v955
  %v968 = vadd.f32 %v897, %v955
  %v969 = vadd.f32 %v898, %v955
  %v970 = vadd.f32 %v899, %v955
  %v971 = vadd.f32 %v900, %v955
  %v972 = vadd.f32 %v901, %v955
  %v973 = vadd.f32 %v902, %v955
  %v974 = vadd.f32 %v903, %v955
  %v975 = vadd.f32 %v904, %v955
  %v976 = vadd.f32 %v905, %v955
  %v977 = vadd.f32 %v906, %v955
  %v978 = vadd.f32 %v907, %v955
  %v979 = vadd.f32 %v908, %v955
  %v980 = vadd.f32 %v909, %v955
  %v981 = vadd.f32 %v910, %v955
  %v982 = vadd.f32 %v911, %v955
  %v983 = vadd.f32 %v912, %v955
  %v984 = vadd.f32 %v913, %v955
  %v985 = vadd.f32 %v914, %v955
  %v986 = vadd.f32 %v915, %v955
  %v987 = vadd.f32 %v916, %v955
  %v988 = vadd.f32 %v917, %v955
  %v989 = vadd.f32 %v918, %v955
  %v990 = vadd.f32 %v919, %v955
  %v991 = vadd.f32 %v920, %v955
  %v992 = vadd.f32 %v921, %v955
  %v993 = vadd.f32 %v922, %v955
  %v994 = vadd.f32 %v923, %v955
  %v995 = vadd.f32 %v924, %v955
  %v996 = vadd.f32 %v925, %v955
  %v997 = vadd.f32 %v926, %v955
  %v998 = vadd.f32 %v927, %v955
  %v999 = vadd.f32 %v928, %v955
  %v1000 = vadd.f32 %v929, %v955
  %v1001 = vadd.f32 %v930, %v955
  %v1002 = vadd.f32 %v931, %v955
  %v1003 = vadd.f32 %v932, %v955
  %v1004 = vadd.f32 %v933, %v955
  %v1005 = vadd.f32 %v934, %v955
  %v1006 = vadd.f32 %v935, %v955
  %v1007 = vadd.f32 %v936, %v955
  %v1008 = vadd.f32 %v937, %v955
  %v1009 = vadd.f32 %v938, %v955
  %v1010 = vadd.f32 %v939, %v955
  %v1011 = vadd.f32 %v940, %v955
  %v1012 = vadd.f32 %v941, %v955
  %v1013 = vadd.f32 %v942, %v955
  %v1014 = vadd.f32 %v943, %v955
  %v1015 = vadd.f32 %v944, %v955
  %v1016 = vadd.f32 %v945, %v955
  %v1017 = vadd.f32 %v946, %v955
  %v1018 = vadd.f32 %v947, %v955
  %v1019 = vadd.f32 %v948, %v955
  %v1020 = vadd.f32 %v949, %v955
  %v1021 = vxor.u32 %v957, 2147483648
  %v1022 = vxor.u32 %v958, 2147483648
  %v1023 = vxor.u32 %v959, 2147483648
  %v1024 = vxor.u32 %v960, 2147483648
  %v1025 = vxor.u32 %v961, 2147483648
  %v1026 = vxor.u32 %v962, 2147483648
  %v1027 = vxor.u32 %v963, 2147483648
  %v1028 = vxor.u32 %v964, 2147483648
  %v1029 = vxor.u32 %v965, 2147483648
  %v1030 = vxor.u32 %v966, 2147483648
  %v1031 = vxor.u32 %v967, 2147483648
  %v1032 = vxor.u32 %v968, 2147483648
  %v1033 = vxor.u32 %v969, 2147483648
  %v1034 = vxor.u32 %v970, 2147483648
  %v1035 = vxor.u32 %v971, 2147483648
  %v1036 = vxor.u32 %v972, 2147483648
  %v1037 = vxor.u32 %v973, 2147483648
  %v1038 = vxor.u32 %v974, 2147483648
  %v1039 = vxor.u32 %v975, 2147483648
  %v1040 = vxor.u32 %v976, 2147483648
  %v1041 = vxor.u32 %v977, 2147483648
  %v1042 = vxor.u32 %v978, 2147483648
  %v1043 = vxor.u32 %v979, 2147483648
  %v1044 = vxor.u32 %v980, 2147483648
  %v1045 = vxor.u32 %v981, 2147483648
  %v1046 = vxor.u32 %v982, 2147483648
  %v1047 = vxor.u32 %v983, 2147483648
  %v1048 = vxor.u32 %v984, 2147483648
  %v1049 = vxor.u32 %v985, 2147483648
  %v1050 = vxor.u32 %v986, 2147483648
  %v1051 = vxor.u32 %v987, 2147483648
  %v1052 = vxor.u32 %v988, 2147483648
  %v1053 = vxor.u32 %v989, 2147483648
  %v1054 = vxor.u32 %v990, 2147483648
  %v1055 = vxor.u32 %v991, 2147483648
  %v1056 = vxor.u32 %v992, 2147483648
  %v1057 = vxor.u32 %v993, 2147483648
  %v1058 = vxor.u32 %v994, 2147483648
  %v1059 = vxor.u32 %v995, 2147483648
  %v1060 = vxor.u32 %v996, 2147483648
  %v1061 = vxor.u32 %v997, 2147483648
  %v1062 = vxor.u32 %v998, 2147483648
  %v1063 = vxor.u32 %v999, 2147483648
  %v1064 = vxor.u32 %v1000, 2147483648
  %v1065 = vxor.u32 %v1001, 2147483648
  %v1066 = vxor.u32 %v1002, 2147483648
  %v1067 = vxor.u32 %v1003, 2147483648
  %v1068 = vxor.u32 %v1004, 2147483648
  %v1069 = vxor.u32 %v1005, 2147483648
  %v1070 = vxor.u32 %v1006, 2147483648
  %v1071 = vxor.u32 %v1007, 2147483648
  %v1072 = vxor.u32 %v1008, 2147483648
  %v1073 = vxor.u32 %v1009, 2147483648
  %v1074 = vxor.u32 %v1010, 2147483648
  %v1075 = vxor.u32 %v1011, 2147483648
  %v1076 = vxor.u32 %v1012, 2147483648
  %v1077 = vxor.u32 %v1013, 2147483648
  %v1078 = vxor.u32 %v1014, 2147483648
  %v1079 = vxor.u32 %v1015, 2147483648
  %v1080 = vxor.u32 %v1016, 2147483648
  %v1081 = vxor.u32 %v1017, 2147483648
  %v1082 = vxor.u32 %v1018, 2147483648
  %v1083 = vxor.u32 %v1019, 2147483648
  %v1084 = vxor.u32 %v1020, 2147483648
  %v1085 = vmul.f32 %v1021, 1.442695
  %v1086 = vpow.pop %v1085
  %v1087 = vmul.f32 %v1022, 1.442695
  %v1088 = vpow.pop %v1087
  %v1089 = vmul.f32 %v1023, 1.442695
  %v1090 = vpow.pop %v1089
  %v1091 = vmul.f32 %v1024, 1.442695
  %v1092 = vpow.pop %v1091
  %v1093 = vmul.f32 %v1025, 1.442695
  %v1094 = vpow.pop %v1093
  %v1095 = vmul.f32 %v1026, 1.442695
  %v1096 = vpow.pop %v1095
  %v1097 = vmul.f32 %v1027, 1.442695
  %v1098 = vpow.pop %v1097
  %v1099 = vmul.f32 %v1028, 1.442695
  %v1100 = vpow.pop %v1099
  %v1101 = vmul.f32 %v1029, 1.442695
  %v1102 = vpow.pop %v1101
  %v1103 = vmul.f32 %v1030, 1.442695
  %v1104 = vpow.pop %v1103
  %v1105 = vmul.f32 %v1031, 1.442695
  %v1106 = vpow.pop %v1105
  %v1107 = vmul.f32 %v1032, 1.442695
  %v1108 = vpow.pop %v1107
  %v1109 = vmul.f32 %v1033, 1.442695
  %v1110 = vpow.pop %v1109
  %v1111 = vmul.f32 %v1034, 1.442695
  %v1112 = vpow.pop %v1111
  %v1113 = vmul.f32 %v1035, 1.442695
  %v1114 = vpow.pop %v1113
  %v1115 = vmul.f32 %v1036, 1.442695
  %v1116 = vpow.pop %v1115
  %v1117 = vmul.f32 %v1037, 1.442695
  %v1118 = vpow.pop %v1117
  %v1119 = vmul.f32 %v1038, 1.442695
  %v1120 = vpow.pop %v1119
  %v1121 = vmul.f32 %v1039, 1.442695
  %v1122 = vpow.pop %v1121
  %v1123 = vmul.f32 %v1040, 1.442695
  %v1124 = vpow.pop %v1123
  %v1125 = vmul.f32 %v1041, 1.442695
  %v1126 = vpow.pop %v1125
  %v1127 = vmul.f32 %v1042, 1.442695
  %v1128 = vpow.pop %v1127
  %v1129 = vmul.f32 %v1043, 1.442695
  %v1130 = vpow.pop %v1129
  %v1131 = vmul.f32 %v1044, 1.442695
  %v1132 = vpow.pop %v1131
  %v1133 = vmul.f32 %v1045, 1.442695
  %v1134 = vpow.pop %v1133
  %v1135 = vmul.f32 %v1046, 1.442695
  %v1136 = vpow.pop %v1135
  %v1137 = vmul.f32 %v1047, 1.442695
  %v1138 = vpow.pop %v1137
  %v1139 = vmul.f32 %v1048, 1.442695
  %v1140 = vpow.pop %v1139
  %v1141 = vmul.f32 %v1049, 1.442695
  %v1142 = vpow.pop %v1141
  %v1143 = vmul.f32 %v1050, 1.442695
  %v1144 = vpow.pop %v1143
  %v1145 = vmul.f32 %v1051, 1.442695
  %v1146 = vpow.pop %v1145
  %v1147 = vmul.f32 %v1052, 1.442695
  %v1148 = vpow.pop %v1147
  %v1149 = vmul.f32 %v1053, 1.442695
  %v1150 = vpow.pop %v1149
  %v1151 = vmul.f32 %v1054, 1.442695
  %v1152 = vpow.pop %v1151
  %v1153 = vmul.f32 %v1055, 1.442695
  %v1154 = vpow.pop %v1153
  %v1155 = vmul.f32 %v1056, 1.442695
  %v1156 = vpow.pop %v1155
  %v1157 = vmul.f32 %v1057, 1.442695
  %v1158 = vpow.pop %v1157
  %v1159 = vmul.f32 %v1058, 1.442695
  %v1160 = vpow.pop %v1159
  %v1161 = vmul.f32 %v1059, 1.442695
  %v1162 = vpow.pop %v1161
  %v1163 = vmul.f32 %v1060, 1.442695
  %v1164 = vpow.pop %v1163
  %v1165 = vmul.f32 %v1061, 1.442695
  %v1166 = vpow.pop %v1165
  %v1167 = vmul.f32 %v1062, 1.442695
  %v1168 = vpow.pop %v1167
  %v1169 = vmul.f32 %v1063, 1.442695
  %v1170 = vpow.pop %v1169
  %v1171 = vmul.f32 %v1064, 1.442695
  %v1172 = vpow.pop %v1171
  %v1173 = vmul.f32 %v1065, 1.442695
  %v1174 = vpow.pop %v1173
  %v1175 = vmul.f32 %v1066, 1.442695
  %v1176 = vpow.pop %v1175
  %v1177 = vmul.f32 %v1067, 1.442695
  %v1178 = vpow.pop %v1177
  %v1179 = vmul.f32 %v1068, 1.442695
  %v1180 = vpow.pop %v1179
  %v1181 = vmul.f32 %v1069, 1.442695
  %v1182 = vpow.pop %v1181
  %v1183 = vmul.f32 %v1070, 1.442695
  %v1184 = vpow.pop %v1183
  %v1185 = vmul.f32 %v1071, 1.442695
  %v1186 = vpow.pop %v1185
  %v1187 = vmul.f32 %v1072, 1.442695
  %v1188 = vpow.pop %v1187
  %v1189 = vmul.f32 %v1073, 1.442695
  %v1190 = vpow.pop %v1189
  %v1191 = vmul.f32 %v1074, 1.442695
  %v1192 = vpow.pop %v1191
  %v1193 = vmul.f32 %v1075, 1.442695
  %v1194 = vpow.pop %v1193
  %v1195 = vmul.f32 %v1076, 1.442695
  %v1196 = vpow.pop %v1195
  %v1197 = vmul.f32 %v1077, 1.442695
  %v1198 = vpow.pop %v1197
  %v1199 = vmul.f32 %v1078, 1.442695
  %v1200 = vpow.pop %v1199
  %v1201 = vmul.f32 %v1079, 1.442695
  %v1202 = vpow.pop %v1201
  %v1203 = vmul.f32 %v1080, 1.442695
  %v1204 = vpow.pop %v1203
  %v1205 = vmul.f32 %v1081, 1.442695
  %v1206 = vpow.pop %v1205
  %v1207 = vmul.f32 %v1082, 1.442695
  %v1208 = vpow.pop %v1207
  %v1209 = vmul.f32 %v1083, 1.442695
  %v1210 = vpow.pop %v1209
  %v1211 = vmul.f32 %v1084, 1.442695
  %v1212 = vpow.pop %v1211
  %v1213 = vadd.f32 %v1086, 1.0
  %v1214 = vadd.f32 %v1088, 1.0
  %v1215 = vadd.f32 %v1090, 1.0
  %v1216 = vadd.f32 %v1092, 1.0
  %v1217 = vadd.f32 %v1094, 1.0
  %v1218 = vadd.f32 %v1096, 1.0
  %v1219 = vadd.f32 %v1098, 1.0
  %v1220 = vadd.f32 %v1100, 1.0
  %v1221 = vadd.f32 %v1102, 1.0
  %v1222 = vadd.f32 %v1104, 1.0
  %v1223 = vadd.f32 %v1106, 1.0
  %v1224 = vadd.f32 %v1108, 1.0
  %v1225 = vadd.f32 %v1110, 1.0
  %v1226 = vadd.f32 %v1112, 1.0
  %v1227 = vadd.f32 %v1114, 1.0
  %v1228 = vadd.f32 %v1116, 1.0
  %v1229 = vadd.f32 %v1118, 1.0
  %v1230 = vadd.f32 %v1120, 1.0
  %v1231 = vadd.f32 %v1122, 1.0
  %v1232 = vadd.f32 %v1124, 1.0
  %v1233 = vadd.f32 %v1126, 1.0
  %v1234 = vadd.f32 %v1128, 1.0
  %v1235 = vadd.f32 %v1130, 1.0
  %v1236 = vadd.f32 %v1132, 1.0
  %v1237 = vadd.f32 %v1134, 1.0
  %v1238 = vadd.f32 %v1136, 1.0
  %v1239 = vadd.f32 %v1138, 1.0
  %v1240 = vadd.f32 %v1140, 1.0
  %v1241 = vadd.f32 %v1142, 1.0
  %v1242 = vadd.f32 %v1144, 1.0
  %v1243 = vadd.f32 %v1146, 1.0
  %v1244 = vadd.f32 %v1148, 1.0
  %v1245 = vadd.f32 %v1150, 1.0
  %v1246 = vadd.f32 %v1152, 1.0
  %v1247 = vadd.f32 %v1154, 1.0
  %v1248 = vadd.f32 %v1156, 1.0
  %v1249 = vadd.f32 %v1158, 1.0
  %v1250 = vadd.f32 %v1160, 1.0
  %v1251 = vadd.f32 %v1162, 1.0
  %v1252 = vadd.f32 %v1164, 1.0
  %v1253 = vadd.f32 %v1166, 1.0
  %v1254 = vadd.f32 %v1168, 1.0
  %v1255 = vadd.f32 %v1170, 1.0
  %v1256 = vadd.f32 %v1172, 1.0
  %v1257 = vadd.f32 %v1174, 1.0
  %v1258 = vadd.f32 %v1176, 1.0
  %v1259 = vadd.f32 %v1178, 1.0
  %v1260 = vadd.f32 %v1180, 1.0
  %v1261 = vadd.f32 %v1182, 1.0
  %v1262 = vadd.f32 %v1184, 1.0
  %v1263 = vadd.f32 %v1186, 1.0
  %v1264 = vadd.f32 %v1188, 1.0
  %v1265 = vadd.f32 %v1190, 1.0
  %v1266 = vadd.f32 %v1192, 1.0
  %v1267 = vadd.f32 %v1194, 1.0
  %v1268 = vadd.f32 %v1196, 1.0
  %v1269 = vadd.f32 %v1198, 1.0
  %v1270 = vadd.f32 %v1200, 1.0
  %v1271 = vadd.f32 %v1202, 1.0
  %v1272 = vadd.f32 %v1204, 1.0
  %v1273 = vadd.f32 %v1206, 1.0
  %v1274 = vadd.f32 %v1208, 1.0
  %v1275 = vadd.f32 %v1210, 1.0
  %v1276 = vadd.f32 %v1212, 1.0
  %v1277 = vrcp.pop %v1213
  %v1278 = vmul.f32 1.0, %v1277
  %v1279 = vrcp.pop %v1214
  %v1280 = vmul.f32 1.0, %v1279
  %v1281 = vrcp.pop %v1215
  %v1282 = vmul.f32 1.0, %v1281
  %v1283 = vrcp.pop %v1216
  %v1284 = vmul.f32 1.0, %v1283
  %v1285 = vrcp.pop %v1217
  %v1286 = vmul.f32 1.0, %v1285
  %v1287 = vrcp.pop %v1218
  %v1288 = vmul.f32 1.0, %v1287
  %v1289 = vrcp.pop %v1219
  %v1290 = vmul.f32 1.0, %v1289
  %v1291 = vrcp.pop %v1220
  %v1292 = vmul.f32 1.0, %v1291
  %v1293 = vrcp.pop %v1221
  %v1294 = vmul.f32 1.0, %v1293
  %v1295 = vrcp.pop %v1222
  %v1296 = vmul.f32 1.0, %v1295
  %v1297 = vrcp.pop %v1223
  %v1298 = vmul.f32 1.0, %v1297
  %v1299 = vrcp.pop %v1224
  %v1300 = vmul.f32 1.0, %v1299
  %v1301 = vrcp.pop %v1225
  %v1302 = vmul.f32 1.0, %v1301
  %v1303 = vrcp.pop %v1226
  %v1304 = vmul.f32 1.0, %v1303
  %v1305 = vrcp.pop %v1227
  %v1306 = vmul.f32 1.0, %v1305
  %v1307 = vrcp.pop %v1228
  %v1308 = vmul.f32 1.0, %v1307
  %v1309 = vrcp.pop %v1229
  %v1310 = vmul.f32 1.0, %v1309
  %v1311 = vrcp.pop %v1230
  %v1312 = vmul.f32 1.0, %v1311
  %v1313 = vrcp.pop %v1231
  %v1314 = vmul.f32 1.0, %v1313
  %v1315 = vrcp.pop %v1232
  %v1316 = vmul.f32 1.0, %v1315
  %v1317 = vrcp.pop %v1233
  %v1318 = vmul.f32 1.0, %v1317
  %v1319 = vrcp.pop %v1234
  %v1320 = vmul.f32 1.0, %v1319
  %v1321 = vrcp.pop %v1235
  %v1322 = vmul.f32 1.0, %v1321
  %v1323 = vrcp.pop %v1236
  %v1324 = vmul.f32 1.0, %v1323
  %v1325 = vrcp.pop %v1237
  %v1326 = vmul.f32 1.0, %v1325
  %v1327 = vrcp.pop %v1238
  %v1328 = vmul.f32 1.0, %v1327
  %v1329 = vrcp.pop %v1239
  %v1330 = vmul.f32 1.0, %v1329
  %v1331 = vrcp.pop %v1240
  %v1332 = vmul.f32 1.0, %v1331
  %v1333 = vrcp.pop %v1241
  %v1334 = vmul.f32 1.0, %v1333
  %v1335 = vrcp.pop %v1242
  %v1336 = vmul.f32 1.0, %v1335
  %v1337 = vrcp.pop %v1243
  %v1338 = vmul.f32 1.0, %v1337
  %v1339 = vrcp.pop %v1244
  %v1340 = vmul.f32 1.0, %v1339
  %v1341 = vrcp.pop %v1245
  %v1342 = vmul.f32 1.0, %v1341
  %v1343 = vrcp.pop %v1246
  %v1344 = vmul.f32 1.0, %v1343
  %v1345 = vrcp.pop %v1247
  %v1346 = vmul.f32 1.0, %v1345
  %v1347 = vrcp.pop %v1248
  %v1348 = vmul.f32 1.0, %v1347
  %v1349 = vrcp.pop %v1249
  %v1350 = vmul.f32 1.0, %v1349
  %v1351 = vrcp.pop %v1250
  %v1352 = vmul.f32 1.0, %v1351
  %v1353 = vrcp.pop %v1251
  %v1354 = vmul.f32 1.0, %v1353
  %v1355 = vrcp.pop %v1252
  %v1356 = vmul.f32 1.0, %v1355
  %v1357 = vrcp.pop %v1253
  %v1358 = vmul.f32 1.0, %v1357
  %v1359 = vrcp.pop %v1254
  %v1360 = vmul.f32 1.0, %v1359
  %v1361 = vrcp.pop %v1255
  %v1362 = vmul.f32 1.0, %v1361
  %v1363 = vrcp.pop %v1256
  %v1364 = vmul.f32 1.0, %v1363
  %v1365 = vrcp.pop %v1257
  %v1366 = vmul.f32 1.0, %v1365
  %v1367 = vrcp.pop %v1258
  %v1368 = vmul.f32 1.0, %v1367
  %v1369 = vrcp.pop %v1259
  %v1370 = vmul.f32 1.0, %v1369
  %v1371 = vrcp.pop %v1260
  %v1372 = vmul.f32 1.0, %v1371
  %v1373 = vrcp.pop %v1261
  %v1374 = vmul.f32 1.0, %v1373
  %v1375 = vrcp.pop %v1262
  %v1376 = vmul.f32 1.0, %v1375
  %v1377 = vrcp.pop %v1263
  %v1378 = vmul.f32 1.0, %v1377
  %v1379 = vrcp.pop %v1264
  %v1380 = vmul.f32 1.0, %v1379
  %v1381 = vrcp.pop %v1265
  %v1382 = vmul.f32 1.0, %v1381
  %v1383 = vrcp.pop %v1266
  %v1384 = vmul.f32 1.0, %v1383
  %v1385 = vrcp.pop %v1267
  %v1386 = vmul.f32 1.0, %v1385
  %v1387 = vrcp.pop %v1268
  %v1388 = vmul.f32 1.0, %v1387
  %v1389 = vrcp.pop %v1269
  %v1390 = vmul.f32 1.0, %v1389
  %v1391 = vrcp.pop %v1270
  %v1392 = vmul.f32 1.0, %v1391
  %v1393 = vrcp.pop %v1271
  %v1394 = vmul.f32 1.0, %v1393
  %v1395 = vrcp.pop %v1272
  %v1396 = vmul.f32 1.0, %v1395
  %v1397 = vrcp.pop %v1273
  %v1398 = vmul.f32 1.0, %v1397
  %v1399 = vrcp.pop %v1274
  %v1400 = vmul.f32 1.0, %v1399
  %v1401 = vrcp.pop %v1275
  %v1402 = vmul.f32 1.0, %v1401
  %v1403 = vrcp.pop %v1276
  %v1404 = vmul.f32 1.0, %v1403
  %v1405 = vmul.f32 %v957, %v1278
  %v1406 = vmul.f32 %v958, %v1280
  %v1407 = vmul.f32 %v959, %v1282
  %v1408 = vmul.f32 %v960, %v1284
  %v1409 = vmul.f32 %v961, %v1286
  %v1410 = vmul.f32 %v962, %v1288
  %v1411 = vmul.f32 %v963, %v1290
  %v1412 = vmul.f32 %v964, %v1292
  %v1413 = vmul.f32 %v965, %v1294
  %v1414 = vmul.f32 %v966, %v1296
  %v1415 = vmul.f32 %v967, %v1298
  %v1416 = vmul.f32 %v968, %v1300
  %v1417 = vmul.f32 %v969, %v1302
  %v1418 = vmul.f32 %v970, %v1304
  %v1419 = vmul.f32 %v971, %v1306
  %v1420 = vmul.f32 %v972, %v1308
  %v1421 = vmul.f32 %v973, %v1310
  %v1422 = vmul.f32 %v974, %v1312
  %v1423 = vmul.f32 %v975, %v1314
  %v1424 = vmul.f32 %v976, %v1316
  %v1425 = vmul.f32 %v977, %v1318
  %v1426 = vmul.f32 %v978, %v1320
  %v1427 = vmul.f32 %v979, %v1322
  %v1428 = vmul.f32 %v980, %v1324
  %v1429 = vmul.f32 %v981, %v1326
  %v1430 = vmul.f32 %v982, %v1328
  %v1431 = vmul.f32 %v983, %v1330
  %v1432 = vmul.f32 %v984, %v1332
  %v1433 = vmul.f32 %v985, %v1334
  %v1434 = vmul.f32 %v986, %v1336
  %v1435 = vmul.f32 %v987, %v1338
  %v1436 = vmul.f32 %v988, %v1340
  %v1437 = vmul.f32 %v989, %v1342
  %v1438 = vmul.f32 %v990, %v1344
  %v1439 = vmul.f32 %v991, %v1346
  %v1440 = vmul.f32 %v992, %v1348
  %v1441 = vmul.f32 %v993, %v1350
  %v1442 = vmul.f32 %v994, %v1352
  %v1443 = vmul.f32 %v995, %v1354
  %v1444 = vmul.f32 %v996, %v1356
  %v1445 = vmul.f32 %v997, %v1358
  %v1446 = vmul.f32 %v998, %v1360
  %v1447 = vmul.f32 %v999, %v1362
  %v1448 = vmul.f32 %v1000, %v1364
  %v1449 = vmul.f32 %v1001, %v1366
  %v1450 = vmul.f32 %v1002, %v1368
  %v1451 = vmul.f32 %v1003, %v1370
  %v1452 = vmul.f32 %v1004, %v1372
  %v1453 = vmul.f32 %v1005, %v1374
  %v1454 = vmul.f32 %v1006, %v1376
  %v1455 = vmul.f32 %v1007, %v1378
  %v1456 = vmul.f32 %v1008, %v1380
  %v1457 = vmul.f32 %v1009, %v1382
  %v1458 = vmul.f32 %v1010, %v1384
  %v1459 = vmul.f32 %v1011, %v1386
  %v1460 = vmul.f32 %v1012, %v1388
  %v1461 = vmul.f32 %v1013, %v1390
  %v1462 = vmul.f32 %v1014, %v1392
  %v1463 = vmul.f32 %v1015, %v1394
  %v1464 = vmul.f32 %v1016, %v1396
  %v1465 = vmul.f32 %v1017, %v1398
  %v1466 = vmul.f32 %v1018, %v1400
  %v1467 = vmul.f32 %v1019, %v1402
  %v1468 = vmul.f32 %v1020, %v1404
  %v1469 = vpack.c.bf16 %v688, %v687
  %v1470 = vpack.c.bf16 %v690, %v689
  %v1471 = vpack.c.bf16 %v692, %v691
  %v1472 = vpack.c.bf16 %v694, %v693
  %v1473 = vpack.c.bf16 %v696, %v695
  %v1474 = vpack.c.bf16 %v698, %v697
  %v1475 = vpack.c.bf16 %v700, %v699
  %v1476 = vpack.c.bf16 %v702, %v701
  %v1477 = vpack.c.bf16 %v704, %v703
  %v1478 = vpack.c.bf16 %v706, %v705
  %v1479 = vpack.c.bf16 %v708, %v707
  %v1480 = vpack.c.bf16 %v710, %v709
  %v1481 = vpack.c.bf16 %v712, %v711
  %v1482 = vpack.c.bf16 %v714, %v713
  %v1483 = vpack.c.bf16 %v716, %v715
  %v1484 = vpack.c.bf16 %v718, %v717
  %v1485 = vpack.c.bf16 %v720, %v719
  %v1486 = vpack.c.bf16 %v722, %v721
  %v1487 = vpack.c.bf16 %v724, %v723
  %v1488 = vpack.c.bf16 %v726, %v725
  %v1489 = vpack.c.bf16 %v728, %v727
  %v1490 = vpack.c.bf16 %v730, %v729
  %v1491 = vpack.c.bf16 %v732, %v731
  %v1492 = vpack.c.bf16 %v734, %v733
  %v1493 = vpack.c.bf16 %v736, %v735
  %v1494 = vpack.c.bf16 %v738, %v737
  %v1495 = vpack.c.bf16 %v740, %v739
  %v1496 = vpack.c.bf16 %v742, %v741
  %v1497 = vpack.c.bf16 %v744, %v743
  %v1498 = vpack.c.bf16 %v746, %v745
  %v1499 = vpack.c.bf16 %v748, %v747
  %v1500 = vpack.c.bf16 %v750, %v749
  %v1501 = vld [vmem:[%s6] sm:$0x3]
  %v1502 = vpack.c.bf16 %v1406, %v1405
  %v1503 = vpack.c.bf16 %v1408, %v1407
  %v1504 = vpack.c.bf16 %v1410, %v1409
  %v1505 = vpack.c.bf16 %v1412, %v1411
  %v1506 = vpack.c.bf16 %v1414, %v1413
  %v1507 = vpack.c.bf16 %v1416, %v1415
  %v1508 = vpack.c.bf16 %v1418, %v1417
  %v1509 = vpack.c.bf16 %v1420, %v1419
  %v1510 = vpack.c.bf16 %v1422, %v1421
  %v1511 = vpack.c.bf16 %v1424, %v1423
  %v1512 = vpack.c.bf16 %v1426, %v1425
  %v1513 = vpack.c.bf16 %v1428, %v1427
  %v1514 = vpack.c.bf16 %v1430, %v1429
  %v1515 = vpack.c.bf16 %v1432, %v1431
  %v1516 = vpack.c.bf16 %v1434, %v1433
  %v1517 = vpack.c.bf16 %v1436, %v1435
  %v1518 = vpack.c.bf16 %v1438, %v1437
  %v1519 = vpack.c.bf16 %v1440, %v1439
  %v1520 = vpack.c.bf16 %v1442, %v1441
  %v1521 = vpack.c.bf16 %v1444, %v1443
  %v1522 = vpack.c.bf16 %v1446, %v1445
  %v1523 = vpack.c.bf16 %v1448, %v1447
  %v1524 = vpack.c.bf16 %v1450, %v1449
  %v1525 = vpack.c.bf16 %v1452, %v1451
  %v1526 = vpack.c.bf16 %v1454, %v1453
  %v1527 = vpack.c.bf16 %v1456, %v1455
  %v1528 = vpack.c.bf16 %v1458, %v1457
  %v1529 = vpack.c.bf16 %v1460, %v1459
  %v1530 = vpack.c.bf16 %v1462, %v1461
  %v1531 = vpack.c.bf16 %v1464, %v1463
  %v1532 = vpack.c.bf16 %v1466, %v1465
  %v1533 = vpack.c.bf16 %v1468, %v1467
  %v1534 = vld [vmem:[%s7] sm:$0x3]
  %vm1535 = vcmask 31744
  %v1537 = vsel %vm1535, %v1502, 0
  %v1540 = vsel %vm1535, %v1503, 0
  %v1543 = vsel %vm1535, %v1504, 0
  %v1546 = vsel %vm1535, %v1505, 0
  %v1549 = vsel %vm1535, %v1506, 0
  %v1552 = vsel %vm1535, %v1507, 0
  %v1555 = vsel %vm1535, %v1508, 0
  %v1558 = vsel %vm1535, %v1509, 0
  %v1561 = vsel %vm1535, %v1510, 0
  %v1564 = vsel %vm1535, %v1511, 0
  %v1567 = vsel %vm1535, %v1512, 0
  %v1570 = vsel %vm1535, %v1513, 0
  %v1573 = vsel %vm1535, %v1514, 0
  %v1576 = vsel %vm1535, %v1515, 0
  %v1579 = vsel %vm1535, %v1516, 0
  %v1582 = vsel %vm1535, %v1517, 0
  %v1585 = vsel %vm1535, %v1518, 0
  %v1588 = vsel %vm1535, %v1519, 0
  %v1591 = vsel %vm1535, %v1520, 0
  %v1594 = vsel %vm1535, %v1521, 0
  %v1597 = vsel %vm1535, %v1522, 0
  %v1600 = vsel %vm1535, %v1523, 0
  %v1603 = vsel %vm1535, %v1524, 0
  %v1606 = vsel %vm1535, %v1525, 0
  %v1609 = vsel %vm1535, %v1526, 0
  %v1612 = vsel %vm1535, %v1527, 0
  %v1615 = vsel %vm1535, %v1528, 0
  %v1618 = vsel %vm1535, %v1529, 0
  %v1621 = vsel %vm1535, %v1530, 0
  %v1624 = vsel %vm1535, %v1531, 0
  %v1627 = vsel %vm1535, %v1532, 0
  %v1630 = vsel %vm1535, %v1533, 0
  %vm1632 = vcmask 1041408
  %v1634 = vsel %vm1632, %v1534, 0
  %1636 = vmatprep.subr.bf16.mxu0 0
  %1637 = vmatpush1.bf16.msra.mxu0 %v1634
  %1638 = vmatprep.subr.bf16.mxu0 0
  %1639 = vmatpush1.bf16.msra.mxu0 0
  %1640 = vmatprep.subr.bf16.mxu0 0
  %1641 = vmatpush1.bf16.msra.mxu0 0
  %1642 = vmatprep.subr.bf16.mxu0 0
  %1643 = vmatpush1.bf16.msra.mxu0 0
  %1644 = vmatprep.subr.bf16.mxu0 0
  %1645 = vmatpush1.bf16.msra.mxu0 0
  %1646 = vmatprep.subr.bf16.mxu0 0
  %1647 = vmatpush1.bf16.msra.mxu0 0
  %1648 = vmatprep.subr.bf16.mxu0 0
  %1649 = vmatpush1.bf16.msra.mxu0 0
  %1650 = vmatprep.subr.bf16.mxu0 0
  %1651 = vmatpush1.bf16.msra.mxu0 0
  %1652 = vmatprep.subr.bf16.mxu0 0
  %1653 = vmatpush1.bf16.msra.mxu0 0
  %1654 = vmatprep.subr.bf16.mxu0 0
  %1655 = vmatpush1.bf16.msra.mxu0 0
  %1656 = vmatprep.subr.bf16.mxu0 0
  %1657 = vmatpush1.bf16.msra.mxu0 0
  %1658 = vmatprep.subr.bf16.mxu0 0
  %1659 = vmatpush1.bf16.msra.mxu0 0
  %1660 = vmatprep.subr.bf16.mxu0 0
  %1661 = vmatpush1.bf16.msra.mxu0 0
  %1662 = vmatprep.subr.bf16.mxu0 0
  %1663 = vmatpush1.bf16.msra.mxu0 0
  %1664 = vmatprep.subr.bf16.mxu0 0
  %1665 = vmatpush1.bf16.msra.mxu0 0
  %1666 = vmatprep.subr.bf16.mxu0 0
  %1667 = vmatpush1.bf16.msra.mxu0 0
  %1668 = vmatprep.mubr.bf16.mxu0 0
  %1669 = vmatmul.mubr.bf16.gmra.mrb[0].mxu0 %v1537
  %v1670 = vpop.f32.mrb[0].mxu0
  %v1671 = vadd.f32 0.0, %v1670
  %v1672 = vpop.f32.mrb[0].mxu0
  %v1673 = vpop.f32.mrb[0].mxu0
  %v1674 = vadd.f32 0.0, %v1673
  %v1675 = vpop.f32.mrb[0].mxu0
  %1676 = vmatprep.mubr.bf16.mxu0 0
  %1677 = vmatmul.mubr.bf16.gmra.mrb[0].mxu0 %v1540
  %v1678 = vpop.f32.mrb[0].mxu0
  %v1679 = vadd.f32 0.0, %v1678
  %v1680 = vpop.f32.mrb[0].mxu0
  %v1681 = vpop.f32.mrb[0].mxu0
  %v1682 = vadd.f32 0.0, %v1681
  %v1683 = vpop.f32.mrb[0].mxu0
  %1684 = vmatprep.mubr.bf16.mxu0 0
  %1685 = vmatmul.mubr.bf16.gmra.mrb[0].mxu0 %v1543
  %v1686 = vpop.f32.mrb[0].mxu0
  %v1687 = vadd.f32 0.0, %v1686
  %v1688 = vpop.f32.mrb[0].mxu0
  %v1689 = vpop.f32.mrb[0].mxu0
  %v1690 = vadd.f32 0.0, %v1689
  %v1691 = vpop.f32.mrb[0].mxu0
  %1692 = vmatprep.mubr.bf16.mxu0 0
  %1693 = vmatmul.mubr.bf16.gmra.mrb[0].mxu0 %v1546
  %v1694 = vpop.f32.mrb[0].mxu0
  %v1695 = vadd.f32 0.0, %v1694
  %v1696 = vpop.f32.mrb[0].mxu0
  %v1697 = vpop.f32.mrb[0].mxu0
  %v1698 = vadd.f32 0.0, %v1697
  %v1699 = vpop.f32.mrb[0].mxu0
  %1700 = vmatprep.mubr.bf16.mxu0 0
  %1701 = vmatmul.mubr.bf16.gmra.mrb[0].mxu0 %v1549
  %v1702 = vpop.f32.mrb[0].mxu0
  %v1703 = vadd.f32 0.0, %v1702
  %v1704 = vpop.f32.mrb[0].mxu0
  %v1705 = vpop.f32.mrb[0].mxu0
  %v1706 = vadd.f32 0.0, %v1705
  %v1707 = vpop.f32.mrb[0].mxu0
  %1708 = vmatprep.mubr.bf16.mxu0 0
  %1709 = vmatmul.mubr.bf16.gmra.mrb[0].mxu0 %v1552
  %v1710 = vpop.f32.mrb[0].mxu0
  %v1711 = vadd.f32 0.0, %v1710
  %v1712 = vpop.f32.mrb[0].mxu0
  %v1713 = vpop.f32.mrb[0].mxu0
  %v1714 = vadd.f32 0.0, %v1713
  %v1715 = vpop.f32.mrb[0].mxu0
  %1716 = vmatprep.mubr.bf16.mxu0 0
  %1717 = vmatmul.mubr.bf16.gmra.mrb[0].mxu0 %v1555
  %v1718 = vpop.f32.mrb[0].mxu0
  %v1719 = vadd.f32 0.0, %v1718
  %v1720 = vpop.f32.mrb[0].mxu0
  %v1721 = vpop.f32.mrb[0].mxu0
  %v1722 = vadd.f32 0.0, %v1721
  %v1723 = vpop.f32.mrb[0].mxu0
  %1724 = vmatprep.mubr.bf16.mxu0 0
  %1725 = vmatmul.mubr.bf16.gmra.mrb[0].mxu0 %v1558
  %v1726 = vpop.f32.mrb[0].mxu0
  %v1727 = vadd.f32 0.0, %v1726
  %v1728 = vpop.f32.mrb[0].mxu0
  %v1729 = vpop.f32.mrb[0].mxu0
  %v1730 = vadd.f32 0.0, %v1729
  %v1731 = vpop.f32.mrb[0].mxu0
  %1732 = vmatprep.mubr.bf16.mxu0 0
  %1733 = vmatmul.mubr.bf16.gmra.mrb[0].mxu0 %v1561
  %v1734 = vpop.f32.mrb[0].mxu0
  %v1735 = vadd.f32 0.0, %v1734
  %v1736 = vpop.f32.mrb[0].mxu0
  %v1737 = vpop.f32.mrb[0].mxu0
  %v1738 = vadd.f32 0.0, %v1737
  %v1739 = vpop.f32.mrb[0].mxu0
  %1740 = vmatprep.mubr.bf16.mxu0 0
  %1741 = vmatmul.mubr.bf16.gmra.mrb[0].mxu0 %v1564
  %v1742 = vpop.f32.mrb[0].mxu0
  %v1743 = vadd.f32 0.0, %v1742
  %v1744 = vpop.f32.mrb[0].mxu0
  %v1745 = vpop.f32.mrb[0].mxu0
  %v1746 = vadd.f32 0.0, %v1745
  %v1747 = vpop.f32.mrb[0].mxu0
  %1748 = vmatprep.mubr.bf16.mxu0 0
  %1749 = vmatmul.mubr.bf16.gmra.mrb[0].mxu0 %v1567
  %v1750 = vpop.f32.mrb[0].mxu0
  %v1751 = vadd.f32 0.0, %v1750
  %v1752 = vpop.f32.mrb[0].mxu0
  %v1753 = vpop.f32.mrb[0].mxu0
  %v1754 = vadd.f32 0.0, %v1753
  %v1755 = vpop.f32.mrb[0].mxu0
  %1756 = vmatprep.mubr.bf16.mxu0 0
  %1757 = vmatmul.mubr.bf16.gmra.mrb[0].mxu0 %v1570
  %v1758 = vpop.f32.mrb[0].mxu0
  %v1759 = vadd.f32 0.0, %v1758
  %v1760 = vpop.f32.mrb[0].mxu0
  %v1761 = vpop.f32.mrb[0].mxu0
  %v1762 = vadd.f32 0.0, %v1761
  %v1763 = vpop.f32.mrb[0].mxu0
  %1764 = vmatprep.mubr.bf16.mxu0 0
  %1765 = vmatmul.mubr.bf16.gmra.mrb[0].mxu0 %v1573
  %v1766 = vpop.f32.mrb[0].mxu0
  %v1767 = vadd.f32 0.0, %v1766
  %v1768 = vpop.f32.mrb[0].mxu0
  %v1769 = vpop.f32.mrb[0].mxu0
  %v1770 = vadd.f32 0.0, %v1769
  %v1771 = vpop.f32.mrb[0].mxu0
  %1772 = vmatprep.mubr.bf16.mxu0 0
  %1773 = vmatmul.mubr.bf16.gmra.mrb[0].mxu0 %v1576
  %v1774 = vpop.f32.mrb[0].mxu0
  %v1775 = vadd.f32 0.0, %v1774
  %v1776 = vpop.f32.mrb[0].mxu0
  %v1777 = vpop.f32.mrb[0].mxu0
  %v1778 = vadd.f32 0.0, %v1777
  %v1779 = vpop.f32.mrb[0].mxu0
  %1780 = vmatprep.mubr.bf16.mxu0 0
  %1781 = vmatmul.mubr.bf16.gmra.mrb[0].mxu0 %v1579
  %v1782 = vpop.f32.mrb[0].mxu0
  %v1783 = vadd.f32 0.0, %v1782
  %v1784 = vpop.f32.mrb[0].mxu0
  %v1785 = vpop.f32.mrb[0].mxu0
  %v1786 = vadd.f32 0.0, %v1785
  %v1787 = vpop.f32.mrb[0].mxu0
  %1788 = vmatprep.mubr.bf16.mxu0 0
  %1789 = vmatmul.mubr.bf16.gmra.mrb[0].mxu0 %v1582
  %v1790 = vpop.f32.mrb[0].mxu0
  %v1791 = vadd.f32 0.0, %v1790
  %v1792 = vpop.f32.mrb[0].mxu0
  %v1793 = vpop.f32.mrb[0].mxu0
  %v1794 = vadd.f32 0.0, %v1793
  %v1795 = vpop.f32.mrb[0].mxu0
  %1796 = vmatprep.mubr.bf16.mxu0 0
  %1797 = vmatmul.mubr.bf16.gmra.mrb[0].mxu0 %v1585
  %v1798 = vpop.f32.mrb[0].mxu0
  %v1799 = vadd.f32 0.0, %v1798
  %v1800 = vpop.f32.mrb[0].mxu0
  %v1801 = vpop.f32.mrb[0].mxu0
  %v1802 = vadd.f32 0.0, %v1801
  %v1803 = vpop.f32.mrb[0].mxu0
  %1804 = vmatprep.mubr.bf16.mxu0 0
  %1805 = vmatmul.mubr.bf16.gmra.mrb[0].mxu0 %v1588
  %v1806 = vpop.f32.mrb[0].mxu0
  %v1807 = vadd.f32 0.0, %v1806
  %v1808 = vpop.f32.mrb[0].mxu0
  %v1809 = vpop.f32.mrb[0].mxu0
  %v1810 = vadd.f32 0.0, %v1809
  %v1811 = vpop.f32.mrb[0].mxu0
  %1812 = vmatprep.mubr.bf16.mxu0 0
  %1813 = vmatmul.mubr.bf16.gmra.mrb[0].mxu0 %v1591
  %v1814 = vpop.f32.mrb[0].mxu0
  %v1815 = vadd.f32 0.0, %v1814
  %v1816 = vpop.f32.mrb[0].mxu0
  %v1817 = vpop.f32.mrb[0].mxu0
  %v1818 = vadd.f32 0.0, %v1817
  %v1819 = vpop.f32.mrb[0].mxu0
  %1820 = vmatprep.mubr.bf16.mxu0 0
  %1821 = vmatmul.mubr.bf16.gmra.mrb[0].mxu0 %v1594
  %v1822 = vpop.f32.mrb[0].mxu0
  %v1823 = vadd.f32 0.0, %v1822
  %v1824 = vpop.f32.mrb[0].mxu0
  %v1825 = vpop.f32.mrb[0].mxu0
  %v1826 = vadd.f32 0.0, %v1825
  %v1827 = vpop.f32.mrb[0].mxu0
  %1828 = vmatprep.mubr.bf16.mxu0 0
  %1829 = vmatmul.mubr.bf16.gmra.mrb[0].mxu0 %v1597
  %v1830 = vpop.f32.mrb[0].mxu0
  %v1831 = vadd.f32 0.0, %v1830
  %v1832 = vpop.f32.mrb[0].mxu0
  %v1833 = vpop.f32.mrb[0].mxu0
  %v1834 = vadd.f32 0.0, %v1833
  %v1835 = vpop.f32.mrb[0].mxu0
  %1836 = vmatprep.mubr.bf16.mxu0 0
  %1837 = vmatmul.mubr.bf16.gmra.mrb[0].mxu0 %v1600
  %v1838 = vpop.f32.mrb[0].mxu0
  %v1839 = vadd.f32 0.0, %v1838
  %v1840 = vpop.f32.mrb[0].mxu0
  %v1841 = vpop.f32.mrb[0].mxu0
  %v1842 = vadd.f32 0.0, %v1841
  %v1843 = vpop.f32.mrb[0].mxu0
  %1844 = vmatprep.mubr.bf16.mxu0 0
  %1845 = vmatmul.mubr.bf16.gmra.mrb[0].mxu0 %v1603
  %v1846 = vpop.f32.mrb[0].mxu0
  %v1847 = vadd.f32 0.0, %v1846
  %v1848 = vpop.f32.mrb[0].mxu0
  %v1849 = vpop.f32.mrb[0].mxu0
  %v1850 = vadd.f32 0.0, %v1849
  %v1851 = vpop.f32.mrb[0].mxu0
  %1852 = vmatprep.mubr.bf16.mxu0 0
  %1853 = vmatmul.mubr.bf16.gmra.mrb[0].mxu0 %v1606
  %v1854 = vpop.f32.mrb[0].mxu0
  %v1855 = vadd.f32 0.0, %v1854
  %v1856 = vpop.f32.mrb[0].mxu0
  %v1857 = vpop.f32.mrb[0].mxu0
  %v1858 = vadd.f32 0.0, %v1857
  %v1859 = vpop.f32.mrb[0].mxu0
  %1860 = vmatprep.mubr.bf16.mxu0 0
  %1861 = vmatmul.mubr.bf16.gmra.mrb[0].mxu0 %v1609
  %v1862 = vpop.f32.mrb[0].mxu0
  %v1863 = vadd.f32 0.0, %v1862
  %v1864 = vpop.f32.mrb[0].mxu0
  %v1865 = vpop.f32.mrb[0].mxu0
  %v1866 = vadd.f32 0.0, %v1865
  %v1867 = vpop.f32.mrb[0].mxu0
  %1868 = vmatprep.mubr.bf16.mxu0 0
  %1869 = vmatmul.mubr.bf16.gmra.mrb[0].mxu0 %v1612
  %v1870 = vpop.f32.mrb[0].mxu0
  %v1871 = vadd.f32 0.0, %v1870
  %v1872 = vpop.f32.mrb[0].mxu0
  %v1873 = vpop.f32.mrb[0].mxu0
  %v1874 = vadd.f32 0.0, %v1873
  %v1875 = vpop.f32.mrb[0].mxu0
  %1876 = vmatprep.mubr.bf16.mxu0 0
  %1877 = vmatmul.mubr.bf16.gmra.mrb[0].mxu0 %v1615
  %v1878 = vpop.f32.mrb[0].mxu0
  %v1879 = vadd.f32 0.0, %v1878
  %v1880 = vpop.f32.mrb[0].mxu0
  %v1881 = vpop.f32.mrb[0].mxu0
  %v1882 = vadd.f32 0.0, %v1881
  %v1883 = vpop.f32.mrb[0].mxu0
  %1884 = vmatprep.mubr.bf16.mxu0 0
  %1885 = vmatmul.mubr.bf16.gmra.mrb[0].mxu0 %v1618
  %v1886 = vpop.f32.mrb[0].mxu0
  %v1887 = vadd.f32 0.0, %v1886
  %v1888 = vpop.f32.mrb[0].mxu0
  %v1889 = vpop.f32.mrb[0].mxu0
  %v1890 = vadd.f32 0.0, %v1889
  %v1891 = vpop.f32.mrb[0].mxu0
  %1892 = vmatprep.mubr.bf16.mxu0 0
  %1893 = vmatmul.mubr.bf16.gmra.mrb[0].mxu0 %v1621
  %v1894 = vpop.f32.mrb[0].mxu0
  %v1895 = vadd.f32 0.0, %v1894
  %v1896 = vpop.f32.mrb[0].mxu0
  %v1897 = vpop.f32.mrb[0].mxu0
  %v1898 = vadd.f32 0.0, %v1897
  %v1899 = vpop.f32.mrb[0].mxu0
  %1900 = vmatprep.mubr.bf16.mxu0 0
  %1901 = vmatmul.mubr.bf16.gmra.mrb[0].mxu0 %v1624
  %v1902 = vpop.f32.mrb[0].mxu0
  %v1903 = vadd.f32 0.0, %v1902
  %v1904 = vpop.f32.mrb[0].mxu0
  %v1905 = vpop.f32.mrb[0].mxu0
  %v1906 = vadd.f32 0.0, %v1905
  %v1907 = vpop.f32.mrb[0].mxu0
  %1908 = vmatprep.mubr.bf16.mxu0 0
  %1909 = vmatmul.mubr.bf16.gmra.mrb[0].mxu0 %v1627
  %v1910 = vpop.f32.mrb[0].mxu0
  %v1911 = vadd.f32 0.0, %v1910
  %v1912 = vpop.f32.mrb[0].mxu0
  %v1913 = vpop.f32.mrb[0].mxu0
  %v1914 = vadd.f32 0.0, %v1913
  %v1915 = vpop.f32.mrb[0].mxu0
  %1916 = vmatprep.mubr.bf16.mxu0 0
  %1917 = vmatmul.mubr.bf16.gmra.mrb[0].mxu0 %v1630
  %v1918 = vpop.f32.mrb[0].mxu0
  %v1919 = vadd.f32 0.0, %v1918
  %v1920 = vpop.f32.mrb[0].mxu0
  %v1921 = vpop.f32.mrb[0].mxu0
  %v1922 = vadd.f32 0.0, %v1921
  %v1923 = vpop.f32.mrb[0].mxu0
  %1924 = vdwg.mxu0
  %v1926 = vsel %vm1535, %v1469, 0
  %v1929 = vsel %vm1535, %v1470, 0
  %v1932 = vsel %vm1535, %v1471, 0
  %v1935 = vsel %vm1535, %v1472, 0
  %v1938 = vsel %vm1535, %v1473, 0
  %v1941 = vsel %vm1535, %v1474, 0
  %v1944 = vsel %vm1535, %v1475, 0
  %v1947 = vsel %vm1535, %v1476, 0
  %v1950 = vsel %vm1535, %v1477, 0
  %v1953 = vsel %vm1535, %v1478, 0
  %v1956 = vsel %vm1535, %v1479, 0
  %v1959 = vsel %vm1535, %v1480, 0
  %v1962 = vsel %vm1535, %v1481, 0
  %v1965 = vsel %vm1535, %v1482, 0
  %v1968 = vsel %vm1535, %v1483, 0
  %v1971 = vsel %vm1535, %v1484, 0
  %v1974 = vsel %vm1535, %v1485, 0
  %v1977 = vsel %vm1535, %v1486, 0
  %v1980 = vsel %vm1535, %v1487, 0
  %v1983 = vsel %vm1535, %v1488, 0
  %v1986 = vsel %vm1535, %v1489, 0
  %v1989 = vsel %vm1535, %v1490, 0
  %v1992 = vsel %vm1535, %v1491, 0
  %v1995 = vsel %vm1535, %v1492, 0
  %v1998 = vsel %vm1535, %v1493, 0
  %v2001 = vsel %vm1535, %v1494, 0
  %v2004 = vsel %vm1535, %v1495, 0
  %v2007 = vsel %vm1535, %v1496, 0
  %v2010 = vsel %vm1535, %v1497, 0
  %v2013 = vsel %vm1535, %v1498, 0
  %v2016 = vsel %vm1535, %v1499, 0
  %v2019 = vsel %vm1535, %v1500, 0
  %v2022 = vsel %vm1632, %v1501, 0
  %2024 = vmatprep.subr.bf16.mxu0 0
  %2025 = vmatpush1.bf16.msra.mxu0 %v2022
  %2026 = vmatprep.subr.bf16.mxu0 0
  %2027 = vmatpush1.bf16.msra.mxu0 0
  %2028 = vmatprep.subr.bf16.mxu0 0
  %2029 = vmatpush1.bf16.msra.mxu0 0
  %2030 = vmatprep.subr.bf16.mxu0 0
  %2031 = vmatpush1.bf16.msra.mxu0 0
  %2032 = vmatprep.subr.bf16.mxu0 0
  %2033 = vmatpush1.bf16.msra.mxu0 0
  %2034 = vmatprep.subr.bf16.mxu0 0
  %2035 = vmatpush1.bf16.msra.mxu0 0
  %2036 = vmatprep.subr.bf16.mxu0 0
  %2037 = vmatpush1.bf16.msra.mxu0 0
  %2038 = vmatprep.subr.bf16.mxu0 0
  %2039 = vmatpush1.bf16.msra.mxu0 0
  %2040 = vmatprep.subr.bf16.mxu0 0
  %2041 = vmatpush1.bf16.msra.mxu0 0
  %2042 = vmatprep.subr.bf16.mxu0 0
  %2043 = vmatpush1.bf16.msra.mxu0 0
  %2044 = vmatprep.subr.bf16.mxu0 0
  %2045 = vmatpush1.bf16.msra.mxu0 0
  %2046 = vmatprep.subr.bf16.mxu0 0
  %2047 = vmatpush1.bf16.msra.mxu0 0
  %2048 = vmatprep.subr.bf16.mxu0 0
  %2049 = vmatpush1.bf16.msra.mxu0 0
  %2050 = vmatprep.subr.bf16.mxu0 0
  %2051 = vmatpush1.bf16.msra.mxu0 0
  %2052 = vmatprep.subr.bf16.mxu0 0
  %2053 = vmatpush1.bf16.msra.mxu0 0
  %2054 = vmatprep.subr.bf16.mxu0 0
  %2055 = vmatpush1.bf16.msra.mxu0 0
  %2056 = vmatprep.mubr.bf16.mxu0 0
  %2057 = vmatmul.mubr.bf16.gmra.mrb[0].mxu0 %v1926
  %v2058 = vpop.f32.mrb[0].mxu0
  %v2059 = vadd.f32 %v1671, %v2058
  %v2060 = vpop.f32.mrb[0].mxu0
  %v2061 = vpop.f32.mrb[0].mxu0
  %v2062 = vadd.f32 %v1674, %v2061
  %v2063 = vpop.f32.mrb[0].mxu0
  %2064 = vmatprep.mubr.bf16.mxu0 0
  %2065 = vmatmul.mubr.bf16.gmra.mrb[0].mxu0 %v1929
  %v2066 = vpop.f32.mrb[0].mxu0
  %v2067 = vadd.f32 %v1679, %v2066
  %v2068 = vpop.f32.mrb[0].mxu0
  %v2069 = vpop.f32.mrb[0].mxu0
  %v2070 = vadd.f32 %v1682, %v2069
  %v2071 = vpop.f32.mrb[0].mxu0
  %2072 = vmatprep.mubr.bf16.mxu0 0
  %2073 = vmatmul.mubr.bf16.gmra.mrb[0].mxu0 %v1932
  %v2074 = vpop.f32.mrb[0].mxu0
  %v2075 = vadd.f32 %v1687, %v2074
  %v2076 = vpop.f32.mrb[0].mxu0
  %v2077 = vpop.f32.mrb[0].mxu0
  %v2078 = vadd.f32 %v1690, %v2077
  %v2079 = vpop.f32.mrb[0].mxu0
  %2080 = vmatprep.mubr.bf16.mxu0 0
  %2081 = vmatmul.mubr.bf16.gmra.mrb[0].mxu0 %v1935
  %v2082 = vpop.f32.mrb[0].mxu0
  %v2083 = vadd.f32 %v1695, %v2082
  %v2084 = vpop.f32.mrb[0].mxu0
  %v2085 = vpop.f32.mrb[0].mxu0
  %v2086 = vadd.f32 %v1698, %v2085
  %v2087 = vpop.f32.mrb[0].mxu0
  %2088 = vmatprep.mubr.bf16.mxu0 0
  %2089 = vmatmul.mubr.bf16.gmra.mrb[0].mxu0 %v1938
  %v2090 = vpop.f32.mrb[0].mxu0
  %v2091 = vadd.f32 %v1703, %v2090
  %v2092 = vpop.f32.mrb[0].mxu0
  %v2093 = vpop.f32.mrb[0].mxu0
  %v2094 = vadd.f32 %v1706, %v2093
  %v2095 = vpop.f32.mrb[0].mxu0
  %2096 = vmatprep.mubr.bf16.mxu0 0
  %2097 = vmatmul.mubr.bf16.gmra.mrb[0].mxu0 %v1941
  %v2098 = vpop.f32.mrb[0].mxu0
  %v2099 = vadd.f32 %v1711, %v2098
  %v2100 = vpop.f32.mrb[0].mxu0
  %v2101 = vpop.f32.mrb[0].mxu0
  %v2102 = vadd.f32 %v1714, %v2101
  %v2103 = vpop.f32.mrb[0].mxu0
  %2104 = vmatprep.mubr.bf16.mxu0 0
  %2105 = vmatmul.mubr.bf16.gmra.mrb[0].mxu0 %v1944
  %v2106 = vpop.f32.mrb[0].mxu0
  %v2107 = vadd.f32 %v1719, %v2106
  %v2108 = vpop.f32.mrb[0].mxu0
  %v2109 = vpop.f32.mrb[0].mxu0
  %v2110 = vadd.f32 %v1722, %v2109
  %v2111 = vpop.f32.mrb[0].mxu0
  %2112 = vmatprep.mubr.bf16.mxu0 0
  %2113 = vmatmul.mubr.bf16.gmra.mrb[0].mxu0 %v1947
  %v2114 = vpop.f32.mrb[0].mxu0
  %v2115 = vadd.f32 %v1727, %v2114
  %v2116 = vpop.f32.mrb[0].mxu0
  %v2117 = vpop.f32.mrb[0].mxu0
  %v2118 = vadd.f32 %v1730, %v2117
  %v2119 = vpop.f32.mrb[0].mxu0
  %2120 = vmatprep.mubr.bf16.mxu0 0
  %2121 = vmatmul.mubr.bf16.gmra.mrb[0].mxu0 %v1950
  %v2122 = vpop.f32.mrb[0].mxu0
  %v2123 = vadd.f32 %v1735, %v2122
  %v2124 = vpop.f32.mrb[0].mxu0
  %v2125 = vpop.f32.mrb[0].mxu0
  %v2126 = vadd.f32 %v1738, %v2125
  %v2127 = vpop.f32.mrb[0].mxu0
  %2128 = vmatprep.mubr.bf16.mxu0 0
  %2129 = vmatmul.mubr.bf16.gmra.mrb[0].mxu0 %v1953
  %v2130 = vpop.f32.mrb[0].mxu0
  %v2131 = vadd.f32 %v1743, %v2130
  %v2132 = vpop.f32.mrb[0].mxu0
  %v2133 = vpop.f32.mrb[0].mxu0
  %v2134 = vadd.f32 %v1746, %v2133
  %v2135 = vpop.f32.mrb[0].mxu0
  %2136 = vmatprep.mubr.bf16.mxu0 0
  %2137 = vmatmul.mubr.bf16.gmra.mrb[0].mxu0 %v1956
  %v2138 = vpop.f32.mrb[0].mxu0
  %v2139 = vadd.f32 %v1751, %v2138
  %v2140 = vpop.f32.mrb[0].mxu0
  %v2141 = vpop.f32.mrb[0].mxu0
  %v2142 = vadd.f32 %v1754, %v2141
  %v2143 = vpop.f32.mrb[0].mxu0
  %2144 = vmatprep.mubr.bf16.mxu0 0
  %2145 = vmatmul.mubr.bf16.gmra.mrb[0].mxu0 %v1959
  %v2146 = vpop.f32.mrb[0].mxu0
  %v2147 = vadd.f32 %v1759, %v2146
  %v2148 = vpop.f32.mrb[0].mxu0
  %v2149 = vpop.f32.mrb[0].mxu0
  %v2150 = vadd.f32 %v1762, %v2149
  %v2151 = vpop.f32.mrb[0].mxu0
  %2152 = vmatprep.mubr.bf16.mxu0 0
  %2153 = vmatmul.mubr.bf16.gmra.mrb[0].mxu0 %v1962
  %v2154 = vpop.f32.mrb[0].mxu0
  %v2155 = vadd.f32 %v1767, %v2154
  %v2156 = vpop.f32.mrb[0].mxu0
  %v2157 = vpop.f32.mrb[0].mxu0
  %v2158 = vadd.f32 %v1770, %v2157
  %v2159 = vpop.f32.mrb[0].mxu0
  %2160 = vmatprep.mubr.bf16.mxu0 0
  %2161 = vmatmul.mubr.bf16.gmra.mrb[0].mxu0 %v1965
  %v2162 = vpop.f32.mrb[0].mxu0
  %v2163 = vadd.f32 %v1775, %v2162
  %v2164 = vpop.f32.mrb[0].mxu0
  %v2165 = vpop.f32.mrb[0].mxu0
  %v2166 = vadd.f32 %v1778, %v2165
  %v2167 = vpop.f32.mrb[0].mxu0
  %2168 = vmatprep.mubr.bf16.mxu0 0
  %2169 = vmatmul.mubr.bf16.gmra.mrb[0].mxu0 %v1968
  %v2170 = vpop.f32.mrb[0].mxu0
  %v2171 = vadd.f32 %v1783, %v2170
  %v2172 = vpop.f32.mrb[0].mxu0
  %v2173 = vpop.f32.mrb[0].mxu0
  %v2174 = vadd.f32 %v1786, %v2173
  %v2175 = vpop.f32.mrb[0].mxu0
  %2176 = vmatprep.mubr.bf16.mxu0 0
  %2177 = vmatmul.mubr.bf16.gmra.mrb[0].mxu0 %v1971
  %v2178 = vpop.f32.mrb[0].mxu0
  %v2179 = vadd.f32 %v1791, %v2178
  %v2180 = vpop.f32.mrb[0].mxu0
  %v2181 = vpop.f32.mrb[0].mxu0
  %v2182 = vadd.f32 %v1794, %v2181
  %v2183 = vpop.f32.mrb[0].mxu0
  %2184 = vmatprep.mubr.bf16.mxu0 0
  %2185 = vmatmul.mubr.bf16.gmra.mrb[0].mxu0 %v1974
  %v2186 = vpop.f32.mrb[0].mxu0
  %v2187 = vadd.f32 %v1799, %v2186
  %v2188 = vpop.f32.mrb[0].mxu0
  %v2189 = vpop.f32.mrb[0].mxu0
  %v2190 = vadd.f32 %v1802, %v2189
  %v2191 = vpop.f32.mrb[0].mxu0
  %2192 = vmatprep.mubr.bf16.mxu0 0
  %2193 = vmatmul.mubr.bf16.gmra.mrb[0].mxu0 %v1977
  %v2194 = vpop.f32.mrb[0].mxu0
  %v2195 = vadd.f32 %v1807, %v2194
  %v2196 = vpop.f32.mrb[0].mxu0
  %v2197 = vpop.f32.mrb[0].mxu0
  %v2198 = vadd.f32 %v1810, %v2197
  %v2199 = vpop.f32.mrb[0].mxu0
  %2200 = vmatprep.mubr.bf16.mxu0 0
  %2201 = vmatmul.mubr.bf16.gmra.mrb[0].mxu0 %v1980
  %v2202 = vpop.f32.mrb[0].mxu0
  %v2203 = vadd.f32 %v1815, %v2202
  %v2204 = vpop.f32.mrb[0].mxu0
  %v2205 = vpop.f32.mrb[0].mxu0
  %v2206 = vadd.f32 %v1818, %v2205
  %v2207 = vpop.f32.mrb[0].mxu0
  %2208 = vmatprep.mubr.bf16.mxu0 0
  %2209 = vmatmul.mubr.bf16.gmra.mrb[0].mxu0 %v1983
  %v2210 = vpop.f32.mrb[0].mxu0
  %v2211 = vadd.f32 %v1823, %v2210
  %v2212 = vpop.f32.mrb[0].mxu0
  %v2213 = vpop.f32.mrb[0].mxu0
  %v2214 = vadd.f32 %v1826, %v2213
  %v2215 = vpop.f32.mrb[0].mxu0
  %2216 = vmatprep.mubr.bf16.mxu0 0
  %2217 = vmatmul.mubr.bf16.gmra.mrb[0].mxu0 %v1986
  %v2218 = vpop.f32.mrb[0].mxu0
  %v2219 = vadd.f32 %v1831, %v2218
  %v2220 = vpop.f32.mrb[0].mxu0
  %v2221 = vpop.f32.mrb[0].mxu0
  %v2222 = vadd.f32 %v1834, %v2221
  %v2223 = vpop.f32.mrb[0].mxu0
  %2224 = vmatprep.mubr.bf16.mxu0 0
  %2225 = vmatmul.mubr.bf16.gmra.mrb[0].mxu0 %v1989
  %v2226 = vpop.f32.mrb[0].mxu0
  %v2227 = vadd.f32 %v1839, %v2226
  %v2228 = vpop.f32.mrb[0].mxu0
  %v2229 = vpop.f32.mrb[0].mxu0
  %v2230 = vadd.f32 %v1842, %v2229
  %v2231 = vpop.f32.mrb[0].mxu0
  %2232 = vmatprep.mubr.bf16.mxu0 0
  %2233 = vmatmul.mubr.bf16.gmra.mrb[0].mxu0 %v1992
  %v2234 = vpop.f32.mrb[0].mxu0
  %v2235 = vadd.f32 %v1847, %v2234
  %v2236 = vpop.f32.mrb[0].mxu0
  %v2237 = vpop.f32.mrb[0].mxu0
  %v2238 = vadd.f32 %v1850, %v2237
  %v2239 = vpop.f32.mrb[0].mxu0
  %2240 = vmatprep.mubr.bf16.mxu0 0
  %2241 = vmatmul.mubr.bf16.gmra.mrb[0].mxu0 %v1995
  %v2242 = vpop.f32.mrb[0].mxu0
  %v2243 = vadd.f32 %v1855, %v2242
  %v2244 = vpop.f32.mrb[0].mxu0
  %v2245 = vpop.f32.mrb[0].mxu0
  %v2246 = vadd.f32 %v1858, %v2245
  %v2247 = vpop.f32.mrb[0].mxu0
  %2248 = vmatprep.mubr.bf16.mxu0 0
  %2249 = vmatmul.mubr.bf16.gmra.mrb[0].mxu0 %v1998
  %v2250 = vpop.f32.mrb[0].mxu0
  %v2251 = vadd.f32 %v1863, %v2250
  %v2252 = vpop.f32.mrb[0].mxu0
  %v2253 = vpop.f32.mrb[0].mxu0
  %v2254 = vadd.f32 %v1866, %v2253
  %v2255 = vpop.f32.mrb[0].mxu0
  %2256 = vmatprep.mubr.bf16.mxu0 0
  %2257 = vmatmul.mubr.bf16.gmra.mrb[0].mxu0 %v2001
  %v2258 = vpop.f32.mrb[0].mxu0
  %v2259 = vadd.f32 %v1871, %v2258
  %v2260 = vpop.f32.mrb[0].mxu0
  %v2261 = vpop.f32.mrb[0].mxu0
  %v2262 = vadd.f32 %v1874, %v2261
  %v2263 = vpop.f32.mrb[0].mxu0
  %2264 = vmatprep.mubr.bf16.mxu0 0
  %2265 = vmatmul.mubr.bf16.gmra.mrb[0].mxu0 %v2004
  %v2266 = vpop.f32.mrb[0].mxu0
  %v2267 = vadd.f32 %v1879, %v2266
  %v2268 = vpop.f32.mrb[0].mxu0
  %v2269 = vpop.f32.mrb[0].mxu0
  %v2270 = vadd.f32 %v1882, %v2269
  %v2271 = vpop.f32.mrb[0].mxu0
  %2272 = vmatprep.mubr.bf16.mxu0 0
  %2273 = vmatmul.mubr.bf16.gmra.mrb[0].mxu0 %v2007
  %v2274 = vpop.f32.mrb[0].mxu0
  %v2275 = vadd.f32 %v1887, %v2274
  %v2276 = vpop.f32.mrb[0].mxu0
  %v2277 = vpop.f32.mrb[0].mxu0
  %v2278 = vadd.f32 %v1890, %v2277
  %v2279 = vpop.f32.mrb[0].mxu0
  %2280 = vmatprep.mubr.bf16.mxu0 0
  %2281 = vmatmul.mubr.bf16.gmra.mrb[0].mxu0 %v2010
  %v2282 = vpop.f32.mrb[0].mxu0
  %v2283 = vadd.f32 %v1895, %v2282
  %v2284 = vpop.f32.mrb[0].mxu0
  %v2285 = vpop.f32.mrb[0].mxu0
  %v2286 = vadd.f32 %v1898, %v2285
  %v2287 = vpop.f32.mrb[0].mxu0
  %2288 = vmatprep.mubr.bf16.mxu0 0
  %2289 = vmatmul.mubr.bf16.gmra.mrb[0].mxu0 %v2013
  %v2290 = vpop.f32.mrb[0].mxu0
  %v2291 = vadd.f32 %v1903, %v2290
  %v2292 = vpop.f32.mrb[0].mxu0
  %v2293 = vpop.f32.mrb[0].mxu0
  %v2294 = vadd.f32 %v1906, %v2293
  %v2295 = vpop.f32.mrb[0].mxu0
  %2296 = vmatprep.mubr.bf16.mxu0 0
  %2297 = vmatmul.mubr.bf16.gmra.mrb[0].mxu0 %v2016
  %v2298 = vpop.f32.mrb[0].mxu0
  %v2299 = vadd.f32 %v1911, %v2298
  %v2300 = vpop.f32.mrb[0].mxu0
  %v2301 = vpop.f32.mrb[0].mxu0
  %v2302 = vadd.f32 %v1914, %v2301
  %v2303 = vpop.f32.mrb[0].mxu0
  %2304 = vmatprep.mubr.bf16.mxu0 0
  %2305 = vmatmul.mubr.bf16.gmra.mrb[0].mxu0 %v2019
  %v2306 = vpop.f32.mrb[0].mxu0
  %v2307 = vadd.f32 %v1919, %v2306
  %v2308 = vpop.f32.mrb[0].mxu0
  %v2309 = vpop.f32.mrb[0].mxu0
  %v2310 = vadd.f32 %v1922, %v2309
  %v2311 = vpop.f32.mrb[0].mxu0
  %2312 = vdwg.mxu0
  %v2313 = vld [vmem:[%s8] sm:$0x1]
  %v2315 = vlaneseq
  %v2316 = vshrl.u32 %v2315, 7
  %v2317 = vsub.s32 0, %v2316
  %v2318 = vrot.slane %v2313, %v2317
  %v2320 = vadd.f32 %v2059, %v2318
  %v2321 = vadd.f32 %v2062, %v2318
  %v2322 = vadd.f32 %v2067, %v2318
  %v2323 = vadd.f32 %v2070, %v2318
  %v2324 = vadd.f32 %v2075, %v2318
  %v2325 = vadd.f32 %v2078, %v2318
  %v2326 = vadd.f32 %v2083, %v2318
  %v2327 = vadd.f32 %v2086, %v2318
  %v2328 = vadd.f32 %v2091, %v2318
  %v2329 = vadd.f32 %v2094, %v2318
  %v2330 = vadd.f32 %v2099, %v2318
  %v2331 = vadd.f32 %v2102, %v2318
  %v2332 = vadd.f32 %v2107, %v2318
  %v2333 = vadd.f32 %v2110, %v2318
  %v2334 = vadd.f32 %v2115, %v2318
  %v2335 = vadd.f32 %v2118, %v2318
  %v2336 = vadd.f32 %v2123, %v2318
  %v2337 = vadd.f32 %v2126, %v2318
  %v2338 = vadd.f32 %v2131, %v2318
  %v2339 = vadd.f32 %v2134, %v2318
  %v2340 = vadd.f32 %v2139, %v2318
  %v2341 = vadd.f32 %v2142, %v2318
  %v2342 = vadd.f32 %v2147, %v2318
  %v2343 = vadd.f32 %v2150, %v2318
  %v2344 = vadd.f32 %v2155, %v2318
  %v2345 = vadd.f32 %v2158, %v2318
  %v2346 = vadd.f32 %v2163, %v2318
  %v2347 = vadd.f32 %v2166, %v2318
  %v2348 = vadd.f32 %v2171, %v2318
  %v2349 = vadd.f32 %v2174, %v2318
  %v2350 = vadd.f32 %v2179, %v2318
  %v2351 = vadd.f32 %v2182, %v2318
  %v2352 = vadd.f32 %v2187, %v2318
  %v2353 = vadd.f32 %v2190, %v2318
  %v2354 = vadd.f32 %v2195, %v2318
  %v2355 = vadd.f32 %v2198, %v2318
  %v2356 = vadd.f32 %v2203, %v2318
  %v2357 = vadd.f32 %v2206, %v2318
  %v2358 = vadd.f32 %v2211, %v2318
  %v2359 = vadd.f32 %v2214, %v2318
  %v2360 = vadd.f32 %v2219, %v2318
  %v2361 = vadd.f32 %v2222, %v2318
  %v2362 = vadd.f32 %v2227, %v2318
  %v2363 = vadd.f32 %v2230, %v2318
  %v2364 = vadd.f32 %v2235, %v2318
  %v2365 = vadd.f32 %v2238, %v2318
  %v2366 = vadd.f32 %v2243, %v2318
  %v2367 = vadd.f32 %v2246, %v2318
  %v2368 = vadd.f32 %v2251, %v2318
  %v2369 = vadd.f32 %v2254, %v2318
  %v2370 = vadd.f32 %v2259, %v2318
  %v2371 = vadd.f32 %v2262, %v2318
  %v2372 = vadd.f32 %v2267, %v2318
  %v2373 = vadd.f32 %v2270, %v2318
  %v2374 = vadd.f32 %v2275, %v2318
  %v2375 = vadd.f32 %v2278, %v2318
  %v2376 = vadd.f32 %v2283, %v2318
  %v2377 = vadd.f32 %v2286, %v2318
  %v2378 = vadd.f32 %v2291, %v2318
  %v2379 = vadd.f32 %v2294, %v2318
  %v2380 = vadd.f32 %v2299, %v2318
  %v2381 = vadd.f32 %v2302, %v2318
  %v2382 = vadd.f32 %v2307, %v2318
  %v2383 = vadd.f32 %v2310, %v2318
  %v2384 = vxor.u32 %v2320, 2147483648
  %v2385 = vxor.u32 %v2321, 2147483648
  %v2386 = vxor.u32 %v2322, 2147483648
  %v2387 = vxor.u32 %v2323, 2147483648
  %v2388 = vxor.u32 %v2324, 2147483648
  %v2389 = vxor.u32 %v2325, 2147483648
  %v2390 = vxor.u32 %v2326, 2147483648
  %v2391 = vxor.u32 %v2327, 2147483648
  %v2392 = vxor.u32 %v2328, 2147483648
  %v2393 = vxor.u32 %v2329, 2147483648
  %v2394 = vxor.u32 %v2330, 2147483648
  %v2395 = vxor.u32 %v2331, 2147483648
  %v2396 = vxor.u32 %v2332, 2147483648
  %v2397 = vxor.u32 %v2333, 2147483648
  %v2398 = vxor.u32 %v2334, 2147483648
  %v2399 = vxor.u32 %v2335, 2147483648
  %v2400 = vxor.u32 %v2336, 2147483648
  %v2401 = vxor.u32 %v2337, 2147483648
  %v2402 = vxor.u32 %v2338, 2147483648
  %v2403 = vxor.u32 %v2339, 2147483648
  %v2404 = vxor.u32 %v2340, 2147483648
  %v2405 = vxor.u32 %v2341, 2147483648
  %v2406 = vxor.u32 %v2342, 2147483648
  %v2407 = vxor.u32 %v2343, 2147483648
  %v2408 = vxor.u32 %v2344, 2147483648
  %v2409 = vxor.u32 %v2345, 2147483648
  %v2410 = vxor.u32 %v2346, 2147483648
  %v2411 = vxor.u32 %v2347, 2147483648
  %v2412 = vxor.u32 %v2348, 2147483648
  %v2413 = vxor.u32 %v2349, 2147483648
  %v2414 = vxor.u32 %v2350, 2147483648
  %v2415 = vxor.u32 %v2351, 2147483648
  %v2416 = vxor.u32 %v2352, 2147483648
  %v2417 = vxor.u32 %v2353, 2147483648
  %v2418 = vxor.u32 %v2354, 2147483648
  %v2419 = vxor.u32 %v2355, 2147483648
  %v2420 = vxor.u32 %v2356, 2147483648
  %v2421 = vxor.u32 %v2357, 2147483648
  %v2422 = vxor.u32 %v2358, 2147483648
  %v2423 = vxor.u32 %v2359, 2147483648
  %v2424 = vxor.u32 %v2360, 2147483648
  %v2425 = vxor.u32 %v2361, 2147483648
  %v2426 = vxor.u32 %v2362, 2147483648
  %v2427 = vxor.u32 %v2363, 2147483648
  %v2428 = vxor.u32 %v2364, 2147483648
  %v2429 = vxor.u32 %v2365, 2147483648
  %v2430 = vxor.u32 %v2366, 2147483648
  %v2431 = vxor.u32 %v2367, 2147483648
  %v2432 = vxor.u32 %v2368, 2147483648
  %v2433 = vxor.u32 %v2369, 2147483648
  %v2434 = vxor.u32 %v2370, 2147483648
  %v2435 = vxor.u32 %v2371, 2147483648
  %v2436 = vxor.u32 %v2372, 2147483648
  %v2437 = vxor.u32 %v2373, 2147483648
  %v2438 = vxor.u32 %v2374, 2147483648
  %v2439 = vxor.u32 %v2375, 2147483648
  %v2440 = vxor.u32 %v2376, 2147483648
  %v2441 = vxor.u32 %v2377, 2147483648
  %v2442 = vxor.u32 %v2378, 2147483648
  %v2443 = vxor.u32 %v2379, 2147483648
  %v2444 = vxor.u32 %v2380, 2147483648
  %v2445 = vxor.u32 %v2381, 2147483648
  %v2446 = vxor.u32 %v2382, 2147483648
  %v2447 = vxor.u32 %v2383, 2147483648
  %v2448 = vmul.f32 %v2384, 1.442695
  %v2449 = vpow.pop %v2448
  %v2450 = vmul.f32 %v2385, 1.442695
  %v2451 = vpow.pop %v2450
  %v2452 = vmul.f32 %v2386, 1.442695
  %v2453 = vpow.pop %v2452
  %v2454 = vmul.f32 %v2387, 1.442695
  %v2455 = vpow.pop %v2454
  %v2456 = vmul.f32 %v2388, 1.442695
  %v2457 = vpow.pop %v2456
  %v2458 = vmul.f32 %v2389, 1.442695
  %v2459 = vpow.pop %v2458
  %v2460 = vmul.f32 %v2390, 1.442695
  %v2461 = vpow.pop %v2460
  %v2462 = vmul.f32 %v2391, 1.442695
  %v2463 = vpow.pop %v2462
  %v2464 = vmul.f32 %v2392, 1.442695
  %v2465 = vpow.pop %v2464
  %v2466 = vmul.f32 %v2393, 1.442695
  %v2467 = vpow.pop %v2466
  %v2468 = vmul.f32 %v2394, 1.442695
  %v2469 = vpow.pop %v2468
  %v2470 = vmul.f32 %v2395, 1.442695
  %v2471 = vpow.pop %v2470
  %v2472 = vmul.f32 %v2396, 1.442695
  %v2473 = vpow.pop %v2472
  %v2474 = vmul.f32 %v2397, 1.442695
  %v2475 = vpow.pop %v2474
  %v2476 = vmul.f32 %v2398, 1.442695
  %v2477 = vpow.pop %v2476
  %v2478 = vmul.f32 %v2399, 1.442695
  %v2479 = vpow.pop %v2478
  %v2480 = vmul.f32 %v2400, 1.442695
  %v2481 = vpow.pop %v2480
  %v2482 = vmul.f32 %v2401, 1.442695
  %v2483 = vpow.pop %v2482
  %v2484 = vmul.f32 %v2402, 1.442695
  %v2485 = vpow.pop %v2484
  %v2486 = vmul.f32 %v2403, 1.442695
  %v2487 = vpow.pop %v2486
  %v2488 = vmul.f32 %v2404, 1.442695
  %v2489 = vpow.pop %v2488
  %v2490 = vmul.f32 %v2405, 1.442695
  %v2491 = vpow.pop %v2490
  %v2492 = vmul.f32 %v2406, 1.442695
  %v2493 = vpow.pop %v2492
  %v2494 = vmul.f32 %v2407, 1.442695
  %v2495 = vpow.pop %v2494
  %v2496 = vmul.f32 %v2408, 1.442695
  %v2497 = vpow.pop %v2496
  %v2498 = vmul.f32 %v2409, 1.442695
  %v2499 = vpow.pop %v2498
  %v2500 = vmul.f32 %v2410, 1.442695
  %v2501 = vpow.pop %v2500
  %v2502 = vmul.f32 %v2411, 1.442695
  %v2503 = vpow.pop %v2502
  %v2504 = vmul.f32 %v2412, 1.442695
  %v2505 = vpow.pop %v2504
  %v2506 = vmul.f32 %v2413, 1.442695
  %v2507 = vpow.pop %v2506
  %v2508 = vmul.f32 %v2414, 1.442695
  %v2509 = vpow.pop %v2508
  %v2510 = vmul.f32 %v2415, 1.442695
  %v2511 = vpow.pop %v2510
  %v2512 = vmul.f32 %v2416, 1.442695
  %v2513 = vpow.pop %v2512
  %v2514 = vmul.f32 %v2417, 1.442695
  %v2515 = vpow.pop %v2514
  %v2516 = vmul.f32 %v2418, 1.442695
  %v2517 = vpow.pop %v2516
  %v2518 = vmul.f32 %v2419, 1.442695
  %v2519 = vpow.pop %v2518
  %v2520 = vmul.f32 %v2420, 1.442695
  %v2521 = vpow.pop %v2520
  %v2522 = vmul.f32 %v2421, 1.442695
  %v2523 = vpow.pop %v2522
  %v2524 = vmul.f32 %v2422, 1.442695
  %v2525 = vpow.pop %v2524
  %v2526 = vmul.f32 %v2423, 1.442695
  %v2527 = vpow.pop %v2526
  %v2528 = vmul.f32 %v2424, 1.442695
  %v2529 = vpow.pop %v2528
  %v2530 = vmul.f32 %v2425, 1.442695
  %v2531 = vpow.pop %v2530
  %v2532 = vmul.f32 %v2426, 1.442695
  %v2533 = vpow.pop %v2532
  %v2534 = vmul.f32 %v2427, 1.442695
  %v2535 = vpow.pop %v2534
  %v2536 = vmul.f32 %v2428, 1.442695
  %v2537 = vpow.pop %v2536
  %v2538 = vmul.f32 %v2429, 1.442695
  %v2539 = vpow.pop %v2538
  %v2540 = vmul.f32 %v2430, 1.442695
  %v2541 = vpow.pop %v2540
  %v2542 = vmul.f32 %v2431, 1.442695
  %v2543 = vpow.pop %v2542
  %v2544 = vmul.f32 %v2432, 1.442695
  %v2545 = vpow.pop %v2544
  %v2546 = vmul.f32 %v2433, 1.442695
  %v2547 = vpow.pop %v2546
  %v2548 = vmul.f32 %v2434, 1.442695
  %v2549 = vpow.pop %v2548
  %v2550 = vmul.f32 %v2435, 1.442695
  %v2551 = vpow.pop %v2550
  %v2552 = vmul.f32 %v2436, 1.442695
  %v2553 = vpow.pop %v2552
  %v2554 = vmul.f32 %v2437, 1.442695
  %v2555 = vpow.pop %v2554
  %v2556 = vmul.f32 %v2438, 1.442695
  %v2557 = vpow.pop %v2556
  %v2558 = vmul.f32 %v2439, 1.442695
  %v2559 = vpow.pop %v2558
  %v2560 = vmul.f32 %v2440, 1.442695
  %v2561 = vpow.pop %v2560
  %v2562 = vmul.f32 %v2441, 1.442695
  %v2563 = vpow.pop %v2562
  %v2564 = vmul.f32 %v2442, 1.442695
  %v2565 = vpow.pop %v2564
  %v2566 = vmul.f32 %v2443, 1.442695
  %v2567 = vpow.pop %v2566
  %v2568 = vmul.f32 %v2444, 1.442695
  %v2569 = vpow.pop %v2568
  %v2570 = vmul.f32 %v2445, 1.442695
  %v2571 = vpow.pop %v2570
  %v2572 = vmul.f32 %v2446, 1.442695
  %v2573 = vpow.pop %v2572
  %v2574 = vmul.f32 %v2447, 1.442695
  %v2575 = vpow.pop %v2574
  %v2576 = vadd.f32 %v2449, 1.0
  %v2577 = vadd.f32 %v2451, 1.0
  %v2578 = vadd.f32 %v2453, 1.0
  %v2579 = vadd.f32 %v2455, 1.0
  %v2580 = vadd.f32 %v2457, 1.0
  %v2581 = vadd.f32 %v2459, 1.0
  %v2582 = vadd.f32 %v2461, 1.0
  %v2583 = vadd.f32 %v2463, 1.0
  %v2584 = vadd.f32 %v2465, 1.0
  %v2585 = vadd.f32 %v2467, 1.0
  %v2586 = vadd.f32 %v2469, 1.0
  %v2587 = vadd.f32 %v2471, 1.0
  %v2588 = vadd.f32 %v2473, 1.0
  %v2589 = vadd.f32 %v2475, 1.0
  %v2590 = vadd.f32 %v2477, 1.0
  %v2591 = vadd.f32 %v2479, 1.0
  %v2592 = vadd.f32 %v2481, 1.0
  %v2593 = vadd.f32 %v2483, 1.0
  %v2594 = vadd.f32 %v2485, 1.0
  %v2595 = vadd.f32 %v2487, 1.0
  %v2596 = vadd.f32 %v2489, 1.0
  %v2597 = vadd.f32 %v2491, 1.0
  %v2598 = vadd.f32 %v2493, 1.0
  %v2599 = vadd.f32 %v2495, 1.0
  %v2600 = vadd.f32 %v2497, 1.0
  %v2601 = vadd.f32 %v2499, 1.0
  %v2602 = vadd.f32 %v2501, 1.0
  %v2603 = vadd.f32 %v2503, 1.0
  %v2604 = vadd.f32 %v2505, 1.0
  %v2605 = vadd.f32 %v2507, 1.0
  %v2606 = vadd.f32 %v2509, 1.0
  %v2607 = vadd.f32 %v2511, 1.0
  %v2608 = vadd.f32 %v2513, 1.0
  %v2609 = vadd.f32 %v2515, 1.0
  %v2610 = vadd.f32 %v2517, 1.0
  %v2611 = vadd.f32 %v2519, 1.0
  %v2612 = vadd.f32 %v2521, 1.0
  %v2613 = vadd.f32 %v2523, 1.0
  %v2614 = vadd.f32 %v2525, 1.0
  %v2615 = vadd.f32 %v2527, 1.0
  %v2616 = vadd.f32 %v2529, 1.0
  %v2617 = vadd.f32 %v2531, 1.0
  %v2618 = vadd.f32 %v2533, 1.0
  %v2619 = vadd.f32 %v2535, 1.0
  %v2620 = vadd.f32 %v2537, 1.0
  %v2621 = vadd.f32 %v2539, 1.0
  %v2622 = vadd.f32 %v2541, 1.0
  %v2623 = vadd.f32 %v2543, 1.0
  %v2624 = vadd.f32 %v2545, 1.0
  %v2625 = vadd.f32 %v2547, 1.0
  %v2626 = vadd.f32 %v2549, 1.0
  %v2627 = vadd.f32 %v2551, 1.0
  %v2628 = vadd.f32 %v2553, 1.0
  %v2629 = vadd.f32 %v2555, 1.0
  %v2630 = vadd.f32 %v2557, 1.0
  %v2631 = vadd.f32 %v2559, 1.0
  %v2632 = vadd.f32 %v2561, 1.0
  %v2633 = vadd.f32 %v2563, 1.0
  %v2634 = vadd.f32 %v2565, 1.0
  %v2635 = vadd.f32 %v2567, 1.0
  %v2636 = vadd.f32 %v2569, 1.0
  %v2637 = vadd.f32 %v2571, 1.0
  %v2638 = vadd.f32 %v2573, 1.0
  %v2639 = vadd.f32 %v2575, 1.0
  %v2640 = vrcp.pop %v2576
  %v2641 = vmul.f32 1.0, %v2640
  %v2642 = vrcp.pop %v2577
  %v2643 = vmul.f32 1.0, %v2642
  %v2644 = vrcp.pop %v2578
  %v2645 = vmul.f32 1.0, %v2644
  %v2646 = vrcp.pop %v2579
  %v2647 = vmul.f32 1.0, %v2646
  %v2648 = vrcp.pop %v2580
  %v2649 = vmul.f32 1.0, %v2648
  %v2650 = vrcp.pop %v2581
  %v2651 = vmul.f32 1.0, %v2650
  %v2652 = vrcp.pop %v2582
  %v2653 = vmul.f32 1.0, %v2652
  %v2654 = vrcp.pop %v2583
  %v2655 = vmul.f32 1.0, %v2654
  %v2656 = vrcp.pop %v2584
  %v2657 = vmul.f32 1.0, %v2656
  %v2658 = vrcp.pop %v2585
  %v2659 = vmul.f32 1.0, %v2658
  %v2660 = vrcp.pop %v2586
  %v2661 = vmul.f32 1.0, %v2660
  %v2662 = vrcp.pop %v2587
  %v2663 = vmul.f32 1.0, %v2662
  %v2664 = vrcp.pop %v2588
  %v2665 = vmul.f32 1.0, %v2664
  %v2666 = vrcp.pop %v2589
  %v2667 = vmul.f32 1.0, %v2666
  %v2668 = vrcp.pop %v2590
  %v2669 = vmul.f32 1.0, %v2668
  %v2670 = vrcp.pop %v2591
  %v2671 = vmul.f32 1.0, %v2670
  %v2672 = vrcp.pop %v2592
  %v2673 = vmul.f32 1.0, %v2672
  %v2674 = vrcp.pop %v2593
  %v2675 = vmul.f32 1.0, %v2674
  %v2676 = vrcp.pop %v2594
  %v2677 = vmul.f32 1.0, %v2676
  %v2678 = vrcp.pop %v2595
  %v2679 = vmul.f32 1.0, %v2678
  %v2680 = vrcp.pop %v2596
  %v2681 = vmul.f32 1.0, %v2680
  %v2682 = vrcp.pop %v2597
  %v2683 = vmul.f32 1.0, %v2682
  %v2684 = vrcp.pop %v2598
  %v2685 = vmul.f32 1.0, %v2684
  %v2686 = vrcp.pop %v2599
  %v2687 = vmul.f32 1.0, %v2686
  %v2688 = vrcp.pop %v2600
  %v2689 = vmul.f32 1.0, %v2688
  %v2690 = vrcp.pop %v2601
  %v2691 = vmul.f32 1.0, %v2690
  %v2692 = vrcp.pop %v2602
  %v2693 = vmul.f32 1.0, %v2692
  %v2694 = vrcp.pop %v2603
  %v2695 = vmul.f32 1.0, %v2694
  %v2696 = vrcp.pop %v2604
  %v2697 = vmul.f32 1.0, %v2696
  %v2698 = vrcp.pop %v2605
  %v2699 = vmul.f32 1.0, %v2698
  %v2700 = vrcp.pop %v2606
  %v2701 = vmul.f32 1.0, %v2700
  %v2702 = vrcp.pop %v2607
  %v2703 = vmul.f32 1.0, %v2702
  %v2704 = vrcp.pop %v2608
  %v2705 = vmul.f32 1.0, %v2704
  %v2706 = vrcp.pop %v2609
  %v2707 = vmul.f32 1.0, %v2706
  %v2708 = vrcp.pop %v2610
  %v2709 = vmul.f32 1.0, %v2708
  %v2710 = vrcp.pop %v2611
  %v2711 = vmul.f32 1.0, %v2710
  %v2712 = vrcp.pop %v2612
  %v2713 = vmul.f32 1.0, %v2712
  %v2714 = vrcp.pop %v2613
  %v2715 = vmul.f32 1.0, %v2714
  %v2716 = vrcp.pop %v2614
  %v2717 = vmul.f32 1.0, %v2716
  %v2718 = vrcp.pop %v2615
  %v2719 = vmul.f32 1.0, %v2718
  %v2720 = vrcp.pop %v2616
  %v2721 = vmul.f32 1.0, %v2720
  %v2722 = vrcp.pop %v2617
  %v2723 = vmul.f32 1.0, %v2722
  %v2724 = vrcp.pop %v2618
  %v2725 = vmul.f32 1.0, %v2724
  %v2726 = vrcp.pop %v2619
  %v2727 = vmul.f32 1.0, %v2726
  %v2728 = vrcp.pop %v2620
  %v2729 = vmul.f32 1.0, %v2728
  %v2730 = vrcp.pop %v2621
  %v2731 = vmul.f32 1.0, %v2730
  %v2732 = vrcp.pop %v2622
  %v2733 = vmul.f32 1.0, %v2732
  %v2734 = vrcp.pop %v2623
  %v2735 = vmul.f32 1.0, %v2734
  %v2736 = vrcp.pop %v2624
  %v2737 = vmul.f32 1.0, %v2736
  %v2738 = vrcp.pop %v2625
  %v2739 = vmul.f32 1.0, %v2738
  %v2740 = vrcp.pop %v2626
  %v2741 = vmul.f32 1.0, %v2740
  %v2742 = vrcp.pop %v2627
  %v2743 = vmul.f32 1.0, %v2742
  %v2744 = vrcp.pop %v2628
  %v2745 = vmul.f32 1.0, %v2744
  %v2746 = vrcp.pop %v2629
  %v2747 = vmul.f32 1.0, %v2746
  %v2748 = vrcp.pop %v2630
  %v2749 = vmul.f32 1.0, %v2748
  %v2750 = vrcp.pop %v2631
  %v2751 = vmul.f32 1.0, %v2750
  %v2752 = vrcp.pop %v2632
  %v2753 = vmul.f32 1.0, %v2752
  %v2754 = vrcp.pop %v2633
  %v2755 = vmul.f32 1.0, %v2754
  %v2756 = vrcp.pop %v2634
  %v2757 = vmul.f32 1.0, %v2756
  %v2758 = vrcp.pop %v2635
  %v2759 = vmul.f32 1.0, %v2758
  %v2760 = vrcp.pop %v2636
  %v2761 = vmul.f32 1.0, %v2760
  %v2762 = vrcp.pop %v2637
  %v2763 = vmul.f32 1.0, %v2762
  %v2764 = vrcp.pop %v2638
  %v2765 = vmul.f32 1.0, %v2764
  %v2766 = vrcp.pop %v2639
  %v2767 = vmul.f32 1.0, %v2766
  %v2768 = vmul.f32 %v2320, %v2641
  %v2769 = vmul.f32 %v2321, %v2643
  %v2770 = vmul.f32 %v2322, %v2645
  %v2771 = vmul.f32 %v2323, %v2647
  %v2772 = vmul.f32 %v2324, %v2649
  %v2773 = vmul.f32 %v2325, %v2651
  %v2774 = vmul.f32 %v2326, %v2653
  %v2775 = vmul.f32 %v2327, %v2655
  %v2776 = vmul.f32 %v2328, %v2657
  %v2777 = vmul.f32 %v2329, %v2659
  %v2778 = vmul.f32 %v2330, %v2661
  %v2779 = vmul.f32 %v2331, %v2663
  %v2780 = vmul.f32 %v2332, %v2665
  %v2781 = vmul.f32 %v2333, %v2667
  %v2782 = vmul.f32 %v2334, %v2669
  %v2783 = vmul.f32 %v2335, %v2671
  %v2784 = vmul.f32 %v2336, %v2673
  %v2785 = vmul.f32 %v2337, %v2675
  %v2786 = vmul.f32 %v2338, %v2677
  %v2787 = vmul.f32 %v2339, %v2679
  %v2788 = vmul.f32 %v2340, %v2681
  %v2789 = vmul.f32 %v2341, %v2683
  %v2790 = vmul.f32 %v2342, %v2685
  %v2791 = vmul.f32 %v2343, %v2687
  %v2792 = vmul.f32 %v2344, %v2689
  %v2793 = vmul.f32 %v2345, %v2691
  %v2794 = vmul.f32 %v2346, %v2693
  %v2795 = vmul.f32 %v2347, %v2695
  %v2796 = vmul.f32 %v2348, %v2697
  %v2797 = vmul.f32 %v2349, %v2699
  %v2798 = vmul.f32 %v2350, %v2701
  %v2799 = vmul.f32 %v2351, %v2703
  %v2800 = vmul.f32 %v2352, %v2705
  %v2801 = vmul.f32 %v2353, %v2707
  %v2802 = vmul.f32 %v2354, %v2709
  %v2803 = vmul.f32 %v2355, %v2711
  %v2804 = vmul.f32 %v2356, %v2713
  %v2805 = vmul.f32 %v2357, %v2715
  %v2806 = vmul.f32 %v2358, %v2717
  %v2807 = vmul.f32 %v2359, %v2719
  %v2808 = vmul.f32 %v2360, %v2721
  %v2809 = vmul.f32 %v2361, %v2723
  %v2810 = vmul.f32 %v2362, %v2725
  %v2811 = vmul.f32 %v2363, %v2727
  %v2812 = vmul.f32 %v2364, %v2729
  %v2813 = vmul.f32 %v2365, %v2731
  %v2814 = vmul.f32 %v2366, %v2733
  %v2815 = vmul.f32 %v2367, %v2735
  %v2816 = vmul.f32 %v2368, %v2737
  %v2817 = vmul.f32 %v2369, %v2739
  %v2818 = vmul.f32 %v2370, %v2741
  %v2819 = vmul.f32 %v2371, %v2743
  %v2820 = vmul.f32 %v2372, %v2745
  %v2821 = vmul.f32 %v2373, %v2747
  %v2822 = vmul.f32 %v2374, %v2749
  %v2823 = vmul.f32 %v2375, %v2751
  %v2824 = vmul.f32 %v2376, %v2753
  %v2825 = vmul.f32 %v2377, %v2755
  %v2826 = vmul.f32 %v2378, %v2757
  %v2827 = vmul.f32 %v2379, %v2759
  %v2828 = vmul.f32 %v2380, %v2761
  %v2829 = vmul.f32 %v2381, %v2763
  %v2830 = vmul.f32 %v2382, %v2765
  %v2831 = vmul.f32 %v2383, %v2767
  %2832 = vst.msk [vmem:[%s9] sm:$0xff] %vm1535, %v2768
  %2833 = vst.msk [vmem:[%s9 + $0x8] sm:$0xff] %vm1535, %v2769
  %2834 = vst.msk [vmem:[%s9 + $0x10] sm:$0xff] %vm1535, %v2770
  %2835 = vst.msk [vmem:[%s9 + $0x18] sm:$0xff] %vm1535, %v2771
  %2836 = vst.msk [vmem:[%s9 + $0x20] sm:$0xff] %vm1535, %v2772
  %2837 = vst.msk [vmem:[%s9 + $0x28] sm:$0xff] %vm1535, %v2773
  %2838 = vst.msk [vmem:[%s9 + $0x30] sm:$0xff] %vm1535, %v2774
  %2839 = vst.msk [vmem:[%s9 + $0x38] sm:$0xff] %vm1535, %v2775
  %2840 = vst.msk [vmem:[%s9 + $0x40] sm:$0xff] %vm1535, %v2776
  %2841 = vst.msk [vmem:[%s9 + $0x48] sm:$0xff] %vm1535, %v2777
  %2842 = vst.msk [vmem:[%s9 + $0x50] sm:$0xff] %vm1535, %v2778
  %2843 = vst.msk [vmem:[%s9 + $0x58] sm:$0xff] %vm1535, %v2779
  %2844 = vst.msk [vmem:[%s9 + $0x60] sm:$0xff] %vm1535, %v2780
  %2845 = vst.msk [vmem:[%s9 + $0x68] sm:$0xff] %vm1535, %v2781
  %2846 = vst.msk [vmem:[%s9 + $0x70] sm:$0xff] %vm1535, %v2782
  %2847 = vst.msk [vmem:[%s9 + $0x78] sm:$0xff] %vm1535, %v2783
  %2848 = vst.msk [vmem:[%s9 + $0x80] sm:$0xff] %vm1535, %v2784
  %2849 = vst.msk [vmem:[%s9 + $0x88] sm:$0xff] %vm1535, %v2785
  %2850 = vst.msk [vmem:[%s9 + $0x90] sm:$0xff] %vm1535, %v2786
  %2851 = vst.msk [vmem:[%s9 + $0x98] sm:$0xff] %vm1535, %v2787
  %2852 = vst.msk [vmem:[%s9 + $0xa0] sm:$0xff] %vm1535, %v2788
  %2853 = vst.msk [vmem:[%s9 + $0xa8] sm:$0xff] %vm1535, %v2789
  %2854 = vst.msk [vmem:[%s9 + $0xb0] sm:$0xff] %vm1535, %v2790
  %2855 = vst.msk [vmem:[%s9 + $0xb8] sm:$0xff] %vm1535, %v2791
  %2856 = vst.msk [vmem:[%s9 + $0xc0] sm:$0xff] %vm1535, %v2792
  %2857 = vst.msk [vmem:[%s9 + $0xc8] sm:$0xff] %vm1535, %v2793
  %2858 = vst.msk [vmem:[%s9 + $0xd0] sm:$0xff] %vm1535, %v2794
  %2859 = vst.msk [vmem:[%s9 + $0xd8] sm:$0xff] %vm1535, %v2795
  %2860 = vst.msk [vmem:[%s9 + $0xe0] sm:$0xff] %vm1535, %v2796
  %2861 = vst.msk [vmem:[%s9 + $0xe8] sm:$0xff] %vm1535, %v2797
  %2862 = vst.msk [vmem:[%s9 + $0xf0] sm:$0xff] %vm1535, %v2798
  %2863 = vst.msk [vmem:[%s9 + $0xf8] sm:$0xff] %vm1535, %v2799
  %2864 = vst.msk [vmem:[%s9 + $0x100] sm:$0xff] %vm1535, %v2800
  %2865 = vst.msk [vmem:[%s9 + $0x108] sm:$0xff] %vm1535, %v2801
  %2866 = vst.msk [vmem:[%s9 + $0x110] sm:$0xff] %vm1535, %v2802
  %2867 = vst.msk [vmem:[%s9 + $0x118] sm:$0xff] %vm1535, %v2803
  %2868 = vst.msk [vmem:[%s9 + $0x120] sm:$0xff] %vm1535, %v2804
  %2869 = vst.msk [vmem:[%s9 + $0x128] sm:$0xff] %vm1535, %v2805
  %2870 = vst.msk [vmem:[%s9 + $0x130] sm:$0xff] %vm1535, %v2806
  %2871 = vst.msk [vmem:[%s9 + $0x138] sm:$0xff] %vm1535, %v2807
  %2872 = vst.msk [vmem:[%s9 + $0x140] sm:$0xff] %vm1535, %v2808
  %2873 = vst.msk [vmem:[%s9 + $0x148] sm:$0xff] %vm1535, %v2809
  %2874 = vst.msk [vmem:[%s9 + $0x150] sm:$0xff] %vm1535, %v2810
  %2875 = vst.msk [vmem:[%s9 + $0x158] sm:$0xff] %vm1535, %v2811
  %2876 = vst.msk [vmem:[%s9 + $0x160] sm:$0xff] %vm1535, %v2812
  %2877 = vst.msk [vmem:[%s9 + $0x168] sm:$0xff] %vm1535, %v2813
  %2878 = vst.msk [vmem:[%s9 + $0x170] sm:$0xff] %vm1535, %v2814
  %2879 = vst.msk [vmem:[%s9 + $0x178] sm:$0xff] %vm1535, %v2815
  %2880 = vst.msk [vmem:[%s9 + $0x180] sm:$0xff] %vm1535, %v2816
  %2881 = vst.msk [vmem:[%s9 + $0x188] sm:$0xff] %vm1535, %v2817
  %2882 = vst.msk [vmem:[%s9 + $0x190] sm:$0xff] %vm1535, %v2818
  %2883 = vst.msk [vmem:[%s9 + $0x198] sm:$0xff] %vm1535, %v2819
  %2884 = vst.msk [vmem:[%s9 + $0x1a0] sm:$0xff] %vm1535, %v2820
  %2885 = vst.msk [vmem:[%s9 + $0x1a8] sm:$0xff] %vm1535, %v2821
  %2886 = vst.msk [vmem:[%s9 + $0x1b0] sm:$0xff] %vm1535, %v2822
  %2887 = vst.msk [vmem:[%s9 + $0x1b8] sm:$0xff] %vm1535, %v2823
  %2888 = vst.msk [vmem:[%s9 + $0x1c0] sm:$0xff] %vm1535, %v2824
  %2889 = vst.msk [vmem:[%s9 + $0x1c8] sm:$0xff] %vm1535, %v2825
  %2890 = vst.msk [vmem:[%s9 + $0x1d0] sm:$0xff] %vm1535, %v2826
  %2891 = vst.msk [vmem:[%s9 + $0x1d8] sm:$0xff] %vm1535, %v2827
  %2892 = vst.msk [vmem:[%s9 + $0x1e0] sm:$0xff] %vm1535, %v2828
  %2893 = vst.msk [vmem:[%s9 + $0x1e8] sm:$0xff] %vm1535, %v2829
  %2894 = vst.msk [vmem:[%s9 + $0x1f0] sm:$0xff] %vm1535, %v2830
  %2895 = vst.msk [vmem:[%s9 + $0x1f8] sm:$0xff] %vm1535, %v2831
  // Predicated region
  $region38: #{bottleneck_csp2_pallas.5} parent=0 // pred_check
    _
  $region39: #{bottleneck_csp2_pallas.5} parent=0 // pred_check_branch
    %2897 = sbr.rel (0) target = $region41
  $region40: #{bottleneck_csp2_pallas.5} parent=0 // pred_region
    _
  $region41: #{bottleneck_csp2_pallas.5} parent=0 // pred_fallthru
    _
  // Predicated region
  $region42: #{bottleneck_csp2_pallas.5} parent=0 // pred_check
    _
  $region43: #{bottleneck_csp2_pallas.5} parent=0 // pred_check_branch
    %2899 = sbr.rel (0) target = $region45
  $region44: #{bottleneck_csp2_pallas.5} parent=0 // pred_region
    _
  $region45: #{bottleneck_csp2_pallas.5} parent=0 // pred_fallthru
    _

// kernel: bottleneck_csp2_pallas.3
$region0: #{bottleneck_csp2_pallas.3}
  #allocation0 [shape = 'u32[]', space=smem, size = 0x4, offset = 0x4, fixed_abs, tag = 'smem constant byte address 0x4 - core index']
  #allocation1 [shape = 'u32[144,128]{1,0:T(1,128)}', space=vmem, size = 0x12000, scoped, tag = 'internal scratch']
  %s0 = inlined_call_operand.vmem [shape: bf16[512,4], index: 0, kind: input, shape index: {}]
  %s1 = inlined_call_operand.vmem [shape: bf16[4,4], index: 1, kind: input, shape index: {}]
  %s2 = inlined_call_operand.vmem [shape: f32[1,4], index: 2, kind: input, shape index: {}]
  %s3 = inlined_call_operand.vmem [shape: bf16[4,4], index: 3, kind: input, shape index: {}]
  %s4 = inlined_call_operand.vmem [shape: bf16[4,4], index: 4, kind: input, shape index: {}]
  %s5 = inlined_call_operand.vmem [shape: f32[1,4], index: 5, kind: input, shape index: {}]
  %s6 = inlined_call_operand.vmem [shape: bf16[512,4], index: 6, kind: output, shape index: {0}]
  %s7 = inlined_call_operand.vmem [shape: bf16[512,4], index: 7, kind: output, shape index: {1}]
  %8 = xla_tuple %s6, %s7
  %s9 = sld [smem:[#allocation0]]
  $region42: #{bottleneck_csp2_pallas.3} parent=0
    _
  %s11 = ssub.s32 1, %s9
  %s12 = scalar_select 0, %s11, %s9
  // Predicated region
  $region2: #{bottleneck_csp2_pallas.3} parent=0 // pred_check
    _
  $region3: #{bottleneck_csp2_pallas.3} parent=0 // pred_check_branch
    %14 = sbr.rel (0) target = $region5
  $region4: #{bottleneck_csp2_pallas.3} parent=0 // pred_region
    _
  $region5: #{bottleneck_csp2_pallas.3} parent=0 // pred_fallthru
    _
  // Predicated region
  $region6: #{bottleneck_csp2_pallas.3} parent=0 // pred_check
    _
  $region7: #{bottleneck_csp2_pallas.3} parent=0 // pred_check_branch
    %16 = sbr.rel (0) target = $region9
  $region8: #{bottleneck_csp2_pallas.3} parent=0 // pred_region
    _
  $region9: #{bottleneck_csp2_pallas.3} parent=0 // pred_fallthru
    _
  // Predicated region
  $region10: #{bottleneck_csp2_pallas.3} parent=0 // pred_check
    _
  $region11: #{bottleneck_csp2_pallas.3} parent=0 // pred_check_branch
    %18 = sbr.rel (0) target = $region13
  $region12: #{bottleneck_csp2_pallas.3} parent=0 // pred_region
    _
  $region13: #{bottleneck_csp2_pallas.3} parent=0 // pred_fallthru
    _
  // Predicated region
  $region14: #{bottleneck_csp2_pallas.3} parent=0 // pred_check
    _
  $region15: #{bottleneck_csp2_pallas.3} parent=0 // pred_check_branch
    %20 = sbr.rel (0) target = $region17
  $region16: #{bottleneck_csp2_pallas.3} parent=0 // pred_region
    _
  $region17: #{bottleneck_csp2_pallas.3} parent=0 // pred_fallthru
    _
  // Predicated region
  $region18: #{bottleneck_csp2_pallas.3} parent=0 // pred_check
    _
  $region19: #{bottleneck_csp2_pallas.3} parent=0 // pred_check_branch
    %22 = sbr.rel (0) target = $region21
  $region20: #{bottleneck_csp2_pallas.3} parent=0 // pred_region
    _
  $region21: #{bottleneck_csp2_pallas.3} parent=0 // pred_fallthru
    _
  // Predicated region
  $region22: #{bottleneck_csp2_pallas.3} parent=0 // pred_check
    _
  $region23: #{bottleneck_csp2_pallas.3} parent=0 // pred_check_branch
    %24 = sbr.rel (0) target = $region25
  $region24: #{bottleneck_csp2_pallas.3} parent=0 // pred_region
    _
  $region25: #{bottleneck_csp2_pallas.3} parent=0 // pred_fallthru
    _
  %v26 = vld [vmem:[%s0] sm:$0xf]
  %v27 = vld [vmem:[%s0 + $0x4] sm:$0xf]
  %v28 = vld [vmem:[%s0 + $0x8] sm:$0xf]
  %v29 = vld [vmem:[%s0 + $0xc] sm:$0xf]
  %v30 = vld [vmem:[%s0 + $0x10] sm:$0xf]
  %v31 = vld [vmem:[%s0 + $0x14] sm:$0xf]
  %v32 = vld [vmem:[%s0 + $0x18] sm:$0xf]
  %v33 = vld [vmem:[%s0 + $0x1c] sm:$0xf]
  %v34 = vld [vmem:[%s0 + $0x20] sm:$0xf]
  %v35 = vld [vmem:[%s0 + $0x24] sm:$0xf]
  %v36 = vld [vmem:[%s0 + $0x28] sm:$0xf]
  %v37 = vld [vmem:[%s0 + $0x2c] sm:$0xf]
  %v38 = vld [vmem:[%s0 + $0x30] sm:$0xf]
  %v39 = vld [vmem:[%s0 + $0x34] sm:$0xf]
  %v40 = vld [vmem:[%s0 + $0x38] sm:$0xf]
  %v41 = vld [vmem:[%s0 + $0x3c] sm:$0xf]
  %v42 = vld [vmem:[%s0 + $0x40] sm:$0xf]
  %v43 = vld [vmem:[%s0 + $0x44] sm:$0xf]
  %v44 = vld [vmem:[%s0 + $0x48] sm:$0xf]
  %v45 = vld [vmem:[%s0 + $0x4c] sm:$0xf]
  %v46 = vld [vmem:[%s0 + $0x50] sm:$0xf]
  %v47 = vld [vmem:[%s0 + $0x54] sm:$0xf]
  %v48 = vld [vmem:[%s0 + $0x58] sm:$0xf]
  %v49 = vld [vmem:[%s0 + $0x5c] sm:$0xf]
  %v50 = vld [vmem:[%s0 + $0x60] sm:$0xf]
  %v51 = vld [vmem:[%s0 + $0x64] sm:$0xf]
  %v52 = vld [vmem:[%s0 + $0x68] sm:$0xf]
  %v53 = vld [vmem:[%s0 + $0x6c] sm:$0xf]
  %v54 = vld [vmem:[%s0 + $0x70] sm:$0xf]
  %v55 = vld [vmem:[%s0 + $0x74] sm:$0xf]
  %v56 = vld [vmem:[%s0 + $0x78] sm:$0xf]
  %v57 = vld [vmem:[%s0 + $0x7c] sm:$0xf]
  %v58 = vld [vmem:[%s0 + $0x80] sm:$0xf]
  %v59 = vld [vmem:[%s0 + $0x84] sm:$0xf]
  %v60 = vld [vmem:[%s0 + $0x88] sm:$0xf]
  %v61 = vld [vmem:[%s0 + $0x8c] sm:$0xf]
  %v62 = vld [vmem:[%s0 + $0x90] sm:$0xf]
  %v63 = vld [vmem:[%s0 + $0x94] sm:$0xf]
  %v64 = vld [vmem:[%s0 + $0x98] sm:$0xf]
  %v65 = vld [vmem:[%s0 + $0x9c] sm:$0xf]
  %v66 = vld [vmem:[%s0 + $0xa0] sm:$0xf]
  %v67 = vld [vmem:[%s0 + $0xa4] sm:$0xf]
  %v68 = vld [vmem:[%s0 + $0xa8] sm:$0xf]
  %v69 = vld [vmem:[%s0 + $0xac] sm:$0xf]
  %v70 = vld [vmem:[%s0 + $0xb0] sm:$0xf]
  %v71 = vld [vmem:[%s0 + $0xb4] sm:$0xf]
  %v72 = vld [vmem:[%s0 + $0xb8] sm:$0xf]
  %v73 = vld [vmem:[%s0 + $0xbc] sm:$0xf]
  %v74 = vld [vmem:[%s0 + $0xc0] sm:$0xf]
  %v75 = vld [vmem:[%s0 + $0xc4] sm:$0xf]
  %v76 = vld [vmem:[%s0 + $0xc8] sm:$0xf]
  %v77 = vld [vmem:[%s0 + $0xcc] sm:$0xf]
  %v78 = vld [vmem:[%s0 + $0xd0] sm:$0xf]
  %v79 = vld [vmem:[%s0 + $0xd4] sm:$0xf]
  %v80 = vld [vmem:[%s0 + $0xd8] sm:$0xf]
  %v81 = vld [vmem:[%s0 + $0xdc] sm:$0xf]
  %v82 = vld [vmem:[%s0 + $0xe0] sm:$0xf]
  %v83 = vld [vmem:[%s0 + $0xe4] sm:$0xf]
  %v84 = vld [vmem:[%s0 + $0xe8] sm:$0xf]
  %v85 = vld [vmem:[%s0 + $0xec] sm:$0xf]
  %v86 = vld [vmem:[%s0 + $0xf0] sm:$0xf]
  %v87 = vld [vmem:[%s0 + $0xf4] sm:$0xf]
  %v88 = vld [vmem:[%s0 + $0xf8] sm:$0xf]
  %v89 = vld [vmem:[%s0 + $0xfc] sm:$0xf]
  %v90 = vld [vmem:[%s1] sm:$0x3]
  %v91 = vld [vmem:[%s2] sm:$0x1]
  %v93 = vlaneseq
  %v94 = vshrl.u32 %v93, 7
  %v95 = vsub.s32 0, %v94
  %v96 = vrot.slane %v91, %v95
  %v162 = vunpack.c.l.b16 %v26
  %v163 = vunpack.c.l.b16 %v27
  %v164 = vunpack.c.l.b16 %v28
  %v165 = vunpack.c.l.b16 %v29
  %v166 = vunpack.c.l.b16 %v30
  %v167 = vunpack.c.l.b16 %v31
  %v168 = vunpack.c.l.b16 %v32
  %v169 = vunpack.c.l.b16 %v33
  %v170 = vunpack.c.l.b16 %v34
  %v171 = vunpack.c.l.b16 %v35
  %v172 = vunpack.c.l.b16 %v36
  %v173 = vunpack.c.l.b16 %v37
  %v174 = vunpack.c.l.b16 %v38
  %v175 = vunpack.c.l.b16 %v39
  %v176 = vunpack.c.l.b16 %v40
  %v177 = vunpack.c.l.b16 %v41
  %v178 = vunpack.c.l.b16 %v42
  %v179 = vunpack.c.l.b16 %v43
  %v180 = vunpack.c.l.b16 %v44
  %v181 = vunpack.c.l.b16 %v45
  %v182 = vunpack.c.l.b16 %v46
  %v183 = vunpack.c.l.b16 %v47
  %v184 = vunpack.c.l.b16 %v48
  %v185 = vunpack.c.l.b16 %v49
  %v186 = vunpack.c.l.b16 %v50
  %v187 = vunpack.c.l.b16 %v51
  %v188 = vunpack.c.l.b16 %v52
  %v189 = vunpack.c.l.b16 %v53
  %v190 = vunpack.c.l.b16 %v54
  %v191 = vunpack.c.l.b16 %v55
  %v192 = vunpack.c.l.b16 %v56
  %v193 = vunpack.c.l.b16 %v57
  %v194 = vunpack.c.l.b16 %v58
  %v195 = vunpack.c.l.b16 %v59
  %v196 = vunpack.c.l.b16 %v60
  %v197 = vunpack.c.l.b16 %v61
  %v198 = vunpack.c.l.b16 %v62
  %v199 = vunpack.c.l.b16 %v63
  %v200 = vunpack.c.l.b16 %v64
  %v201 = vunpack.c.l.b16 %v65
  %v202 = vunpack.c.l.b16 %v66
  %v203 = vunpack.c.l.b16 %v67
  %v204 = vunpack.c.l.b16 %v68
  %v205 = vunpack.c.l.b16 %v69
  %v206 = vunpack.c.l.b16 %v70
  %v207 = vunpack.c.l.b16 %v71
  %v208 = vunpack.c.l.b16 %v72
  %v209 = vunpack.c.l.b16 %v73
  %v210 = vunpack.c.l.b16 %v74
  %v211 = vunpack.c.l.b16 %v75
  %v212 = vunpack.c.l.b16 %v76
  %v213 = vunpack.c.l.b16 %v77
  %v214 = vunpack.c.l.b16 %v78
  %v215 = vunpack.c.l.b16 %v79
  %v216 = vunpack.c.l.b16 %v80
  %v217 = vunpack.c.l.b16 %v81
  %v218 = vunpack.c.l.b16 %v82
  %v219 = vunpack.c.l.b16 %v83
  %v220 = vunpack.c.l.b16 %v84
  %v221 = vunpack.c.l.b16 %v85
  %v222 = vunpack.c.l.b16 %v86
  %v223 = vunpack.c.l.b16 %v87
  %v224 = vunpack.c.l.b16 %v88
  %v225 = vunpack.c.l.b16 %v89
  %v226 = vpack.c.b16 %v163, %v162
  %v227 = vpack.c.b16 %v165, %v164
  %v228 = vpack.c.b16 %v167, %v166
  %v229 = vpack.c.b16 %v169, %v168
  %v230 = vpack.c.b16 %v171, %v170
  %v231 = vpack.c.b16 %v173, %v172
  %v232 = vpack.c.b16 %v175, %v174
  %v233 = vpack.c.b16 %v177, %v176
  %v234 = vpack.c.b16 %v179, %v178
  %v235 = vpack.c.b16 %v181, %v180
  %v236 = vpack.c.b16 %v183, %v182
  %v237 = vpack.c.b16 %v185, %v184
  %v238 = vpack.c.b16 %v187, %v186
  %v239 = vpack.c.b16 %v189, %v188
  %v240 = vpack.c.b16 %v191, %v190
  %v241 = vpack.c.b16 %v193, %v192
  %v242 = vpack.c.b16 %v195, %v194
  %v243 = vpack.c.b16 %v197, %v196
  %v244 = vpack.c.b16 %v199, %v198
  %v245 = vpack.c.b16 %v201, %v200
  %v246 = vpack.c.b16 %v203, %v202
  %v247 = vpack.c.b16 %v205, %v204
  %v248 = vpack.c.b16 %v207, %v206
  %v249 = vpack.c.b16 %v209, %v208
  %v250 = vpack.c.b16 %v211, %v210
  %v251 = vpack.c.b16 %v213, %v212
  %v252 = vpack.c.b16 %v215, %v214
  %v253 = vpack.c.b16 %v217, %v216
  %v254 = vpack.c.b16 %v219, %v218
  %v255 = vpack.c.b16 %v221, %v220
  %v256 = vpack.c.b16 %v223, %v222
  %v257 = vpack.c.b16 %v225, %v224
  %vm258 = vcmask 31744
  %v260 = vsel %vm258, %v226, 0
  %v263 = vsel %vm258, %v227, 0
  %v266 = vsel %vm258, %v228, 0
  %v269 = vsel %vm258, %v229, 0
  %v272 = vsel %vm258, %v230, 0
  %v275 = vsel %vm258, %v231, 0
  %v278 = vsel %vm258, %v232, 0
  %v281 = vsel %vm258, %v233, 0
  %v284 = vsel %vm258, %v234, 0
  %v287 = vsel %vm258, %v235, 0
  %v290 = vsel %vm258, %v236, 0
  %v293 = vsel %vm258, %v237, 0
  %v296 = vsel %vm258, %v238, 0
  %v299 = vsel %vm258, %v239, 0
  %v302 = vsel %vm258, %v240, 0
  %v305 = vsel %vm258, %v241, 0
  %v308 = vsel %vm258, %v242, 0
  %v311 = vsel %vm258, %v243, 0
  %v314 = vsel %vm258, %v244, 0
  %v317 = vsel %vm258, %v245, 0
  %v320 = vsel %vm258, %v246, 0
  %v323 = vsel %vm258, %v247, 0
  %v326 = vsel %vm258, %v248, 0
  %v329 = vsel %vm258, %v249, 0
  %v332 = vsel %vm258, %v250, 0
  %v335 = vsel %vm258, %v251, 0
  %v338 = vsel %vm258, %v252, 0
  %v341 = vsel %vm258, %v253, 0
  %v344 = vsel %vm258, %v254, 0
  %v347 = vsel %vm258, %v255, 0
  %v350 = vsel %vm258, %v256, 0
  %v353 = vsel %vm258, %v257, 0
  %vm355 = vcmask 1041408
  %v357 = vsel %vm355, %v90, 0
  %359 = vmatprep.subr.bf16.mxu0 0
  %360 = vmatpush1.bf16.msra.mxu0 %v357
  %361 = vmatprep.subr.bf16.mxu0 0
  %362 = vmatpush1.bf16.msra.mxu0 0
  %363 = vmatprep.subr.bf16.mxu0 0
  %364 = vmatpush1.bf16.msra.mxu0 0
  %365 = vmatprep.subr.bf16.mxu0 0
  %366 = vmatpush1.bf16.msra.mxu0 0
  %367 = vmatprep.subr.bf16.mxu0 0
  %368 = vmatpush1.bf16.msra.mxu0 0
  %369 = vmatprep.subr.bf16.mxu0 0
  %370 = vmatpush1.bf16.msra.mxu0 0
  %371 = vmatprep.subr.bf16.mxu0 0
  %372 = vmatpush1.bf16.msra.mxu0 0
  %373 = vmatprep.subr.bf16.mxu0 0
  %374 = vmatpush1.bf16.msra.mxu0 0
  %375 = vmatprep.subr.bf16.mxu0 0
  %376 = vmatpush1.bf16.msra.mxu0 0
  %377 = vmatprep.subr.bf16.mxu0 0
  %378 = vmatpush1.bf16.msra.mxu0 0
  %379 = vmatprep.subr.bf16.mxu0 0
  %380 = vmatpush1.bf16.msra.mxu0 0
  %381 = vmatprep.subr.bf16.mxu0 0
  %382 = vmatpush1.bf16.msra.mxu0 0
  %383 = vmatprep.subr.bf16.mxu0 0
  %384 = vmatpush1.bf16.msra.mxu0 0
  %385 = vmatprep.subr.bf16.mxu0 0
  %386 = vmatpush1.bf16.msra.mxu0 0
  %387 = vmatprep.subr.bf16.mxu0 0
  %388 = vmatpush1.bf16.msra.mxu0 0
  %389 = vmatprep.subr.bf16.mxu0 0
  %390 = vmatpush1.bf16.msra.mxu0 0
  %391 = vmatprep.mubr.bf16.mxu0 0
  %392 = vmatmul.mubr.bf16.gmra.mrb[0].mxu0 %v260
  %v393 = vpop.f32.mrb[0].mxu0
  %v394 = vadd.f32 %v96, %v393
  %v395 = vpop.f32.mrb[0].mxu0
  %v396 = vpop.f32.mrb[0].mxu0
  %v397 = vadd.f32 %v96, %v396
  %v398 = vpop.f32.mrb[0].mxu0
  %399 = vmatprep.mubr.bf16.mxu0 0
  %400 = vmatmul.mubr.bf16.gmra.mrb[0].mxu0 %v263
  %v401 = vpop.f32.mrb[0].mxu0
  %v402 = vadd.f32 %v96, %v401
  %v403 = vpop.f32.mrb[0].mxu0
  %v404 = vpop.f32.mrb[0].mxu0
  %v405 = vadd.f32 %v96, %v404
  %v406 = vpop.f32.mrb[0].mxu0
  %407 = vmatprep.mubr.bf16.mxu0 0
  %408 = vmatmul.mubr.bf16.gmra.mrb[0].mxu0 %v266
  %v409 = vpop.f32.mrb[0].mxu0
  %v410 = vadd.f32 %v96, %v409
  %v411 = vpop.f32.mrb[0].mxu0
  %v412 = vpop.f32.mrb[0].mxu0
  %v413 = vadd.f32 %v96, %v412
  %v414 = vpop.f32.mrb[0].mxu0
  %415 = vmatprep.mubr.bf16.mxu0 0
  %416 = vmatmul.mubr.bf16.gmra.mrb[0].mxu0 %v269
  %v417 = vpop.f32.mrb[0].mxu0
  %v418 = vadd.f32 %v96, %v417
  %v419 = vpop.f32.mrb[0].mxu0
  %v420 = vpop.f32.mrb[0].mxu0
  %v421 = vadd.f32 %v96, %v420
  %v422 = vpop.f32.mrb[0].mxu0
  %423 = vmatprep.mubr.bf16.mxu0 0
  %424 = vmatmul.mubr.bf16.gmra.mrb[0].mxu0 %v272
  %v425 = vpop.f32.mrb[0].mxu0
  %v426 = vadd.f32 %v96, %v425
  %v427 = vpop.f32.mrb[0].mxu0
  %v428 = vpop.f32.mrb[0].mxu0
  %v429 = vadd.f32 %v96, %v428
  %v430 = vpop.f32.mrb[0].mxu0
  %431 = vmatprep.mubr.bf16.mxu0 0
  %432 = vmatmul.mubr.bf16.gmra.mrb[0].mxu0 %v275
  %v433 = vpop.f32.mrb[0].mxu0
  %v434 = vadd.f32 %v96, %v433
  %v435 = vpop.f32.mrb[0].mxu0
  %v436 = vpop.f32.mrb[0].mxu0
  %v437 = vadd.f32 %v96, %v436
  %v438 = vpop.f32.mrb[0].mxu0
  %439 = vmatprep.mubr.bf16.mxu0 0
  %440 = vmatmul.mubr.bf16.gmra.mrb[0].mxu0 %v278
  %v441 = vpop.f32.mrb[0].mxu0
  %v442 = vadd.f32 %v96, %v441
  %v443 = vpop.f32.mrb[0].mxu0
  %v444 = vpop.f32.mrb[0].mxu0
  %v445 = vadd.f32 %v96, %v444
  %v446 = vpop.f32.mrb[0].mxu0
  %447 = vmatprep.mubr.bf16.mxu0 0
  %448 = vmatmul.mubr.bf16.gmra.mrb[0].mxu0 %v281
  %v449 = vpop.f32.mrb[0].mxu0
  %v450 = vadd.f32 %v96, %v449
  %v451 = vpop.f32.mrb[0].mxu0
  %v452 = vpop.f32.mrb[0].mxu0
  %v453 = vadd.f32 %v96, %v452
  %v454 = vpop.f32.mrb[0].mxu0
  %455 = vmatprep.mubr.bf16.mxu0 0
  %456 = vmatmul.mubr.bf16.gmra.mrb[0].mxu0 %v284
  %v457 = vpop.f32.mrb[0].mxu0
  %v458 = vadd.f32 %v96, %v457
  %v459 = vpop.f32.mrb[0].mxu0
  %v460 = vpop.f32.mrb[0].mxu0
  %v461 = vadd.f32 %v96, %v460
  %v462 = vpop.f32.mrb[0].mxu0
  %463 = vmatprep.mubr.bf16.mxu0 0
  %464 = vmatmul.mubr.bf16.gmra.mrb[0].mxu0 %v287
  %v465 = vpop.f32.mrb[0].mxu0
  %v466 = vadd.f32 %v96, %v465
  %v467 = vpop.f32.mrb[0].mxu0
  %v468 = vpop.f32.mrb[0].mxu0
  %v469 = vadd.f32 %v96, %v468
  %v470 = vpop.f32.mrb[0].mxu0
  %471 = vmatprep.mubr.bf16.mxu0 0
  %472 = vmatmul.mubr.bf16.gmra.mrb[0].mxu0 %v290
  %v473 = vpop.f32.mrb[0].mxu0
  %v474 = vadd.f32 %v96, %v473
  %v475 = vpop.f32.mrb[0].mxu0
  %v476 = vpop.f32.mrb[0].mxu0
  %v477 = vadd.f32 %v96, %v476
  %v478 = vpop.f32.mrb[0].mxu0
  %479 = vmatprep.mubr.bf16.mxu0 0
  %480 = vmatmul.mubr.bf16.gmra.mrb[0].mxu0 %v293
  %v481 = vpop.f32.mrb[0].mxu0
  %v482 = vadd.f32 %v96, %v481
  %v483 = vpop.f32.mrb[0].mxu0
  %v484 = vpop.f32.mrb[0].mxu0
  %v485 = vadd.f32 %v96, %v484
  %v486 = vpop.f32.mrb[0].mxu0
  %487 = vmatprep.mubr.bf16.mxu0 0
  %488 = vmatmul.mubr.bf16.gmra.mrb[0].mxu0 %v296
  %v489 = vpop.f32.mrb[0].mxu0
  %v490 = vadd.f32 %v96, %v489
  %v491 = vpop.f32.mrb[0].mxu0
  %v492 = vpop.f32.mrb[0].mxu0
  %v493 = vadd.f32 %v96, %v492
  %v494 = vpop.f32.mrb[0].mxu0
  %495 = vmatprep.mubr.bf16.mxu0 0
  %496 = vmatmul.mubr.bf16.gmra.mrb[0].mxu0 %v299
  %v497 = vpop.f32.mrb[0].mxu0
  %v498 = vadd.f32 %v96, %v497
  %v499 = vpop.f32.mrb[0].mxu0
  %v500 = vpop.f32.mrb[0].mxu0
  %v501 = vadd.f32 %v96, %v500
  %v502 = vpop.f32.mrb[0].mxu0
  %503 = vmatprep.mubr.bf16.mxu0 0
  %504 = vmatmul.mubr.bf16.gmra.mrb[0].mxu0 %v302
  %v505 = vpop.f32.mrb[0].mxu0
  %v506 = vadd.f32 %v96, %v505
  %v507 = vpop.f32.mrb[0].mxu0
  %v508 = vpop.f32.mrb[0].mxu0
  %v509 = vadd.f32 %v96, %v508
  %v510 = vpop.f32.mrb[0].mxu0
  %511 = vmatprep.mubr.bf16.mxu0 0
  %512 = vmatmul.mubr.bf16.gmra.mrb[0].mxu0 %v305
  %v513 = vpop.f32.mrb[0].mxu0
  %v514 = vadd.f32 %v96, %v513
  %v515 = vpop.f32.mrb[0].mxu0
  %v516 = vpop.f32.mrb[0].mxu0
  %v517 = vadd.f32 %v96, %v516
  %v518 = vpop.f32.mrb[0].mxu0
  %519 = vmatprep.mubr.bf16.mxu0 0
  %520 = vmatmul.mubr.bf16.gmra.mrb[0].mxu0 %v308
  %v521 = vpop.f32.mrb[0].mxu0
  %v522 = vadd.f32 %v96, %v521
  %v523 = vpop.f32.mrb[0].mxu0
  %v524 = vpop.f32.mrb[0].mxu0
  %v525 = vadd.f32 %v96, %v524
  %v526 = vpop.f32.mrb[0].mxu0
  %527 = vmatprep.mubr.bf16.mxu0 0
  %528 = vmatmul.mubr.bf16.gmra.mrb[0].mxu0 %v311
  %v529 = vpop.f32.mrb[0].mxu0
  %v530 = vadd.f32 %v96, %v529
  %v531 = vpop.f32.mrb[0].mxu0
  %v532 = vpop.f32.mrb[0].mxu0
  %v533 = vadd.f32 %v96, %v532
  %v534 = vpop.f32.mrb[0].mxu0
  %535 = vmatprep.mubr.bf16.mxu0 0
  %536 = vmatmul.mubr.bf16.gmra.mrb[0].mxu0 %v314
  %v537 = vpop.f32.mrb[0].mxu0
  %v538 = vadd.f32 %v96, %v537
  %v539 = vpop.f32.mrb[0].mxu0
  %v540 = vpop.f32.mrb[0].mxu0
  %v541 = vadd.f32 %v96, %v540
  %v542 = vpop.f32.mrb[0].mxu0
  %543 = vmatprep.mubr.bf16.mxu0 0
  %544 = vmatmul.mubr.bf16.gmra.mrb[0].mxu0 %v317
  %v545 = vpop.f32.mrb[0].mxu0
  %v546 = vadd.f32 %v96, %v545
  %v547 = vpop.f32.mrb[0].mxu0
  %v548 = vpop.f32.mrb[0].mxu0
  %v549 = vadd.f32 %v96, %v548
  %v550 = vpop.f32.mrb[0].mxu0
  %551 = vmatprep.mubr.bf16.mxu0 0
  %552 = vmatmul.mubr.bf16.gmra.mrb[0].mxu0 %v320
  %v553 = vpop.f32.mrb[0].mxu0
  %v554 = vadd.f32 %v96, %v553
  %v555 = vpop.f32.mrb[0].mxu0
  %v556 = vpop.f32.mrb[0].mxu0
  %v557 = vadd.f32 %v96, %v556
  %v558 = vpop.f32.mrb[0].mxu0
  %559 = vmatprep.mubr.bf16.mxu0 0
  %560 = vmatmul.mubr.bf16.gmra.mrb[0].mxu0 %v323
  %v561 = vpop.f32.mrb[0].mxu0
  %v562 = vadd.f32 %v96, %v561
  %v563 = vpop.f32.mrb[0].mxu0
  %v564 = vpop.f32.mrb[0].mxu0
  %v565 = vadd.f32 %v96, %v564
  %v566 = vpop.f32.mrb[0].mxu0
  %567 = vmatprep.mubr.bf16.mxu0 0
  %568 = vmatmul.mubr.bf16.gmra.mrb[0].mxu0 %v326
  %v569 = vpop.f32.mrb[0].mxu0
  %v570 = vadd.f32 %v96, %v569
  %v571 = vpop.f32.mrb[0].mxu0
  %v572 = vpop.f32.mrb[0].mxu0
  %v573 = vadd.f32 %v96, %v572
  %v574 = vpop.f32.mrb[0].mxu0
  %575 = vmatprep.mubr.bf16.mxu0 0
  %576 = vmatmul.mubr.bf16.gmra.mrb[0].mxu0 %v329
  %v577 = vpop.f32.mrb[0].mxu0
  %v578 = vadd.f32 %v96, %v577
  %v579 = vpop.f32.mrb[0].mxu0
  %v580 = vpop.f32.mrb[0].mxu0
  %v581 = vadd.f32 %v96, %v580
  %v582 = vpop.f32.mrb[0].mxu0
  %583 = vmatprep.mubr.bf16.mxu0 0
  %584 = vmatmul.mubr.bf16.gmra.mrb[0].mxu0 %v332
  %v585 = vpop.f32.mrb[0].mxu0
  %v586 = vadd.f32 %v96, %v585
  %v587 = vpop.f32.mrb[0].mxu0
  %v588 = vpop.f32.mrb[0].mxu0
  %v589 = vadd.f32 %v96, %v588
  %v590 = vpop.f32.mrb[0].mxu0
  %591 = vmatprep.mubr.bf16.mxu0 0
  %592 = vmatmul.mubr.bf16.gmra.mrb[0].mxu0 %v335
  %v593 = vpop.f32.mrb[0].mxu0
  %v594 = vadd.f32 %v96, %v593
  %v595 = vpop.f32.mrb[0].mxu0
  %v596 = vpop.f32.mrb[0].mxu0
  %v597 = vadd.f32 %v96, %v596
  %v598 = vpop.f32.mrb[0].mxu0
  %599 = vmatprep.mubr.bf16.mxu0 0
  %600 = vmatmul.mubr.bf16.gmra.mrb[0].mxu0 %v338
  %v601 = vpop.f32.mrb[0].mxu0
  %v602 = vadd.f32 %v96, %v601
  %v603 = vpop.f32.mrb[0].mxu0
  %v604 = vpop.f32.mrb[0].mxu0
  %v605 = vadd.f32 %v96, %v604
  %v606 = vpop.f32.mrb[0].mxu0
  %607 = vmatprep.mubr.bf16.mxu0 0
  %608 = vmatmul.mubr.bf16.gmra.mrb[0].mxu0 %v341
  %v609 = vpop.f32.mrb[0].mxu0
  %v610 = vadd.f32 %v96, %v609
  %v611 = vpop.f32.mrb[0].mxu0
  %v612 = vpop.f32.mrb[0].mxu0
  %v613 = vadd.f32 %v96, %v612
  %v614 = vpop.f32.mrb[0].mxu0
  %615 = vmatprep.mubr.bf16.mxu0 0
  %616 = vmatmul.mubr.bf16.gmra.mrb[0].mxu0 %v344
  %v617 = vpop.f32.mrb[0].mxu0
  %v618 = vadd.f32 %v96, %v617
  %v619 = vpop.f32.mrb[0].mxu0
  %v620 = vpop.f32.mrb[0].mxu0
  %v621 = vadd.f32 %v96, %v620
  %v622 = vpop.f32.mrb[0].mxu0
  %623 = vmatprep.mubr.bf16.mxu0 0
  %624 = vmatmul.mubr.bf16.gmra.mrb[0].mxu0 %v347
  %v625 = vpop.f32.mrb[0].mxu0
  %v626 = vadd.f32 %v96, %v625
  %v627 = vpop.f32.mrb[0].mxu0
  %v628 = vpop.f32.mrb[0].mxu0
  %v629 = vadd.f32 %v96, %v628
  %v630 = vpop.f32.mrb[0].mxu0
  %631 = vmatprep.mubr.bf16.mxu0 0
  %632 = vmatmul.mubr.bf16.gmra.mrb[0].mxu0 %v350
  %v633 = vpop.f32.mrb[0].mxu0
  %v634 = vadd.f32 %v96, %v633
  %v635 = vpop.f32.mrb[0].mxu0
  %v636 = vpop.f32.mrb[0].mxu0
  %v637 = vadd.f32 %v96, %v636
  %v638 = vpop.f32.mrb[0].mxu0
  %639 = vmatprep.mubr.bf16.mxu0 0
  %640 = vmatmul.mubr.bf16.gmra.mrb[0].mxu0 %v353
  %v641 = vpop.f32.mrb[0].mxu0
  %v642 = vadd.f32 %v96, %v641
  %v643 = vpop.f32.mrb[0].mxu0
  %v644 = vpop.f32.mrb[0].mxu0
  %v645 = vadd.f32 %v96, %v644
  %v646 = vpop.f32.mrb[0].mxu0
  %647 = vdwg.mxu0
  %v648 = vxor.u32 %v394, 2147483648
  %v649 = vxor.u32 %v397, 2147483648
  %v650 = vxor.u32 %v402, 2147483648
  %v651 = vxor.u32 %v405, 2147483648
  %v652 = vxor.u32 %v410, 2147483648
  %v653 = vxor.u32 %v413, 2147483648
  %v654 = vxor.u32 %v418, 2147483648
  %v655 = vxor.u32 %v421, 2147483648
  %v656 = vxor.u32 %v426, 2147483648
  %v657 = vxor.u32 %v429, 2147483648
  %v658 = vxor.u32 %v434, 2147483648
  %v659 = vxor.u32 %v437, 2147483648
  %v660 = vxor.u32 %v442, 2147483648
  %v661 = vxor.u32 %v445, 2147483648
  %v662 = vxor.u32 %v450, 2147483648
  %v663 = vxor.u32 %v453, 2147483648
  %v664 = vxor.u32 %v458, 2147483648
  %v665 = vxor.u32 %v461, 2147483648
  %v666 = vxor.u32 %v466, 2147483648
  %v667 = vxor.u32 %v469, 2147483648
  %v668 = vxor.u32 %v474, 2147483648
  %v669 = vxor.u32 %v477, 2147483648
  %v670 = vxor.u32 %v482, 2147483648
  %v671 = vxor.u32 %v485, 2147483648
  %v672 = vxor.u32 %v490, 2147483648
  %v673 = vxor.u32 %v493, 2147483648
  %v674 = vxor.u32 %v498, 2147483648
  %v675 = vxor.u32 %v501, 2147483648
  %v676 = vxor.u32 %v506, 2147483648
  %v677 = vxor.u32 %v509, 2147483648
  %v678 = vxor.u32 %v514, 2147483648
  %v679 = vxor.u32 %v517, 2147483648
  %v680 = vxor.u32 %v522, 2147483648
  %v681 = vxor.u32 %v525, 2147483648
  %v682 = vxor.u32 %v530, 2147483648
  %v683 = vxor.u32 %v533, 2147483648
  %v684 = vxor.u32 %v538, 2147483648
  %v685 = vxor.u32 %v541, 2147483648
  %v686 = vxor.u32 %v546, 2147483648
  %v687 = vxor.u32 %v549, 2147483648
  %v688 = vxor.u32 %v554, 2147483648
  %v689 = vxor.u32 %v557, 2147483648
  %v690 = vxor.u32 %v562, 2147483648
  %v691 = vxor.u32 %v565, 2147483648
  %v692 = vxor.u32 %v570, 2147483648
  %v693 = vxor.u32 %v573, 2147483648
  %v694 = vxor.u32 %v578, 2147483648
  %v695 = vxor.u32 %v581, 2147483648
  %v696 = vxor.u32 %v586, 2147483648
  %v697 = vxor.u32 %v589, 2147483648
  %v698 = vxor.u32 %v594, 2147483648
  %v699 = vxor.u32 %v597, 2147483648
  %v700 = vxor.u32 %v602, 2147483648
  %v701 = vxor.u32 %v605, 2147483648
  %v702 = vxor.u32 %v610, 2147483648
  %v703 = vxor.u32 %v613, 2147483648
  %v704 = vxor.u32 %v618, 2147483648
  %v705 = vxor.u32 %v621, 2147483648
  %v706 = vxor.u32 %v626, 2147483648
  %v707 = vxor.u32 %v629, 2147483648
  %v708 = vxor.u32 %v634, 2147483648
  %v709 = vxor.u32 %v637, 2147483648
  %v710 = vxor.u32 %v642, 2147483648
  %v711 = vxor.u32 %v645, 2147483648
  %v712 = vmul.f32 %v648, 1.442695
  %v713 = vpow.pop %v712
  %v714 = vmul.f32 %v649, 1.442695
  %v715 = vpow.pop %v714
  %v716 = vmul.f32 %v650, 1.442695
  %v717 = vpow.pop %v716
  %v718 = vmul.f32 %v651, 1.442695
  %v719 = vpow.pop %v718
  %v720 = vmul.f32 %v652, 1.442695
  %v721 = vpow.pop %v720
  %v722 = vmul.f32 %v653, 1.442695
  %v723 = vpow.pop %v722
  %v724 = vmul.f32 %v654, 1.442695
  %v725 = vpow.pop %v724
  %v726 = vmul.f32 %v655, 1.442695
  %v727 = vpow.pop %v726
  %v728 = vmul.f32 %v656, 1.442695
  %v729 = vpow.pop %v728
  %v730 = vmul.f32 %v657, 1.442695
  %v731 = vpow.pop %v730
  %v732 = vmul.f32 %v658, 1.442695
  %v733 = vpow.pop %v732
  %v734 = vmul.f32 %v659, 1.442695
  %v735 = vpow.pop %v734
  %v736 = vmul.f32 %v660, 1.442695
  %v737 = vpow.pop %v736
  %v738 = vmul.f32 %v661, 1.442695
  %v739 = vpow.pop %v738
  %v740 = vmul.f32 %v662, 1.442695
  %v741 = vpow.pop %v740
  %v742 = vmul.f32 %v663, 1.442695
  %v743 = vpow.pop %v742
  %v744 = vmul.f32 %v664, 1.442695
  %v745 = vpow.pop %v744
  %v746 = vmul.f32 %v665, 1.442695
  %v747 = vpow.pop %v746
  %v748 = vmul.f32 %v666, 1.442695
  %v749 = vpow.pop %v748
  %v750 = vmul.f32 %v667, 1.442695
  %v751 = vpow.pop %v750
  %v752 = vmul.f32 %v668, 1.442695
  %v753 = vpow.pop %v752
  %v754 = vmul.f32 %v669, 1.442695
  %v755 = vpow.pop %v754
  %v756 = vmul.f32 %v670, 1.442695
  %v757 = vpow.pop %v756
  %v758 = vmul.f32 %v671, 1.442695
  %v759 = vpow.pop %v758
  %v760 = vmul.f32 %v672, 1.442695
  %v761 = vpow.pop %v760
  %v762 = vmul.f32 %v673, 1.442695
  %v763 = vpow.pop %v762
  %v764 = vmul.f32 %v674, 1.442695
  %v765 = vpow.pop %v764
  %v766 = vmul.f32 %v675, 1.442695
  %v767 = vpow.pop %v766
  %v768 = vmul.f32 %v676, 1.442695
  %v769 = vpow.pop %v768
  %v770 = vmul.f32 %v677, 1.442695
  %v771 = vpow.pop %v770
  %v772 = vmul.f32 %v678, 1.442695
  %v773 = vpow.pop %v772
  %v774 = vmul.f32 %v679, 1.442695
  %v775 = vpow.pop %v774
  %v776 = vmul.f32 %v680, 1.442695
  %v777 = vpow.pop %v776
  %v778 = vmul.f32 %v681, 1.442695
  %v779 = vpow.pop %v778
  %v780 = vmul.f32 %v682, 1.442695
  %v781 = vpow.pop %v780
  %v782 = vmul.f32 %v683, 1.442695
  %v783 = vpow.pop %v782
  %v784 = vmul.f32 %v684, 1.442695
  %v785 = vpow.pop %v784
  %v786 = vmul.f32 %v685, 1.442695
  %v787 = vpow.pop %v786
  %v788 = vmul.f32 %v686, 1.442695
  %v789 = vpow.pop %v788
  %v790 = vmul.f32 %v687, 1.442695
  %v791 = vpow.pop %v790
  %v792 = vmul.f32 %v688, 1.442695
  %v793 = vpow.pop %v792
  %v794 = vmul.f32 %v689, 1.442695
  %v795 = vpow.pop %v794
  %v796 = vmul.f32 %v690, 1.442695
  %v797 = vpow.pop %v796
  %v798 = vmul.f32 %v691, 1.442695
  %v799 = vpow.pop %v798
  %v800 = vmul.f32 %v692, 1.442695
  %v801 = vpow.pop %v800
  %v802 = vmul.f32 %v693, 1.442695
  %v803 = vpow.pop %v802
  %v804 = vmul.f32 %v694, 1.442695
  %v805 = vpow.pop %v804
  %v806 = vmul.f32 %v695, 1.442695
  %v807 = vpow.pop %v806
  %v808 = vmul.f32 %v696, 1.442695
  %v809 = vpow.pop %v808
  %v810 = vmul.f32 %v697, 1.442695
  %v811 = vpow.pop %v810
  %v812 = vmul.f32 %v698, 1.442695
  %v813 = vpow.pop %v812
  %v814 = vmul.f32 %v699, 1.442695
  %v815 = vpow.pop %v814
  %v816 = vmul.f32 %v700, 1.442695
  %v817 = vpow.pop %v816
  %v818 = vmul.f32 %v701, 1.442695
  %v819 = vpow.pop %v818
  %v820 = vmul.f32 %v702, 1.442695
  %v821 = vpow.pop %v820
  %v822 = vmul.f32 %v703, 1.442695
  %v823 = vpow.pop %v822
  %v824 = vmul.f32 %v704, 1.442695
  %v825 = vpow.pop %v824
  %v826 = vmul.f32 %v705, 1.442695
  %v827 = vpow.pop %v826
  %v828 = vmul.f32 %v706, 1.442695
  %v829 = vpow.pop %v828
  %v830 = vmul.f32 %v707, 1.442695
  %v831 = vpow.pop %v830
  %v832 = vmul.f32 %v708, 1.442695
  %v833 = vpow.pop %v832
  %v834 = vmul.f32 %v709, 1.442695
  %v835 = vpow.pop %v834
  %v836 = vmul.f32 %v710, 1.442695
  %v837 = vpow.pop %v836
  %v838 = vmul.f32 %v711, 1.442695
  %v839 = vpow.pop %v838
  %v840 = vadd.f32 %v713, 1.0
  %v841 = vadd.f32 %v715, 1.0
  %v842 = vadd.f32 %v717, 1.0
  %v843 = vadd.f32 %v719, 1.0
  %v844 = vadd.f32 %v721, 1.0
  %v845 = vadd.f32 %v723, 1.0
  %v846 = vadd.f32 %v725, 1.0
  %v847 = vadd.f32 %v727, 1.0
  %v848 = vadd.f32 %v729, 1.0
  %v849 = vadd.f32 %v731, 1.0
  %v850 = vadd.f32 %v733, 1.0
  %v851 = vadd.f32 %v735, 1.0
  %v852 = vadd.f32 %v737, 1.0
  %v853 = vadd.f32 %v739, 1.0
  %v854 = vadd.f32 %v741, 1.0
  %v855 = vadd.f32 %v743, 1.0
  %v856 = vadd.f32 %v745, 1.0
  %v857 = vadd.f32 %v747, 1.0
  %v858 = vadd.f32 %v749, 1.0
  %v859 = vadd.f32 %v751, 1.0
  %v860 = vadd.f32 %v753, 1.0
  %v861 = vadd.f32 %v755, 1.0
  %v862 = vadd.f32 %v757, 1.0
  %v863 = vadd.f32 %v759, 1.0
  %v864 = vadd.f32 %v761, 1.0
  %v865 = vadd.f32 %v763, 1.0
  %v866 = vadd.f32 %v765, 1.0
  %v867 = vadd.f32 %v767, 1.0
  %v868 = vadd.f32 %v769, 1.0
  %v869 = vadd.f32 %v771, 1.0
  %v870 = vadd.f32 %v773, 1.0
  %v871 = vadd.f32 %v775, 1.0
  %v872 = vadd.f32 %v777, 1.0
  %v873 = vadd.f32 %v779, 1.0
  %v874 = vadd.f32 %v781, 1.0
  %v875 = vadd.f32 %v783, 1.0
  %v876 = vadd.f32 %v785, 1.0
  %v877 = vadd.f32 %v787, 1.0
  %v878 = vadd.f32 %v789, 1.0
  %v879 = vadd.f32 %v791, 1.0
  %v880 = vadd.f32 %v793, 1.0
  %v881 = vadd.f32 %v795, 1.0
  %v882 = vadd.f32 %v797, 1.0
  %v883 = vadd.f32 %v799, 1.0
  %v884 = vadd.f32 %v801, 1.0
  %v885 = vadd.f32 %v803, 1.0
  %v886 = vadd.f32 %v805, 1.0
  %v887 = vadd.f32 %v807, 1.0
  %v888 = vadd.f32 %v809, 1.0
  %v889 = vadd.f32 %v811, 1.0
  %v890 = vadd.f32 %v813, 1.0
  %v891 = vadd.f32 %v815, 1.0
  %v892 = vadd.f32 %v817, 1.0
  %v893 = vadd.f32 %v819, 1.0
  %v894 = vadd.f32 %v821, 1.0
  %v895 = vadd.f32 %v823, 1.0
  %v896 = vadd.f32 %v825, 1.0
  %v897 = vadd.f32 %v827, 1.0
  %v898 = vadd.f32 %v829, 1.0
  %v899 = vadd.f32 %v831, 1.0
  %v900 = vadd.f32 %v833, 1.0
  %v901 = vadd.f32 %v835, 1.0
  %v902 = vadd.f32 %v837, 1.0
  %v903 = vadd.f32 %v839, 1.0
  %v904 = vrcp.pop %v840
  %v905 = vmul.f32 1.0, %v904
  %v906 = vrcp.pop %v841
  %v907 = vmul.f32 1.0, %v906
  %v908 = vrcp.pop %v842
  %v909 = vmul.f32 1.0, %v908
  %v910 = vrcp.pop %v843
  %v911 = vmul.f32 1.0, %v910
  %v912 = vrcp.pop %v844
  %v913 = vmul.f32 1.0, %v912
  %v914 = vrcp.pop %v845
  %v915 = vmul.f32 1.0, %v914
  %v916 = vrcp.pop %v846
  %v917 = vmul.f32 1.0, %v916
  %v918 = vrcp.pop %v847
  %v919 = vmul.f32 1.0, %v918
  %v920 = vrcp.pop %v848
  %v921 = vmul.f32 1.0, %v920
  %v922 = vrcp.pop %v849
  %v923 = vmul.f32 1.0, %v922
  %v924 = vrcp.pop %v850
  %v925 = vmul.f32 1.0, %v924
  %v926 = vrcp.pop %v851
  %v927 = vmul.f32 1.0, %v926
  %v928 = vrcp.pop %v852
  %v929 = vmul.f32 1.0, %v928
  %v930 = vrcp.pop %v853
  %v931 = vmul.f32 1.0, %v930
  %v932 = vrcp.pop %v854
  %v933 = vmul.f32 1.0, %v932
  %v934 = vrcp.pop %v855
  %v935 = vmul.f32 1.0, %v934
  %v936 = vrcp.pop %v856
  %v937 = vmul.f32 1.0, %v936
  %v938 = vrcp.pop %v857
  %v939 = vmul.f32 1.0, %v938
  %v940 = vrcp.pop %v858
  %v941 = vmul.f32 1.0, %v940
  %v942 = vrcp.pop %v859
  %v943 = vmul.f32 1.0, %v942
  %v944 = vrcp.pop %v860
  %v945 = vmul.f32 1.0, %v944
  %v946 = vrcp.pop %v861
  %v947 = vmul.f32 1.0, %v946
  %v948 = vrcp.pop %v862
  %v949 = vmul.f32 1.0, %v948
  %v950 = vrcp.pop %v863
  %v951 = vmul.f32 1.0, %v950
  %v952 = vrcp.pop %v864
  %v953 = vmul.f32 1.0, %v952
  %v954 = vrcp.pop %v865
  %v955 = vmul.f32 1.0, %v954
  %v956 = vrcp.pop %v866
  %v957 = vmul.f32 1.0, %v956
  %v958 = vrcp.pop %v867
  %v959 = vmul.f32 1.0, %v958
  %v960 = vrcp.pop %v868
  %v961 = vmul.f32 1.0, %v960
  %v962 = vrcp.pop %v869
  %v963 = vmul.f32 1.0, %v962
  %v964 = vrcp.pop %v870
  %v965 = vmul.f32 1.0, %v964
  %v966 = vrcp.pop %v871
  %v967 = vmul.f32 1.0, %v966
  %v968 = vrcp.pop %v872
  %v969 = vmul.f32 1.0, %v968
  %v970 = vrcp.pop %v873
  %v971 = vmul.f32 1.0, %v970
  %v972 = vrcp.pop %v874
  %v973 = vmul.f32 1.0, %v972
  %v974 = vrcp.pop %v875
  %v975 = vmul.f32 1.0, %v974
  %v976 = vrcp.pop %v876
  %v977 = vmul.f32 1.0, %v976
  %v978 = vrcp.pop %v877
  %v979 = vmul.f32 1.0, %v978
  %v980 = vrcp.pop %v878
  %v981 = vmul.f32 1.0, %v980
  %v982 = vrcp.pop %v879
  %v983 = vmul.f32 1.0, %v982
  %v984 = vrcp.pop %v880
  %v985 = vmul.f32 1.0, %v984
  %v986 = vrcp.pop %v881
  %v987 = vmul.f32 1.0, %v986
  %v988 = vrcp.pop %v882
  %v989 = vmul.f32 1.0, %v988
  %v990 = vrcp.pop %v883
  %v991 = vmul.f32 1.0, %v990
  %v992 = vrcp.pop %v884
  %v993 = vmul.f32 1.0, %v992
  %v994 = vrcp.pop %v885
  %v995 = vmul.f32 1.0, %v994
  %v996 = vrcp.pop %v886
  %v997 = vmul.f32 1.0, %v996
  %v998 = vrcp.pop %v887
  %v999 = vmul.f32 1.0, %v998
  %v1000 = vrcp.pop %v888
  %v1001 = vmul.f32 1.0, %v1000
  %v1002 = vrcp.pop %v889
  %v1003 = vmul.f32 1.0, %v1002
  %v1004 = vrcp.pop %v890
  %v1005 = vmul.f32 1.0, %v1004
  %v1006 = vrcp.pop %v891
  %v1007 = vmul.f32 1.0, %v1006
  %v1008 = vrcp.pop %v892
  %v1009 = vmul.f32 1.0, %v1008
  %v1010 = vrcp.pop %v893
  %v1011 = vmul.f32 1.0, %v1010
  %v1012 = vrcp.pop %v894
  %v1013 = vmul.f32 1.0, %v1012
  %v1014 = vrcp.pop %v895
  %v1015 = vmul.f32 1.0, %v1014
  %v1016 = vrcp.pop %v896
  %v1017 = vmul.f32 1.0, %v1016
  %v1018 = vrcp.pop %v897
  %v1019 = vmul.f32 1.0, %v1018
  %v1020 = vrcp.pop %v898
  %v1021 = vmul.f32 1.0, %v1020
  %v1022 = vrcp.pop %v899
  %v1023 = vmul.f32 1.0, %v1022
  %v1024 = vrcp.pop %v900
  %v1025 = vmul.f32 1.0, %v1024
  %v1026 = vrcp.pop %v901
  %v1027 = vmul.f32 1.0, %v1026
  %v1028 = vrcp.pop %v902
  %v1029 = vmul.f32 1.0, %v1028
  %v1030 = vrcp.pop %v903
  %v1031 = vmul.f32 1.0, %v1030
  %v1032 = vmul.f32 %v394, %v905
  %v1033 = vmul.f32 %v397, %v907
  %v1034 = vmul.f32 %v402, %v909
  %v1035 = vmul.f32 %v405, %v911
  %v1036 = vmul.f32 %v410, %v913
  %v1037 = vmul.f32 %v413, %v915
  %v1038 = vmul.f32 %v418, %v917
  %v1039 = vmul.f32 %v421, %v919
  %v1040 = vmul.f32 %v426, %v921
  %v1041 = vmul.f32 %v429, %v923
  %v1042 = vmul.f32 %v434, %v925
  %v1043 = vmul.f32 %v437, %v927
  %v1044 = vmul.f32 %v442, %v929
  %v1045 = vmul.f32 %v445, %v931
  %v1046 = vmul.f32 %v450, %v933
  %v1047 = vmul.f32 %v453, %v935
  %v1048 = vmul.f32 %v458, %v937
  %v1049 = vmul.f32 %v461, %v939
  %v1050 = vmul.f32 %v466, %v941
  %v1051 = vmul.f32 %v469, %v943
  %v1052 = vmul.f32 %v474, %v945
  %v1053 = vmul.f32 %v477, %v947
  %v1054 = vmul.f32 %v482, %v949
  %v1055 = vmul.f32 %v485, %v951
  %v1056 = vmul.f32 %v490, %v953
  %v1057 = vmul.f32 %v493, %v955
  %v1058 = vmul.f32 %v498, %v957
  %v1059 = vmul.f32 %v501, %v959
  %v1060 = vmul.f32 %v506, %v961
  %v1061 = vmul.f32 %v509, %v963
  %v1062 = vmul.f32 %v514, %v965
  %v1063 = vmul.f32 %v517, %v967
  %v1064 = vmul.f32 %v522, %v969
  %v1065 = vmul.f32 %v525, %v971
  %v1066 = vmul.f32 %v530, %v973
  %v1067 = vmul.f32 %v533, %v975
  %v1068 = vmul.f32 %v538, %v977
  %v1069 = vmul.f32 %v541, %v979
  %v1070 = vmul.f32 %v546, %v981
  %v1071 = vmul.f32 %v549, %v983
  %v1072 = vmul.f32 %v554, %v985
  %v1073 = vmul.f32 %v557, %v987
  %v1074 = vmul.f32 %v562, %v989
  %v1075 = vmul.f32 %v565, %v991
  %v1076 = vmul.f32 %v570, %v993
  %v1077 = vmul.f32 %v573, %v995
  %v1078 = vmul.f32 %v578, %v997
  %v1079 = vmul.f32 %v581, %v999
  %v1080 = vmul.f32 %v586, %v1001
  %v1081 = vmul.f32 %v589, %v1003
  %v1082 = vmul.f32 %v594, %v1005
  %v1083 = vmul.f32 %v597, %v1007
  %v1084 = vmul.f32 %v602, %v1009
  %v1085 = vmul.f32 %v605, %v1011
  %v1086 = vmul.f32 %v610, %v1013
  %v1087 = vmul.f32 %v613, %v1015
  %v1088 = vmul.f32 %v618, %v1017
  %v1089 = vmul.f32 %v621, %v1019
  %v1090 = vmul.f32 %v626, %v1021
  %v1091 = vmul.f32 %v629, %v1023
  %v1092 = vmul.f32 %v634, %v1025
  %v1093 = vmul.f32 %v637, %v1027
  %v1094 = vmul.f32 %v642, %v1029
  %v1095 = vmul.f32 %v645, %v1031
  %v1096 = vpack.c.bf16 %v1033, %v1032
  %v1097 = vpack.c.bf16 %v1035, %v1034
  %v1098 = vpack.c.bf16 %v1037, %v1036
  %v1099 = vpack.c.bf16 %v1039, %v1038
  %v1100 = vpack.c.bf16 %v1041, %v1040
  %v1101 = vpack.c.bf16 %v1043, %v1042
  %v1102 = vpack.c.bf16 %v1045, %v1044
  %v1103 = vpack.c.bf16 %v1047, %v1046
  %v1104 = vpack.c.bf16 %v1049, %v1048
  %v1105 = vpack.c.bf16 %v1051, %v1050
  %v1106 = vpack.c.bf16 %v1053, %v1052
  %v1107 = vpack.c.bf16 %v1055, %v1054
  %v1108 = vpack.c.bf16 %v1057, %v1056
  %v1109 = vpack.c.bf16 %v1059, %v1058
  %v1110 = vpack.c.bf16 %v1061, %v1060
  %v1111 = vpack.c.bf16 %v1063, %v1062
  %v1112 = vpack.c.bf16 %v1065, %v1064
  %v1113 = vpack.c.bf16 %v1067, %v1066
  %v1114 = vpack.c.bf16 %v1069, %v1068
  %v1115 = vpack.c.bf16 %v1071, %v1070
  %v1116 = vpack.c.bf16 %v1073, %v1072
  %v1117 = vpack.c.bf16 %v1075, %v1074
  %v1118 = vpack.c.bf16 %v1077, %v1076
  %v1119 = vpack.c.bf16 %v1079, %v1078
  %v1120 = vpack.c.bf16 %v1081, %v1080
  %v1121 = vpack.c.bf16 %v1083, %v1082
  %v1122 = vpack.c.bf16 %v1085, %v1084
  %v1123 = vpack.c.bf16 %v1087, %v1086
  %v1124 = vpack.c.bf16 %v1089, %v1088
  %v1125 = vpack.c.bf16 %v1091, %v1090
  %v1126 = vpack.c.bf16 %v1093, %v1092
  %v1127 = vpack.c.bf16 %v1095, %v1094
  %v1128 = vld [vmem:[%s3] sm:$0x3]
  %v1130 = vsel %vm258, %v1096, 0
  %v1133 = vsel %vm258, %v1097, 0
  %v1136 = vsel %vm258, %v1098, 0
  %v1139 = vsel %vm258, %v1099, 0
  %v1142 = vsel %vm258, %v1100, 0
  %v1145 = vsel %vm258, %v1101, 0
  %v1148 = vsel %vm258, %v1102, 0
  %v1151 = vsel %vm258, %v1103, 0
  %v1154 = vsel %vm258, %v1104, 0
  %v1157 = vsel %vm258, %v1105, 0
  %v1160 = vsel %vm258, %v1106, 0
  %v1163 = vsel %vm258, %v1107, 0
  %v1166 = vsel %vm258, %v1108, 0
  %v1169 = vsel %vm258, %v1109, 0
  %v1172 = vsel %vm258, %v1110, 0
  %v1175 = vsel %vm258, %v1111, 0
  %v1178 = vsel %vm258, %v1112, 0
  %v1181 = vsel %vm258, %v1113, 0
  %v1184 = vsel %vm258, %v1114, 0
  %v1187 = vsel %vm258, %v1115, 0
  %v1190 = vsel %vm258, %v1116, 0
  %v1193 = vsel %vm258, %v1117, 0
  %v1196 = vsel %vm258, %v1118, 0
  %v1199 = vsel %vm258, %v1119, 0
  %v1202 = vsel %vm258, %v1120, 0
  %v1205 = vsel %vm258, %v1121, 0
  %v1208 = vsel %vm258, %v1122, 0
  %v1211 = vsel %vm258, %v1123, 0
  %v1214 = vsel %vm258, %v1124, 0
  %v1217 = vsel %vm258, %v1125, 0
  %v1220 = vsel %vm258, %v1126, 0
  %v1223 = vsel %vm258, %v1127, 0
  %v1226 = vsel %vm355, %v1128, 0
  %1228 = vmatprep.subr.bf16.mxu0 0
  %1229 = vmatpush1.bf16.msra.mxu0 %v1226
  %1230 = vmatprep.subr.bf16.mxu0 0
  %1231 = vmatpush1.bf16.msra.mxu0 0
  %1232 = vmatprep.subr.bf16.mxu0 0
  %1233 = vmatpush1.bf16.msra.mxu0 0
  %1234 = vmatprep.subr.bf16.mxu0 0
  %1235 = vmatpush1.bf16.msra.mxu0 0
  %1236 = vmatprep.subr.bf16.mxu0 0
  %1237 = vmatpush1.bf16.msra.mxu0 0
  %1238 = vmatprep.subr.bf16.mxu0 0
  %1239 = vmatpush1.bf16.msra.mxu0 0
  %1240 = vmatprep.subr.bf16.mxu0 0
  %1241 = vmatpush1.bf16.msra.mxu0 0
  %1242 = vmatprep.subr.bf16.mxu0 0
  %1243 = vmatpush1.bf16.msra.mxu0 0
  %1244 = vmatprep.subr.bf16.mxu0 0
  %1245 = vmatpush1.bf16.msra.mxu0 0
  %1246 = vmatprep.subr.bf16.mxu0 0
  %1247 = vmatpush1.bf16.msra.mxu0 0
  %1248 = vmatprep.subr.bf16.mxu0 0
  %1249 = vmatpush1.bf16.msra.mxu0 0
  %1250 = vmatprep.subr.bf16.mxu0 0
  %1251 = vmatpush1.bf16.msra.mxu0 0
  %1252 = vmatprep.subr.bf16.mxu0 0
  %1253 = vmatpush1.bf16.msra.mxu0 0
  %1254 = vmatprep.subr.bf16.mxu0 0
  %1255 = vmatpush1.bf16.msra.mxu0 0
  %1256 = vmatprep.subr.bf16.mxu0 0
  %1257 = vmatpush1.bf16.msra.mxu0 0
  %1258 = vmatprep.subr.bf16.mxu0 0
  %1259 = vmatpush1.bf16.msra.mxu0 0
  %1260 = vmatprep.mubr.bf16.mxu0 0
  %1261 = vmatmul.mubr.bf16.gmra.mrb[0].mxu0 %v1130
  %v1262 = vpop.f32.mrb[0].mxu0
  %v1263 = vadd.f32 0.0, %v1262
  %v1264 = vpop.f32.mrb[0].mxu0
  %v1265 = vpop.f32.mrb[0].mxu0
  %v1266 = vadd.f32 0.0, %v1265
  %v1267 = vpop.f32.mrb[0].mxu0
  %1268 = vmatprep.mubr.bf16.mxu0 0
  %1269 = vmatmul.mubr.bf16.gmra.mrb[0].mxu0 %v1133
  %v1270 = vpop.f32.mrb[0].mxu0
  %v1271 = vadd.f32 0.0, %v1270
  %v1272 = vpop.f32.mrb[0].mxu0
  %v1273 = vpop.f32.mrb[0].mxu0
  %v1274 = vadd.f32 0.0, %v1273
  %v1275 = vpop.f32.mrb[0].mxu0
  %1276 = vmatprep.mubr.bf16.mxu0 0
  %1277 = vmatmul.mubr.bf16.gmra.mrb[0].mxu0 %v1136
  %v1278 = vpop.f32.mrb[0].mxu0
  %v1279 = vadd.f32 0.0, %v1278
  %v1280 = vpop.f32.mrb[0].mxu0
  %v1281 = vpop.f32.mrb[0].mxu0
  %v1282 = vadd.f32 0.0, %v1281
  %v1283 = vpop.f32.mrb[0].mxu0
  %1284 = vmatprep.mubr.bf16.mxu0 0
  %1285 = vmatmul.mubr.bf16.gmra.mrb[0].mxu0 %v1139
  %v1286 = vpop.f32.mrb[0].mxu0
  %v1287 = vadd.f32 0.0, %v1286
  %v1288 = vpop.f32.mrb[0].mxu0
  %v1289 = vpop.f32.mrb[0].mxu0
  %v1290 = vadd.f32 0.0, %v1289
  %v1291 = vpop.f32.mrb[0].mxu0
  %1292 = vmatprep.mubr.bf16.mxu0 0
  %1293 = vmatmul.mubr.bf16.gmra.mrb[0].mxu0 %v1142
  %v1294 = vpop.f32.mrb[0].mxu0
  %v1295 = vadd.f32 0.0, %v1294
  %v1296 = vpop.f32.mrb[0].mxu0
  %v1297 = vpop.f32.mrb[0].mxu0
  %v1298 = vadd.f32 0.0, %v1297
  %v1299 = vpop.f32.mrb[0].mxu0
  %1300 = vmatprep.mubr.bf16.mxu0 0
  %1301 = vmatmul.mubr.bf16.gmra.mrb[0].mxu0 %v1145
  %v1302 = vpop.f32.mrb[0].mxu0
  %v1303 = vadd.f32 0.0, %v1302
  %v1304 = vpop.f32.mrb[0].mxu0
  %v1305 = vpop.f32.mrb[0].mxu0
  %v1306 = vadd.f32 0.0, %v1305
  %v1307 = vpop.f32.mrb[0].mxu0
  %1308 = vmatprep.mubr.bf16.mxu0 0
  %1309 = vmatmul.mubr.bf16.gmra.mrb[0].mxu0 %v1148
  %v1310 = vpop.f32.mrb[0].mxu0
  %v1311 = vadd.f32 0.0, %v1310
  %v1312 = vpop.f32.mrb[0].mxu0
  %v1313 = vpop.f32.mrb[0].mxu0
  %v1314 = vadd.f32 0.0, %v1313
  %v1315 = vpop.f32.mrb[0].mxu0
  %1316 = vmatprep.mubr.bf16.mxu0 0
  %1317 = vmatmul.mubr.bf16.gmra.mrb[0].mxu0 %v1151
  %v1318 = vpop.f32.mrb[0].mxu0
  %v1319 = vadd.f32 0.0, %v1318
  %v1320 = vpop.f32.mrb[0].mxu0
  %v1321 = vpop.f32.mrb[0].mxu0
  %v1322 = vadd.f32 0.0, %v1321
  %v1323 = vpop.f32.mrb[0].mxu0
  %1324 = vmatprep.mubr.bf16.mxu0 0
  %1325 = vmatmul.mubr.bf16.gmra.mrb[0].mxu0 %v1154
  %v1326 = vpop.f32.mrb[0].mxu0
  %v1327 = vadd.f32 0.0, %v1326
  %v1328 = vpop.f32.mrb[0].mxu0
  %v1329 = vpop.f32.mrb[0].mxu0
  %v1330 = vadd.f32 0.0, %v1329
  %v1331 = vpop.f32.mrb[0].mxu0
  %1332 = vmatprep.mubr.bf16.mxu0 0
  %1333 = vmatmul.mubr.bf16.gmra.mrb[0].mxu0 %v1157
  %v1334 = vpop.f32.mrb[0].mxu0
  %v1335 = vadd.f32 0.0, %v1334
  %v1336 = vpop.f32.mrb[0].mxu0
  %v1337 = vpop.f32.mrb[0].mxu0
  %v1338 = vadd.f32 0.0, %v1337
  %v1339 = vpop.f32.mrb[0].mxu0
  %1340 = vmatprep.mubr.bf16.mxu0 0
  %1341 = vmatmul.mubr.bf16.gmra.mrb[0].mxu0 %v1160
  %v1342 = vpop.f32.mrb[0].mxu0
  %v1343 = vadd.f32 0.0, %v1342
  %v1344 = vpop.f32.mrb[0].mxu0
  %v1345 = vpop.f32.mrb[0].mxu0
  %v1346 = vadd.f32 0.0, %v1345
  %v1347 = vpop.f32.mrb[0].mxu0
  %1348 = vmatprep.mubr.bf16.mxu0 0
  %1349 = vmatmul.mubr.bf16.gmra.mrb[0].mxu0 %v1163
  %v1350 = vpop.f32.mrb[0].mxu0
  %v1351 = vadd.f32 0.0, %v1350
  %v1352 = vpop.f32.mrb[0].mxu0
  %v1353 = vpop.f32.mrb[0].mxu0
  %v1354 = vadd.f32 0.0, %v1353
  %v1355 = vpop.f32.mrb[0].mxu0
  %1356 = vmatprep.mubr.bf16.mxu0 0
  %1357 = vmatmul.mubr.bf16.gmra.mrb[0].mxu0 %v1166
  %v1358 = vpop.f32.mrb[0].mxu0
  %v1359 = vadd.f32 0.0, %v1358
  %v1360 = vpop.f32.mrb[0].mxu0
  %v1361 = vpop.f32.mrb[0].mxu0
  %v1362 = vadd.f32 0.0, %v1361
  %v1363 = vpop.f32.mrb[0].mxu0
  %1364 = vmatprep.mubr.bf16.mxu0 0
  %1365 = vmatmul.mubr.bf16.gmra.mrb[0].mxu0 %v1169
  %v1366 = vpop.f32.mrb[0].mxu0
  %v1367 = vadd.f32 0.0, %v1366
  %v1368 = vpop.f32.mrb[0].mxu0
  %v1369 = vpop.f32.mrb[0].mxu0
  %v1370 = vadd.f32 0.0, %v1369
  %v1371 = vpop.f32.mrb[0].mxu0
  %1372 = vmatprep.mubr.bf16.mxu0 0
  %1373 = vmatmul.mubr.bf16.gmra.mrb[0].mxu0 %v1172
  %v1374 = vpop.f32.mrb[0].mxu0
  %v1375 = vadd.f32 0.0, %v1374
  %v1376 = vpop.f32.mrb[0].mxu0
  %v1377 = vpop.f32.mrb[0].mxu0
  %v1378 = vadd.f32 0.0, %v1377
  %v1379 = vpop.f32.mrb[0].mxu0
  %1380 = vmatprep.mubr.bf16.mxu0 0
  %1381 = vmatmul.mubr.bf16.gmra.mrb[0].mxu0 %v1175
  %v1382 = vpop.f32.mrb[0].mxu0
  %v1383 = vadd.f32 0.0, %v1382
  %v1384 = vpop.f32.mrb[0].mxu0
  %v1385 = vpop.f32.mrb[0].mxu0
  %v1386 = vadd.f32 0.0, %v1385
  %v1387 = vpop.f32.mrb[0].mxu0
  %1388 = vmatprep.mubr.bf16.mxu0 0
  %1389 = vmatmul.mubr.bf16.gmra.mrb[0].mxu0 %v1178
  %v1390 = vpop.f32.mrb[0].mxu0
  %v1391 = vadd.f32 0.0, %v1390
  %v1392 = vpop.f32.mrb[0].mxu0
  %v1393 = vpop.f32.mrb[0].mxu0
  %v1394 = vadd.f32 0.0, %v1393
  %v1395 = vpop.f32.mrb[0].mxu0
  %1396 = vmatprep.mubr.bf16.mxu0 0
  %1397 = vmatmul.mubr.bf16.gmra.mrb[0].mxu0 %v1181
  %v1398 = vpop.f32.mrb[0].mxu0
  %v1399 = vadd.f32 0.0, %v1398
  %v1400 = vpop.f32.mrb[0].mxu0
  %v1401 = vpop.f32.mrb[0].mxu0
  %v1402 = vadd.f32 0.0, %v1401
  %v1403 = vpop.f32.mrb[0].mxu0
  %1404 = vmatprep.mubr.bf16.mxu0 0
  %1405 = vmatmul.mubr.bf16.gmra.mrb[0].mxu0 %v1184
  %v1406 = vpop.f32.mrb[0].mxu0
  %v1407 = vadd.f32 0.0, %v1406
  %v1408 = vpop.f32.mrb[0].mxu0
  %v1409 = vpop.f32.mrb[0].mxu0
  %v1410 = vadd.f32 0.0, %v1409
  %v1411 = vpop.f32.mrb[0].mxu0
  %1412 = vmatprep.mubr.bf16.mxu0 0
  %1413 = vmatmul.mubr.bf16.gmra.mrb[0].mxu0 %v1187
  %v1414 = vpop.f32.mrb[0].mxu0
  %v1415 = vadd.f32 0.0, %v1414
  %v1416 = vpop.f32.mrb[0].mxu0
  %v1417 = vpop.f32.mrb[0].mxu0
  %v1418 = vadd.f32 0.0, %v1417
  %v1419 = vpop.f32.mrb[0].mxu0
  %1420 = vmatprep.mubr.bf16.mxu0 0
  %1421 = vmatmul.mubr.bf16.gmra.mrb[0].mxu0 %v1190
  %v1422 = vpop.f32.mrb[0].mxu0
  %v1423 = vadd.f32 0.0, %v1422
  %v1424 = vpop.f32.mrb[0].mxu0
  %v1425 = vpop.f32.mrb[0].mxu0
  %v1426 = vadd.f32 0.0, %v1425
  %v1427 = vpop.f32.mrb[0].mxu0
  %1428 = vmatprep.mubr.bf16.mxu0 0
  %1429 = vmatmul.mubr.bf16.gmra.mrb[0].mxu0 %v1193
  %v1430 = vpop.f32.mrb[0].mxu0
  %v1431 = vadd.f32 0.0, %v1430
  %v1432 = vpop.f32.mrb[0].mxu0
  %v1433 = vpop.f32.mrb[0].mxu0
  %v1434 = vadd.f32 0.0, %v1433
  %v1435 = vpop.f32.mrb[0].mxu0
  %1436 = vmatprep.mubr.bf16.mxu0 0
  %1437 = vmatmul.mubr.bf16.gmra.mrb[0].mxu0 %v1196
  %v1438 = vpop.f32.mrb[0].mxu0
  %v1439 = vadd.f32 0.0, %v1438
  %v1440 = vpop.f32.mrb[0].mxu0
  %v1441 = vpop.f32.mrb[0].mxu0
  %v1442 = vadd.f32 0.0, %v1441
  %v1443 = vpop.f32.mrb[0].mxu0
  %1444 = vmatprep.mubr.bf16.mxu0 0
  %1445 = vmatmul.mubr.bf16.gmra.mrb[0].mxu0 %v1199
  %v1446 = vpop.f32.mrb[0].mxu0
  %v1447 = vadd.f32 0.0, %v1446
  %v1448 = vpop.f32.mrb[0].mxu0
  %v1449 = vpop.f32.mrb[0].mxu0
  %v1450 = vadd.f32 0.0, %v1449
  %v1451 = vpop.f32.mrb[0].mxu0
  %1452 = vmatprep.mubr.bf16.mxu0 0
  %1453 = vmatmul.mubr.bf16.gmra.mrb[0].mxu0 %v1202
  %v1454 = vpop.f32.mrb[0].mxu0
  %v1455 = vadd.f32 0.0, %v1454
  %v1456 = vpop.f32.mrb[0].mxu0
  %v1457 = vpop.f32.mrb[0].mxu0
  %v1458 = vadd.f32 0.0, %v1457
  %v1459 = vpop.f32.mrb[0].mxu0
  %1460 = vmatprep.mubr.bf16.mxu0 0
  %1461 = vmatmul.mubr.bf16.gmra.mrb[0].mxu0 %v1205
  %v1462 = vpop.f32.mrb[0].mxu0
  %v1463 = vadd.f32 0.0, %v1462
  %v1464 = vpop.f32.mrb[0].mxu0
  %v1465 = vpop.f32.mrb[0].mxu0
  %v1466 = vadd.f32 0.0, %v1465
  %v1467 = vpop.f32.mrb[0].mxu0
  %1468 = vmatprep.mubr.bf16.mxu0 0
  %1469 = vmatmul.mubr.bf16.gmra.mrb[0].mxu0 %v1208
  %v1470 = vpop.f32.mrb[0].mxu0
  %v1471 = vadd.f32 0.0, %v1470
  %v1472 = vpop.f32.mrb[0].mxu0
  %v1473 = vpop.f32.mrb[0].mxu0
  %v1474 = vadd.f32 0.0, %v1473
  %v1475 = vpop.f32.mrb[0].mxu0
  %1476 = vmatprep.mubr.bf16.mxu0 0
  %1477 = vmatmul.mubr.bf16.gmra.mrb[0].mxu0 %v1211
  %v1478 = vpop.f32.mrb[0].mxu0
  %v1479 = vadd.f32 0.0, %v1478
  %v1480 = vpop.f32.mrb[0].mxu0
  %v1481 = vpop.f32.mrb[0].mxu0
  %v1482 = vadd.f32 0.0, %v1481
  %v1483 = vpop.f32.mrb[0].mxu0
  %1484 = vmatprep.mubr.bf16.mxu0 0
  %1485 = vmatmul.mubr.bf16.gmra.mrb[0].mxu0 %v1214
  %v1486 = vpop.f32.mrb[0].mxu0
  %v1487 = vadd.f32 0.0, %v1486
  %v1488 = vpop.f32.mrb[0].mxu0
  %v1489 = vpop.f32.mrb[0].mxu0
  %v1490 = vadd.f32 0.0, %v1489
  %v1491 = vpop.f32.mrb[0].mxu0
  %1492 = vmatprep.mubr.bf16.mxu0 0
  %1493 = vmatmul.mubr.bf16.gmra.mrb[0].mxu0 %v1217
  %v1494 = vpop.f32.mrb[0].mxu0
  %v1495 = vadd.f32 0.0, %v1494
  %v1496 = vpop.f32.mrb[0].mxu0
  %v1497 = vpop.f32.mrb[0].mxu0
  %v1498 = vadd.f32 0.0, %v1497
  %v1499 = vpop.f32.mrb[0].mxu0
  %1500 = vmatprep.mubr.bf16.mxu0 0
  %1501 = vmatmul.mubr.bf16.gmra.mrb[0].mxu0 %v1220
  %v1502 = vpop.f32.mrb[0].mxu0
  %v1503 = vadd.f32 0.0, %v1502
  %v1504 = vpop.f32.mrb[0].mxu0
  %v1505 = vpop.f32.mrb[0].mxu0
  %v1506 = vadd.f32 0.0, %v1505
  %v1507 = vpop.f32.mrb[0].mxu0
  %1508 = vmatprep.mubr.bf16.mxu0 0
  %1509 = vmatmul.mubr.bf16.gmra.mrb[0].mxu0 %v1223
  %v1510 = vpop.f32.mrb[0].mxu0
  %v1511 = vadd.f32 0.0, %v1510
  %v1512 = vpop.f32.mrb[0].mxu0
  %v1513 = vpop.f32.mrb[0].mxu0
  %v1514 = vadd.f32 0.0, %v1513
  %v1515 = vpop.f32.mrb[0].mxu0
  %1516 = vdwg.mxu0
  %v1517 = vpack.c.bf16 %v1266, %v1263
  %v1518 = vpack.c.bf16 %v1274, %v1271
  %v1519 = vpack.c.bf16 %v1282, %v1279
  %v1520 = vpack.c.bf16 %v1290, %v1287
  %v1521 = vpack.c.bf16 %v1298, %v1295
  %v1522 = vpack.c.bf16 %v1306, %v1303
  %v1523 = vpack.c.bf16 %v1314, %v1311
  %v1524 = vpack.c.bf16 %v1322, %v1319
  %v1525 = vpack.c.bf16 %v1330, %v1327
  %v1526 = vpack.c.bf16 %v1338, %v1335
  %v1527 = vpack.c.bf16 %v1346, %v1343
  %v1528 = vpack.c.bf16 %v1354, %v1351
  %v1529 = vpack.c.bf16 %v1362, %v1359
  %v1530 = vpack.c.bf16 %v1370, %v1367
  %v1531 = vpack.c.bf16 %v1378, %v1375
  %v1532 = vpack.c.bf16 %v1386, %v1383
  %v1533 = vpack.c.bf16 %v1394, %v1391
  %v1534 = vpack.c.bf16 %v1402, %v1399
  %v1535 = vpack.c.bf16 %v1410, %v1407
  %v1536 = vpack.c.bf16 %v1418, %v1415
  %v1537 = vpack.c.bf16 %v1426, %v1423
  %v1538 = vpack.c.bf16 %v1434, %v1431
  %v1539 = vpack.c.bf16 %v1442, %v1439
  %v1540 = vpack.c.bf16 %v1450, %v1447
  %v1541 = vpack.c.bf16 %v1458, %v1455
  %v1542 = vpack.c.bf16 %v1466, %v1463
  %v1543 = vpack.c.bf16 %v1474, %v1471
  %v1544 = vpack.c.bf16 %v1482, %v1479
  %v1545 = vpack.c.bf16 %v1490, %v1487
  %v1546 = vpack.c.bf16 %v1498, %v1495
  %v1547 = vpack.c.bf16 %v1506, %v1503
  %v1548 = vpack.c.bf16 %v1514, %v1511
  %v1581 = vunpack.c.l.b16 %v1517
  %v1582 = vunpack.c.h.b16 %v1517
  %v1583 = vunpack.c.l.b16 %v1518
  %v1584 = vunpack.c.h.b16 %v1518
  %v1585 = vunpack.c.l.b16 %v1519
  %v1586 = vunpack.c.h.b16 %v1519
  %v1587 = vunpack.c.l.b16 %v1520
  %v1588 = vunpack.c.h.b16 %v1520
  %v1589 = vunpack.c.l.b16 %v1521
  %v1590 = vunpack.c.h.b16 %v1521
  %v1591 = vunpack.c.l.b16 %v1522
  %v1592 = vunpack.c.h.b16 %v1522
  %v1593 = vunpack.c.l.b16 %v1523
  %v1594 = vunpack.c.h.b16 %v1523
  %v1595 = vunpack.c.l.b16 %v1524
  %v1596 = vunpack.c.h.b16 %v1524
  %v1597 = vunpack.c.l.b16 %v1525
  %v1598 = vunpack.c.h.b16 %v1525
  %v1599 = vunpack.c.l.b16 %v1526
  %v1600 = vunpack.c.h.b16 %v1526
  %v1601 = vunpack.c.l.b16 %v1527
  %v1602 = vunpack.c.h.b16 %v1527
  %v1603 = vunpack.c.l.b16 %v1528
  %v1604 = vunpack.c.h.b16 %v1528
  %v1605 = vunpack.c.l.b16 %v1529
  %v1606 = vunpack.c.h.b16 %v1529
  %v1607 = vunpack.c.l.b16 %v1530
  %v1608 = vunpack.c.h.b16 %v1530
  %v1609 = vunpack.c.l.b16 %v1531
  %v1610 = vunpack.c.h.b16 %v1531
  %v1611 = vunpack.c.l.b16 %v1532
  %v1612 = vunpack.c.h.b16 %v1532
  %v1613 = vunpack.c.l.b16 %v1533
  %v1614 = vunpack.c.h.b16 %v1533
  %v1615 = vunpack.c.l.b16 %v1534
  %v1616 = vunpack.c.h.b16 %v1534
  %v1617 = vunpack.c.l.b16 %v1535
  %v1618 = vunpack.c.h.b16 %v1535
  %v1619 = vunpack.c.l.b16 %v1536
  %v1620 = vunpack.c.h.b16 %v1536
  %v1621 = vunpack.c.l.b16 %v1537
  %v1622 = vunpack.c.h.b16 %v1537
  %v1623 = vunpack.c.l.b16 %v1538
  %v1624 = vunpack.c.h.b16 %v1538
  %v1625 = vunpack.c.l.b16 %v1539
  %v1626 = vunpack.c.h.b16 %v1539
  %v1627 = vunpack.c.l.b16 %v1540
  %v1628 = vunpack.c.h.b16 %v1540
  %v1629 = vunpack.c.l.b16 %v1541
  %v1630 = vunpack.c.h.b16 %v1541
  %v1631 = vunpack.c.l.b16 %v1542
  %v1632 = vunpack.c.h.b16 %v1542
  %v1633 = vunpack.c.l.b16 %v1543
  %v1634 = vunpack.c.h.b16 %v1543
  %v1635 = vunpack.c.l.b16 %v1544
  %v1636 = vunpack.c.h.b16 %v1544
  %v1637 = vunpack.c.l.b16 %v1545
  %v1638 = vunpack.c.h.b16 %v1545
  %v1639 = vunpack.c.l.b16 %v1546
  %v1640 = vunpack.c.h.b16 %v1546
  %v1641 = vunpack.c.l.b16 %v1547
  %v1642 = vunpack.c.h.b16 %v1547
  %v1643 = vunpack.c.l.b16 %v1548
  %v1644 = vunpack.c.h.b16 %v1548
  %v1645 = vpack.c.b16 %v1581, %v1581
  %v1646 = vpack.c.b16 %v1582, %v1582
  %v1647 = vpack.c.b16 %v1583, %v1583
  %v1648 = vpack.c.b16 %v1584, %v1584
  %v1649 = vpack.c.b16 %v1585, %v1585
  %v1650 = vpack.c.b16 %v1586, %v1586
  %v1651 = vpack.c.b16 %v1587, %v1587
  %v1652 = vpack.c.b16 %v1588, %v1588
  %v1653 = vpack.c.b16 %v1589, %v1589
  %v1654 = vpack.c.b16 %v1590, %v1590
  %v1655 = vpack.c.b16 %v1591, %v1591
  %v1656 = vpack.c.b16 %v1592, %v1592
  %v1657 = vpack.c.b16 %v1593, %v1593
  %v1658 = vpack.c.b16 %v1594, %v1594
  %v1659 = vpack.c.b16 %v1595, %v1595
  %v1660 = vpack.c.b16 %v1596, %v1596
  %v1661 = vpack.c.b16 %v1597, %v1597
  %v1662 = vpack.c.b16 %v1598, %v1598
  %v1663 = vpack.c.b16 %v1599, %v1599
  %v1664 = vpack.c.b16 %v1600, %v1600
  %v1665 = vpack.c.b16 %v1601, %v1601
  %v1666 = vpack.c.b16 %v1602, %v1602
  %v1667 = vpack.c.b16 %v1603, %v1603
  %v1668 = vpack.c.b16 %v1604, %v1604
  %v1669 = vpack.c.b16 %v1605, %v1605
  %v1670 = vpack.c.b16 %v1606, %v1606
  %v1671 = vpack.c.b16 %v1607, %v1607
  %v1672 = vpack.c.b16 %v1608, %v1608
  %v1673 = vpack.c.b16 %v1609, %v1609
  %v1674 = vpack.c.b16 %v1610, %v1610
  %v1675 = vpack.c.b16 %v1611, %v1611
  %v1676 = vpack.c.b16 %v1612, %v1612
  %v1677 = vpack.c.b16 %v1613, %v1613
  %v1678 = vpack.c.b16 %v1614, %v1614
  %v1679 = vpack.c.b16 %v1615, %v1615
  %v1680 = vpack.c.b16 %v1616, %v1616
  %v1681 = vpack.c.b16 %v1617, %v1617
  %v1682 = vpack.c.b16 %v1618, %v1618
  %v1683 = vpack.c.b16 %v1619, %v1619
  %v1684 = vpack.c.b16 %v1620, %v1620
  %v1685 = vpack.c.b16 %v1621, %v1621
  %v1686 = vpack.c.b16 %v1622, %v1622
  %v1687 = vpack.c.b16 %v1623, %v1623
  %v1688 = vpack.c.b16 %v1624, %v1624
  %v1689 = vpack.c.b16 %v1625, %v1625
  %v1690 = vpack.c.b16 %v1626, %v1626
  %v1691 = vpack.c.b16 %v1627, %v1627
  %v1692 = vpack.c.b16 %v1628, %v1628
  %v1693 = vpack.c.b16 %v1629, %v1629
  %v1694 = vpack.c.b16 %v1630, %v1630
  %v1695 = vpack.c.b16 %v1631, %v1631
  %v1696 = vpack.c.b16 %v1632, %v1632
  %v1697 = vpack.c.b16 %v1633, %v1633
  %v1698 = vpack.c.b16 %v1634, %v1634
  %v1699 = vpack.c.b16 %v1635, %v1635
  %v1700 = vpack.c.b16 %v1636, %v1636
  %v1701 = vpack.c.b16 %v1637, %v1637
  %v1702 = vpack.c.b16 %v1638, %v1638
  %v1703 = vpack.c.b16 %v1639, %v1639
  %v1704 = vpack.c.b16 %v1640, %v1640
  %v1705 = vpack.c.b16 %v1641, %v1641
  %v1706 = vpack.c.b16 %v1642, %v1642
  %v1707 = vpack.c.b16 %v1643, %v1643
  %v1708 = vpack.c.b16 %v1644, %v1644
  %vm1773 = vcmask 27648
  %1774 = vst.msk [vmem:[%s6] sm:$0xf] %vm1773, %v1645
  %1775 = vst.msk [vmem:[%s6 + $0x4] sm:$0xf] %vm1773, %v1646
  %1776 = vst.msk [vmem:[%s6 + $0x8] sm:$0xf] %vm1773, %v1647
  %1777 = vst.msk [vmem:[%s6 + $0xc] sm:$0xf] %vm1773, %v1648
  %1778 = vst.msk [vmem:[%s6 + $0x10] sm:$0xf] %vm1773, %v1649
  %1779 = vst.msk [vmem:[%s6 + $0x14] sm:$0xf] %vm1773, %v1650
  %1780 = vst.msk [vmem:[%s6 + $0x18] sm:$0xf] %vm1773, %v1651
  %1781 = vst.msk [vmem:[%s6 + $0x1c] sm:$0xf] %vm1773, %v1652
  %1782 = vst.msk [vmem:[%s6 + $0x20] sm:$0xf] %vm1773, %v1653
  %1783 = vst.msk [vmem:[%s6 + $0x24] sm:$0xf] %vm1773, %v1654
  %1784 = vst.msk [vmem:[%s6 + $0x28] sm:$0xf] %vm1773, %v1655
  %1785 = vst.msk [vmem:[%s6 + $0x2c] sm:$0xf] %vm1773, %v1656
  %1786 = vst.msk [vmem:[%s6 + $0x30] sm:$0xf] %vm1773, %v1657
  %1787 = vst.msk [vmem:[%s6 + $0x34] sm:$0xf] %vm1773, %v1658
  %1788 = vst.msk [vmem:[%s6 + $0x38] sm:$0xf] %vm1773, %v1659
  %1789 = vst.msk [vmem:[%s6 + $0x3c] sm:$0xf] %vm1773, %v1660
  %1790 = vst.msk [vmem:[%s6 + $0x40] sm:$0xf] %vm1773, %v1661
  %1791 = vst.msk [vmem:[%s6 + $0x44] sm:$0xf] %vm1773, %v1662
  %1792 = vst.msk [vmem:[%s6 + $0x48] sm:$0xf] %vm1773, %v1663
  %1793 = vst.msk [vmem:[%s6 + $0x4c] sm:$0xf] %vm1773, %v1664
  %1794 = vst.msk [vmem:[%s6 + $0x50] sm:$0xf] %vm1773, %v1665
  %1795 = vst.msk [vmem:[%s6 + $0x54] sm:$0xf] %vm1773, %v1666
  %1796 = vst.msk [vmem:[%s6 + $0x58] sm:$0xf] %vm1773, %v1667
  %1797 = vst.msk [vmem:[%s6 + $0x5c] sm:$0xf] %vm1773, %v1668
  %1798 = vst.msk [vmem:[%s6 + $0x60] sm:$0xf] %vm1773, %v1669
  %1799 = vst.msk [vmem:[%s6 + $0x64] sm:$0xf] %vm1773, %v1670
  %1800 = vst.msk [vmem:[%s6 + $0x68] sm:$0xf] %vm1773, %v1671
  %1801 = vst.msk [vmem:[%s6 + $0x6c] sm:$0xf] %vm1773, %v1672
  %1802 = vst.msk [vmem:[%s6 + $0x70] sm:$0xf] %vm1773, %v1673
  %1803 = vst.msk [vmem:[%s6 + $0x74] sm:$0xf] %vm1773, %v1674
  %1804 = vst.msk [vmem:[%s6 + $0x78] sm:$0xf] %vm1773, %v1675
  %1805 = vst.msk [vmem:[%s6 + $0x7c] sm:$0xf] %vm1773, %v1676
  %1806 = vst.msk [vmem:[%s6 + $0x80] sm:$0xf] %vm1773, %v1677
  %1807 = vst.msk [vmem:[%s6 + $0x84] sm:$0xf] %vm1773, %v1678
  %1808 = vst.msk [vmem:[%s6 + $0x88] sm:$0xf] %vm1773, %v1679
  %1809 = vst.msk [vmem:[%s6 + $0x8c] sm:$0xf] %vm1773, %v1680
  %1810 = vst.msk [vmem:[%s6 + $0x90] sm:$0xf] %vm1773, %v1681
  %1811 = vst.msk [vmem:[%s6 + $0x94] sm:$0xf] %vm1773, %v1682
  %1812 = vst.msk [vmem:[%s6 + $0x98] sm:$0xf] %vm1773, %v1683
  %1813 = vst.msk [vmem:[%s6 + $0x9c] sm:$0xf] %vm1773, %v1684
  %1814 = vst.msk [vmem:[%s6 + $0xa0] sm:$0xf] %vm1773, %v1685
  %1815 = vst.msk [vmem:[%s6 + $0xa4] sm:$0xf] %vm1773, %v1686
  %1816 = vst.msk [vmem:[%s6 + $0xa8] sm:$0xf] %vm1773, %v1687
  %1817 = vst.msk [vmem:[%s6 + $0xac] sm:$0xf] %vm1773, %v1688
  %1818 = vst.msk [vmem:[%s6 + $0xb0] sm:$0xf] %vm1773, %v1689
  %1819 = vst.msk [vmem:[%s6 + $0xb4] sm:$0xf] %vm1773, %v1690
  %1820 = vst.msk [vmem:[%s6 + $0xb8] sm:$0xf] %vm1773, %v1691
  %1821 = vst.msk [vmem:[%s6 + $0xbc] sm:$0xf] %vm1773, %v1692
  %1822 = vst.msk [vmem:[%s6 + $0xc0] sm:$0xf] %vm1773, %v1693
  %1823 = vst.msk [vmem:[%s6 + $0xc4] sm:$0xf] %vm1773, %v1694
  %1824 = vst.msk [vmem:[%s6 + $0xc8] sm:$0xf] %vm1773, %v1695
  %1825 = vst.msk [vmem:[%s6 + $0xcc] sm:$0xf] %vm1773, %v1696
  %1826 = vst.msk [vmem:[%s6 + $0xd0] sm:$0xf] %vm1773, %v1697
  %1827 = vst.msk [vmem:[%s6 + $0xd4] sm:$0xf] %vm1773, %v1698
  %1828 = vst.msk [vmem:[%s6 + $0xd8] sm:$0xf] %vm1773, %v1699
  %1829 = vst.msk [vmem:[%s6 + $0xdc] sm:$0xf] %vm1773, %v1700
  %1830 = vst.msk [vmem:[%s6 + $0xe0] sm:$0xf] %vm1773, %v1701
  %1831 = vst.msk [vmem:[%s6 + $0xe4] sm:$0xf] %vm1773, %v1702
  %1832 = vst.msk [vmem:[%s6 + $0xe8] sm:$0xf] %vm1773, %v1703
  %1833 = vst.msk [vmem:[%s6 + $0xec] sm:$0xf] %vm1773, %v1704
  %1834 = vst.msk [vmem:[%s6 + $0xf0] sm:$0xf] %vm1773, %v1705
  %1835 = vst.msk [vmem:[%s6 + $0xf4] sm:$0xf] %vm1773, %v1706
  %1836 = vst.msk [vmem:[%s6 + $0xf8] sm:$0xf] %vm1773, %v1707
  %1837 = vst.msk [vmem:[%s6 + $0xfc] sm:$0xf] %vm1773, %v1708
  %v1838 = vld [vmem:[%s4] sm:$0x3]
  %v1839 = vld [vmem:[%s5] sm:$0x1]
  %v1841 = vlaneseq
  %v1842 = vshrl.u32 %v1841, 7
  %v1843 = vsub.s32 0, %v1842
  %v1844 = vrot.slane %v1839, %v1843
  %v1847 = vsel %vm355, %v1838, 0
  %1849 = vmatprep.subr.bf16.mxu0 0
  %1850 = vmatpush1.bf16.msra.mxu0 %v1847
  %1851 = vmatprep.subr.bf16.mxu0 0
  %1852 = vmatpush1.bf16.msra.mxu0 0
  %1853 = vmatprep.subr.bf16.mxu0 0
  %1854 = vmatpush1.bf16.msra.mxu0 0
  %1855 = vmatprep.subr.bf16.mxu0 0
  %1856 = vmatpush1.bf16.msra.mxu0 0
  %1857 = vmatprep.subr.bf16.mxu0 0
  %1858 = vmatpush1.bf16.msra.mxu0 0
  %1859 = vmatprep.subr.bf16.mxu0 0
  %1860 = vmatpush1.bf16.msra.mxu0 0
  %1861 = vmatprep.subr.bf16.mxu0 0
  %1862 = vmatpush1.bf16.msra.mxu0 0
  %1863 = vmatprep.subr.bf16.mxu0 0
  %1864 = vmatpush1.bf16.msra.mxu0 0
  %1865 = vmatprep.subr.bf16.mxu0 0
  %1866 = vmatpush1.bf16.msra.mxu0 0
  %1867 = vmatprep.subr.bf16.mxu0 0
  %1868 = vmatpush1.bf16.msra.mxu0 0
  %1869 = vmatprep.subr.bf16.mxu0 0
  %1870 = vmatpush1.bf16.msra.mxu0 0
  %1871 = vmatprep.subr.bf16.mxu0 0
  %1872 = vmatpush1.bf16.msra.mxu0 0
  %1873 = vmatprep.subr.bf16.mxu0 0
  %1874 = vmatpush1.bf16.msra.mxu0 0
  %1875 = vmatprep.subr.bf16.mxu0 0
  %1876 = vmatpush1.bf16.msra.mxu0 0
  %1877 = vmatprep.subr.bf16.mxu0 0
  %1878 = vmatpush1.bf16.msra.mxu0 0
  %1879 = vmatprep.subr.bf16.mxu0 0
  %1880 = vmatpush1.bf16.msra.mxu0 0
  %1881 = vmatprep.mubr.bf16.mxu0 0
  %1882 = vmatmul.mubr.bf16.gmra.mrb[0].mxu0 %v1130
  %v1883 = vpop.f32.mrb[0].mxu0
  %v1884 = vadd.f32 %v1844, %v1883
  %v1885 = vpop.f32.mrb[0].mxu0
  %v1886 = vpop.f32.mrb[0].mxu0
  %v1887 = vadd.f32 %v1844, %v1886
  %v1888 = vpop.f32.mrb[0].mxu0
  %1889 = vmatprep.mubr.bf16.mxu0 0
  %1890 = vmatmul.mubr.bf16.gmra.mrb[0].mxu0 %v1133
  %v1891 = vpop.f32.mrb[0].mxu0
  %v1892 = vadd.f32 %v1844, %v1891
  %v1893 = vpop.f32.mrb[0].mxu0
  %v1894 = vpop.f32.mrb[0].mxu0
  %v1895 = vadd.f32 %v1844, %v1894
  %v1896 = vpop.f32.mrb[0].mxu0
  %1897 = vmatprep.mubr.bf16.mxu0 0
  %1898 = vmatmul.mubr.bf16.gmra.mrb[0].mxu0 %v1136
  %v1899 = vpop.f32.mrb[0].mxu0
  %v1900 = vadd.f32 %v1844, %v1899
  %v1901 = vpop.f32.mrb[0].mxu0
  %v1902 = vpop.f32.mrb[0].mxu0
  %v1903 = vadd.f32 %v1844, %v1902
  %v1904 = vpop.f32.mrb[0].mxu0
  %1905 = vmatprep.mubr.bf16.mxu0 0
  %1906 = vmatmul.mubr.bf16.gmra.mrb[0].mxu0 %v1139
  %v1907 = vpop.f32.mrb[0].mxu0
  %v1908 = vadd.f32 %v1844, %v1907
  %v1909 = vpop.f32.mrb[0].mxu0
  %v1910 = vpop.f32.mrb[0].mxu0
  %v1911 = vadd.f32 %v1844, %v1910
  %v1912 = vpop.f32.mrb[0].mxu0
  %1913 = vmatprep.mubr.bf16.mxu0 0
  %1914 = vmatmul.mubr.bf16.gmra.mrb[0].mxu0 %v1142
  %v1915 = vpop.f32.mrb[0].mxu0
  %v1916 = vadd.f32 %v1844, %v1915
  %v1917 = vpop.f32.mrb[0].mxu0
  %v1918 = vpop.f32.mrb[0].mxu0
  %v1919 = vadd.f32 %v1844, %v1918
  %v1920 = vpop.f32.mrb[0].mxu0
  %1921 = vmatprep.mubr.bf16.mxu0 0
  %1922 = vmatmul.mubr.bf16.gmra.mrb[0].mxu0 %v1145
  %v1923 = vpop.f32.mrb[0].mxu0
  %v1924 = vadd.f32 %v1844, %v1923
  %v1925 = vpop.f32.mrb[0].mxu0
  %v1926 = vpop.f32.mrb[0].mxu0
  %v1927 = vadd.f32 %v1844, %v1926
  %v1928 = vpop.f32.mrb[0].mxu0
  %1929 = vmatprep.mubr.bf16.mxu0 0
  %1930 = vmatmul.mubr.bf16.gmra.mrb[0].mxu0 %v1148
  %v1931 = vpop.f32.mrb[0].mxu0
  %v1932 = vadd.f32 %v1844, %v1931
  %v1933 = vpop.f32.mrb[0].mxu0
  %v1934 = vpop.f32.mrb[0].mxu0
  %v1935 = vadd.f32 %v1844, %v1934
  %v1936 = vpop.f32.mrb[0].mxu0
  %1937 = vmatprep.mubr.bf16.mxu0 0
  %1938 = vmatmul.mubr.bf16.gmra.mrb[0].mxu0 %v1151
  %v1939 = vpop.f32.mrb[0].mxu0
  %v1940 = vadd.f32 %v1844, %v1939
  %v1941 = vpop.f32.mrb[0].mxu0
  %v1942 = vpop.f32.mrb[0].mxu0
  %v1943 = vadd.f32 %v1844, %v1942
  %v1944 = vpop.f32.mrb[0].mxu0
  %1945 = vmatprep.mubr.bf16.mxu0 0
  %1946 = vmatmul.mubr.bf16.gmra.mrb[0].mxu0 %v1154
  %v1947 = vpop.f32.mrb[0].mxu0
  %v1948 = vadd.f32 %v1844, %v1947
  %v1949 = vpop.f32.mrb[0].mxu0
  %v1950 = vpop.f32.mrb[0].mxu0
  %v1951 = vadd.f32 %v1844, %v1950
  %v1952 = vpop.f32.mrb[0].mxu0
  %1953 = vmatprep.mubr.bf16.mxu0 0
  %1954 = vmatmul.mubr.bf16.gmra.mrb[0].mxu0 %v1157
  %v1955 = vpop.f32.mrb[0].mxu0
  %v1956 = vadd.f32 %v1844, %v1955
  %v1957 = vpop.f32.mrb[0].mxu0
  %v1958 = vpop.f32.mrb[0].mxu0
  %v1959 = vadd.f32 %v1844, %v1958
  %v1960 = vpop.f32.mrb[0].mxu0
  %1961 = vmatprep.mubr.bf16.mxu0 0
  %1962 = vmatmul.mubr.bf16.gmra.mrb[0].mxu0 %v1160
  %v1963 = vpop.f32.mrb[0].mxu0
  %v1964 = vadd.f32 %v1844, %v1963
  %v1965 = vpop.f32.mrb[0].mxu0
  %v1966 = vpop.f32.mrb[0].mxu0
  %v1967 = vadd.f32 %v1844, %v1966
  %v1968 = vpop.f32.mrb[0].mxu0
  %1969 = vmatprep.mubr.bf16.mxu0 0
  %1970 = vmatmul.mubr.bf16.gmra.mrb[0].mxu0 %v1163
  %v1971 = vpop.f32.mrb[0].mxu0
  %v1972 = vadd.f32 %v1844, %v1971
  %v1973 = vpop.f32.mrb[0].mxu0
  %v1974 = vpop.f32.mrb[0].mxu0
  %v1975 = vadd.f32 %v1844, %v1974
  %v1976 = vpop.f32.mrb[0].mxu0
  %1977 = vmatprep.mubr.bf16.mxu0 0
  %1978 = vmatmul.mubr.bf16.gmra.mrb[0].mxu0 %v1166
  %v1979 = vpop.f32.mrb[0].mxu0
  %v1980 = vadd.f32 %v1844, %v1979
  %v1981 = vpop.f32.mrb[0].mxu0
  %v1982 = vpop.f32.mrb[0].mxu0
  %v1983 = vadd.f32 %v1844, %v1982
  %v1984 = vpop.f32.mrb[0].mxu0
  %1985 = vmatprep.mubr.bf16.mxu0 0
  %1986 = vmatmul.mubr.bf16.gmra.mrb[0].mxu0 %v1169
  %v1987 = vpop.f32.mrb[0].mxu0
  %v1988 = vadd.f32 %v1844, %v1987
  %v1989 = vpop.f32.mrb[0].mxu0
  %v1990 = vpop.f32.mrb[0].mxu0
  %v1991 = vadd.f32 %v1844, %v1990
  %v1992 = vpop.f32.mrb[0].mxu0
  %1993 = vmatprep.mubr.bf16.mxu0 0
  %1994 = vmatmul.mubr.bf16.gmra.mrb[0].mxu0 %v1172
  %v1995 = vpop.f32.mrb[0].mxu0
  %v1996 = vadd.f32 %v1844, %v1995
  %v1997 = vpop.f32.mrb[0].mxu0
  %v1998 = vpop.f32.mrb[0].mxu0
  %v1999 = vadd.f32 %v1844, %v1998
  %v2000 = vpop.f32.mrb[0].mxu0
  %2001 = vmatprep.mubr.bf16.mxu0 0
  %2002 = vmatmul.mubr.bf16.gmra.mrb[0].mxu0 %v1175
  %v2003 = vpop.f32.mrb[0].mxu0
  %v2004 = vadd.f32 %v1844, %v2003
  %v2005 = vpop.f32.mrb[0].mxu0
  %v2006 = vpop.f32.mrb[0].mxu0
  %v2007 = vadd.f32 %v1844, %v2006
  %v2008 = vpop.f32.mrb[0].mxu0
  %2009 = vmatprep.mubr.bf16.mxu0 0
  %2010 = vmatmul.mubr.bf16.gmra.mrb[0].mxu0 %v1178
  %v2011 = vpop.f32.mrb[0].mxu0
  %v2012 = vadd.f32 %v1844, %v2011
  %v2013 = vpop.f32.mrb[0].mxu0
  %v2014 = vpop.f32.mrb[0].mxu0
  %v2015 = vadd.f32 %v1844, %v2014
  %v2016 = vpop.f32.mrb[0].mxu0
  %2017 = vmatprep.mubr.bf16.mxu0 0
  %2018 = vmatmul.mubr.bf16.gmra.mrb[0].mxu0 %v1181
  %v2019 = vpop.f32.mrb[0].mxu0
  %v2020 = vadd.f32 %v1844, %v2019
  %v2021 = vpop.f32.mrb[0].mxu0
  %v2022 = vpop.f32.mrb[0].mxu0
  %v2023 = vadd.f32 %v1844, %v2022
  %v2024 = vpop.f32.mrb[0].mxu0
  %2025 = vmatprep.mubr.bf16.mxu0 0
  %2026 = vmatmul.mubr.bf16.gmra.mrb[0].mxu0 %v1184
  %v2027 = vpop.f32.mrb[0].mxu0
  %v2028 = vadd.f32 %v1844, %v2027
  %v2029 = vpop.f32.mrb[0].mxu0
  %v2030 = vpop.f32.mrb[0].mxu0
  %v2031 = vadd.f32 %v1844, %v2030
  %v2032 = vpop.f32.mrb[0].mxu0
  %2033 = vmatprep.mubr.bf16.mxu0 0
  %2034 = vmatmul.mubr.bf16.gmra.mrb[0].mxu0 %v1187
  %v2035 = vpop.f32.mrb[0].mxu0
  %v2036 = vadd.f32 %v1844, %v2035
  %v2037 = vpop.f32.mrb[0].mxu0
  %v2038 = vpop.f32.mrb[0].mxu0
  %v2039 = vadd.f32 %v1844, %v2038
  %v2040 = vpop.f32.mrb[0].mxu0
  %2041 = vmatprep.mubr.bf16.mxu0 0
  %2042 = vmatmul.mubr.bf16.gmra.mrb[0].mxu0 %v1190
  %v2043 = vpop.f32.mrb[0].mxu0
  %v2044 = vadd.f32 %v1844, %v2043
  %v2045 = vpop.f32.mrb[0].mxu0
  %v2046 = vpop.f32.mrb[0].mxu0
  %v2047 = vadd.f32 %v1844, %v2046
  %v2048 = vpop.f32.mrb[0].mxu0
  %2049 = vmatprep.mubr.bf16.mxu0 0
  %2050 = vmatmul.mubr.bf16.gmra.mrb[0].mxu0 %v1193
  %v2051 = vpop.f32.mrb[0].mxu0
  %v2052 = vadd.f32 %v1844, %v2051
  %v2053 = vpop.f32.mrb[0].mxu0
  %v2054 = vpop.f32.mrb[0].mxu0
  %v2055 = vadd.f32 %v1844, %v2054
  %v2056 = vpop.f32.mrb[0].mxu0
  %2057 = vmatprep.mubr.bf16.mxu0 0
  %2058 = vmatmul.mubr.bf16.gmra.mrb[0].mxu0 %v1196
  %v2059 = vpop.f32.mrb[0].mxu0
  %v2060 = vadd.f32 %v1844, %v2059
  %v2061 = vpop.f32.mrb[0].mxu0
  %v2062 = vpop.f32.mrb[0].mxu0
  %v2063 = vadd.f32 %v1844, %v2062
  %v2064 = vpop.f32.mrb[0].mxu0
  %2065 = vmatprep.mubr.bf16.mxu0 0
  %2066 = vmatmul.mubr.bf16.gmra.mrb[0].mxu0 %v1199
  %v2067 = vpop.f32.mrb[0].mxu0
  %v2068 = vadd.f32 %v1844, %v2067
  %v2069 = vpop.f32.mrb[0].mxu0
  %v2070 = vpop.f32.mrb[0].mxu0
  %v2071 = vadd.f32 %v1844, %v2070
  %v2072 = vpop.f32.mrb[0].mxu0
  %2073 = vmatprep.mubr.bf16.mxu0 0
  %2074 = vmatmul.mubr.bf16.gmra.mrb[0].mxu0 %v1202
  %v2075 = vpop.f32.mrb[0].mxu0
  %v2076 = vadd.f32 %v1844, %v2075
  %v2077 = vpop.f32.mrb[0].mxu0
  %v2078 = vpop.f32.mrb[0].mxu0
  %v2079 = vadd.f32 %v1844, %v2078
  %v2080 = vpop.f32.mrb[0].mxu0
  %2081 = vmatprep.mubr.bf16.mxu0 0
  %2082 = vmatmul.mubr.bf16.gmra.mrb[0].mxu0 %v1205
  %v2083 = vpop.f32.mrb[0].mxu0
  %v2084 = vadd.f32 %v1844, %v2083
  %v2085 = vpop.f32.mrb[0].mxu0
  %v2086 = vpop.f32.mrb[0].mxu0
  %v2087 = vadd.f32 %v1844, %v2086
  %v2088 = vpop.f32.mrb[0].mxu0
  %2089 = vmatprep.mubr.bf16.mxu0 0
  %2090 = vmatmul.mubr.bf16.gmra.mrb[0].mxu0 %v1208
  %v2091 = vpop.f32.mrb[0].mxu0
  %v2092 = vadd.f32 %v1844, %v2091
  %v2093 = vpop.f32.mrb[0].mxu0
  %v2094 = vpop.f32.mrb[0].mxu0
  %v2095 = vadd.f32 %v1844, %v2094
  %v2096 = vpop.f32.mrb[0].mxu0
  %2097 = vmatprep.mubr.bf16.mxu0 0
  %2098 = vmatmul.mubr.bf16.gmra.mrb[0].mxu0 %v1211
  %v2099 = vpop.f32.mrb[0].mxu0
  %v2100 = vadd.f32 %v1844, %v2099
  %v2101 = vpop.f32.mrb[0].mxu0
  %v2102 = vpop.f32.mrb[0].mxu0
  %v2103 = vadd.f32 %v1844, %v2102
  %v2104 = vpop.f32.mrb[0].mxu0
  %2105 = vmatprep.mubr.bf16.mxu0 0
  %2106 = vmatmul.mubr.bf16.gmra.mrb[0].mxu0 %v1214
  %v2107 = vpop.f32.mrb[0].mxu0
  %v2108 = vadd.f32 %v1844, %v2107
  %v2109 = vpop.f32.mrb[0].mxu0
  %v2110 = vpop.f32.mrb[0].mxu0
  %v2111 = vadd.f32 %v1844, %v2110
  %v2112 = vpop.f32.mrb[0].mxu0
  %2113 = vmatprep.mubr.bf16.mxu0 0
  %2114 = vmatmul.mubr.bf16.gmra.mrb[0].mxu0 %v1217
  %v2115 = vpop.f32.mrb[0].mxu0
  %v2116 = vadd.f32 %v1844, %v2115
  %v2117 = vpop.f32.mrb[0].mxu0
  %v2118 = vpop.f32.mrb[0].mxu0
  %v2119 = vadd.f32 %v1844, %v2118
  %v2120 = vpop.f32.mrb[0].mxu0
  %2121 = vmatprep.mubr.bf16.mxu0 0
  %2122 = vmatmul.mubr.bf16.gmra.mrb[0].mxu0 %v1220
  %v2123 = vpop.f32.mrb[0].mxu0
  %v2124 = vadd.f32 %v1844, %v2123
  %v2125 = vpop.f32.mrb[0].mxu0
  %v2126 = vpop.f32.mrb[0].mxu0
  %v2127 = vadd.f32 %v1844, %v2126
  %v2128 = vpop.f32.mrb[0].mxu0
  %2129 = vmatprep.mubr.bf16.mxu0 0
  %2130 = vmatmul.mubr.bf16.gmra.mrb[0].mxu0 %v1223
  %v2131 = vpop.f32.mrb[0].mxu0
  %v2132 = vadd.f32 %v1844, %v2131
  %v2133 = vpop.f32.mrb[0].mxu0
  %v2134 = vpop.f32.mrb[0].mxu0
  %v2135 = vadd.f32 %v1844, %v2134
  %v2136 = vpop.f32.mrb[0].mxu0
  %2137 = vdwg.mxu0
  %v2138 = vxor.u32 %v1884, 2147483648
  %v2139 = vxor.u32 %v1887, 2147483648
  %v2140 = vxor.u32 %v1892, 2147483648
  %v2141 = vxor.u32 %v1895, 2147483648
  %v2142 = vxor.u32 %v1900, 2147483648
  %v2143 = vxor.u32 %v1903, 2147483648
  %v2144 = vxor.u32 %v1908, 2147483648
  %v2145 = vxor.u32 %v1911, 2147483648
  %v2146 = vxor.u32 %v1916, 2147483648
  %v2147 = vxor.u32 %v1919, 2147483648
  %v2148 = vxor.u32 %v1924, 2147483648
  %v2149 = vxor.u32 %v1927, 2147483648
  %v2150 = vxor.u32 %v1932, 2147483648
  %v2151 = vxor.u32 %v1935, 2147483648
  %v2152 = vxor.u32 %v1940, 2147483648
  %v2153 = vxor.u32 %v1943, 2147483648
  %v2154 = vxor.u32 %v1948, 2147483648
  %v2155 = vxor.u32 %v1951, 2147483648
  %v2156 = vxor.u32 %v1956, 2147483648
  %v2157 = vxor.u32 %v1959, 2147483648
  %v2158 = vxor.u32 %v1964, 2147483648
  %v2159 = vxor.u32 %v1967, 2147483648
  %v2160 = vxor.u32 %v1972, 2147483648
  %v2161 = vxor.u32 %v1975, 2147483648
  %v2162 = vxor.u32 %v1980, 2147483648
  %v2163 = vxor.u32 %v1983, 2147483648
  %v2164 = vxor.u32 %v1988, 2147483648
  %v2165 = vxor.u32 %v1991, 2147483648
  %v2166 = vxor.u32 %v1996, 2147483648
  %v2167 = vxor.u32 %v1999, 2147483648
  %v2168 = vxor.u32 %v2004, 2147483648
  %v2169 = vxor.u32 %v2007, 2147483648
  %v2170 = vxor.u32 %v2012, 2147483648
  %v2171 = vxor.u32 %v2015, 2147483648
  %v2172 = vxor.u32 %v2020, 2147483648
  %v2173 = vxor.u32 %v2023, 2147483648
  %v2174 = vxor.u32 %v2028, 2147483648
  %v2175 = vxor.u32 %v2031, 2147483648
  %v2176 = vxor.u32 %v2036, 2147483648
  %v2177 = vxor.u32 %v2039, 2147483648
  %v2178 = vxor.u32 %v2044, 2147483648
  %v2179 = vxor.u32 %v2047, 2147483648
  %v2180 = vxor.u32 %v2052, 2147483648
  %v2181 = vxor.u32 %v2055, 2147483648
  %v2182 = vxor.u32 %v2060, 2147483648
  %v2183 = vxor.u32 %v2063, 2147483648
  %v2184 = vxor.u32 %v2068, 2147483648
  %v2185 = vxor.u32 %v2071, 2147483648
  %v2186 = vxor.u32 %v2076, 2147483648
  %v2187 = vxor.u32 %v2079, 2147483648
  %v2188 = vxor.u32 %v2084, 2147483648
  %v2189 = vxor.u32 %v2087, 2147483648
  %v2190 = vxor.u32 %v2092, 2147483648
  %v2191 = vxor.u32 %v2095, 2147483648
  %v2192 = vxor.u32 %v2100, 2147483648
  %v2193 = vxor.u32 %v2103, 2147483648
  %v2194 = vxor.u32 %v2108, 2147483648
  %v2195 = vxor.u32 %v2111, 2147483648
  %v2196 = vxor.u32 %v2116, 2147483648
  %v2197 = vxor.u32 %v2119, 2147483648
  %v2198 = vxor.u32 %v2124, 2147483648
  %v2199 = vxor.u32 %v2127, 2147483648
  %v2200 = vxor.u32 %v2132, 2147483648
  %v2201 = vxor.u32 %v2135, 2147483648
  %v2202 = vmul.f32 %v2138, 1.442695
  %v2203 = vpow.pop %v2202
  %v2204 = vmul.f32 %v2139, 1.442695
  %v2205 = vpow.pop %v2204
  %v2206 = vmul.f32 %v2140, 1.442695
  %v2207 = vpow.pop %v2206
  %v2208 = vmul.f32 %v2141, 1.442695
  %v2209 = vpow.pop %v2208
  %v2210 = vmul.f32 %v2142, 1.442695
  %v2211 = vpow.pop %v2210
  %v2212 = vmul.f32 %v2143, 1.442695
  %v2213 = vpow.pop %v2212
  %v2214 = vmul.f32 %v2144, 1.442695
  %v2215 = vpow.pop %v2214
  %v2216 = vmul.f32 %v2145, 1.442695
  %v2217 = vpow.pop %v2216
  %v2218 = vmul.f32 %v2146, 1.442695
  %v2219 = vpow.pop %v2218
  %v2220 = vmul.f32 %v2147, 1.442695
  %v2221 = vpow.pop %v2220
  %v2222 = vmul.f32 %v2148, 1.442695
  %v2223 = vpow.pop %v2222
  %v2224 = vmul.f32 %v2149, 1.442695
  %v2225 = vpow.pop %v2224
  %v2226 = vmul.f32 %v2150, 1.442695
  %v2227 = vpow.pop %v2226
  %v2228 = vmul.f32 %v2151, 1.442695
  %v2229 = vpow.pop %v2228
  %v2230 = vmul.f32 %v2152, 1.442695
  %v2231 = vpow.pop %v2230
  %v2232 = vmul.f32 %v2153, 1.442695
  %v2233 = vpow.pop %v2232
  %v2234 = vmul.f32 %v2154, 1.442695
  %v2235 = vpow.pop %v2234
  %v2236 = vmul.f32 %v2155, 1.442695
  %v2237 = vpow.pop %v2236
  %v2238 = vmul.f32 %v2156, 1.442695
  %v2239 = vpow.pop %v2238
  %v2240 = vmul.f32 %v2157, 1.442695
  %v2241 = vpow.pop %v2240
  %v2242 = vmul.f32 %v2158, 1.442695
  %v2243 = vpow.pop %v2242
  %v2244 = vmul.f32 %v2159, 1.442695
  %v2245 = vpow.pop %v2244
  %v2246 = vmul.f32 %v2160, 1.442695
  %v2247 = vpow.pop %v2246
  %v2248 = vmul.f32 %v2161, 1.442695
  %v2249 = vpow.pop %v2248
  %v2250 = vmul.f32 %v2162, 1.442695
  %v2251 = vpow.pop %v2250
  %v2252 = vmul.f32 %v2163, 1.442695
  %v2253 = vpow.pop %v2252
  %v2254 = vmul.f32 %v2164, 1.442695
  %v2255 = vpow.pop %v2254
  %v2256 = vmul.f32 %v2165, 1.442695
  %v2257 = vpow.pop %v2256
  %v2258 = vmul.f32 %v2166, 1.442695
  %v2259 = vpow.pop %v2258
  %v2260 = vmul.f32 %v2167, 1.442695
  %v2261 = vpow.pop %v2260
  %v2262 = vmul.f32 %v2168, 1.442695
  %v2263 = vpow.pop %v2262
  %v2264 = vmul.f32 %v2169, 1.442695
  %v2265 = vpow.pop %v2264
  %v2266 = vmul.f32 %v2170, 1.442695
  %v2267 = vpow.pop %v2266
  %v2268 = vmul.f32 %v2171, 1.442695
  %v2269 = vpow.pop %v2268
  %v2270 = vmul.f32 %v2172, 1.442695
  %v2271 = vpow.pop %v2270
  %v2272 = vmul.f32 %v2173, 1.442695
  %v2273 = vpow.pop %v2272
  %v2274 = vmul.f32 %v2174, 1.442695
  %v2275 = vpow.pop %v2274
  %v2276 = vmul.f32 %v2175, 1.442695
  %v2277 = vpow.pop %v2276
  %v2278 = vmul.f32 %v2176, 1.442695
  %v2279 = vpow.pop %v2278
  %v2280 = vmul.f32 %v2177, 1.442695
  %v2281 = vpow.pop %v2280
  %v2282 = vmul.f32 %v2178, 1.442695
  %v2283 = vpow.pop %v2282
  %v2284 = vmul.f32 %v2179, 1.442695
  %v2285 = vpow.pop %v2284
  %v2286 = vmul.f32 %v2180, 1.442695
  %v2287 = vpow.pop %v2286
  %v2288 = vmul.f32 %v2181, 1.442695
  %v2289 = vpow.pop %v2288
  %v2290 = vmul.f32 %v2182, 1.442695
  %v2291 = vpow.pop %v2290
  %v2292 = vmul.f32 %v2183, 1.442695
  %v2293 = vpow.pop %v2292
  %v2294 = vmul.f32 %v2184, 1.442695
  %v2295 = vpow.pop %v2294
  %v2296 = vmul.f32 %v2185, 1.442695
  %v2297 = vpow.pop %v2296
  %v2298 = vmul.f32 %v2186, 1.442695
  %v2299 = vpow.pop %v2298
  %v2300 = vmul.f32 %v2187, 1.442695
  %v2301 = vpow.pop %v2300
  %v2302 = vmul.f32 %v2188, 1.442695
  %v2303 = vpow.pop %v2302
  %v2304 = vmul.f32 %v2189, 1.442695
  %v2305 = vpow.pop %v2304
  %v2306 = vmul.f32 %v2190, 1.442695
  %v2307 = vpow.pop %v2306
  %v2308 = vmul.f32 %v2191, 1.442695
  %v2309 = vpow.pop %v2308
  %v2310 = vmul.f32 %v2192, 1.442695
  %v2311 = vpow.pop %v2310
  %v2312 = vmul.f32 %v2193, 1.442695
  %v2313 = vpow.pop %v2312
  %v2314 = vmul.f32 %v2194, 1.442695
  %v2315 = vpow.pop %v2314
  %v2316 = vmul.f32 %v2195, 1.442695
  %v2317 = vpow.pop %v2316
  %v2318 = vmul.f32 %v2196, 1.442695
  %v2319 = vpow.pop %v2318
  %v2320 = vmul.f32 %v2197, 1.442695
  %v2321 = vpow.pop %v2320
  %v2322 = vmul.f32 %v2198, 1.442695
  %v2323 = vpow.pop %v2322
  %v2324 = vmul.f32 %v2199, 1.442695
  %v2325 = vpow.pop %v2324
  %v2326 = vmul.f32 %v2200, 1.442695
  %v2327 = vpow.pop %v2326
  %v2328 = vmul.f32 %v2201, 1.442695
  %v2329 = vpow.pop %v2328
  %v2330 = vadd.f32 %v2203, 1.0
  %v2331 = vadd.f32 %v2205, 1.0
  %v2332 = vadd.f32 %v2207, 1.0
  %v2333 = vadd.f32 %v2209, 1.0
  %v2334 = vadd.f32 %v2211, 1.0
  %v2335 = vadd.f32 %v2213, 1.0
  %v2336 = vadd.f32 %v2215, 1.0
  %v2337 = vadd.f32 %v2217, 1.0
  %v2338 = vadd.f32 %v2219, 1.0
  %v2339 = vadd.f32 %v2221, 1.0
  %v2340 = vadd.f32 %v2223, 1.0
  %v2341 = vadd.f32 %v2225, 1.0
  %v2342 = vadd.f32 %v2227, 1.0
  %v2343 = vadd.f32 %v2229, 1.0
  %v2344 = vadd.f32 %v2231, 1.0
  %v2345 = vadd.f32 %v2233, 1.0
  %v2346 = vadd.f32 %v2235, 1.0
  %v2347 = vadd.f32 %v2237, 1.0
  %v2348 = vadd.f32 %v2239, 1.0
  %v2349 = vadd.f32 %v2241, 1.0
  %v2350 = vadd.f32 %v2243, 1.0
  %v2351 = vadd.f32 %v2245, 1.0
  %v2352 = vadd.f32 %v2247, 1.0
  %v2353 = vadd.f32 %v2249, 1.0
  %v2354 = vadd.f32 %v2251, 1.0
  %v2355 = vadd.f32 %v2253, 1.0
  %v2356 = vadd.f32 %v2255, 1.0
  %v2357 = vadd.f32 %v2257, 1.0
  %v2358 = vadd.f32 %v2259, 1.0
  %v2359 = vadd.f32 %v2261, 1.0
  %v2360 = vadd.f32 %v2263, 1.0
  %v2361 = vadd.f32 %v2265, 1.0
  %v2362 = vadd.f32 %v2267, 1.0
  %v2363 = vadd.f32 %v2269, 1.0
  %v2364 = vadd.f32 %v2271, 1.0
  %v2365 = vadd.f32 %v2273, 1.0
  %v2366 = vadd.f32 %v2275, 1.0
  %v2367 = vadd.f32 %v2277, 1.0
  %v2368 = vadd.f32 %v2279, 1.0
  %v2369 = vadd.f32 %v2281, 1.0
  %v2370 = vadd.f32 %v2283, 1.0
  %v2371 = vadd.f32 %v2285, 1.0
  %v2372 = vadd.f32 %v2287, 1.0
  %v2373 = vadd.f32 %v2289, 1.0
  %v2374 = vadd.f32 %v2291, 1.0
  %v2375 = vadd.f32 %v2293, 1.0
  %v2376 = vadd.f32 %v2295, 1.0
  %v2377 = vadd.f32 %v2297, 1.0
  %v2378 = vadd.f32 %v2299, 1.0
  %v2379 = vadd.f32 %v2301, 1.0
  %v2380 = vadd.f32 %v2303, 1.0
  %v2381 = vadd.f32 %v2305, 1.0
  %v2382 = vadd.f32 %v2307, 1.0
  %v2383 = vadd.f32 %v2309, 1.0
  %v2384 = vadd.f32 %v2311, 1.0
  %v2385 = vadd.f32 %v2313, 1.0
  %v2386 = vadd.f32 %v2315, 1.0
  %v2387 = vadd.f32 %v2317, 1.0
  %v2388 = vadd.f32 %v2319, 1.0
  %v2389 = vadd.f32 %v2321, 1.0
  %v2390 = vadd.f32 %v2323, 1.0
  %v2391 = vadd.f32 %v2325, 1.0
  %v2392 = vadd.f32 %v2327, 1.0
  %v2393 = vadd.f32 %v2329, 1.0
  %v2394 = vrcp.pop %v2330
  %v2395 = vmul.f32 1.0, %v2394
  %v2396 = vrcp.pop %v2331
  %v2397 = vmul.f32 1.0, %v2396
  %v2398 = vrcp.pop %v2332
  %v2399 = vmul.f32 1.0, %v2398
  %v2400 = vrcp.pop %v2333
  %v2401 = vmul.f32 1.0, %v2400
  %v2402 = vrcp.pop %v2334
  %v2403 = vmul.f32 1.0, %v2402
  %v2404 = vrcp.pop %v2335
  %v2405 = vmul.f32 1.0, %v2404
  %v2406 = vrcp.pop %v2336
  %v2407 = vmul.f32 1.0, %v2406
  %v2408 = vrcp.pop %v2337
  %v2409 = vmul.f32 1.0, %v2408
  %v2410 = vrcp.pop %v2338
  %v2411 = vmul.f32 1.0, %v2410
  %v2412 = vrcp.pop %v2339
  %v2413 = vmul.f32 1.0, %v2412
  %v2414 = vrcp.pop %v2340
  %v2415 = vmul.f32 1.0, %v2414
  %v2416 = vrcp.pop %v2341
  %v2417 = vmul.f32 1.0, %v2416
  %v2418 = vrcp.pop %v2342
  %v2419 = vmul.f32 1.0, %v2418
  %v2420 = vrcp.pop %v2343
  %v2421 = vmul.f32 1.0, %v2420
  %v2422 = vrcp.pop %v2344
  %v2423 = vmul.f32 1.0, %v2422
  %v2424 = vrcp.pop %v2345
  %v2425 = vmul.f32 1.0, %v2424
  %v2426 = vrcp.pop %v2346
  %v2427 = vmul.f32 1.0, %v2426
  %v2428 = vrcp.pop %v2347
  %v2429 = vmul.f32 1.0, %v2428
  %v2430 = vrcp.pop %v2348
  %v2431 = vmul.f32 1.0, %v2430
  %v2432 = vrcp.pop %v2349
  %v2433 = vmul.f32 1.0, %v2432
  %v2434 = vrcp.pop %v2350
  %v2435 = vmul.f32 1.0, %v2434
  %v2436 = vrcp.pop %v2351
  %v2437 = vmul.f32 1.0, %v2436
  %v2438 = vrcp.pop %v2352
  %v2439 = vmul.f32 1.0, %v2438
  %v2440 = vrcp.pop %v2353
  %v2441 = vmul.f32 1.0, %v2440
  %v2442 = vrcp.pop %v2354
  %v2443 = vmul.f32 1.0, %v2442
  %v2444 = vrcp.pop %v2355
  %v2445 = vmul.f32 1.0, %v2444
  %v2446 = vrcp.pop %v2356
  %v2447 = vmul.f32 1.0, %v2446
  %v2448 = vrcp.pop %v2357
  %v2449 = vmul.f32 1.0, %v2448
  %v2450 = vrcp.pop %v2358
  %v2451 = vmul.f32 1.0, %v2450
  %v2452 = vrcp.pop %v2359
  %v2453 = vmul.f32 1.0, %v2452
  %v2454 = vrcp.pop %v2360
  %v2455 = vmul.f32 1.0, %v2454
  %v2456 = vrcp.pop %v2361
  %v2457 = vmul.f32 1.0, %v2456
  %v2458 = vrcp.pop %v2362
  %v2459 = vmul.f32 1.0, %v2458
  %v2460 = vrcp.pop %v2363
  %v2461 = vmul.f32 1.0, %v2460
  %v2462 = vrcp.pop %v2364
  %v2463 = vmul.f32 1.0, %v2462
  %v2464 = vrcp.pop %v2365
  %v2465 = vmul.f32 1.0, %v2464
  %v2466 = vrcp.pop %v2366
  %v2467 = vmul.f32 1.0, %v2466
  %v2468 = vrcp.pop %v2367
  %v2469 = vmul.f32 1.0, %v2468
  %v2470 = vrcp.pop %v2368
  %v2471 = vmul.f32 1.0, %v2470
  %v2472 = vrcp.pop %v2369
  %v2473 = vmul.f32 1.0, %v2472
  %v2474 = vrcp.pop %v2370
  %v2475 = vmul.f32 1.0, %v2474
  %v2476 = vrcp.pop %v2371
  %v2477 = vmul.f32 1.0, %v2476
  %v2478 = vrcp.pop %v2372
  %v2479 = vmul.f32 1.0, %v2478
  %v2480 = vrcp.pop %v2373
  %v2481 = vmul.f32 1.0, %v2480
  %v2482 = vrcp.pop %v2374
  %v2483 = vmul.f32 1.0, %v2482
  %v2484 = vrcp.pop %v2375
  %v2485 = vmul.f32 1.0, %v2484
  %v2486 = vrcp.pop %v2376
  %v2487 = vmul.f32 1.0, %v2486
  %v2488 = vrcp.pop %v2377
  %v2489 = vmul.f32 1.0, %v2488
  %v2490 = vrcp.pop %v2378
  %v2491 = vmul.f32 1.0, %v2490
  %v2492 = vrcp.pop %v2379
  %v2493 = vmul.f32 1.0, %v2492
  %v2494 = vrcp.pop %v2380
  %v2495 = vmul.f32 1.0, %v2494
  %v2496 = vrcp.pop %v2381
  %v2497 = vmul.f32 1.0, %v2496
  %v2498 = vrcp.pop %v2382
  %v2499 = vmul.f32 1.0, %v2498
  %v2500 = vrcp.pop %v2383
  %v2501 = vmul.f32 1.0, %v2500
  %v2502 = vrcp.pop %v2384
  %v2503 = vmul.f32 1.0, %v2502
  %v2504 = vrcp.pop %v2385
  %v2505 = vmul.f32 1.0, %v2504
  %v2506 = vrcp.pop %v2386
  %v2507 = vmul.f32 1.0, %v2506
  %v2508 = vrcp.pop %v2387
  %v2509 = vmul.f32 1.0, %v2508
  %v2510 = vrcp.pop %v2388
  %v2511 = vmul.f32 1.0, %v2510
  %v2512 = vrcp.pop %v2389
  %v2513 = vmul.f32 1.0, %v2512
  %v2514 = vrcp.pop %v2390
  %v2515 = vmul.f32 1.0, %v2514
  %v2516 = vrcp.pop %v2391
  %v2517 = vmul.f32 1.0, %v2516
  %v2518 = vrcp.pop %v2392
  %v2519 = vmul.f32 1.0, %v2518
  %v2520 = vrcp.pop %v2393
  %v2521 = vmul.f32 1.0, %v2520
  %v2522 = vmul.f32 %v1884, %v2395
  %v2523 = vmul.f32 %v1887, %v2397
  %v2524 = vmul.f32 %v1892, %v2399
  %v2525 = vmul.f32 %v1895, %v2401
  %v2526 = vmul.f32 %v1900, %v2403
  %v2527 = vmul.f32 %v1903, %v2405
  %v2528 = vmul.f32 %v1908, %v2407
  %v2529 = vmul.f32 %v1911, %v2409
  %v2530 = vmul.f32 %v1916, %v2411
  %v2531 = vmul.f32 %v1919, %v2413
  %v2532 = vmul.f32 %v1924, %v2415
  %v2533 = vmul.f32 %v1927, %v2417
  %v2534 = vmul.f32 %v1932, %v2419
  %v2535 = vmul.f32 %v1935, %v2421
  %v2536 = vmul.f32 %v1940, %v2423
  %v2537 = vmul.f32 %v1943, %v2425
  %v2538 = vmul.f32 %v1948, %v2427
  %v2539 = vmul.f32 %v1951, %v2429
  %v2540 = vmul.f32 %v1956, %v2431
  %v2541 = vmul.f32 %v1959, %v2433
  %v2542 = vmul.f32 %v1964, %v2435
  %v2543 = vmul.f32 %v1967, %v2437
  %v2544 = vmul.f32 %v1972, %v2439
  %v2545 = vmul.f32 %v1975, %v2441
  %v2546 = vmul.f32 %v1980, %v2443
  %v2547 = vmul.f32 %v1983, %v2445
  %v2548 = vmul.f32 %v1988, %v2447
  %v2549 = vmul.f32 %v1991, %v2449
  %v2550 = vmul.f32 %v1996, %v2451
  %v2551 = vmul.f32 %v1999, %v2453
  %v2552 = vmul.f32 %v2004, %v2455
  %v2553 = vmul.f32 %v2007, %v2457
  %v2554 = vmul.f32 %v2012, %v2459
  %v2555 = vmul.f32 %v2015, %v2461
  %v2556 = vmul.f32 %v2020, %v2463
  %v2557 = vmul.f32 %v2023, %v2465
  %v2558 = vmul.f32 %v2028, %v2467
  %v2559 = vmul.f32 %v2031, %v2469
  %v2560 = vmul.f32 %v2036, %v2471
  %v2561 = vmul.f32 %v2039, %v2473
  %v2562 = vmul.f32 %v2044, %v2475
  %v2563 = vmul.f32 %v2047, %v2477
  %v2564 = vmul.f32 %v2052, %v2479
  %v2565 = vmul.f32 %v2055, %v2481
  %v2566 = vmul.f32 %v2060, %v2483
  %v2567 = vmul.f32 %v2063, %v2485
  %v2568 = vmul.f32 %v2068, %v2487
  %v2569 = vmul.f32 %v2071, %v2489
  %v2570 = vmul.f32 %v2076, %v2491
  %v2571 = vmul.f32 %v2079, %v2493
  %v2572 = vmul.f32 %v2084, %v2495
  %v2573 = vmul.f32 %v2087, %v2497
  %v2574 = vmul.f32 %v2092, %v2499
  %v2575 = vmul.f32 %v2095, %v2501
  %v2576 = vmul.f32 %v2100, %v2503
  %v2577 = vmul.f32 %v2103, %v2505
  %v2578 = vmul.f32 %v2108, %v2507
  %v2579 = vmul.f32 %v2111, %v2509
  %v2580 = vmul.f32 %v2116, %v2511
  %v2581 = vmul.f32 %v2119, %v2513
  %v2582 = vmul.f32 %v2124, %v2515
  %v2583 = vmul.f32 %v2127, %v2517
  %v2584 = vmul.f32 %v2132, %v2519
  %v2585 = vmul.f32 %v2135, %v2521
  %v2586 = vpack.c.bf16 %v2523, %v2522
  %v2587 = vpack.c.bf16 %v2525, %v2524
  %v2588 = vpack.c.bf16 %v2527, %v2526
  %v2589 = vpack.c.bf16 %v2529, %v2528
  %v2590 = vpack.c.bf16 %v2531, %v2530
  %v2591 = vpack.c.bf16 %v2533, %v2532
  %v2592 = vpack.c.bf16 %v2535, %v2534
  %v2593 = vpack.c.bf16 %v2537, %v2536
  %v2594 = vpack.c.bf16 %v2539, %v2538
  %v2595 = vpack.c.bf16 %v2541, %v2540
  %v2596 = vpack.c.bf16 %v2543, %v2542
  %v2597 = vpack.c.bf16 %v2545, %v2544
  %v2598 = vpack.c.bf16 %v2547, %v2546
  %v2599 = vpack.c.bf16 %v2549, %v2548
  %v2600 = vpack.c.bf16 %v2551, %v2550
  %v2601 = vpack.c.bf16 %v2553, %v2552
  %v2602 = vpack.c.bf16 %v2555, %v2554
  %v2603 = vpack.c.bf16 %v2557, %v2556
  %v2604 = vpack.c.bf16 %v2559, %v2558
  %v2605 = vpack.c.bf16 %v2561, %v2560
  %v2606 = vpack.c.bf16 %v2563, %v2562
  %v2607 = vpack.c.bf16 %v2565, %v2564
  %v2608 = vpack.c.bf16 %v2567, %v2566
  %v2609 = vpack.c.bf16 %v2569, %v2568
  %v2610 = vpack.c.bf16 %v2571, %v2570
  %v2611 = vpack.c.bf16 %v2573, %v2572
  %v2612 = vpack.c.bf16 %v2575, %v2574
  %v2613 = vpack.c.bf16 %v2577, %v2576
  %v2614 = vpack.c.bf16 %v2579, %v2578
  %v2615 = vpack.c.bf16 %v2581, %v2580
  %v2616 = vpack.c.bf16 %v2583, %v2582
  %v2617 = vpack.c.bf16 %v2585, %v2584
  %v2650 = vunpack.c.l.b16 %v2586
  %v2651 = vunpack.c.h.b16 %v2586
  %v2652 = vunpack.c.l.b16 %v2587
  %v2653 = vunpack.c.h.b16 %v2587
  %v2654 = vunpack.c.l.b16 %v2588
  %v2655 = vunpack.c.h.b16 %v2588
  %v2656 = vunpack.c.l.b16 %v2589
  %v2657 = vunpack.c.h.b16 %v2589
  %v2658 = vunpack.c.l.b16 %v2590
  %v2659 = vunpack.c.h.b16 %v2590
  %v2660 = vunpack.c.l.b16 %v2591
  %v2661 = vunpack.c.h.b16 %v2591
  %v2662 = vunpack.c.l.b16 %v2592
  %v2663 = vunpack.c.h.b16 %v2592
  %v2664 = vunpack.c.l.b16 %v2593
  %v2665 = vunpack.c.h.b16 %v2593
  %v2666 = vunpack.c.l.b16 %v2594
  %v2667 = vunpack.c.h.b16 %v2594
  %v2668 = vunpack.c.l.b16 %v2595
  %v2669 = vunpack.c.h.b16 %v2595
  %v2670 = vunpack.c.l.b16 %v2596
  %v2671 = vunpack.c.h.b16 %v2596
  %v2672 = vunpack.c.l.b16 %v2597
  %v2673 = vunpack.c.h.b16 %v2597
  %v2674 = vunpack.c.l.b16 %v2598
  %v2675 = vunpack.c.h.b16 %v2598
  %v2676 = vunpack.c.l.b16 %v2599
  %v2677 = vunpack.c.h.b16 %v2599
  %v2678 = vunpack.c.l.b16 %v2600
  %v2679 = vunpack.c.h.b16 %v2600
  %v2680 = vunpack.c.l.b16 %v2601
  %v2681 = vunpack.c.h.b16 %v2601
  %v2682 = vunpack.c.l.b16 %v2602
  %v2683 = vunpack.c.h.b16 %v2602
  %v2684 = vunpack.c.l.b16 %v2603
  %v2685 = vunpack.c.h.b16 %v2603
  %v2686 = vunpack.c.l.b16 %v2604
  %v2687 = vunpack.c.h.b16 %v2604
  %v2688 = vunpack.c.l.b16 %v2605
  %v2689 = vunpack.c.h.b16 %v2605
  %v2690 = vunpack.c.l.b16 %v2606
  %v2691 = vunpack.c.h.b16 %v2606
  %v2692 = vunpack.c.l.b16 %v2607
  %v2693 = vunpack.c.h.b16 %v2607
  %v2694 = vunpack.c.l.b16 %v2608
  %v2695 = vunpack.c.h.b16 %v2608
  %v2696 = vunpack.c.l.b16 %v2609
  %v2697 = vunpack.c.h.b16 %v2609
  %v2698 = vunpack.c.l.b16 %v2610
  %v2699 = vunpack.c.h.b16 %v2610
  %v2700 = vunpack.c.l.b16 %v2611
  %v2701 = vunpack.c.h.b16 %v2611
  %v2702 = vunpack.c.l.b16 %v2612
  %v2703 = vunpack.c.h.b16 %v2612
  %v2704 = vunpack.c.l.b16 %v2613
  %v2705 = vunpack.c.h.b16 %v2613
  %v2706 = vunpack.c.l.b16 %v2614
  %v2707 = vunpack.c.h.b16 %v2614
  %v2708 = vunpack.c.l.b16 %v2615
  %v2709 = vunpack.c.h.b16 %v2615
  %v2710 = vunpack.c.l.b16 %v2616
  %v2711 = vunpack.c.h.b16 %v2616
  %v2712 = vunpack.c.l.b16 %v2617
  %v2713 = vunpack.c.h.b16 %v2617
  %v2714 = vpack.c.b16 %v2650, %v2650
  %v2715 = vpack.c.b16 %v2651, %v2651
  %v2716 = vpack.c.b16 %v2652, %v2652
  %v2717 = vpack.c.b16 %v2653, %v2653
  %v2718 = vpack.c.b16 %v2654, %v2654
  %v2719 = vpack.c.b16 %v2655, %v2655
  %v2720 = vpack.c.b16 %v2656, %v2656
  %v2721 = vpack.c.b16 %v2657, %v2657
  %v2722 = vpack.c.b16 %v2658, %v2658
  %v2723 = vpack.c.b16 %v2659, %v2659
  %v2724 = vpack.c.b16 %v2660, %v2660
  %v2725 = vpack.c.b16 %v2661, %v2661
  %v2726 = vpack.c.b16 %v2662, %v2662
  %v2727 = vpack.c.b16 %v2663, %v2663
  %v2728 = vpack.c.b16 %v2664, %v2664
  %v2729 = vpack.c.b16 %v2665, %v2665
  %v2730 = vpack.c.b16 %v2666, %v2666
  %v2731 = vpack.c.b16 %v2667, %v2667
  %v2732 = vpack.c.b16 %v2668, %v2668
  %v2733 = vpack.c.b16 %v2669, %v2669
  %v2734 = vpack.c.b16 %v2670, %v2670
  %v2735 = vpack.c.b16 %v2671, %v2671
  %v2736 = vpack.c.b16 %v2672, %v2672
  %v2737 = vpack.c.b16 %v2673, %v2673
  %v2738 = vpack.c.b16 %v2674, %v2674
  %v2739 = vpack.c.b16 %v2675, %v2675
  %v2740 = vpack.c.b16 %v2676, %v2676
  %v2741 = vpack.c.b16 %v2677, %v2677
  %v2742 = vpack.c.b16 %v2678, %v2678
  %v2743 = vpack.c.b16 %v2679, %v2679
  %v2744 = vpack.c.b16 %v2680, %v2680
  %v2745 = vpack.c.b16 %v2681, %v2681
  %v2746 = vpack.c.b16 %v2682, %v2682
  %v2747 = vpack.c.b16 %v2683, %v2683
  %v2748 = vpack.c.b16 %v2684, %v2684
  %v2749 = vpack.c.b16 %v2685, %v2685
  %v2750 = vpack.c.b16 %v2686, %v2686
  %v2751 = vpack.c.b16 %v2687, %v2687
  %v2752 = vpack.c.b16 %v2688, %v2688
  %v2753 = vpack.c.b16 %v2689, %v2689
  %v2754 = vpack.c.b16 %v2690, %v2690
  %v2755 = vpack.c.b16 %v2691, %v2691
  %v2756 = vpack.c.b16 %v2692, %v2692
  %v2757 = vpack.c.b16 %v2693, %v2693
  %v2758 = vpack.c.b16 %v2694, %v2694
  %v2759 = vpack.c.b16 %v2695, %v2695
  %v2760 = vpack.c.b16 %v2696, %v2696
  %v2761 = vpack.c.b16 %v2697, %v2697
  %v2762 = vpack.c.b16 %v2698, %v2698
  %v2763 = vpack.c.b16 %v2699, %v2699
  %v2764 = vpack.c.b16 %v2700, %v2700
  %v2765 = vpack.c.b16 %v2701, %v2701
  %v2766 = vpack.c.b16 %v2702, %v2702
  %v2767 = vpack.c.b16 %v2703, %v2703
  %v2768 = vpack.c.b16 %v2704, %v2704
  %v2769 = vpack.c.b16 %v2705, %v2705
  %v2770 = vpack.c.b16 %v2706, %v2706
  %v2771 = vpack.c.b16 %v2707, %v2707
  %v2772 = vpack.c.b16 %v2708, %v2708
  %v2773 = vpack.c.b16 %v2709, %v2709
  %v2774 = vpack.c.b16 %v2710, %v2710
  %v2775 = vpack.c.b16 %v2711, %v2711
  %v2776 = vpack.c.b16 %v2712, %v2712
  %v2777 = vpack.c.b16 %v2713, %v2713
  %2842 = vst.msk [vmem:[%s7] sm:$0xf] %vm1773, %v2714
  %2843 = vst.msk [vmem:[%s7 + $0x4] sm:$0xf] %vm1773, %v2715
  %2844 = vst.msk [vmem:[%s7 + $0x8] sm:$0xf] %vm1773, %v2716
  %2845 = vst.msk [vmem:[%s7 + $0xc] sm:$0xf] %vm1773, %v2717
  %2846 = vst.msk [vmem:[%s7 + $0x10] sm:$0xf] %vm1773, %v2718
  %2847 = vst.msk [vmem:[%s7 + $0x14] sm:$0xf] %vm1773, %v2719
  %2848 = vst.msk [vmem:[%s7 + $0x18] sm:$0xf] %vm1773, %v2720
  %2849 = vst.msk [vmem:[%s7 + $0x1c] sm:$0xf] %vm1773, %v2721
  %2850 = vst.msk [vmem:[%s7 + $0x20] sm:$0xf] %vm1773, %v2722
  %2851 = vst.msk [vmem:[%s7 + $0x24] sm:$0xf] %vm1773, %v2723
  %2852 = vst.msk [vmem:[%s7 + $0x28] sm:$0xf] %vm1773, %v2724
  %2853 = vst.msk [vmem:[%s7 + $0x2c] sm:$0xf] %vm1773, %v2725
  %2854 = vst.msk [vmem:[%s7 + $0x30] sm:$0xf] %vm1773, %v2726
  %2855 = vst.msk [vmem:[%s7 + $0x34] sm:$0xf] %vm1773, %v2727
  %2856 = vst.msk [vmem:[%s7 + $0x38] sm:$0xf] %vm1773, %v2728
  %2857 = vst.msk [vmem:[%s7 + $0x3c] sm:$0xf] %vm1773, %v2729
  %2858 = vst.msk [vmem:[%s7 + $0x40] sm:$0xf] %vm1773, %v2730
  %2859 = vst.msk [vmem:[%s7 + $0x44] sm:$0xf] %vm1773, %v2731
  %2860 = vst.msk [vmem:[%s7 + $0x48] sm:$0xf] %vm1773, %v2732
  %2861 = vst.msk [vmem:[%s7 + $0x4c] sm:$0xf] %vm1773, %v2733
  %2862 = vst.msk [vmem:[%s7 + $0x50] sm:$0xf] %vm1773, %v2734
  %2863 = vst.msk [vmem:[%s7 + $0x54] sm:$0xf] %vm1773, %v2735
  %2864 = vst.msk [vmem:[%s7 + $0x58] sm:$0xf] %vm1773, %v2736
  %2865 = vst.msk [vmem:[%s7 + $0x5c] sm:$0xf] %vm1773, %v2737
  %2866 = vst.msk [vmem:[%s7 + $0x60] sm:$0xf] %vm1773, %v2738
  %2867 = vst.msk [vmem:[%s7 + $0x64] sm:$0xf] %vm1773, %v2739
  %2868 = vst.msk [vmem:[%s7 + $0x68] sm:$0xf] %vm1773, %v2740
  %2869 = vst.msk [vmem:[%s7 + $0x6c] sm:$0xf] %vm1773, %v2741
  %2870 = vst.msk [vmem:[%s7 + $0x70] sm:$0xf] %vm1773, %v2742
  %2871 = vst.msk [vmem:[%s7 + $0x74] sm:$0xf] %vm1773, %v2743
  %2872 = vst.msk [vmem:[%s7 + $0x78] sm:$0xf] %vm1773, %v2744
  %2873 = vst.msk [vmem:[%s7 + $0x7c] sm:$0xf] %vm1773, %v2745
  %2874 = vst.msk [vmem:[%s7 + $0x80] sm:$0xf] %vm1773, %v2746
  %2875 = vst.msk [vmem:[%s7 + $0x84] sm:$0xf] %vm1773, %v2747
  %2876 = vst.msk [vmem:[%s7 + $0x88] sm:$0xf] %vm1773, %v2748
  %2877 = vst.msk [vmem:[%s7 + $0x8c] sm:$0xf] %vm1773, %v2749
  %2878 = vst.msk [vmem:[%s7 + $0x90] sm:$0xf] %vm1773, %v2750
  %2879 = vst.msk [vmem:[%s7 + $0x94] sm:$0xf] %vm1773, %v2751
  %2880 = vst.msk [vmem:[%s7 + $0x98] sm:$0xf] %vm1773, %v2752
  %2881 = vst.msk [vmem:[%s7 + $0x9c] sm:$0xf] %vm1773, %v2753
  %2882 = vst.msk [vmem:[%s7 + $0xa0] sm:$0xf] %vm1773, %v2754
  %2883 = vst.msk [vmem:[%s7 + $0xa4] sm:$0xf] %vm1773, %v2755
  %2884 = vst.msk [vmem:[%s7 + $0xa8] sm:$0xf] %vm1773, %v2756
  %2885 = vst.msk [vmem:[%s7 + $0xac] sm:$0xf] %vm1773, %v2757
  %2886 = vst.msk [vmem:[%s7 + $0xb0] sm:$0xf] %vm1773, %v2758
  %2887 = vst.msk [vmem:[%s7 + $0xb4] sm:$0xf] %vm1773, %v2759
  %2888 = vst.msk [vmem:[%s7 + $0xb8] sm:$0xf] %vm1773, %v2760
  %2889 = vst.msk [vmem:[%s7 + $0xbc] sm:$0xf] %vm1773, %v2761
  %2890 = vst.msk [vmem:[%s7 + $0xc0] sm:$0xf] %vm1773, %v2762
  %2891 = vst.msk [vmem:[%s7 + $0xc4] sm:$0xf] %vm1773, %v2763
  %2892 = vst.msk [vmem:[%s7 + $0xc8] sm:$0xf] %vm1773, %v2764
  %2893 = vst.msk [vmem:[%s7 + $0xcc] sm:$0xf] %vm1773, %v2765
  %2894 = vst.msk [vmem:[%s7 + $0xd0] sm:$0xf] %vm1773, %v2766
  %2895 = vst.msk [vmem:[%s7 + $0xd4] sm:$0xf] %vm1773, %v2767
  %2896 = vst.msk [vmem:[%s7 + $0xd8] sm:$0xf] %vm1773, %v2768
  %2897 = vst.msk [vmem:[%s7 + $0xdc] sm:$0xf] %vm1773, %v2769
  %2898 = vst.msk [vmem:[%s7 + $0xe0] sm:$0xf] %vm1773, %v2770
  %2899 = vst.msk [vmem:[%s7 + $0xe4] sm:$0xf] %vm1773, %v2771
  %2900 = vst.msk [vmem:[%s7 + $0xe8] sm:$0xf] %vm1773, %v2772
  %2901 = vst.msk [vmem:[%s7 + $0xec] sm:$0xf] %vm1773, %v2773
  %2902 = vst.msk [vmem:[%s7 + $0xf0] sm:$0xf] %vm1773, %v2774
  %2903 = vst.msk [vmem:[%s7 + $0xf4] sm:$0xf] %vm1773, %v2775
  %2904 = vst.msk [vmem:[%s7 + $0xf8] sm:$0xf] %vm1773, %v2776
  %2905 = vst.msk [vmem:[%s7 + $0xfc] sm:$0xf] %vm1773, %v2777
  // Predicated region
  $region26: #{bottleneck_csp2_pallas.3} parent=0 // pred_check
    _
  $region27: #{bottleneck_csp2_pallas.3} parent=0 // pred_check_branch
    %2907 = sbr.rel (0) target = $region29
  $region28: #{bottleneck_csp2_pallas.3} parent=0 // pred_region
    _
  $region29: #{bottleneck_csp2_pallas.3} parent=0 // pred_fallthru
    _
  // Predicated region
  $region30: #{bottleneck_csp2_pallas.3} parent=0 // pred_check
    _
  $region31: #{bottleneck_csp2_pallas.3} parent=0 // pred_check_branch
    %2909 = sbr.rel (0) target = $region33
  $region32: #{bottleneck_csp2_pallas.3} parent=0 // pred_region
    _
  $region33: #{bottleneck_csp2_pallas.3} parent=0 // pred_fallthru
    _
  // Predicated region
  $region34: #{bottleneck_csp2_pallas.3} parent=0 // pred_check
    _
  $region35: #{bottleneck_csp2_pallas.3} parent=0 // pred_check_branch
    %2911 = sbr.rel (0) target = $region37
  $region36: #{bottleneck_csp2_pallas.3} parent=0 // pred_region
    _
  $region37: #{bottleneck_csp2_pallas.3} parent=0 // pred_fallthru
    _
  // Predicated region
  $region38: #{bottleneck_csp2_pallas.3} parent=0 // pred_check
    _
  $region39: #{bottleneck_csp2_pallas.3} parent=0 // pred_check_branch
    %2913 = sbr.rel (0) target = $region41
  $region40: #{bottleneck_csp2_pallas.3} parent=0 // pred_region
    _
  $region41: #{bottleneck_csp2_pallas.3} parent=0 // pred_fallthru
    _

// kernel: bottleneck_csp2_pallas.4
$region0: #{bottleneck_csp2_pallas.4}
  #allocation0 [shape = 'u32[]', space=smem, size = 0x4, offset = 0x4, fixed_abs, tag = 'smem constant byte address 0x4 - core index']
  #allocation1 [shape = 'u32[144,128]{1,0:T(1,128)}', space=vmem, size = 0x12000, scoped, tag = 'internal scratch']
  %s0 = inlined_call_operand.vmem [shape: bf16[2,18,18,4], index: 0, kind: input, shape index: {}]
  %s1 = inlined_call_operand.vmem [shape: bf16[9,4,4], index: 1, kind: input, shape index: {}]
  %s2 = inlined_call_operand.vmem [shape: f32[1,4], index: 2, kind: input, shape index: {}]
  %s3 = inlined_call_operand.vmem [shape: bf16[512,4], index: 3, kind: output, shape index: {}]
  %s4 = sld [smem:[#allocation0]]
  $region45: #{bottleneck_csp2_pallas.4} parent=0
    _
  %s6 = ssub.s32 1, %s4
  %s7 = scalar_select 0, %s6, %s4
  loop: start=0, step=1, limit=4
  $region2: #{bottleneck_csp2_pallas.4} parent=0 // loop_pre_header
    _
  $region3: #{bottleneck_csp2_pallas.4} parent=0 // loop_header
    %s9 = sphi 0, %s13
    %p10 = scmp.ge.s32.totalorder %s9, 4
    %s19 = sphi 0, %s21
    %s22 = sphi 0, %s19
    %s23 = sphi 0, %s22
    %s39 = sphi 0, %s23
    %s43 = sphi 0, %s43
    %s45 = sphi 0, %s43
    %s46 = sphi 0, %s45
    %s60 = sphi 0, %s46
    %s64 = sphi 0, %s64
    %s66 = sphi 0, %s64
    %s67 = sphi 0, %s66
    %s81 = sphi 0, %s67
    %s87 = sphi 0, %s89
    %s90 = sphi 0, %s87
    %s91 = sphi 0, %s90
    %s107 = sphi 0, %s91
  $region4: #{bottleneck_csp2_pallas.4} parent=0 // loop_header_branch
    %12 = sbr.rel (%p10) target = $region8
  $region5: #{bottleneck_csp2_pallas.4} parent=0 // loop_body
    %s14 = ssub.s32 %s9, 1
    %s15 = ssub.s32 %s9, 2
    %s16 = sadd.s32 %s9, 1
    %s17 = ssub.s32 %s9, %s16
    %p18 = scmp.eq.s32.totalorder %s17, 0
    %s20 = sadd.s32 %s19, 1
    %s21 = scalar_select %p18, %s19, %s20
    %p24 = pneg %p18
    %p25 = scmp.eq.s32.totalorder %s9, 1
    %p26 = por %p24, %p25
    %p27 = scmp.ne.s32.totalorder %s19, %s22
    %p28 = scmp.eq.s32.totalorder %s9, 0
    %p29 = por %p27, %p28
    %p30 = scmp.ne.s32.totalorder %s19, %s22
    %p31 = scmp.eq.s32.totalorder %s14, 1
    %p32 = por %p30, %p31
    %p33 = scmp.ne.s32.totalorder %s22, %s23
    %p34 = scmp.eq.s32.totalorder %s14, 0
    %p35 = por %p33, %p34
    %p36 = scmp.ne.s32.totalorder %s22, %s23
    %p37 = scmp.eq.s32.totalorder %s15, 1
    %p38 = por %p36, %p37
    %p40 = scmp.ne.s32.totalorder %s23, %s39
    %p41 = scmp.eq.s32.totalorder %s15, 0
    %p42 = por %p40, %p41
    %s44 = sadd.s32 %s43, 1
    %p47 = scmp.eq.s32.totalorder %s9, 1
    %p48 = scmp.ne.s32.totalorder %s43, %s45
    %p49 = scmp.eq.s32.totalorder %s9, 0
    %p50 = por %p48, %p49
    %p51 = scmp.ne.s32.totalorder %s43, %s45
    %p52 = scmp.eq.s32.totalorder %s14, 1
    %p53 = por %p51, %p52
    %p54 = scmp.ne.s32.totalorder %s45, %s46
    %p55 = scmp.eq.s32.totalorder %s14, 0
    %p56 = por %p54, %p55
    %p57 = scmp.ne.s32.totalorder %s45, %s46
    %p58 = scmp.eq.s32.totalorder %s15, 1
    %p59 = por %p57, %p58
    %p61 = scmp.ne.s32.totalorder %s46, %s60
    %p62 = scmp.eq.s32.totalorder %s15, 0
    %p63 = por %p61, %p62
    %s65 = sadd.s32 %s64, 1
    %p68 = scmp.eq.s32.totalorder %s9, 1
    %p69 = scmp.ne.s32.totalorder %s64, %s66
    %p70 = scmp.eq.s32.totalorder %s9, 0
    %p71 = por %p69, %p70
    %p72 = scmp.ne.s32.totalorder %s64, %s66
    %p73 = scmp.eq.s32.totalorder %s14, 1
    %p74 = por %p72, %p73
    %p75 = scmp.ne.s32.totalorder %s66, %s67
    %p76 = scmp.eq.s32.totalorder %s14, 0
    %p77 = por %p75, %p76
    %p78 = scmp.ne.s32.totalorder %s66, %s67
    %p79 = scmp.eq.s32.totalorder %s15, 1
    %p80 = por %p78, %p79
    %p82 = scmp.ne.s32.totalorder %s67, %s81
    %p83 = scmp.eq.s32.totalorder %s15, 0
    %p84 = por %p82, %p83
    %s85 = ssub.s32 %s9, %s16
    %p86 = scmp.eq.s32.totalorder %s85, 0
    %s88 = sadd.s32 %s87, 1
    %s89 = scalar_select %p86, %s87, %s88
    %p92 = pneg %p86
    %p93 = scmp.eq.s32.totalorder %s9, 1
    %p94 = por %p92, %p93
    %p95 = scmp.ne.s32.totalorder %s87, %s90
    %p96 = scmp.eq.s32.totalorder %s9, 0
    %p97 = por %p95, %p96
    %p98 = scmp.ne.s32.totalorder %s87, %s90
    %p99 = scmp.eq.s32.totalorder %s14, 1
    %p100 = por %p98, %p99
    %p101 = scmp.ne.s32.totalorder %s90, %s91
    %p102 = scmp.eq.s32.totalorder %s14, 0
    %p103 = por %p101, %p102
    %p104 = scmp.ne.s32.totalorder %s90, %s91
    %p105 = scmp.eq.s32.totalorder %s15, 1
    %p106 = por %p104, %p105
    %p108 = scmp.ne.s32.totalorder %s91, %s107
    %p109 = scmp.eq.s32.totalorder %s15, 0
    %p110 = por %p108, %p109
    %p111 = scmp.le.s32.totalorder 1, %s9
    %p112 = scmp.lt.s32.totalorder %s9, 3
    %p113 = pnand %p111, %p112
    %p114 = pneg %p113
    // Predicated region
    $region9: #{bottleneck_csp2_pallas.4} parent=5 // pred_check
      _
    $region10: #{bottleneck_csp2_pallas.4} parent=5 // pred_check_branch
      %116 = sbr.rel (%p113) target = $region12
    $region11: #{bottleneck_csp2_pallas.4} parent=5 // pred_region
      %s117 = ssub.s32 %s9, 1
      // Predicated region
      $region13: #{bottleneck_csp2_pallas.4} parent=11 // pred_check
        %p118 = pneg %p56
      $region14: #{bottleneck_csp2_pallas.4} parent=11 // pred_check_branch
        %120 = sbr.rel (%p118) target = $region16
      $region15: #{bottleneck_csp2_pallas.4} parent=11 // pred_region
        _
      $region16: #{bottleneck_csp2_pallas.4} parent=11 // pred_fallthru
        _
      // Predicated region
      $region17: #{bottleneck_csp2_pallas.4} parent=11 // pred_check
        %p121 = pneg %p77
      $region18: #{bottleneck_csp2_pallas.4} parent=11 // pred_check_branch
        %123 = sbr.rel (%p121) target = $region20
      $region19: #{bottleneck_csp2_pallas.4} parent=11 // pred_region
        _
      $region20: #{bottleneck_csp2_pallas.4} parent=11 // pred_fallthru
        _
    $region12: #{bottleneck_csp2_pallas.4} parent=5 // pred_fallthru
      _
    %p124 = scmp.lt.s32.totalorder %s9, 2
    // Predicated region
    $region21: #{bottleneck_csp2_pallas.4} parent=5 // pred_check
      %p125 = pneg %p124
    $region22: #{bottleneck_csp2_pallas.4} parent=5 // pred_check_branch
      %127 = sbr.rel (%p125) target = $region24
    $region23: #{bottleneck_csp2_pallas.4} parent=5 // pred_region
      // Predicated region
      $region25: #{bottleneck_csp2_pallas.4} parent=23 // pred_check
        %p128 = pneg %p29
      $region26: #{bottleneck_csp2_pallas.4} parent=23 // pred_check_branch
        %130 = sbr.rel (%p128) target = $region28
      $region27: #{bottleneck_csp2_pallas.4} parent=23 // pred_region
        %p131 = scmp.lt.s32.totalorder %s9, 1
        %s132 = scalar_select %p131, %s9, 1
        %s133 = smul.addr %s132, 54
        %s134 = smul.addr %s133, 4
        %s135 = scalar_lea.vmem %s0, %s134
      $region28: #{bottleneck_csp2_pallas.4} parent=23 // pred_fallthru
        _
    $region24: #{bottleneck_csp2_pallas.4} parent=5 // pred_fallthru
      _
    %p136 = scmp.le.s32.totalorder 1, %s9
    %p137 = scmp.lt.s32.totalorder %s9, 3
    %p138 = pnand %p136, %p137
    %p139 = pneg %p138
    // Predicated region
    $region29: #{bottleneck_csp2_pallas.4} parent=5 // pred_check
      _
    $region30: #{bottleneck_csp2_pallas.4} parent=5 // pred_check_branch
      %141 = sbr.rel (%p138) target = $region32
    $region31: #{bottleneck_csp2_pallas.4} parent=5 // pred_region
      %s142 = ssub.s32 %s9, 1
      %p143 = scmp.lt.s32.totalorder %s14, 1
      %s144 = scalar_select %p143, %s14, 1
      %s145 = smul.addr %s144, 54
      %s146 = smul.addr %s145, 4
      %s147 = scalar_lea.vmem %s0, %s146
      %p148 = pneg %p35
      %p149 = pneg %p32
      %p150 = pneg %p56
      %p151 = pneg %p53
      %p152 = pneg %p77
      %p153 = pneg %p74
      %p154 = pneg %p103
      %p155 = pneg %p100
      %s156 = smul.u32 32, %s14
      %p157 = scmp.lt.s32.totalorder %s156, 63
      %s158 = scalar_select %p157, %s156, 63
      %s159 = smul.addr %s158, 4
      %s160 = scalar_lea.vmem %s3, %s159
      %p161 = scmp.lt.s32.totalorder %s14, 1
      %s162 = scalar_select %p161, %s14, 1
      %s163 = smul.addr %s162, 54
      %s164 = smul.addr %s163, 4
      %s165 = scalar_lea.vmem %s0, %s164
      %s166 = smul.u32 32, %s14
      %p167 = scmp.lt.s32.totalorder %s166, 63
      %s168 = scalar_select %p167, %s166, 63
      %s169 = smul.addr %s168, 4
      %s170 = scalar_lea.vmem %s3, %s169
      %s171 = smul.u32 32, %s14
      %v173 = vld [vmem:[%s165] sm:$0xf]
      %v174 = vld [vmem:[%s165 + $0x4] sm:$0xf]
      %v175 = vld [vmem:[%s165 + $0x8] sm:$0x1]
      %v176 = vld [vmem:[%s165 + $0xc] sm:$0xf]
      %v177 = vld [vmem:[%s165 + $0x10] sm:$0xf]
      %v178 = vld [vmem:[%s165 + $0x14] sm:$0x1]
      %v179 = vld [vmem:[%s165 + $0x18] sm:$0xf]
      %v180 = vld [vmem:[%s165 + $0x1c] sm:$0xf]
      %v181 = vld [vmem:[%s165 + $0x20] sm:$0x1]
      %v182 = vld [vmem:[%s165 + $0x24] sm:$0xf]
      %v183 = vld [vmem:[%s165 + $0x28] sm:$0xf]
      %v184 = vld [vmem:[%s165 + $0x2c] sm:$0x1]
      %v185 = vld [vmem:[%s165 + $0x30] sm:$0xf]
      %v186 = vld [vmem:[%s165 + $0x34] sm:$0xf]
      %v187 = vld [vmem:[%s165 + $0x38] sm:$0x1]
      %v188 = vld [vmem:[%s165 + $0x3c] sm:$0xf]
      %v189 = vld [vmem:[%s165 + $0x40] sm:$0xf]
      %v190 = vld [vmem:[%s165 + $0x44] sm:$0x1]
      %v191 = vld [vmem:[%s165 + $0x48] sm:$0xf]
      %v192 = vld [vmem:[%s165 + $0x4c] sm:$0xf]
      %v193 = vld [vmem:[%s165 + $0x50] sm:$0x1]
      %v194 = vld [vmem:[%s165 + $0x54] sm:$0xf]
      %v195 = vld [vmem:[%s165 + $0x58] sm:$0xf]
      %v196 = vld [vmem:[%s165 + $0x5c] sm:$0x1]
      %v197 = vld [vmem:[%s165 + $0x60] sm:$0xf]
      %v198 = vld [vmem:[%s165 + $0x64] sm:$0xf]
      %v199 = vld [vmem:[%s165 + $0x68] sm:$0x1]
      %v200 = vld [vmem:[%s165 + $0x6c] sm:$0xf]
      %v201 = vld [vmem:[%s165 + $0x70] sm:$0xf]
      %v202 = vld [vmem:[%s165 + $0x74] sm:$0x1]
      %v203 = vld [vmem:[%s165 + $0x78] sm:$0xf]
      %v204 = vld [vmem:[%s165 + $0x7c] sm:$0xf]
      %v205 = vld [vmem:[%s165 + $0x80] sm:$0x1]
      %v206 = vld [vmem:[%s165 + $0x84] sm:$0xf]
      %v207 = vld [vmem:[%s165 + $0x88] sm:$0xf]
      %v208 = vld [vmem:[%s165 + $0x8c] sm:$0x1]
      %v209 = vld [vmem:[%s165 + $0x90] sm:$0xf]
      %v210 = vld [vmem:[%s165 + $0x94] sm:$0xf]
      %v211 = vld [vmem:[%s165 + $0x98] sm:$0x1]
      %v212 = vld [vmem:[%s165 + $0x9c] sm:$0xf]
      %v213 = vld [vmem:[%s165 + $0xa0] sm:$0xf]
      %v214 = vld [vmem:[%s165 + $0xa4] sm:$0x1]
      %v215 = vld [vmem:[%s165 + $0xa8] sm:$0xf]
      %v216 = vld [vmem:[%s165 + $0xac] sm:$0xf]
      %v217 = vld [vmem:[%s165 + $0xb0] sm:$0x1]
      %v218 = vld [vmem:[%s165 + $0xb4] sm:$0xf]
      %v219 = vld [vmem:[%s165 + $0xb8] sm:$0xf]
      %v220 = vld [vmem:[%s165 + $0xbc] sm:$0x1]
      %v221 = vld [vmem:[%s165 + $0xc0] sm:$0xf]
      %v222 = vld [vmem:[%s165 + $0xc4] sm:$0xf]
      %v223 = vld [vmem:[%s165 + $0xc8] sm:$0x1]
      %v224 = vld [vmem:[%s165 + $0xcc] sm:$0xf]
      %v225 = vld [vmem:[%s165 + $0xd0] sm:$0xf]
      %v226 = vld [vmem:[%s165 + $0xd4] sm:$0x1]
      %v227 = vld [vmem:[%s1] sm:$0x3]
      %vm228 = vsmask.f32 3328
      %vm229 = vsmask.f32 7440
      %vm230 = vmor %vm228, %vm229
      %v232 = vshrl.u32 %v173, 16
      %v234 = vrot.slane %v232, 4
      %v235 = vshll.u32 %v173, 16
      %v237 = vrot.slane %v235, 5
      %v238 = vor.u32 %v234, %v237
      %v239 = vrot.slane %v238, 4
      %v241 = vshll.u32 %v174, 16
      %v243 = vrot.slane %v241, 5
      %v244 = vsel %vm230, %v239, %v243
      %v245 = vshrl.u32 %v174, 16
      %v247 = vrot.slane %v245, 4
      %v248 = vor.u32 %v247, %v243
      %v249 = vrot.slane %v248, 4
      %v251 = vshll.u32 %v175, 16
      %v253 = vrot.slane %v251, 5
      %v254 = vsel %vm230, %v249, %v253
      %v256 = vshrl.u32 %v176, 16
      %v258 = vrot.slane %v256, 4
      %v259 = vshll.u32 %v176, 16
      %v261 = vrot.slane %v259, 5
      %v262 = vor.u32 %v258, %v261
      %v263 = vrot.slane %v262, 4
      %v265 = vshll.u32 %v177, 16
      %v267 = vrot.slane %v265, 5
      %v268 = vsel %vm230, %v263, %v267
      %v269 = vshrl.u32 %v177, 16
      %v271 = vrot.slane %v269, 4
      %v272 = vor.u32 %v271, %v267
      %v273 = vrot.slane %v272, 4
      %v275 = vshll.u32 %v178, 16
      %v277 = vrot.slane %v275, 5
      %v278 = vsel %vm230, %v273, %v277
      %v280 = vshrl.u32 %v179, 16
      %v282 = vrot.slane %v280, 4
      %v283 = vshll.u32 %v179, 16
      %v285 = vrot.slane %v283, 5
      %v286 = vor.u32 %v282, %v285
      %v287 = vrot.slane %v286, 4
      %v289 = vshll.u32 %v180, 16
      %v291 = vrot.slane %v289, 5
      %v292 = vsel %vm230, %v287, %v291
      %v293 = vshrl.u32 %v180, 16
      %v295 = vrot.slane %v293, 4
      %v296 = vor.u32 %v295, %v291
      %v297 = vrot.slane %v296, 4
      %v299 = vshll.u32 %v181, 16
      %v301 = vrot.slane %v299, 5
      %v302 = vsel %vm230, %v297, %v301
      %v304 = vshrl.u32 %v182, 16
      %v306 = vrot.slane %v304, 4
      %v307 = vshll.u32 %v182, 16
      %v309 = vrot.slane %v307, 5
      %v310 = vor.u32 %v306, %v309
      %v311 = vrot.slane %v310, 4
      %v313 = vshll.u32 %v183, 16
      %v315 = vrot.slane %v313, 5
      %v316 = vsel %vm230, %v311, %v315
      %v317 = vshrl.u32 %v183, 16
      %v319 = vrot.slane %v317, 4
      %v320 = vor.u32 %v319, %v315
      %v321 = vrot.slane %v320, 4
      %v323 = vshll.u32 %v184, 16
      %v325 = vrot.slane %v323, 5
      %v326 = vsel %vm230, %v321, %v325
      %v328 = vshrl.u32 %v185, 16
      %v330 = vrot.slane %v328, 4
      %v331 = vshll.u32 %v185, 16
      %v333 = vrot.slane %v331, 5
      %v334 = vor.u32 %v330, %v333
      %v335 = vrot.slane %v334, 4
      %v337 = vshll.u32 %v186, 16
      %v339 = vrot.slane %v337, 5
      %v340 = vsel %vm230, %v335, %v339
      %v341 = vshrl.u32 %v186, 16
      %v343 = vrot.slane %v341, 4
      %v344 = vor.u32 %v343, %v339
      %v345 = vrot.slane %v344, 4
      %v347 = vshll.u32 %v187, 16
      %v349 = vrot.slane %v347, 5
      %v350 = vsel %vm230, %v345, %v349
      %v352 = vshrl.u32 %v188, 16
      %v354 = vrot.slane %v352, 4
      %v355 = vshll.u32 %v188, 16
      %v357 = vrot.slane %v355, 5
      %v358 = vor.u32 %v354, %v357
      %v359 = vrot.slane %v358, 4
      %v361 = vshll.u32 %v189, 16
      %v363 = vrot.slane %v361, 5
      %v364 = vsel %vm230, %v359, %v363
      %v365 = vshrl.u32 %v189, 16
      %v367 = vrot.slane %v365, 4
      %v368 = vor.u32 %v367, %v363
      %v369 = vrot.slane %v368, 4
      %v371 = vshll.u32 %v190, 16
      %v373 = vrot.slane %v371, 5
      %v374 = vsel %vm230, %v369, %v373
      %v376 = vshrl.u32 %v191, 16
      %v378 = vrot.slane %v376, 4
      %v379 = vshll.u32 %v191, 16
      %v381 = vrot.slane %v379, 5
      %v382 = vor.u32 %v378, %v381
      %v383 = vrot.slane %v382, 4
      %v385 = vshll.u32 %v192, 16
      %v387 = vrot.slane %v385, 5
      %v388 = vsel %vm230, %v383, %v387
      %v389 = vshrl.u32 %v192, 16
      %v391 = vrot.slane %v389, 4
      %v392 = vor.u32 %v391, %v387
      %v393 = vrot.slane %v392, 4
      %v395 = vshll.u32 %v193, 16
      %v397 = vrot.slane %v395, 5
      %v398 = vsel %vm230, %v393, %v397
      %v400 = vshrl.u32 %v194, 16
      %v402 = vrot.slane %v400, 4
      %v403 = vshll.u32 %v194, 16
      %v405 = vrot.slane %v403, 5
      %v406 = vor.u32 %v402, %v405
      %v407 = vrot.slane %v406, 4
      %v409 = vshll.u32 %v195, 16
      %v411 = vrot.slane %v409, 5
      %v412 = vsel %vm230, %v407, %v411
      %v413 = vshrl.u32 %v195, 16
      %v415 = vrot.slane %v413, 4
      %v416 = vor.u32 %v415, %v411
      %v417 = vrot.slane %v416, 4
      %v419 = vshll.u32 %v196, 16
      %v421 = vrot.slane %v419, 5
      %v422 = vsel %vm230, %v417, %v421
      %v424 = vshrl.u32 %v197, 16
      %v426 = vrot.slane %v424, 4
      %v427 = vshll.u32 %v197, 16
      %v429 = vrot.slane %v427, 5
      %v430 = vor.u32 %v426, %v429
      %v431 = vrot.slane %v430, 4
      %v433 = vshll.u32 %v198, 16
      %v435 = vrot.slane %v433, 5
      %v436 = vsel %vm230, %v431, %v435
      %v437 = vshrl.u32 %v198, 16
      %v439 = vrot.slane %v437, 4
      %v440 = vor.u32 %v439, %v435
      %v441 = vrot.slane %v440, 4
      %v443 = vshll.u32 %v199, 16
      %v445 = vrot.slane %v443, 5
      %v446 = vsel %vm230, %v441, %v445
      %v448 = vshrl.u32 %v200, 16
      %v450 = vrot.slane %v448, 4
      %v451 = vshll.u32 %v200, 16
      %v453 = vrot.slane %v451, 5
      %v454 = vor.u32 %v450, %v453
      %v455 = vrot.slane %v454, 4
      %v457 = vshll.u32 %v201, 16
      %v459 = vrot.slane %v457, 5
      %v460 = vsel %vm230, %v455, %v459
      %v461 = vshrl.u32 %v201, 16
      %v463 = vrot.slane %v461, 4
      %v464 = vor.u32 %v463, %v459
      %v465 = vrot.slane %v464, 4
      %v467 = vshll.u32 %v202, 16
      %v469 = vrot.slane %v467, 5
      %v470 = vsel %vm230, %v465, %v469
      %v472 = vshrl.u32 %v203, 16
      %v474 = vrot.slane %v472, 4
      %v475 = vshll.u32 %v203, 16
      %v477 = vrot.slane %v475, 5
      %v478 = vor.u32 %v474, %v477
      %v479 = vrot.slane %v478, 4
      %v481 = vshll.u32 %v204, 16
      %v483 = vrot.slane %v481, 5
      %v484 = vsel %vm230, %v479, %v483
      %v485 = vshrl.u32 %v204, 16
      %v487 = vrot.slane %v485, 4
      %v488 = vor.u32 %v487, %v483
      %v489 = vrot.slane %v488, 4
      %v491 = vshll.u32 %v205, 16
      %v493 = vrot.slane %v491, 5
      %v494 = vsel %vm230, %v489, %v493
      %v496 = vshrl.u32 %v206, 16
      %v498 = vrot.slane %v496, 4
      %v499 = vshll.u32 %v206, 16
      %v501 = vrot.slane %v499, 5
      %v502 = vor.u32 %v498, %v501
      %v503 = vrot.slane %v502, 4
      %v505 = vshll.u32 %v207, 16
      %v507 = vrot.slane %v505, 5
      %v508 = vsel %vm230, %v503, %v507
      %v509 = vshrl.u32 %v207, 16
      %v511 = vrot.slane %v509, 4
      %v512 = vor.u32 %v511, %v507
      %v513 = vrot.slane %v512, 4
      %v515 = vshll.u32 %v208, 16
      %v517 = vrot.slane %v515, 5
      %v518 = vsel %vm230, %v513, %v517
      %v520 = vshrl.u32 %v209, 16
      %v522 = vrot.slane %v520, 4
      %v523 = vshll.u32 %v209, 16
      %v525 = vrot.slane %v523, 5
      %v526 = vor.u32 %v522, %v525
      %v527 = vrot.slane %v526, 4
      %v529 = vshll.u32 %v210, 16
      %v531 = vrot.slane %v529, 5
      %v532 = vsel %vm230, %v527, %v531
      %v533 = vshrl.u32 %v210, 16
      %v535 = vrot.slane %v533, 4
      %v536 = vor.u32 %v535, %v531
      %v537 = vrot.slane %v536, 4
      %v539 = vshll.u32 %v211, 16
      %v541 = vrot.slane %v539, 5
      %v542 = vsel %vm230, %v537, %v541
      %v544 = vshrl.u32 %v212, 16
      %v546 = vrot.slane %v544, 4
      %v547 = vshll.u32 %v212, 16
      %v549 = vrot.slane %v547, 5
      %v550 = vor.u32 %v546, %v549
      %v551 = vrot.slane %v550, 4
      %v553 = vshll.u32 %v213, 16
      %v555 = vrot.slane %v553, 5
      %v556 = vsel %vm230, %v551, %v555
      %v557 = vshrl.u32 %v213, 16
      %v559 = vrot.slane %v557, 4
      %v560 = vor.u32 %v559, %v555
      %v561 = vrot.slane %v560, 4
      %v563 = vshll.u32 %v214, 16
      %v565 = vrot.slane %v563, 5
      %v566 = vsel %vm230, %v561, %v565
      %v568 = vshrl.u32 %v215, 16
      %v570 = vrot.slane %v568, 4
      %v571 = vshll.u32 %v215, 16
      %v573 = vrot.slane %v571, 5
      %v574 = vor.u32 %v570, %v573
      %v575 = vrot.slane %v574, 4
      %v577 = vshll.u32 %v216, 16
      %v579 = vrot.slane %v577, 5
      %v580 = vsel %vm230, %v575, %v579
      %v581 = vshrl.u32 %v216, 16
      %v583 = vrot.slane %v581, 4
      %v584 = vor.u32 %v583, %v579
      %v585 = vrot.slane %v584, 4
      %v587 = vshll.u32 %v217, 16
      %v589 = vrot.slane %v587, 5
      %v590 = vsel %vm230, %v585, %v589
      %v592 = vshrl.u32 %v218, 16
      %v594 = vrot.slane %v592, 4
      %v595 = vshll.u32 %v218, 16
      %v597 = vrot.slane %v595, 5
      %v598 = vor.u32 %v594, %v597
      %v599 = vrot.slane %v598, 4
      %v601 = vshll.u32 %v219, 16
      %v603 = vrot.slane %v601, 5
      %v604 = vsel %vm230, %v599, %v603
      %v605 = vshrl.u32 %v219, 16
      %v607 = vrot.slane %v605, 4
      %v608 = vor.u32 %v607, %v603
      %v609 = vrot.slane %v608, 4
      %v611 = vshll.u32 %v220, 16
      %v613 = vrot.slane %v611, 5
      %v614 = vsel %vm230, %v609, %v613
      %s615 = scalar_lea.vmem %s1, 2
      %v616 = vld [vmem:[%s615] sm:$0x3]
      %v617 = vunpack.c.l.b16 %v244
      %v618 = vunpack.c.l.b16 %v254
      %v619 = vunpack.c.l.b16 %v268
      %v620 = vunpack.c.l.b16 %v278
      %v621 = vunpack.c.l.b16 %v292
      %v622 = vunpack.c.l.b16 %v302
      %v623 = vunpack.c.l.b16 %v316
      %v624 = vunpack.c.l.b16 %v326
      %v625 = vunpack.c.l.b16 %v340
      %v626 = vunpack.c.l.b16 %v350
      %v627 = vunpack.c.l.b16 %v364
      %v628 = vunpack.c.l.b16 %v374
      %v629 = vunpack.c.l.b16 %v388
      %v630 = vunpack.c.l.b16 %v398
      %v631 = vunpack.c.l.b16 %v412
      %v632 = vunpack.c.l.b16 %v422
      %v633 = vunpack.c.l.b16 %v436
      %v634 = vunpack.c.l.b16 %v446
      %v635 = vunpack.c.l.b16 %v460
      %v636 = vunpack.c.l.b16 %v470
      %v637 = vunpack.c.l.b16 %v484
      %v638 = vunpack.c.l.b16 %v494
      %v639 = vunpack.c.l.b16 %v508
      %v640 = vunpack.c.l.b16 %v518
      %v641 = vunpack.c.l.b16 %v532
      %v642 = vunpack.c.l.b16 %v542
      %v643 = vunpack.c.l.b16 %v556
      %v644 = vunpack.c.l.b16 %v566
      %v645 = vunpack.c.l.b16 %v580
      %v646 = vunpack.c.l.b16 %v590
      %v647 = vunpack.c.l.b16 %v604
      %v648 = vunpack.c.l.b16 %v614
      %v649 = vpack.c.b16 %v618, %v617
      %v650 = vpack.c.b16 %v620, %v619
      %v651 = vpack.c.b16 %v622, %v621
      %v652 = vpack.c.b16 %v624, %v623
      %v653 = vpack.c.b16 %v626, %v625
      %v654 = vpack.c.b16 %v628, %v627
      %v655 = vpack.c.b16 %v630, %v629
      %v656 = vpack.c.b16 %v632, %v631
      %v657 = vpack.c.b16 %v634, %v633
      %v658 = vpack.c.b16 %v636, %v635
      %v659 = vpack.c.b16 %v638, %v637
      %v660 = vpack.c.b16 %v640, %v639
      %v661 = vpack.c.b16 %v642, %v641
      %v662 = vpack.c.b16 %v644, %v643
      %v663 = vpack.c.b16 %v646, %v645
      %v664 = vpack.c.b16 %v648, %v647
      %vm665 = vcmask 31744
      %v667 = vsel %vm665, %v649, 0
      %v670 = vsel %vm665, %v650, 0
      %v673 = vsel %vm665, %v651, 0
      %v676 = vsel %vm665, %v652, 0
      %v679 = vsel %vm665, %v653, 0
      %v682 = vsel %vm665, %v654, 0
      %v685 = vsel %vm665, %v655, 0
      %v688 = vsel %vm665, %v656, 0
      %v691 = vsel %vm665, %v657, 0
      %v694 = vsel %vm665, %v658, 0
      %v697 = vsel %vm665, %v659, 0
      %v700 = vsel %vm665, %v660, 0
      %v703 = vsel %vm665, %v661, 0
      %v706 = vsel %vm665, %v662, 0
      %v709 = vsel %vm665, %v663, 0
      %v712 = vsel %vm665, %v664, 0
      %vm714 = vcmask 1041408
      %v716 = vsel %vm714, %v616, 0
      %718 = vmatprep.subr.bf16.mxu0 0
      %719 = vmatpush1.bf16.msra.mxu0 %v716
      %720 = vmatprep.subr.bf16.mxu0 0
      %721 = vmatpush1.bf16.msra.mxu0 0
      %722 = vmatprep.subr.bf16.mxu0 0
      %723 = vmatpush1.bf16.msra.mxu0 0
      %724 = vmatprep.subr.bf16.mxu0 0
      %725 = vmatpush1.bf16.msra.mxu0 0
      %726 = vmatprep.subr.bf16.mxu0 0
      %727 = vmatpush1.bf16.msra.mxu0 0
      %728 = vmatprep.subr.bf16.mxu0 0
      %729 = vmatpush1.bf16.msra.mxu0 0
      %730 = vmatprep.subr.bf16.mxu0 0
      %731 = vmatpush1.bf16.msra.mxu0 0
      %732 = vmatprep.subr.bf16.mxu0 0
      %733 = vmatpush1.bf16.msra.mxu0 0
      %734 = vmatprep.subr.bf16.mxu0 0
      %735 = vmatpush1.bf16.msra.mxu0 0
      %736 = vmatprep.subr.bf16.mxu0 0
      %737 = vmatpush1.bf16.msra.mxu0 0
      %738 = vmatprep.subr.bf16.mxu0 0
      %739 = vmatpush1.bf16.msra.mxu0 0
      %740 = vmatprep.subr.bf16.mxu0 0
      %741 = vmatpush1.bf16.msra.mxu0 0
      %742 = vmatprep.subr.bf16.mxu0 0
      %743 = vmatpush1.bf16.msra.mxu0 0
      %744 = vmatprep.subr.bf16.mxu0 0
      %745 = vmatpush1.bf16.msra.mxu0 0
      %746 = vmatprep.subr.bf16.mxu0 0
      %747 = vmatpush1.bf16.msra.mxu0 0
      %748 = vmatprep.subr.bf16.mxu0 0
      %749 = vmatpush1.bf16.msra.mxu0 0
      %750 = vmatprep.mubr.bf16.mxu0 0
      %751 = vmatmul.mubr.bf16.gmra.mrb[0].mxu0 %v667
      %v752 = vpop.f32.mrb[0].mxu0
      %v753 = vadd.f32 0.0, %v752
      %v754 = vpop.f32.mrb[0].mxu0
      %v755 = vpop.f32.mrb[0].mxu0
      %v756 = vadd.f32 0.0, %v755
      %v757 = vpop.f32.mrb[0].mxu0
      %758 = vmatprep.mubr.bf16.mxu0 0
      %759 = vmatmul.mubr.bf16.gmra.mrb[0].mxu0 %v670
      %v760 = vpop.f32.mrb[0].mxu0
      %v761 = vadd.f32 0.0, %v760
      %v762 = vpop.f32.mrb[0].mxu0
      %v763 = vpop.f32.mrb[0].mxu0
      %v764 = vadd.f32 0.0, %v763
      %v765 = vpop.f32.mrb[0].mxu0
      %766 = vmatprep.mubr.bf16.mxu0 0
      %767 = vmatmul.mubr.bf16.gmra.mrb[0].mxu0 %v673
      %v768 = vpop.f32.mrb[0].mxu0
      %v769 = vadd.f32 0.0, %v768
      %v770 = vpop.f32.mrb[0].mxu0
      %v771 = vpop.f32.mrb[0].mxu0
      %v772 = vadd.f32 0.0, %v771
      %v773 = vpop.f32.mrb[0].mxu0
      %774 = vmatprep.mubr.bf16.mxu0 0
      %775 = vmatmul.mubr.bf16.gmra.mrb[0].mxu0 %v676
      %v776 = vpop.f32.mrb[0].mxu0
      %v777 = vadd.f32 0.0, %v776
      %v778 = vpop.f32.mrb[0].mxu0
      %v779 = vpop.f32.mrb[0].mxu0
      %v780 = vadd.f32 0.0, %v779
      %v781 = vpop.f32.mrb[0].mxu0
      %782 = vmatprep.mubr.bf16.mxu0 0
      %783 = vmatmul.mubr.bf16.gmra.mrb[0].mxu0 %v679
      %v784 = vpop.f32.mrb[0].mxu0
      %v785 = vadd.f32 0.0, %v784
      %v786 = vpop.f32.mrb[0].mxu0
      %v787 = vpop.f32.mrb[0].mxu0
      %v788 = vadd.f32 0.0, %v787
      %v789 = vpop.f32.mrb[0].mxu0
      %790 = vmatprep.mubr.bf16.mxu0 0
      %791 = vmatmul.mubr.bf16.gmra.mrb[0].mxu0 %v682
      %v792 = vpop.f32.mrb[0].mxu0
      %v793 = vadd.f32 0.0, %v792
      %v794 = vpop.f32.mrb[0].mxu0
      %v795 = vpop.f32.mrb[0].mxu0
      %v796 = vadd.f32 0.0, %v795
      %v797 = vpop.f32.mrb[0].mxu0
      %798 = vmatprep.mubr.bf16.mxu0 0
      %799 = vmatmul.mubr.bf16.gmra.mrb[0].mxu0 %v685
      %v800 = vpop.f32.mrb[0].mxu0
      %v801 = vadd.f32 0.0, %v800
      %v802 = vpop.f32.mrb[0].mxu0
      %v803 = vpop.f32.mrb[0].mxu0
      %v804 = vadd.f32 0.0, %v803
      %v805 = vpop.f32.mrb[0].mxu0
      %806 = vmatprep.mubr.bf16.mxu0 0
      %807 = vmatmul.mubr.bf16.gmra.mrb[0].mxu0 %v688
      %v808 = vpop.f32.mrb[0].mxu0
      %v809 = vadd.f32 0.0, %v808
      %v810 = vpop.f32.mrb[0].mxu0
      %v811 = vpop.f32.mrb[0].mxu0
      %v812 = vadd.f32 0.0, %v811
      %v813 = vpop.f32.mrb[0].mxu0
      %814 = vmatprep.mubr.bf16.mxu0 0
      %815 = vmatmul.mubr.bf16.gmra.mrb[0].mxu0 %v691
      %v816 = vpop.f32.mrb[0].mxu0
      %v817 = vadd.f32 0.0, %v816
      %v818 = vpop.f32.mrb[0].mxu0
      %v819 = vpop.f32.mrb[0].mxu0
      %v820 = vadd.f32 0.0, %v819
      %v821 = vpop.f32.mrb[0].mxu0
      %822 = vmatprep.mubr.bf16.mxu0 0
      %823 = vmatmul.mubr.bf16.gmra.mrb[0].mxu0 %v694
      %v824 = vpop.f32.mrb[0].mxu0
      %v825 = vadd.f32 0.0, %v824
      %v826 = vpop.f32.mrb[0].mxu0
      %v827 = vpop.f32.mrb[0].mxu0
      %v828 = vadd.f32 0.0, %v827
      %v829 = vpop.f32.mrb[0].mxu0
      %830 = vmatprep.mubr.bf16.mxu0 0
      %831 = vmatmul.mubr.bf16.gmra.mrb[0].mxu0 %v697
      %v832 = vpop.f32.mrb[0].mxu0
      %v833 = vadd.f32 0.0, %v832
      %v834 = vpop.f32.mrb[0].mxu0
      %v835 = vpop.f32.mrb[0].mxu0
      %v836 = vadd.f32 0.0, %v835
      %v837 = vpop.f32.mrb[0].mxu0
      %838 = vmatprep.mubr.bf16.mxu0 0
      %839 = vmatmul.mubr.bf16.gmra.mrb[0].mxu0 %v700
      %v840 = vpop.f32.mrb[0].mxu0
      %v841 = vadd.f32 0.0, %v840
      %v842 = vpop.f32.mrb[0].mxu0
      %v843 = vpop.f32.mrb[0].mxu0
      %v844 = vadd.f32 0.0, %v843
      %v845 = vpop.f32.mrb[0].mxu0
      %846 = vmatprep.mubr.bf16.mxu0 0
      %847 = vmatmul.mubr.bf16.gmra.mrb[0].mxu0 %v703
      %v848 = vpop.f32.mrb[0].mxu0
      %v849 = vadd.f32 0.0, %v848
      %v850 = vpop.f32.mrb[0].mxu0
      %v851 = vpop.f32.mrb[0].mxu0
      %v852 = vadd.f32 0.0, %v851
      %v853 = vpop.f32.mrb[0].mxu0
      %854 = vmatprep.mubr.bf16.mxu0 0
      %855 = vmatmul.mubr.bf16.gmra.mrb[0].mxu0 %v706
      %v856 = vpop.f32.mrb[0].mxu0
      %v857 = vadd.f32 0.0, %v856
      %v858 = vpop.f32.mrb[0].mxu0
      %v859 = vpop.f32.mrb[0].mxu0
      %v860 = vadd.f32 0.0, %v859
      %v861 = vpop.f32.mrb[0].mxu0
      %862 = vmatprep.mubr.bf16.mxu0 0
      %863 = vmatmul.mubr.bf16.gmra.mrb[0].mxu0 %v709
      %v864 = vpop.f32.mrb[0].mxu0
      %v865 = vadd.f32 0.0, %v864
      %v866 = vpop.f32.mrb[0].mxu0
      %v867 = vpop.f32.mrb[0].mxu0
      %v868 = vadd.f32 0.0, %v867
      %v869 = vpop.f32.mrb[0].mxu0
      %870 = vmatprep.mubr.bf16.mxu0 0
      %871 = vmatmul.mubr.bf16.gmra.mrb[0].mxu0 %v712
      %v872 = vpop.f32.mrb[0].mxu0
      %v873 = vadd.f32 0.0, %v872
      %v874 = vpop.f32.mrb[0].mxu0
      %v875 = vpop.f32.mrb[0].mxu0
      %v876 = vadd.f32 0.0, %v875
      %v877 = vpop.f32.mrb[0].mxu0
      %878 = vdwg.mxu0
      %v911 = vunpack.c.l.b16 %v173
      %v912 = vunpack.c.l.b16 %v174
      %v913 = vunpack.c.l.b16 %v176
      %v914 = vunpack.c.l.b16 %v177
      %v915 = vunpack.c.l.b16 %v179
      %v916 = vunpack.c.l.b16 %v180
      %v917 = vunpack.c.l.b16 %v182
      %v918 = vunpack.c.l.b16 %v183
      %v919 = vunpack.c.l.b16 %v185
      %v920 = vunpack.c.l.b16 %v186
      %v921 = vunpack.c.l.b16 %v188
      %v922 = vunpack.c.l.b16 %v189
      %v923 = vunpack.c.l.b16 %v191
      %v924 = vunpack.c.l.b16 %v192
      %v925 = vunpack.c.l.b16 %v194
      %v926 = vunpack.c.l.b16 %v195
      %v927 = vunpack.c.l.b16 %v197
      %v928 = vunpack.c.l.b16 %v198
      %v929 = vunpack.c.l.b16 %v200
      %v930 = vunpack.c.l.b16 %v201
      %v931 = vunpack.c.l.b16 %v203
      %v932 = vunpack.c.l.b16 %v204
      %v933 = vunpack.c.l.b16 %v206
      %v934 = vunpack.c.l.b16 %v207
      %v935 = vunpack.c.l.b16 %v209
      %v936 = vunpack.c.l.b16 %v210
      %v937 = vunpack.c.l.b16 %v212
      %v938 = vunpack.c.l.b16 %v213
      %v939 = vunpack.c.l.b16 %v215
      %v940 = vunpack.c.l.b16 %v216
      %v941 = vunpack.c.l.b16 %v218
      %v942 = vunpack.c.l.b16 %v219
      %v943 = vpack.c.b16 %v912, %v911
      %v944 = vpack.c.b16 %v914, %v913
      %v945 = vpack.c.b16 %v916, %v915
      %v946 = vpack.c.b16 %v918, %v917
      %v947 = vpack.c.b16 %v920, %v919
      %v948 = vpack.c.b16 %v922, %v921
      %v949 = vpack.c.b16 %v924, %v923
      %v950 = vpack.c.b16 %v926, %v925
      %v951 = vpack.c.b16 %v928, %v927
      %v952 = vpack.c.b16 %v930, %v929
      %v953 = vpack.c.b16 %v932, %v931
      %v954 = vpack.c.b16 %v934, %v933
      %v955 = vpack.c.b16 %v936, %v935
      %v956 = vpack.c.b16 %v938, %v937
      %v957 = vpack.c.b16 %v940, %v939
      %v958 = vpack.c.b16 %v942, %v941
      %v960 = vsel %vm665, %v943, 0
      %v963 = vsel %vm665, %v944, 0
      %v966 = vsel %vm665, %v945, 0
      %v969 = vsel %vm665, %v946, 0
      %v972 = vsel %vm665, %v947, 0
      %v975 = vsel %vm665, %v948, 0
      %v978 = vsel %vm665, %v949, 0
      %v981 = vsel %vm665, %v950, 0
      %v984 = vsel %vm665, %v951, 0
      %v987 = vsel %vm665, %v952, 0
      %v990 = vsel %vm665, %v953, 0
      %v993 = vsel %vm665, %v954, 0
      %v996 = vsel %vm665, %v955, 0
      %v999 = vsel %vm665, %v956, 0
      %v1002 = vsel %vm665, %v957, 0
      %v1005 = vsel %vm665, %v958, 0
      %v1008 = vsel %vm714, %v227, 0
      %1010 = vmatprep.subr.bf16.mxu0 0
      %1011 = vmatpush1.bf16.msra.mxu0 %v1008
      %1012 = vmatprep.subr.bf16.mxu0 0
      %1013 = vmatpush1.bf16.msra.mxu0 0
      %1014 = vmatprep.subr.bf16.mxu0 0
      %1015 = vmatpush1.bf16.msra.mxu0 0
      %1016 = vmatprep.subr.bf16.mxu0 0
      %1017 = vmatpush1.bf16.msra.mxu0 0
      %1018 = vmatprep.subr.bf16.mxu0 0
      %1019 = vmatpush1.bf16.msra.mxu0 0
      %1020 = vmatprep.subr.bf16.mxu0 0
      %1021 = vmatpush1.bf16.msra.mxu0 0
      %1022 = vmatprep.subr.bf16.mxu0 0
      %1023 = vmatpush1.bf16.msra.mxu0 0
      %1024 = vmatprep.subr.bf16.mxu0 0
      %1025 = vmatpush1.bf16.msra.mxu0 0
      %1026 = vmatprep.subr.bf16.mxu0 0
      %1027 = vmatpush1.bf16.msra.mxu0 0
      %1028 = vmatprep.subr.bf16.mxu0 0
      %1029 = vmatpush1.bf16.msra.mxu0 0
      %1030 = vmatprep.subr.bf16.mxu0 0
      %1031 = vmatpush1.bf16.msra.mxu0 0
      %1032 = vmatprep.subr.bf16.mxu0 0
      %1033 = vmatpush1.bf16.msra.mxu0 0
      %1034 = vmatprep.subr.bf16.mxu0 0
      %1035 = vmatpush1.bf16.msra.mxu0 0
      %1036 = vmatprep.subr.bf16.mxu0 0
      %1037 = vmatpush1.bf16.msra.mxu0 0
      %1038 = vmatprep.subr.bf16.mxu0 0
      %1039 = vmatpush1.bf16.msra.mxu0 0
      %1040 = vmatprep.subr.bf16.mxu0 0
      %1041 = vmatpush1.bf16.msra.mxu0 0
      %1042 = vmatprep.mubr.bf16.mxu0 0
      %1043 = vmatmul.mubr.bf16.gmra.mrb[0].mxu0 %v960
      %v1044 = vpop.f32.mrb[0].mxu0
      %v1045 = vadd.f32 %v753, %v1044
      %v1046 = vpop.f32.mrb[0].mxu0
      %v1047 = vpop.f32.mrb[0].mxu0
      %v1048 = vadd.f32 %v756, %v1047
      %v1049 = vpop.f32.mrb[0].mxu0
      %1050 = vmatprep.mubr.bf16.mxu0 0
      %1051 = vmatmul.mubr.bf16.gmra.mrb[0].mxu0 %v963
      %v1052 = vpop.f32.mrb[0].mxu0
      %v1053 = vadd.f32 %v761, %v1052
      %v1054 = vpop.f32.mrb[0].mxu0
      %v1055 = vpop.f32.mrb[0].mxu0
      %v1056 = vadd.f32 %v764, %v1055
      %v1057 = vpop.f32.mrb[0].mxu0
      %1058 = vmatprep.mubr.bf16.mxu0 0
      %1059 = vmatmul.mubr.bf16.gmra.mrb[0].mxu0 %v966
      %v1060 = vpop.f32.mrb[0].mxu0
      %v1061 = vadd.f32 %v769, %v1060
      %v1062 = vpop.f32.mrb[0].mxu0
      %v1063 = vpop.f32.mrb[0].mxu0
      %v1064 = vadd.f32 %v772, %v1063
      %v1065 = vpop.f32.mrb[0].mxu0
      %1066 = vmatprep.mubr.bf16.mxu0 0
      %1067 = vmatmul.mubr.bf16.gmra.mrb[0].mxu0 %v969
      %v1068 = vpop.f32.mrb[0].mxu0
      %v1069 = vadd.f32 %v777, %v1068
      %v1070 = vpop.f32.mrb[0].mxu0
      %v1071 = vpop.f32.mrb[0].mxu0
      %v1072 = vadd.f32 %v780, %v1071
      %v1073 = vpop.f32.mrb[0].mxu0
      %1074 = vmatprep.mubr.bf16.mxu0 0
      %1075 = vmatmul.mubr.bf16.gmra.mrb[0].mxu0 %v972
      %v1076 = vpop.f32.mrb[0].mxu0
      %v1077 = vadd.f32 %v785, %v1076
      %v1078 = vpop.f32.mrb[0].mxu0
      %v1079 = vpop.f32.mrb[0].mxu0
      %v1080 = vadd.f32 %v788, %v1079
      %v1081 = vpop.f32.mrb[0].mxu0
      %1082 = vmatprep.mubr.bf16.mxu0 0
      %1083 = vmatmul.mubr.bf16.gmra.mrb[0].mxu0 %v975
      %v1084 = vpop.f32.mrb[0].mxu0
      %v1085 = vadd.f32 %v793, %v1084
      %v1086 = vpop.f32.mrb[0].mxu0
      %v1087 = vpop.f32.mrb[0].mxu0
      %v1088 = vadd.f32 %v796, %v1087
      %v1089 = vpop.f32.mrb[0].mxu0
      %1090 = vmatprep.mubr.bf16.mxu0 0
      %1091 = vmatmul.mubr.bf16.gmra.mrb[0].mxu0 %v978
      %v1092 = vpop.f32.mrb[0].mxu0
      %v1093 = vadd.f32 %v801, %v1092
      %v1094 = vpop.f32.mrb[0].mxu0
      %v1095 = vpop.f32.mrb[0].mxu0
      %v1096 = vadd.f32 %v804, %v1095
      %v1097 = vpop.f32.mrb[0].mxu0
      %1098 = vmatprep.mubr.bf16.mxu0 0
      %1099 = vmatmul.mubr.bf16.gmra.mrb[0].mxu0 %v981
      %v1100 = vpop.f32.mrb[0].mxu0
      %v1101 = vadd.f32 %v809, %v1100
      %v1102 = vpop.f32.mrb[0].mxu0
      %v1103 = vpop.f32.mrb[0].mxu0
      %v1104 = vadd.f32 %v812, %v1103
      %v1105 = vpop.f32.mrb[0].mxu0
      %1106 = vmatprep.mubr.bf16.mxu0 0
      %1107 = vmatmul.mubr.bf16.gmra.mrb[0].mxu0 %v984
      %v1108 = vpop.f32.mrb[0].mxu0
      %v1109 = vadd.f32 %v817, %v1108
      %v1110 = vpop.f32.mrb[0].mxu0
      %v1111 = vpop.f32.mrb[0].mxu0
      %v1112 = vadd.f32 %v820, %v1111
      %v1113 = vpop.f32.mrb[0].mxu0
      %1114 = vmatprep.mubr.bf16.mxu0 0
      %1115 = vmatmul.mubr.bf16.gmra.mrb[0].mxu0 %v987
      %v1116 = vpop.f32.mrb[0].mxu0
      %v1117 = vadd.f32 %v825, %v1116
      %v1118 = vpop.f32.mrb[0].mxu0
      %v1119 = vpop.f32.mrb[0].mxu0
      %v1120 = vadd.f32 %v828, %v1119
      %v1121 = vpop.f32.mrb[0].mxu0
      %1122 = vmatprep.mubr.bf16.mxu0 0
      %1123 = vmatmul.mubr.bf16.gmra.mrb[0].mxu0 %v990
      %v1124 = vpop.f32.mrb[0].mxu0
      %v1125 = vadd.f32 %v833, %v1124
      %v1126 = vpop.f32.mrb[0].mxu0
      %v1127 = vpop.f32.mrb[0].mxu0
      %v1128 = vadd.f32 %v836, %v1127
      %v1129 = vpop.f32.mrb[0].mxu0
      %1130 = vmatprep.mubr.bf16.mxu0 0
      %1131 = vmatmul.mubr.bf16.gmra.mrb[0].mxu0 %v993
      %v1132 = vpop.f32.mrb[0].mxu0
      %v1133 = vadd.f32 %v841, %v1132
      %v1134 = vpop.f32.mrb[0].mxu0
      %v1135 = vpop.f32.mrb[0].mxu0
      %v1136 = vadd.f32 %v844, %v1135
      %v1137 = vpop.f32.mrb[0].mxu0
      %1138 = vmatprep.mubr.bf16.mxu0 0
      %1139 = vmatmul.mubr.bf16.gmra.mrb[0].mxu0 %v996
      %v1140 = vpop.f32.mrb[0].mxu0
      %v1141 = vadd.f32 %v849, %v1140
      %v1142 = vpop.f32.mrb[0].mxu0
      %v1143 = vpop.f32.mrb[0].mxu0
      %v1144 = vadd.f32 %v852, %v1143
      %v1145 = vpop.f32.mrb[0].mxu0
      %1146 = vmatprep.mubr.bf16.mxu0 0
      %1147 = vmatmul.mubr.bf16.gmra.mrb[0].mxu0 %v999
      %v1148 = vpop.f32.mrb[0].mxu0
      %v1149 = vadd.f32 %v857, %v1148
      %v1150 = vpop.f32.mrb[0].mxu0
      %v1151 = vpop.f32.mrb[0].mxu0
      %v1152 = vadd.f32 %v860, %v1151
      %v1153 = vpop.f32.mrb[0].mxu0
      %1154 = vmatprep.mubr.bf16.mxu0 0
      %1155 = vmatmul.mubr.bf16.gmra.mrb[0].mxu0 %v1002
      %v1156 = vpop.f32.mrb[0].mxu0
      %v1157 = vadd.f32 %v865, %v1156
      %v1158 = vpop.f32.mrb[0].mxu0
      %v1159 = vpop.f32.mrb[0].mxu0
      %v1160 = vadd.f32 %v868, %v1159
      %v1161 = vpop.f32.mrb[0].mxu0
      %1162 = vmatprep.mubr.bf16.mxu0 0
      %1163 = vmatmul.mubr.bf16.gmra.mrb[0].mxu0 %v1005
      %v1164 = vpop.f32.mrb[0].mxu0
      %v1165 = vadd.f32 %v873, %v1164
      %v1166 = vpop.f32.mrb[0].mxu0
      %v1167 = vpop.f32.mrb[0].mxu0
      %v1168 = vadd.f32 %v876, %v1167
      %v1169 = vpop.f32.mrb[0].mxu0
      %1170 = vdwg.mxu0
      %vm1187 = vcmask 1042432
      %vm1188 = vcmask 1046532
      %vm1189 = vmor %vm1187, %vm1188
      %v1190 = vrot.slane %v173, 5
      %v1191 = vrot.slane %v1190, 4
      %v1192 = vrot.slane %v174, 5
      %v1193 = vsel %vm1189, %v1191, %v1192
      %v1194 = vrot.slane %v1192, 4
      %v1195 = vrot.slane %v175, 5
      %v1196 = vsel %vm1189, %v1194, %v1195
      %v1197 = vrot.slane %v176, 5
      %v1198 = vrot.slane %v1197, 4
      %v1199 = vrot.slane %v177, 5
      %v1200 = vsel %vm1189, %v1198, %v1199
      %v1201 = vrot.slane %v1199, 4
      %v1202 = vrot.slane %v178, 5
      %v1203 = vsel %vm1189, %v1201, %v1202
      %v1204 = vrot.slane %v179, 5
      %v1205 = vrot.slane %v1204, 4
      %v1206 = vrot.slane %v180, 5
      %v1207 = vsel %vm1189, %v1205, %v1206
      %v1208 = vrot.slane %v1206, 4
      %v1209 = vrot.slane %v181, 5
      %v1210 = vsel %vm1189, %v1208, %v1209
      %v1211 = vrot.slane %v182, 5
      %v1212 = vrot.slane %v1211, 4
      %v1213 = vrot.slane %v183, 5
      %v1214 = vsel %vm1189, %v1212, %v1213
      %v1215 = vrot.slane %v1213, 4
      %v1216 = vrot.slane %v184, 5
      %v1217 = vsel %vm1189, %v1215, %v1216
      %v1218 = vrot.slane %v185, 5
      %v1219 = vrot.slane %v1218, 4
      %v1220 = vrot.slane %v186, 5
      %v1221 = vsel %vm1189, %v1219, %v1220
      %v1222 = vrot.slane %v1220, 4
      %v1223 = vrot.slane %v187, 5
      %v1224 = vsel %vm1189, %v1222, %v1223
      %v1225 = vrot.slane %v188, 5
      %v1226 = vrot.slane %v1225, 4
      %v1227 = vrot.slane %v189, 5
      %v1228 = vsel %vm1189, %v1226, %v1227
      %v1229 = vrot.slane %v1227, 4
      %v1230 = vrot.slane %v190, 5
      %v1231 = vsel %vm1189, %v1229, %v1230
      %v1232 = vrot.slane %v191, 5
      %v1233 = vrot.slane %v1232, 4
      %v1234 = vrot.slane %v192, 5
      %v1235 = vsel %vm1189, %v1233, %v1234
      %v1236 = vrot.slane %v1234, 4
      %v1237 = vrot.slane %v193, 5
      %v1238 = vsel %vm1189, %v1236, %v1237
      %v1239 = vrot.slane %v194, 5
      %v1240 = vrot.slane %v1239, 4
      %v1241 = vrot.slane %v195, 5
      %v1242 = vsel %vm1189, %v1240, %v1241
      %v1243 = vrot.slane %v1241, 4
      %v1244 = vrot.slane %v196, 5
      %v1245 = vsel %vm1189, %v1243, %v1244
      %v1246 = vrot.slane %v197, 5
      %v1247 = vrot.slane %v1246, 4
      %v1248 = vrot.slane %v198, 5
      %v1249 = vsel %vm1189, %v1247, %v1248
      %v1250 = vrot.slane %v1248, 4
      %v1251 = vrot.slane %v199, 5
      %v1252 = vsel %vm1189, %v1250, %v1251
      %v1253 = vrot.slane %v200, 5
      %v1254 = vrot.slane %v1253, 4
      %v1255 = vrot.slane %v201, 5
      %v1256 = vsel %vm1189, %v1254, %v1255
      %v1257 = vrot.slane %v1255, 4
      %v1258 = vrot.slane %v202, 5
      %v1259 = vsel %vm1189, %v1257, %v1258
      %v1260 = vrot.slane %v203, 5
      %v1261 = vrot.slane %v1260, 4
      %v1262 = vrot.slane %v204, 5
      %v1263 = vsel %vm1189, %v1261, %v1262
      %v1264 = vrot.slane %v1262, 4
      %v1265 = vrot.slane %v205, 5
      %v1266 = vsel %vm1189, %v1264, %v1265
      %v1267 = vrot.slane %v206, 5
      %v1268 = vrot.slane %v1267, 4
      %v1269 = vrot.slane %v207, 5
      %v1270 = vsel %vm1189, %v1268, %v1269
      %v1271 = vrot.slane %v1269, 4
      %v1272 = vrot.slane %v208, 5
      %v1273 = vsel %vm1189, %v1271, %v1272
      %v1274 = vrot.slane %v209, 5
      %v1275 = vrot.slane %v1274, 4
      %v1276 = vrot.slane %v210, 5
      %v1277 = vsel %vm1189, %v1275, %v1276
      %v1278 = vrot.slane %v1276, 4
      %v1279 = vrot.slane %v211, 5
      %v1280 = vsel %vm1189, %v1278, %v1279
      %v1281 = vrot.slane %v212, 5
      %v1282 = vrot.slane %v1281, 4
      %v1283 = vrot.slane %v213, 5
      %v1284 = vsel %vm1189, %v1282, %v1283
      %v1285 = vrot.slane %v1283, 4
      %v1286 = vrot.slane %v214, 5
      %v1287 = vsel %vm1189, %v1285, %v1286
      %v1288 = vrot.slane %v215, 5
      %v1289 = vrot.slane %v1288, 4
      %v1290 = vrot.slane %v216, 5
      %v1291 = vsel %vm1189, %v1289, %v1290
      %v1292 = vrot.slane %v1290, 4
      %v1293 = vrot.slane %v217, 5
      %v1294 = vsel %vm1189, %v1292, %v1293
      %v1295 = vrot.slane %v218, 5
      %v1296 = vrot.slane %v1295, 4
      %v1297 = vrot.slane %v219, 5
      %v1298 = vsel %vm1189, %v1296, %v1297
      %v1299 = vrot.slane %v1297, 4
      %v1300 = vrot.slane %v220, 5
      %v1301 = vsel %vm1189, %v1299, %v1300
      %s1302 = scalar_lea.vmem %s1, 4
      %v1303 = vld [vmem:[%s1302] sm:$0x3]
      %v1304 = vunpack.c.l.b16 %v1193
      %v1305 = vunpack.c.l.b16 %v1196
      %v1306 = vunpack.c.l.b16 %v1200
      %v1307 = vunpack.c.l.b16 %v1203
      %v1308 = vunpack.c.l.b16 %v1207
      %v1309 = vunpack.c.l.b16 %v1210
      %v1310 = vunpack.c.l.b16 %v1214
      %v1311 = vunpack.c.l.b16 %v1217
      %v1312 = vunpack.c.l.b16 %v1221
      %v1313 = vunpack.c.l.b16 %v1224
      %v1314 = vunpack.c.l.b16 %v1228
      %v1315 = vunpack.c.l.b16 %v1231
      %v1316 = vunpack.c.l.b16 %v1235
      %v1317 = vunpack.c.l.b16 %v1238
      %v1318 = vunpack.c.l.b16 %v1242
      %v1319 = vunpack.c.l.b16 %v1245
      %v1320 = vunpack.c.l.b16 %v1249
      %v1321 = vunpack.c.l.b16 %v1252
      %v1322 = vunpack.c.l.b16 %v1256
      %v1323 = vunpack.c.l.b16 %v1259
      %v1324 = vunpack.c.l.b16 %v1263
      %v1325 = vunpack.c.l.b16 %v1266
      %v1326 = vunpack.c.l.b16 %v1270
      %v1327 = vunpack.c.l.b16 %v1273
      %v1328 = vunpack.c.l.b16 %v1277
      %v1329 = vunpack.c.l.b16 %v1280
      %v1330 = vunpack.c.l.b16 %v1284
      %v1331 = vunpack.c.l.b16 %v1287
      %v1332 = vunpack.c.l.b16 %v1291
      %v1333 = vunpack.c.l.b16 %v1294
      %v1334 = vunpack.c.l.b16 %v1298
      %v1335 = vunpack.c.l.b16 %v1301
      %v1336 = vpack.c.b16 %v1305, %v1304
      %v1337 = vpack.c.b16 %v1307, %v1306
      %v1338 = vpack.c.b16 %v1309, %v1308
      %v1339 = vpack.c.b16 %v1311, %v1310
      %v1340 = vpack.c.b16 %v1313, %v1312
      %v1341 = vpack.c.b16 %v1315, %v1314
      %v1342 = vpack.c.b16 %v1317, %v1316
      %v1343 = vpack.c.b16 %v1319, %v1318
      %v1344 = vpack.c.b16 %v1321, %v1320
      %v1345 = vpack.c.b16 %v1323, %v1322
      %v1346 = vpack.c.b16 %v1325, %v1324
      %v1347 = vpack.c.b16 %v1327, %v1326
      %v1348 = vpack.c.b16 %v1329, %v1328
      %v1349 = vpack.c.b16 %v1331, %v1330
      %v1350 = vpack.c.b16 %v1333, %v1332
      %v1351 = vpack.c.b16 %v1335, %v1334
      %v1353 = vsel %vm665, %v1336, 0
      %v1356 = vsel %vm665, %v1337, 0
      %v1359 = vsel %vm665, %v1338, 0
      %v1362 = vsel %vm665, %v1339, 0
      %v1365 = vsel %vm665, %v1340, 0
      %v1368 = vsel %vm665, %v1341, 0
      %v1371 = vsel %vm665, %v1342, 0
      %v1374 = vsel %vm665, %v1343, 0
      %v1377 = vsel %vm665, %v1344, 0
      %v1380 = vsel %vm665, %v1345, 0
      %v1383 = vsel %vm665, %v1346, 0
      %v1386 = vsel %vm665, %v1347, 0
      %v1389 = vsel %vm665, %v1348, 0
      %v1392 = vsel %vm665, %v1349, 0
      %v1395 = vsel %vm665, %v1350, 0
      %v1398 = vsel %vm665, %v1351, 0
      %v1401 = vsel %vm714, %v1303, 0
      %1403 = vmatprep.subr.bf16.mxu0 0
      %1404 = vmatpush1.bf16.msra.mxu0 %v1401
      %1405 = vmatprep.subr.bf16.mxu0 0
      %1406 = vmatpush1.bf16.msra.mxu0 0
      %1407 = vmatprep.subr.bf16.mxu0 0
      %1408 = vmatpush1.bf16.msra.mxu0 0
      %1409 = vmatprep.subr.bf16.mxu0 0
      %1410 = vmatpush1.bf16.msra.mxu0 0
      %1411 = vmatprep.subr.bf16.mxu0 0
      %1412 = vmatpush1.bf16.msra.mxu0 0
      %1413 = vmatprep.subr.bf16.mxu0 0
      %1414 = vmatpush1.bf16.msra.mxu0 0
      %1415 = vmatprep.subr.bf16.mxu0 0
      %1416 = vmatpush1.bf16.msra.mxu0 0
      %1417 = vmatprep.subr.bf16.mxu0 0
      %1418 = vmatpush1.bf16.msra.mxu0 0
      %1419 = vmatprep.subr.bf16.mxu0 0
      %1420 = vmatpush1.bf16.msra.mxu0 0
      %1421 = vmatprep.subr.bf16.mxu0 0
      %1422 = vmatpush1.bf16.msra.mxu0 0
      %1423 = vmatprep.subr.bf16.mxu0 0
      %1424 = vmatpush1.bf16.msra.mxu0 0
      %1425 = vmatprep.subr.bf16.mxu0 0
      %1426 = vmatpush1.bf16.msra.mxu0 0
      %1427 = vmatprep.subr.bf16.mxu0 0
      %1428 = vmatpush1.bf16.msra.mxu0 0
      %1429 = vmatprep.subr.bf16.mxu0 0
      %1430 = vmatpush1.bf16.msra.mxu0 0
      %1431 = vmatprep.subr.bf16.mxu0 0
      %1432 = vmatpush1.bf16.msra.mxu0 0
      %1433 = vmatprep.subr.bf16.mxu0 0
      %1434 = vmatpush1.bf16.msra.mxu0 0
      %1435 = vmatprep.mubr.bf16.mxu0 0
      %1436 = vmatmul.mubr.bf16.gmra.mrb[0].mxu0 %v1353
      %v1437 = vpop.f32.mrb[0].mxu0
      %v1438 = vadd.f32 0.0, %v1437
      %v1439 = vpop.f32.mrb[0].mxu0
      %v1440 = vpop.f32.mrb[0].mxu0
      %v1441 = vadd.f32 0.0, %v1440
      %v1442 = vpop.f32.mrb[0].mxu0
      %1443 = vmatprep.mubr.bf16.mxu0 0
      %1444 = vmatmul.mubr.bf16.gmra.mrb[0].mxu0 %v1356
      %v1445 = vpop.f32.mrb[0].mxu0
      %v1446 = vadd.f32 0.0, %v1445
      %v1447 = vpop.f32.mrb[0].mxu0
      %v1448 = vpop.f32.mrb[0].mxu0
      %v1449 = vadd.f32 0.0, %v1448
      %v1450 = vpop.f32.mrb[0].mxu0
      %1451 = vmatprep.mubr.bf16.mxu0 0
      %1452 = vmatmul.mubr.bf16.gmra.mrb[0].mxu0 %v1359
      %v1453 = vpop.f32.mrb[0].mxu0
      %v1454 = vadd.f32 0.0, %v1453
      %v1455 = vpop.f32.mrb[0].mxu0
      %v1456 = vpop.f32.mrb[0].mxu0
      %v1457 = vadd.f32 0.0, %v1456
      %v1458 = vpop.f32.mrb[0].mxu0
      %1459 = vmatprep.mubr.bf16.mxu0 0
      %1460 = vmatmul.mubr.bf16.gmra.mrb[0].mxu0 %v1362
      %v1461 = vpop.f32.mrb[0].mxu0
      %v1462 = vadd.f32 0.0, %v1461
      %v1463 = vpop.f32.mrb[0].mxu0
      %v1464 = vpop.f32.mrb[0].mxu0
      %v1465 = vadd.f32 0.0, %v1464
      %v1466 = vpop.f32.mrb[0].mxu0
      %1467 = vmatprep.mubr.bf16.mxu0 0
      %1468 = vmatmul.mubr.bf16.gmra.mrb[0].mxu0 %v1365
      %v1469 = vpop.f32.mrb[0].mxu0
      %v1470 = vadd.f32 0.0, %v1469
      %v1471 = vpop.f32.mrb[0].mxu0
      %v1472 = vpop.f32.mrb[0].mxu0
      %v1473 = vadd.f32 0.0, %v1472
      %v1474 = vpop.f32.mrb[0].mxu0
      %1475 = vmatprep.mubr.bf16.mxu0 0
      %1476 = vmatmul.mubr.bf16.gmra.mrb[0].mxu0 %v1368
      %v1477 = vpop.f32.mrb[0].mxu0
      %v1478 = vadd.f32 0.0, %v1477
      %v1479 = vpop.f32.mrb[0].mxu0
      %v1480 = vpop.f32.mrb[0].mxu0
      %v1481 = vadd.f32 0.0, %v1480
      %v1482 = vpop.f32.mrb[0].mxu0
      %1483 = vmatprep.mubr.bf16.mxu0 0
      %1484 = vmatmul.mubr.bf16.gmra.mrb[0].mxu0 %v1371
      %v1485 = vpop.f32.mrb[0].mxu0
      %v1486 = vadd.f32 0.0, %v1485
      %v1487 = vpop.f32.mrb[0].mxu0
      %v1488 = vpop.f32.mrb[0].mxu0
      %v1489 = vadd.f32 0.0, %v1488
      %v1490 = vpop.f32.mrb[0].mxu0
      %1491 = vmatprep.mubr.bf16.mxu0 0
      %1492 = vmatmul.mubr.bf16.gmra.mrb[0].mxu0 %v1374
      %v1493 = vpop.f32.mrb[0].mxu0
      %v1494 = vadd.f32 0.0, %v1493
      %v1495 = vpop.f32.mrb[0].mxu0
      %v1496 = vpop.f32.mrb[0].mxu0
      %v1497 = vadd.f32 0.0, %v1496
      %v1498 = vpop.f32.mrb[0].mxu0
      %1499 = vmatprep.mubr.bf16.mxu0 0
      %1500 = vmatmul.mubr.bf16.gmra.mrb[0].mxu0 %v1377
      %v1501 = vpop.f32.mrb[0].mxu0
      %v1502 = vadd.f32 0.0, %v1501
      %v1503 = vpop.f32.mrb[0].mxu0
      %v1504 = vpop.f32.mrb[0].mxu0
      %v1505 = vadd.f32 0.0, %v1504
      %v1506 = vpop.f32.mrb[0].mxu0
      %1507 = vmatprep.mubr.bf16.mxu0 0
      %1508 = vmatmul.mubr.bf16.gmra.mrb[0].mxu0 %v1380
      %v1509 = vpop.f32.mrb[0].mxu0
      %v1510 = vadd.f32 0.0, %v1509
      %v1511 = vpop.f32.mrb[0].mxu0
      %v1512 = vpop.f32.mrb[0].mxu0
      %v1513 = vadd.f32 0.0, %v1512
      %v1514 = vpop.f32.mrb[0].mxu0
      %1515 = vmatprep.mubr.bf16.mxu0 0
      %1516 = vmatmul.mubr.bf16.gmra.mrb[0].mxu0 %v1383
      %v1517 = vpop.f32.mrb[0].mxu0
      %v1518 = vadd.f32 0.0, %v1517
      %v1519 = vpop.f32.mrb[0].mxu0
      %v1520 = vpop.f32.mrb[0].mxu0
      %v1521 = vadd.f32 0.0, %v1520
      %v1522 = vpop.f32.mrb[0].mxu0
      %1523 = vmatprep.mubr.bf16.mxu0 0
      %1524 = vmatmul.mubr.bf16.gmra.mrb[0].mxu0 %v1386
      %v1525 = vpop.f32.mrb[0].mxu0
      %v1526 = vadd.f32 0.0, %v1525
      %v1527 = vpop.f32.mrb[0].mxu0
      %v1528 = vpop.f32.mrb[0].mxu0
      %v1529 = vadd.f32 0.0, %v1528
      %v1530 = vpop.f32.mrb[0].mxu0
      %1531 = vmatprep.mubr.bf16.mxu0 0
      %1532 = vmatmul.mubr.bf16.gmra.mrb[0].mxu0 %v1389
      %v1533 = vpop.f32.mrb[0].mxu0
      %v1534 = vadd.f32 0.0, %v1533
      %v1535 = vpop.f32.mrb[0].mxu0
      %v1536 = vpop.f32.mrb[0].mxu0
      %v1537 = vadd.f32 0.0, %v1536
      %v1538 = vpop.f32.mrb[0].mxu0
      %1539 = vmatprep.mubr.bf16.mxu0 0
      %1540 = vmatmul.mubr.bf16.gmra.mrb[0].mxu0 %v1392
      %v1541 = vpop.f32.mrb[0].mxu0
      %v1542 = vadd.f32 0.0, %v1541
      %v1543 = vpop.f32.mrb[0].mxu0
      %v1544 = vpop.f32.mrb[0].mxu0
      %v1545 = vadd.f32 0.0, %v1544
      %v1546 = vpop.f32.mrb[0].mxu0
      %1547 = vmatprep.mubr.bf16.mxu0 0
      %1548 = vmatmul.mubr.bf16.gmra.mrb[0].mxu0 %v1395
      %v1549 = vpop.f32.mrb[0].mxu0
      %v1550 = vadd.f32 0.0, %v1549
      %v1551 = vpop.f32.mrb[0].mxu0
      %v1552 = vpop.f32.mrb[0].mxu0
      %v1553 = vadd.f32 0.0, %v1552
      %v1554 = vpop.f32.mrb[0].mxu0
      %1555 = vmatprep.mubr.bf16.mxu0 0
      %1556 = vmatmul.mubr.bf16.gmra.mrb[0].mxu0 %v1398
      %v1557 = vpop.f32.mrb[0].mxu0
      %v1558 = vadd.f32 0.0, %v1557
      %v1559 = vpop.f32.mrb[0].mxu0
      %v1560 = vpop.f32.mrb[0].mxu0
      %v1561 = vadd.f32 0.0, %v1560
      %v1562 = vpop.f32.mrb[0].mxu0
      %1563 = vdwg.mxu0
      %v1564 = vadd.f32 %v1045, %v1438
      %v1565 = vadd.f32 %v1048, %v1441
      %v1566 = vadd.f32 %v1053, %v1446
      %v1567 = vadd.f32 %v1056, %v1449
      %v1568 = vadd.f32 %v1061, %v1454
      %v1569 = vadd.f32 %v1064, %v1457
      %v1570 = vadd.f32 %v1069, %v1462
      %v1571 = vadd.f32 %v1072, %v1465
      %v1572 = vadd.f32 %v1077, %v1470
      %v1573 = vadd.f32 %v1080, %v1473
      %v1574 = vadd.f32 %v1085, %v1478
      %v1575 = vadd.f32 %v1088, %v1481
      %v1576 = vadd.f32 %v1093, %v1486
      %v1577 = vadd.f32 %v1096, %v1489
      %v1578 = vadd.f32 %v1101, %v1494
      %v1579 = vadd.f32 %v1104, %v1497
      %v1580 = vadd.f32 %v1109, %v1502
      %v1581 = vadd.f32 %v1112, %v1505
      %v1582 = vadd.f32 %v1117, %v1510
      %v1583 = vadd.f32 %v1120, %v1513
      %v1584 = vadd.f32 %v1125, %v1518
      %v1585 = vadd.f32 %v1128, %v1521
      %v1586 = vadd.f32 %v1133, %v1526
      %v1587 = vadd.f32 %v1136, %v1529
      %v1588 = vadd.f32 %v1141, %v1534
      %v1589 = vadd.f32 %v1144, %v1537
      %v1590 = vadd.f32 %v1149, %v1542
      %v1591 = vadd.f32 %v1152, %v1545
      %v1592 = vadd.f32 %v1157, %v1550
      %v1593 = vadd.f32 %v1160, %v1553
      %v1594 = vadd.f32 %v1165, %v1558
      %v1595 = vadd.f32 %v1168, %v1561
      %s1596 = scalar_lea.vmem %s1, 6
      %v1597 = vld [vmem:[%s1596] sm:$0x3]
      %v1600 = vunpack.c.l.b16 %v221
      %v1601 = vunpack.c.l.b16 %v222
      %v1602 = vpack.c.b16 %v1601, %v1600
      %v1604 = vsel %vm665, %v1602, 0
      %v1607 = vsel %vm714, %v1597, 0
      %1609 = vmatprep.subr.bf16.mxu0 0
      %1610 = vmatpush1.bf16.msra.mxu0 %v1607
      %1611 = vmatprep.subr.bf16.mxu0 0
      %1612 = vmatpush1.bf16.msra.mxu0 0
      %1613 = vmatprep.subr.bf16.mxu0 0
      %1614 = vmatpush1.bf16.msra.mxu0 0
      %1615 = vmatprep.subr.bf16.mxu0 0
      %1616 = vmatpush1.bf16.msra.mxu0 0
      %1617 = vmatprep.subr.bf16.mxu0 0
      %1618 = vmatpush1.bf16.msra.mxu0 0
      %1619 = vmatprep.subr.bf16.mxu0 0
      %1620 = vmatpush1.bf16.msra.mxu0 0
      %1621 = vmatprep.subr.bf16.mxu0 0
      %1622 = vmatpush1.bf16.msra.mxu0 0
      %1623 = vmatprep.subr.bf16.mxu0 0
      %1624 = vmatpush1.bf16.msra.mxu0 0
      %1625 = vmatprep.subr.bf16.mxu0 0
      %1626 = vmatpush1.bf16.msra.mxu0 0
      %1627 = vmatprep.subr.bf16.mxu0 0
      %1628 = vmatpush1.bf16.msra.mxu0 0
      %1629 = vmatprep.subr.bf16.mxu0 0
      %1630 = vmatpush1.bf16.msra.mxu0 0
      %1631 = vmatprep.subr.bf16.mxu0 0
      %1632 = vmatpush1.bf16.msra.mxu0 0
      %1633 = vmatprep.subr.bf16.mxu0 0
      %1634 = vmatpush1.bf16.msra.mxu0 0
      %1635 = vmatprep.subr.bf16.mxu0 0
      %1636 = vmatpush1.bf16.msra.mxu0 0
      %1637 = vmatprep.subr.bf16.mxu0 0
      %1638 = vmatpush1.bf16.msra.mxu0 0
      %1639 = vmatprep.subr.bf16.mxu0 0
      %1640 = vmatpush1.bf16.msra.mxu0 0
      %1641 = vmatprep.mubr.bf16.mxu0 0
      %1642 = vmatmul.mubr.bf16.gmra.mrb[0].mxu0 %v963
      %v1643 = vpop.f32.mrb[0].mxu0
      %v1644 = vadd.f32 0.0, %v1643
      %v1645 = vpop.f32.mrb[0].mxu0
      %v1646 = vpop.f32.mrb[0].mxu0
      %v1647 = vadd.f32 0.0, %v1646
      %v1648 = vpop.f32.mrb[0].mxu0
      %1649 = vmatprep.mubr.bf16.mxu0 0
      %1650 = vmatmul.mubr.bf16.gmra.mrb[0].mxu0 %v966
      %v1651 = vpop.f32.mrb[0].mxu0
      %v1652 = vadd.f32 0.0, %v1651
      %v1653 = vpop.f32.mrb[0].mxu0
      %v1654 = vpop.f32.mrb[0].mxu0
      %v1655 = vadd.f32 0.0, %v1654
      %v1656 = vpop.f32.mrb[0].mxu0
      %1657 = vmatprep.mubr.bf16.mxu0 0
      %1658 = vmatmul.mubr.bf16.gmra.mrb[0].mxu0 %v969
      %v1659 = vpop.f32.mrb[0].mxu0
      %v1660 = vadd.f32 0.0, %v1659
      %v1661 = vpop.f32.mrb[0].mxu0
      %v1662 = vpop.f32.mrb[0].mxu0
      %v1663 = vadd.f32 0.0, %v1662
      %v1664 = vpop.f32.mrb[0].mxu0
      %1665 = vmatprep.mubr.bf16.mxu0 0
      %1666 = vmatmul.mubr.bf16.gmra.mrb[0].mxu0 %v972
      %v1667 = vpop.f32.mrb[0].mxu0
      %v1668 = vadd.f32 0.0, %v1667
      %v1669 = vpop.f32.mrb[0].mxu0
      %v1670 = vpop.f32.mrb[0].mxu0
      %v1671 = vadd.f32 0.0, %v1670
      %v1672 = vpop.f32.mrb[0].mxu0
      %1673 = vmatprep.mubr.bf16.mxu0 0
      %1674 = vmatmul.mubr.bf16.gmra.mrb[0].mxu0 %v975
      %v1675 = vpop.f32.mrb[0].mxu0
      %v1676 = vadd.f32 0.0, %v1675
      %v1677 = vpop.f32.mrb[0].mxu0
      %v1678 = vpop.f32.mrb[0].mxu0
      %v1679 = vadd.f32 0.0, %v1678
      %v1680 = vpop.f32.mrb[0].mxu0
      %1681 = vmatprep.mubr.bf16.mxu0 0
      %1682 = vmatmul.mubr.bf16.gmra.mrb[0].mxu0 %v978
      %v1683 = vpop.f32.mrb[0].mxu0
      %v1684 = vadd.f32 0.0, %v1683
      %v1685 = vpop.f32.mrb[0].mxu0
      %v1686 = vpop.f32.mrb[0].mxu0
      %v1687 = vadd.f32 0.0, %v1686
      %v1688 = vpop.f32.mrb[0].mxu0
      %1689 = vmatprep.mubr.bf16.mxu0 0
      %1690 = vmatmul.mubr.bf16.gmra.mrb[0].mxu0 %v981
      %v1691 = vpop.f32.mrb[0].mxu0
      %v1692 = vadd.f32 0.0, %v1691
      %v1693 = vpop.f32.mrb[0].mxu0
      %v1694 = vpop.f32.mrb[0].mxu0
      %v1695 = vadd.f32 0.0, %v1694
      %v1696 = vpop.f32.mrb[0].mxu0
      %1697 = vmatprep.mubr.bf16.mxu0 0
      %1698 = vmatmul.mubr.bf16.gmra.mrb[0].mxu0 %v984
      %v1699 = vpop.f32.mrb[0].mxu0
      %v1700 = vadd.f32 0.0, %v1699
      %v1701 = vpop.f32.mrb[0].mxu0
      %v1702 = vpop.f32.mrb[0].mxu0
      %v1703 = vadd.f32 0.0, %v1702
      %v1704 = vpop.f32.mrb[0].mxu0
      %1705 = vmatprep.mubr.bf16.mxu0 0
      %1706 = vmatmul.mubr.bf16.gmra.mrb[0].mxu0 %v987
      %v1707 = vpop.f32.mrb[0].mxu0
      %v1708 = vadd.f32 0.0, %v1707
      %v1709 = vpop.f32.mrb[0].mxu0
      %v1710 = vpop.f32.mrb[0].mxu0
      %v1711 = vadd.f32 0.0, %v1710
      %v1712 = vpop.f32.mrb[0].mxu0
      %1713 = vmatprep.mubr.bf16.mxu0 0
      %1714 = vmatmul.mubr.bf16.gmra.mrb[0].mxu0 %v990
      %v1715 = vpop.f32.mrb[0].mxu0
      %v1716 = vadd.f32 0.0, %v1715
      %v1717 = vpop.f32.mrb[0].mxu0
      %v1718 = vpop.f32.mrb[0].mxu0
      %v1719 = vadd.f32 0.0, %v1718
      %v1720 = vpop.f32.mrb[0].mxu0
      %1721 = vmatprep.mubr.bf16.mxu0 0
      %1722 = vmatmul.mubr.bf16.gmra.mrb[0].mxu0 %v993
      %v1723 = vpop.f32.mrb[0].mxu0
      %v1724 = vadd.f32 0.0, %v1723
      %v1725 = vpop.f32.mrb[0].mxu0
      %v1726 = vpop.f32.mrb[0].mxu0
      %v1727 = vadd.f32 0.0, %v1726
      %v1728 = vpop.f32.mrb[0].mxu0
      %1729 = vmatprep.mubr.bf16.mxu0 0
      %1730 = vmatmul.mubr.bf16.gmra.mrb[0].mxu0 %v996
      %v1731 = vpop.f32.mrb[0].mxu0
      %v1732 = vadd.f32 0.0, %v1731
      %v1733 = vpop.f32.mrb[0].mxu0
      %v1734 = vpop.f32.mrb[0].mxu0
      %v1735 = vadd.f32 0.0, %v1734
      %v1736 = vpop.f32.mrb[0].mxu0
      %1737 = vmatprep.mubr.bf16.mxu0 0
      %1738 = vmatmul.mubr.bf16.gmra.mrb[0].mxu0 %v999
      %v1739 = vpop.f32.mrb[0].mxu0
      %v1740 = vadd.f32 0.0, %v1739
      %v1741 = vpop.f32.mrb[0].mxu0
      %v1742 = vpop.f32.mrb[0].mxu0
      %v1743 = vadd.f32 0.0, %v1742
      %v1744 = vpop.f32.mrb[0].mxu0
      %1745 = vmatprep.mubr.bf16.mxu0 0
      %1746 = vmatmul.mubr.bf16.gmra.mrb[0].mxu0 %v1002
      %v1747 = vpop.f32.mrb[0].mxu0
      %v1748 = vadd.f32 0.0, %v1747
      %v1749 = vpop.f32.mrb[0].mxu0
      %v1750 = vpop.f32.mrb[0].mxu0
      %v1751 = vadd.f32 0.0, %v1750
      %v1752 = vpop.f32.mrb[0].mxu0
      %1753 = vmatprep.mubr.bf16.mxu0 0
      %1754 = vmatmul.mubr.bf16.gmra.mrb[0].mxu0 %v1005
      %v1755 = vpop.f32.mrb[0].mxu0
      %v1756 = vadd.f32 0.0, %v1755
      %v1757 = vpop.f32.mrb[0].mxu0
      %v1758 = vpop.f32.mrb[0].mxu0
      %v1759 = vadd.f32 0.0, %v1758
      %v1760 = vpop.f32.mrb[0].mxu0
      %1761 = vmatprep.mubr.bf16.mxu0 0
      %1762 = vmatmul.mubr.bf16.gmra.mrb[0].mxu0 %v1604
      %v1763 = vpop.f32.mrb[0].mxu0
      %v1764 = vadd.f32 0.0, %v1763
      %v1765 = vpop.f32.mrb[0].mxu0
      %v1766 = vpop.f32.mrb[0].mxu0
      %v1767 = vadd.f32 0.0, %v1766
      %v1768 = vpop.f32.mrb[0].mxu0
      %1769 = vdwg.mxu0
      %v1770 = vadd.f32 %v1564, %v1644
      %v1771 = vadd.f32 %v1565, %v1647
      %v1772 = vadd.f32 %v1566, %v1652
      %v1773 = vadd.f32 %v1567, %v1655
      %v1774 = vadd.f32 %v1568, %v1660
      %v1775 = vadd.f32 %v1569, %v1663
      %v1776 = vadd.f32 %v1570, %v1668
      %v1777 = vadd.f32 %v1571, %v1671
      %v1778 = vadd.f32 %v1572, %v1676
      %v1779 = vadd.f32 %v1573, %v1679
      %v1780 = vadd.f32 %v1574, %v1684
      %v1781 = vadd.f32 %v1575, %v1687
      %v1782 = vadd.f32 %v1576, %v1692
      %v1783 = vadd.f32 %v1577, %v1695
      %v1784 = vadd.f32 %v1578, %v1700
      %v1785 = vadd.f32 %v1579, %v1703
      %v1786 = vadd.f32 %v1580, %v1708
      %v1787 = vadd.f32 %v1581, %v1711
      %v1788 = vadd.f32 %v1582, %v1716
      %v1789 = vadd.f32 %v1583, %v1719
      %v1790 = vadd.f32 %v1584, %v1724
      %v1791 = vadd.f32 %v1585, %v1727
      %v1792 = vadd.f32 %v1586, %v1732
      %v1793 = vadd.f32 %v1587, %v1735
      %v1794 = vadd.f32 %v1588, %v1740
      %v1795 = vadd.f32 %v1589, %v1743
      %v1796 = vadd.f32 %v1590, %v1748
      %v1797 = vadd.f32 %v1591, %v1751
      %v1798 = vadd.f32 %v1592, %v1756
      %v1799 = vadd.f32 %v1593, %v1759
      %v1800 = vadd.f32 %v1594, %v1764
      %v1801 = vadd.f32 %v1595, %v1767
      %v1803 = vshrl.u32 %v221, 16
      %v1805 = vrot.slane %v1803, 4
      %v1806 = vshll.u32 %v221, 16
      %v1808 = vrot.slane %v1806, 5
      %v1809 = vor.u32 %v1805, %v1808
      %v1810 = vrot.slane %v1809, 4
      %v1812 = vshll.u32 %v222, 16
      %v1814 = vrot.slane %v1812, 5
      %v1815 = vsel %vm230, %v1810, %v1814
      %v1816 = vshrl.u32 %v222, 16
      %v1818 = vrot.slane %v1816, 4
      %v1819 = vor.u32 %v1818, %v1814
      %v1820 = vrot.slane %v1819, 4
      %v1822 = vshll.u32 %v223, 16
      %v1824 = vrot.slane %v1822, 5
      %v1825 = vsel %vm230, %v1820, %v1824
      %s1826 = scalar_lea.vmem %s1, 8
      %v1827 = vld [vmem:[%s1826] sm:$0x3]
      %v1828 = vunpack.c.l.b16 %v1815
      %v1829 = vunpack.c.l.b16 %v1825
      %v1830 = vpack.c.b16 %v1829, %v1828
      %v1832 = vsel %vm665, %v1830, 0
      %v1835 = vsel %vm714, %v1827, 0
      %1837 = vmatprep.subr.bf16.mxu0 0
      %1838 = vmatpush1.bf16.msra.mxu0 %v1835
      %1839 = vmatprep.subr.bf16.mxu0 0
      %1840 = vmatpush1.bf16.msra.mxu0 0
      %1841 = vmatprep.subr.bf16.mxu0 0
      %1842 = vmatpush1.bf16.msra.mxu0 0
      %1843 = vmatprep.subr.bf16.mxu0 0
      %1844 = vmatpush1.bf16.msra.mxu0 0
      %1845 = vmatprep.subr.bf16.mxu0 0
      %1846 = vmatpush1.bf16.msra.mxu0 0
      %1847 = vmatprep.subr.bf16.mxu0 0
      %1848 = vmatpush1.bf16.msra.mxu0 0
      %1849 = vmatprep.subr.bf16.mxu0 0
      %1850 = vmatpush1.bf16.msra.mxu0 0
      %1851 = vmatprep.subr.bf16.mxu0 0
      %1852 = vmatpush1.bf16.msra.mxu0 0
      %1853 = vmatprep.subr.bf16.mxu0 0
      %1854 = vmatpush1.bf16.msra.mxu0 0
      %1855 = vmatprep.subr.bf16.mxu0 0
      %1856 = vmatpush1.bf16.msra.mxu0 0
      %1857 = vmatprep.subr.bf16.mxu0 0
      %1858 = vmatpush1.bf16.msra.mxu0 0
      %1859 = vmatprep.subr.bf16.mxu0 0
      %1860 = vmatpush1.bf16.msra.mxu0 0
      %1861 = vmatprep.subr.bf16.mxu0 0
      %1862 = vmatpush1.bf16.msra.mxu0 0
      %1863 = vmatprep.subr.bf16.mxu0 0
      %1864 = vmatpush1.bf16.msra.mxu0 0
      %1865 = vmatprep.subr.bf16.mxu0 0
      %1866 = vmatpush1.bf16.msra.mxu0 0
      %1867 = vmatprep.subr.bf16.mxu0 0
      %1868 = vmatpush1.bf16.msra.mxu0 0
      %1869 = vmatprep.mubr.bf16.mxu0 0
      %1870 = vmatmul.mubr.bf16.gmra.mrb[0].mxu0 %v670
      %v1871 = vpop.f32.mrb[0].mxu0
      %v1872 = vadd.f32 0.0, %v1871
      %v1873 = vpop.f32.mrb[0].mxu0
      %v1874 = vpop.f32.mrb[0].mxu0
      %v1875 = vadd.f32 0.0, %v1874
      %v1876 = vpop.f32.mrb[0].mxu0
      %1877 = vmatprep.mubr.bf16.mxu0 0
      %1878 = vmatmul.mubr.bf16.gmra.mrb[0].mxu0 %v673
      %v1879 = vpop.f32.mrb[0].mxu0
      %v1880 = vadd.f32 0.0, %v1879
      %v1881 = vpop.f32.mrb[0].mxu0
      %v1882 = vpop.f32.mrb[0].mxu0
      %v1883 = vadd.f32 0.0, %v1882
      %v1884 = vpop.f32.mrb[0].mxu0
      %1885 = vmatprep.mubr.bf16.mxu0 0
      %1886 = vmatmul.mubr.bf16.gmra.mrb[0].mxu0 %v676
      %v1887 = vpop.f32.mrb[0].mxu0
      %v1888 = vadd.f32 0.0, %v1887
      %v1889 = vpop.f32.mrb[0].mxu0
      %v1890 = vpop.f32.mrb[0].mxu0
      %v1891 = vadd.f32 0.0, %v1890
      %v1892 = vpop.f32.mrb[0].mxu0
      %1893 = vmatprep.mubr.bf16.mxu0 0
      %1894 = vmatmul.mubr.bf16.gmra.mrb[0].mxu0 %v679
      %v1895 = vpop.f32.mrb[0].mxu0
      %v1896 = vadd.f32 0.0, %v1895
      %v1897 = vpop.f32.mrb[0].mxu0
      %v1898 = vpop.f32.mrb[0].mxu0
      %v1899 = vadd.f32 0.0, %v1898
      %v1900 = vpop.f32.mrb[0].mxu0
      %1901 = vmatprep.mubr.bf16.mxu0 0
      %1902 = vmatmul.mubr.bf16.gmra.mrb[0].mxu0 %v682
      %v1903 = vpop.f32.mrb[0].mxu0
      %v1904 = vadd.f32 0.0, %v1903
      %v1905 = vpop.f32.mrb[0].mxu0
      %v1906 = vpop.f32.mrb[0].mxu0
      %v1907 = vadd.f32 0.0, %v1906
      %v1908 = vpop.f32.mrb[0].mxu0
      %1909 = vmatprep.mubr.bf16.mxu0 0
      %1910 = vmatmul.mubr.bf16.gmra.mrb[0].mxu0 %v685
      %v1911 = vpop.f32.mrb[0].mxu0
      %v1912 = vadd.f32 0.0, %v1911
      %v1913 = vpop.f32.mrb[0].mxu0
      %v1914 = vpop.f32.mrb[0].mxu0
      %v1915 = vadd.f32 0.0, %v1914
      %v1916 = vpop.f32.mrb[0].mxu0
      %1917 = vmatprep.mubr.bf16.mxu0 0
      %1918 = vmatmul.mubr.bf16.gmra.mrb[0].mxu0 %v688
      %v1919 = vpop.f32.mrb[0].mxu0
      %v1920 = vadd.f32 0.0, %v1919
      %v1921 = vpop.f32.mrb[0].mxu0
      %v1922 = vpop.f32.mrb[0].mxu0
      %v1923 = vadd.f32 0.0, %v1922
      %v1924 = vpop.f32.mrb[0].mxu0
      %1925 = vmatprep.mubr.bf16.mxu0 0
      %1926 = vmatmul.mubr.bf16.gmra.mrb[0].mxu0 %v691
      %v1927 = vpop.f32.mrb[0].mxu0
      %v1928 = vadd.f32 0.0, %v1927
      %v1929 = vpop.f32.mrb[0].mxu0
      %v1930 = vpop.f32.mrb[0].mxu0
      %v1931 = vadd.f32 0.0, %v1930
      %v1932 = vpop.f32.mrb[0].mxu0
      %1933 = vmatprep.mubr.bf16.mxu0 0
      %1934 = vmatmul.mubr.bf16.gmra.mrb[0].mxu0 %v694
      %v1935 = vpop.f32.mrb[0].mxu0
      %v1936 = vadd.f32 0.0, %v1935
      %v1937 = vpop.f32.mrb[0].mxu0
      %v1938 = vpop.f32.mrb[0].mxu0
      %v1939 = vadd.f32 0.0, %v1938
      %v1940 = vpop.f32.mrb[0].mxu0
      %1941 = vmatprep.mubr.bf16.mxu0 0
      %1942 = vmatmul.mubr.bf16.gmra.mrb[0].mxu0 %v697
      %v1943 = vpop.f32.mrb[0].mxu0
      %v1944 = vadd.f32 0.0, %v1943
      %v1945 = vpop.f32.mrb[0].mxu0
      %v1946 = vpop.f32.mrb[0].mxu0
      %v1947 = vadd.f32 0.0, %v1946
      %v1948 = vpop.f32.mrb[0].mxu0
      %1949 = vmatprep.mubr.bf16.mxu0 0
      %1950 = vmatmul.mubr.bf16.gmra.mrb[0].mxu0 %v700
      %v1951 = vpop.f32.mrb[0].mxu0
      %v1952 = vadd.f32 0.0, %v1951
      %v1953 = vpop.f32.mrb[0].mxu0
      %v1954 = vpop.f32.mrb[0].mxu0
      %v1955 = vadd.f32 0.0, %v1954
      %v1956 = vpop.f32.mrb[0].mxu0
      %1957 = vmatprep.mubr.bf16.mxu0 0
      %1958 = vmatmul.mubr.bf16.gmra.mrb[0].mxu0 %v703
      %v1959 = vpop.f32.mrb[0].mxu0
      %v1960 = vadd.f32 0.0, %v1959
      %v1961 = vpop.f32.mrb[0].mxu0
      %v1962 = vpop.f32.mrb[0].mxu0
      %v1963 = vadd.f32 0.0, %v1962
      %v1964 = vpop.f32.mrb[0].mxu0
      %1965 = vmatprep.mubr.bf16.mxu0 0
      %1966 = vmatmul.mubr.bf16.gmra.mrb[0].mxu0 %v706
      %v1967 = vpop.f32.mrb[0].mxu0
      %v1968 = vadd.f32 0.0, %v1967
      %v1969 = vpop.f32.mrb[0].mxu0
      %v1970 = vpop.f32.mrb[0].mxu0
      %v1971 = vadd.f32 0.0, %v1970
      %v1972 = vpop.f32.mrb[0].mxu0
      %1973 = vmatprep.mubr.bf16.mxu0 0
      %1974 = vmatmul.mubr.bf16.gmra.mrb[0].mxu0 %v709
      %v1975 = vpop.f32.mrb[0].mxu0
      %v1976 = vadd.f32 0.0, %v1975
      %v1977 = vpop.f32.mrb[0].mxu0
      %v1978 = vpop.f32.mrb[0].mxu0
      %v1979 = vadd.f32 0.0, %v1978
      %v1980 = vpop.f32.mrb[0].mxu0
      %1981 = vmatprep.mubr.bf16.mxu0 0
      %1982 = vmatmul.mubr.bf16.gmra.mrb[0].mxu0 %v712
      %v1983 = vpop.f32.mrb[0].mxu0
      %v1984 = vadd.f32 0.0, %v1983
      %v1985 = vpop.f32.mrb[0].mxu0
      %v1986 = vpop.f32.mrb[0].mxu0
      %v1987 = vadd.f32 0.0, %v1986
      %v1988 = vpop.f32.mrb[0].mxu0
      %1989 = vmatprep.mubr.bf16.mxu0 0
      %1990 = vmatmul.mubr.bf16.gmra.mrb[0].mxu0 %v1832
      %v1991 = vpop.f32.mrb[0].mxu0
      %v1992 = vadd.f32 0.0, %v1991
      %v1993 = vpop.f32.mrb[0].mxu0
      %v1994 = vpop.f32.mrb[0].mxu0
      %v1995 = vadd.f32 0.0, %v1994
      %v1996 = vpop.f32.mrb[0].mxu0
      %1997 = vdwg.mxu0
      %v1998 = vadd.f32 %v1770, %v1872
      %v1999 = vadd.f32 %v1771, %v1875
      %v2000 = vadd.f32 %v1772, %v1880
      %v2001 = vadd.f32 %v1773, %v1883
      %v2002 = vadd.f32 %v1774, %v1888
      %v2003 = vadd.f32 %v1775, %v1891
      %v2004 = vadd.f32 %v1776, %v1896
      %v2005 = vadd.f32 %v1777, %v1899
      %v2006 = vadd.f32 %v1778, %v1904
      %v2007 = vadd.f32 %v1779, %v1907
      %v2008 = vadd.f32 %v1780, %v1912
      %v2009 = vadd.f32 %v1781, %v1915
      %v2010 = vadd.f32 %v1782, %v1920
      %v2011 = vadd.f32 %v1783, %v1923
      %v2012 = vadd.f32 %v1784, %v1928
      %v2013 = vadd.f32 %v1785, %v1931
      %v2014 = vadd.f32 %v1786, %v1936
      %v2015 = vadd.f32 %v1787, %v1939
      %v2016 = vadd.f32 %v1788, %v1944
      %v2017 = vadd.f32 %v1789, %v1947
      %v2018 = vadd.f32 %v1790, %v1952
      %v2019 = vadd.f32 %v1791, %v1955
      %v2020 = vadd.f32 %v1792, %v1960
      %v2021 = vadd.f32 %v1793, %v1963
      %v2022 = vadd.f32 %v1794, %v1968
      %v2023 = vadd.f32 %v1795, %v1971
      %v2024 = vadd.f32 %v1796, %v1976
      %v2025 = vadd.f32 %v1797, %v1979
      %v2026 = vadd.f32 %v1798, %v1984
      %v2027 = vadd.f32 %v1799, %v1987
      %v2028 = vadd.f32 %v1800, %v1992
      %v2029 = vadd.f32 %v1801, %v1995
      %v2031 = vrot.slane %v221, 5
      %v2032 = vrot.slane %v2031, 4
      %v2033 = vrot.slane %v222, 5
      %v2034 = vsel %vm1189, %v2032, %v2033
      %v2035 = vrot.slane %v2033, 4
      %v2036 = vrot.slane %v223, 5
      %v2037 = vsel %vm1189, %v2035, %v2036
      %s2038 = scalar_lea.vmem %s1, 10
      %v2039 = vld [vmem:[%s2038] sm:$0x3]
      %v2040 = vunpack.c.l.b16 %v2034
      %v2041 = vunpack.c.l.b16 %v2037
      %v2042 = vpack.c.b16 %v2041, %v2040
      %v2044 = vsel %vm665, %v2042, 0
      %v2047 = vsel %vm714, %v2039, 0
      %2049 = vmatprep.subr.bf16.mxu0 0
      %2050 = vmatpush1.bf16.msra.mxu0 %v2047
      %2051 = vmatprep.subr.bf16.mxu0 0
      %2052 = vmatpush1.bf16.msra.mxu0 0
      %2053 = vmatprep.subr.bf16.mxu0 0
      %2054 = vmatpush1.bf16.msra.mxu0 0
      %2055 = vmatprep.subr.bf16.mxu0 0
      %2056 = vmatpush1.bf16.msra.mxu0 0
      %2057 = vmatprep.subr.bf16.mxu0 0
      %2058 = vmatpush1.bf16.msra.mxu0 0
      %2059 = vmatprep.subr.bf16.mxu0 0
      %2060 = vmatpush1.bf16.msra.mxu0 0
      %2061 = vmatprep.subr.bf16.mxu0 0
      %2062 = vmatpush1.bf16.msra.mxu0 0
      %2063 = vmatprep.subr.bf16.mxu0 0
      %2064 = vmatpush1.bf16.msra.mxu0 0
      %2065 = vmatprep.subr.bf16.mxu0 0
      %2066 = vmatpush1.bf16.msra.mxu0 0
      %2067 = vmatprep.subr.bf16.mxu0 0
      %2068 = vmatpush1.bf16.msra.mxu0 0
      %2069 = vmatprep.subr.bf16.mxu0 0
      %2070 = vmatpush1.bf16.msra.mxu0 0
      %2071 = vmatprep.subr.bf16.mxu0 0
      %2072 = vmatpush1.bf16.msra.mxu0 0
      %2073 = vmatprep.subr.bf16.mxu0 0
      %2074 = vmatpush1.bf16.msra.mxu0 0
      %2075 = vmatprep.subr.bf16.mxu0 0
      %2076 = vmatpush1.bf16.msra.mxu0 0
      %2077 = vmatprep.subr.bf16.mxu0 0
      %2078 = vmatpush1.bf16.msra.mxu0 0
      %2079 = vmatprep.subr.bf16.mxu0 0
      %2080 = vmatpush1.bf16.msra.mxu0 0
      %2081 = vmatprep.mubr.bf16.mxu0 0
      %2082 = vmatmul.mubr.bf16.gmra.mrb[0].mxu0 %v1356
      %v2083 = vpop.f32.mrb[0].mxu0
      %v2084 = vadd.f32 0.0, %v2083
      %v2085 = vpop.f32.mrb[0].mxu0
      %v2086 = vpop.f32.mrb[0].mxu0
      %v2087 = vadd.f32 0.0, %v2086
      %v2088 = vpop.f32.mrb[0].mxu0
      %2089 = vmatprep.mubr.bf16.mxu0 0
      %2090 = vmatmul.mubr.bf16.gmra.mrb[0].mxu0 %v1359
      %v2091 = vpop.f32.mrb[0].mxu0
      %v2092 = vadd.f32 0.0, %v2091
      %v2093 = vpop.f32.mrb[0].mxu0
      %v2094 = vpop.f32.mrb[0].mxu0
      %v2095 = vadd.f32 0.0, %v2094
      %v2096 = vpop.f32.mrb[0].mxu0
      %2097 = vmatprep.mubr.bf16.mxu0 0
      %2098 = vmatmul.mubr.bf16.gmra.mrb[0].mxu0 %v1362
      %v2099 = vpop.f32.mrb[0].mxu0
      %v2100 = vadd.f32 0.0, %v2099
      %v2101 = vpop.f32.mrb[0].mxu0
      %v2102 = vpop.f32.mrb[0].mxu0
      %v2103 = vadd.f32 0.0, %v2102
      %v2104 = vpop.f32.mrb[0].mxu0
      %2105 = vmatprep.mubr.bf16.mxu0 0
      %2106 = vmatmul.mubr.bf16.gmra.mrb[0].mxu0 %v1365
      %v2107 = vpop.f32.mrb[0].mxu0
      %v2108 = vadd.f32 0.0, %v2107
      %v2109 = vpop.f32.mrb[0].mxu0
      %v2110 = vpop.f32.mrb[0].mxu0
      %v2111 = vadd.f32 0.0, %v2110
      %v2112 = vpop.f32.mrb[0].mxu0
      %2113 = vmatprep.mubr.bf16.mxu0 0
      %2114 = vmatmul.mubr.bf16.gmra.mrb[0].mxu0 %v1368
      %v2115 = vpop.f32.mrb[0].mxu0
      %v2116 = vadd.f32 0.0, %v2115
      %v2117 = vpop.f32.mrb[0].mxu0
      %v2118 = vpop.f32.mrb[0].mxu0
      %v2119 = vadd.f32 0.0, %v2118
      %v2120 = vpop.f32.mrb[0].mxu0
      %2121 = vmatprep.mubr.bf16.mxu0 0
      %2122 = vmatmul.mubr.bf16.gmra.mrb[0].mxu0 %v1371
      %v2123 = vpop.f32.mrb[0].mxu0
      %v2124 = vadd.f32 0.0, %v2123
      %v2125 = vpop.f32.mrb[0].mxu0
      %v2126 = vpop.f32.mrb[0].mxu0
      %v2127 = vadd.f32 0.0, %v2126
      %v2128 = vpop.f32.mrb[0].mxu0
      %2129 = vmatprep.mubr.bf16.mxu0 0
      %2130 = vmatmul.mubr.bf16.gmra.mrb[0].mxu0 %v1374
      %v2131 = vpop.f32.mrb[0].mxu0
      %v2132 = vadd.f32 0.0, %v2131
      %v2133 = vpop.f32.mrb[0].mxu0
      %v2134 = vpop.f32.mrb[0].mxu0
      %v2135 = vadd.f32 0.0, %v2134
      %v2136 = vpop.f32.mrb[0].mxu0
      %2137 = vmatprep.mubr.bf16.mxu0 0
      %2138 = vmatmul.mubr.bf16.gmra.mrb[0].mxu0 %v1377
      %v2139 = vpop.f32.mrb[0].mxu0
      %v2140 = vadd.f32 0.0, %v2139
      %v2141 = vpop.f32.mrb[0].mxu0
      %v2142 = vpop.f32.mrb[0].mxu0
      %v2143 = vadd.f32 0.0, %v2142
      %v2144 = vpop.f32.mrb[0].mxu0
      %2145 = vmatprep.mubr.bf16.mxu0 0
      %2146 = vmatmul.mubr.bf16.gmra.mrb[0].mxu0 %v1380
      %v2147 = vpop.f32.mrb[0].mxu0
      %v2148 = vadd.f32 0.0, %v2147
      %v2149 = vpop.f32.mrb[0].mxu0
      %v2150 = vpop.f32.mrb[0].mxu0
      %v2151 = vadd.f32 0.0, %v2150
      %v2152 = vpop.f32.mrb[0].mxu0
      %2153 = vmatprep.mubr.bf16.mxu0 0
      %2154 = vmatmul.mubr.bf16.gmra.mrb[0].mxu0 %v1383
      %v2155 = vpop.f32.mrb[0].mxu0
      %v2156 = vadd.f32 0.0, %v2155
      %v2157 = vpop.f32.mrb[0].mxu0
      %v2158 = vpop.f32.mrb[0].mxu0
      %v2159 = vadd.f32 0.0, %v2158
      %v2160 = vpop.f32.mrb[0].mxu0
      %2161 = vmatprep.mubr.bf16.mxu0 0
      %2162 = vmatmul.mubr.bf16.gmra.mrb[0].mxu0 %v1386
      %v2163 = vpop.f32.mrb[0].mxu0
      %v2164 = vadd.f32 0.0, %v2163
      %v2165 = vpop.f32.mrb[0].mxu0
      %v2166 = vpop.f32.mrb[0].mxu0
      %v2167 = vadd.f32 0.0, %v2166
      %v2168 = vpop.f32.mrb[0].mxu0
      %2169 = vmatprep.mubr.bf16.mxu0 0
      %2170 = vmatmul.mubr.bf16.gmra.mrb[0].mxu0 %v1389
      %v2171 = vpop.f32.mrb[0].mxu0
      %v2172 = vadd.f32 0.0, %v2171
      %v2173 = vpop.f32.mrb[0].mxu0
      %v2174 = vpop.f32.mrb[0].mxu0
      %v2175 = vadd.f32 0.0, %v2174
      %v2176 = vpop.f32.mrb[0].mxu0
      %2177 = vmatprep.mubr.bf16.mxu0 0
      %2178 = vmatmul.mubr.bf16.gmra.mrb[0].mxu0 %v1392
      %v2179 = vpop.f32.mrb[0].mxu0
      %v2180 = vadd.f32 0.0, %v2179
      %v2181 = vpop.f32.mrb[0].mxu0
      %v2182 = vpop.f32.mrb[0].mxu0
      %v2183 = vadd.f32 0.0, %v2182
      %v2184 = vpop.f32.mrb[0].mxu0
      %2185 = vmatprep.mubr.bf16.mxu0 0
      %2186 = vmatmul.mubr.bf16.gmra.mrb[0].mxu0 %v1395
      %v2187 = vpop.f32.mrb[0].mxu0
      %v2188 = vadd.f32 0.0, %v2187
      %v2189 = vpop.f32.mrb[0].mxu0
      %v2190 = vpop.f32.mrb[0].mxu0
      %v2191 = vadd.f32 0.0, %v2190
      %v2192 = vpop.f32.mrb[0].mxu0
      %2193 = vmatprep.mubr.bf16.mxu0 0
      %2194 = vmatmul.mubr.bf16.gmra.mrb[0].mxu0 %v1398
      %v2195 = vpop.f32.mrb[0].mxu0
      %v2196 = vadd.f32 0.0, %v2195
      %v2197 = vpop.f32.mrb[0].mxu0
      %v2198 = vpop.f32.mrb[0].mxu0
      %v2199 = vadd.f32 0.0, %v2198
      %v2200 = vpop.f32.mrb[0].mxu0
      %2201 = vmatprep.mubr.bf16.mxu0 0
      %2202 = vmatmul.mubr.bf16.gmra.mrb[0].mxu0 %v2044
      %v2203 = vpop.f32.mrb[0].mxu0
      %v2204 = vadd.f32 0.0, %v2203
      %v2205 = vpop.f32.mrb[0].mxu0
      %v2206 = vpop.f32.mrb[0].mxu0
      %v2207 = vadd.f32 0.0, %v2206
      %v2208 = vpop.f32.mrb[0].mxu0
      %2209 = vdwg.mxu0
      %v2210 = vadd.f32 %v1998, %v2084
      %v2211 = vadd.f32 %v1999, %v2087
      %v2212 = vadd.f32 %v2000, %v2092
      %v2213 = vadd.f32 %v2001, %v2095
      %v2214 = vadd.f32 %v2002, %v2100
      %v2215 = vadd.f32 %v2003, %v2103
      %v2216 = vadd.f32 %v2004, %v2108
      %v2217 = vadd.f32 %v2005, %v2111
      %v2218 = vadd.f32 %v2006, %v2116
      %v2219 = vadd.f32 %v2007, %v2119
      %v2220 = vadd.f32 %v2008, %v2124
      %v2221 = vadd.f32 %v2009, %v2127
      %v2222 = vadd.f32 %v2010, %v2132
      %v2223 = vadd.f32 %v2011, %v2135
      %v2224 = vadd.f32 %v2012, %v2140
      %v2225 = vadd.f32 %v2013, %v2143
      %v2226 = vadd.f32 %v2014, %v2148
      %v2227 = vadd.f32 %v2015, %v2151
      %v2228 = vadd.f32 %v2016, %v2156
      %v2229 = vadd.f32 %v2017, %v2159
      %v2230 = vadd.f32 %v2018, %v2164
      %v2231 = vadd.f32 %v2019, %v2167
      %v2232 = vadd.f32 %v2020, %v2172
      %v2233 = vadd.f32 %v2021, %v2175
      %v2234 = vadd.f32 %v2022, %v2180
      %v2235 = vadd.f32 %v2023, %v2183
      %v2236 = vadd.f32 %v2024, %v2188
      %v2237 = vadd.f32 %v2025, %v2191
      %v2238 = vadd.f32 %v2026, %v2196
      %v2239 = vadd.f32 %v2027, %v2199
      %v2240 = vadd.f32 %v2028, %v2204
      %v2241 = vadd.f32 %v2029, %v2207
      %s2242 = scalar_lea.vmem %s1, 12
      %v2243 = vld [vmem:[%s2242] sm:$0x3]
      %v2246 = vunpack.c.l.b16 %v224
      %v2247 = vunpack.c.l.b16 %v225
      %v2248 = vpack.c.b16 %v2247, %v2246
      %v2250 = vsel %vm665, %v2248, 0
      %v2253 = vsel %vm714, %v2243, 0
      %2255 = vmatprep.subr.bf16.mxu0 0
      %2256 = vmatpush1.bf16.msra.mxu0 %v2253
      %2257 = vmatprep.subr.bf16.mxu0 0
      %2258 = vmatpush1.bf16.msra.mxu0 0
      %2259 = vmatprep.subr.bf16.mxu0 0
      %2260 = vmatpush1.bf16.msra.mxu0 0
      %2261 = vmatprep.subr.bf16.mxu0 0
      %2262 = vmatpush1.bf16.msra.mxu0 0
      %2263 = vmatprep.subr.bf16.mxu0 0
      %2264 = vmatpush1.bf16.msra.mxu0 0
      %2265 = vmatprep.subr.bf16.mxu0 0
      %2266 = vmatpush1.bf16.msra.mxu0 0
      %2267 = vmatprep.subr.bf16.mxu0 0
      %2268 = vmatpush1.bf16.msra.mxu0 0
      %2269 = vmatprep.subr.bf16.mxu0 0
      %2270 = vmatpush1.bf16.msra.mxu0 0
      %2271 = vmatprep.subr.bf16.mxu0 0
      %2272 = vmatpush1.bf16.msra.mxu0 0
      %2273 = vmatprep.subr.bf16.mxu0 0
      %2274 = vmatpush1.bf16.msra.mxu0 0
      %2275 = vmatprep.subr.bf16.mxu0 0
      %2276 = vmatpush1.bf16.msra.mxu0 0
      %2277 = vmatprep.subr.bf16.mxu0 0
      %2278 = vmatpush1.bf16.msra.mxu0 0
      %2279 = vmatprep.subr.bf16.mxu0 0
      %2280 = vmatpush1.bf16.msra.mxu0 0
      %2281 = vmatprep.subr.bf16.mxu0 0
      %2282 = vmatpush1.bf16.msra.mxu0 0
      %2283 = vmatprep.subr.bf16.mxu0 0
      %2284 = vmatpush1.bf16.msra.mxu0 0
      %2285 = vmatprep.subr.bf16.mxu0 0
      %2286 = vmatpush1.bf16.msra.mxu0 0
      %2287 = vmatprep.mubr.bf16.mxu0 0
      %2288 = vmatmul.mubr.bf16.gmra.mrb[0].mxu0 %v966
      %v2289 = vpop.f32.mrb[0].mxu0
      %v2290 = vadd.f32 0.0, %v2289
      %v2291 = vpop.f32.mrb[0].mxu0
      %v2292 = vpop.f32.mrb[0].mxu0
      %v2293 = vadd.f32 0.0, %v2292
      %v2294 = vpop.f32.mrb[0].mxu0
      %2295 = vmatprep.mubr.bf16.mxu0 0
      %2296 = vmatmul.mubr.bf16.gmra.mrb[0].mxu0 %v969
      %v2297 = vpop.f32.mrb[0].mxu0
      %v2298 = vadd.f32 0.0, %v2297
      %v2299 = vpop.f32.mrb[0].mxu0
      %v2300 = vpop.f32.mrb[0].mxu0
      %v2301 = vadd.f32 0.0, %v2300
      %v2302 = vpop.f32.mrb[0].mxu0
      %2303 = vmatprep.mubr.bf16.mxu0 0
      %2304 = vmatmul.mubr.bf16.gmra.mrb[0].mxu0 %v972
      %v2305 = vpop.f32.mrb[0].mxu0
      %v2306 = vadd.f32 0.0, %v2305
      %v2307 = vpop.f32.mrb[0].mxu0
      %v2308 = vpop.f32.mrb[0].mxu0
      %v2309 = vadd.f32 0.0, %v2308
      %v2310 = vpop.f32.mrb[0].mxu0
      %2311 = vmatprep.mubr.bf16.mxu0 0
      %2312 = vmatmul.mubr.bf16.gmra.mrb[0].mxu0 %v975
      %v2313 = vpop.f32.mrb[0].mxu0
      %v2314 = vadd.f32 0.0, %v2313
      %v2315 = vpop.f32.mrb[0].mxu0
      %v2316 = vpop.f32.mrb[0].mxu0
      %v2317 = vadd.f32 0.0, %v2316
      %v2318 = vpop.f32.mrb[0].mxu0
      %2319 = vmatprep.mubr.bf16.mxu0 0
      %2320 = vmatmul.mubr.bf16.gmra.mrb[0].mxu0 %v978
      %v2321 = vpop.f32.mrb[0].mxu0
      %v2322 = vadd.f32 0.0, %v2321
      %v2323 = vpop.f32.mrb[0].mxu0
      %v2324 = vpop.f32.mrb[0].mxu0
      %v2325 = vadd.f32 0.0, %v2324
      %v2326 = vpop.f32.mrb[0].mxu0
      %2327 = vmatprep.mubr.bf16.mxu0 0
      %2328 = vmatmul.mubr.bf16.gmra.mrb[0].mxu0 %v981
      %v2329 = vpop.f32.mrb[0].mxu0
      %v2330 = vadd.f32 0.0, %v2329
      %v2331 = vpop.f32.mrb[0].mxu0
      %v2332 = vpop.f32.mrb[0].mxu0
      %v2333 = vadd.f32 0.0, %v2332
      %v2334 = vpop.f32.mrb[0].mxu0
      %2335 = vmatprep.mubr.bf16.mxu0 0
      %2336 = vmatmul.mubr.bf16.gmra.mrb[0].mxu0 %v984
      %v2337 = vpop.f32.mrb[0].mxu0
      %v2338 = vadd.f32 0.0, %v2337
      %v2339 = vpop.f32.mrb[0].mxu0
      %v2340 = vpop.f32.mrb[0].mxu0
      %v2341 = vadd.f32 0.0, %v2340
      %v2342 = vpop.f32.mrb[0].mxu0
      %2343 = vmatprep.mubr.bf16.mxu0 0
      %2344 = vmatmul.mubr.bf16.gmra.mrb[0].mxu0 %v987
      %v2345 = vpop.f32.mrb[0].mxu0
      %v2346 = vadd.f32 0.0, %v2345
      %v2347 = vpop.f32.mrb[0].mxu0
      %v2348 = vpop.f32.mrb[0].mxu0
      %v2349 = vadd.f32 0.0, %v2348
      %v2350 = vpop.f32.mrb[0].mxu0
      %2351 = vmatprep.mubr.bf16.mxu0 0
      %2352 = vmatmul.mubr.bf16.gmra.mrb[0].mxu0 %v990
      %v2353 = vpop.f32.mrb[0].mxu0
      %v2354 = vadd.f32 0.0, %v2353
      %v2355 = vpop.f32.mrb[0].mxu0
      %v2356 = vpop.f32.mrb[0].mxu0
      %v2357 = vadd.f32 0.0, %v2356
      %v2358 = vpop.f32.mrb[0].mxu0
      %2359 = vmatprep.mubr.bf16.mxu0 0
      %2360 = vmatmul.mubr.bf16.gmra.mrb[0].mxu0 %v993
      %v2361 = vpop.f32.mrb[0].mxu0
      %v2362 = vadd.f32 0.0, %v2361
      %v2363 = vpop.f32.mrb[0].mxu0
      %v2364 = vpop.f32.mrb[0].mxu0
      %v2365 = vadd.f32 0.0, %v2364
      %v2366 = vpop.f32.mrb[0].mxu0
      %2367 = vmatprep.mubr.bf16.mxu0 0
      %2368 = vmatmul.mubr.bf16.gmra.mrb[0].mxu0 %v996
      %v2369 = vpop.f32.mrb[0].mxu0
      %v2370 = vadd.f32 0.0, %v2369
      %v2371 = vpop.f32.mrb[0].mxu0
      %v2372 = vpop.f32.mrb[0].mxu0
      %v2373 = vadd.f32 0.0, %v2372
      %v2374 = vpop.f32.mrb[0].mxu0
      %2375 = vmatprep.mubr.bf16.mxu0 0
      %2376 = vmatmul.mubr.bf16.gmra.mrb[0].mxu0 %v999
      %v2377 = vpop.f32.mrb[0].mxu0
      %v2378 = vadd.f32 0.0, %v2377
      %v2379 = vpop.f32.mrb[0].mxu0
      %v2380 = vpop.f32.mrb[0].mxu0
      %v2381 = vadd.f32 0.0, %v2380
      %v2382 = vpop.f32.mrb[0].mxu0
      %2383 = vmatprep.mubr.bf16.mxu0 0
      %2384 = vmatmul.mubr.bf16.gmra.mrb[0].mxu0 %v1002
      %v2385 = vpop.f32.mrb[0].mxu0
      %v2386 = vadd.f32 0.0, %v2385
      %v2387 = vpop.f32.mrb[0].mxu0
      %v2388 = vpop.f32.mrb[0].mxu0
      %v2389 = vadd.f32 0.0, %v2388
      %v2390 = vpop.f32.mrb[0].mxu0
      %2391 = vmatprep.mubr.bf16.mxu0 0
      %2392 = vmatmul.mubr.bf16.gmra.mrb[0].mxu0 %v1005
      %v2393 = vpop.f32.mrb[0].mxu0
      %v2394 = vadd.f32 0.0, %v2393
      %v2395 = vpop.f32.mrb[0].mxu0
      %v2396 = vpop.f32.mrb[0].mxu0
      %v2397 = vadd.f32 0.0, %v2396
      %v2398 = vpop.f32.mrb[0].mxu0
      %2399 = vmatprep.mubr.bf16.mxu0 0
      %2400 = vmatmul.mubr.bf16.gmra.mrb[0].mxu0 %v1604
      %v2401 = vpop.f32.mrb[0].mxu0
      %v2402 = vadd.f32 0.0, %v2401
      %v2403 = vpop.f32.mrb[0].mxu0
      %v2404 = vpop.f32.mrb[0].mxu0
      %v2405 = vadd.f32 0.0, %v2404
      %v2406 = vpop.f32.mrb[0].mxu0
      %2407 = vmatprep.mubr.bf16.mxu0 0
      %2408 = vmatmul.mubr.bf16.gmra.mrb[0].mxu0 %v2250
      %v2409 = vpop.f32.mrb[0].mxu0
      %v2410 = vadd.f32 0.0, %v2409
      %v2411 = vpop.f32.mrb[0].mxu0
      %v2412 = vpop.f32.mrb[0].mxu0
      %v2413 = vadd.f32 0.0, %v2412
      %v2414 = vpop.f32.mrb[0].mxu0
      %2415 = vdwg.mxu0
      %v2416 = vadd.f32 %v2210, %v2290
      %v2417 = vadd.f32 %v2211, %v2293
      %v2418 = vadd.f32 %v2212, %v2298
      %v2419 = vadd.f32 %v2213, %v2301
      %v2420 = vadd.f32 %v2214, %v2306
      %v2421 = vadd.f32 %v2215, %v2309
      %v2422 = vadd.f32 %v2216, %v2314
      %v2423 = vadd.f32 %v2217, %v2317
      %v2424 = vadd.f32 %v2218, %v2322
      %v2425 = vadd.f32 %v2219, %v2325
      %v2426 = vadd.f32 %v2220, %v2330
      %v2427 = vadd.f32 %v2221, %v2333
      %v2428 = vadd.f32 %v2222, %v2338
      %v2429 = vadd.f32 %v2223, %v2341
      %v2430 = vadd.f32 %v2224, %v2346
      %v2431 = vadd.f32 %v2225, %v2349
      %v2432 = vadd.f32 %v2226, %v2354
      %v2433 = vadd.f32 %v2227, %v2357
      %v2434 = vadd.f32 %v2228, %v2362
      %v2435 = vadd.f32 %v2229, %v2365
      %v2436 = vadd.f32 %v2230, %v2370
      %v2437 = vadd.f32 %v2231, %v2373
      %v2438 = vadd.f32 %v2232, %v2378
      %v2439 = vadd.f32 %v2233, %v2381
      %v2440 = vadd.f32 %v2234, %v2386
      %v2441 = vadd.f32 %v2235, %v2389
      %v2442 = vadd.f32 %v2236, %v2394
      %v2443 = vadd.f32 %v2237, %v2397
      %v2444 = vadd.f32 %v2238, %v2402
      %v2445 = vadd.f32 %v2239, %v2405
      %v2446 = vadd.f32 %v2240, %v2410
      %v2447 = vadd.f32 %v2241, %v2413
      %v2449 = vshrl.u32 %v224, 16
      %v2451 = vrot.slane %v2449, 4
      %v2452 = vshll.u32 %v224, 16
      %v2454 = vrot.slane %v2452, 5
      %v2455 = vor.u32 %v2451, %v2454
      %v2456 = vrot.slane %v2455, 4
      %v2458 = vshll.u32 %v225, 16
      %v2460 = vrot.slane %v2458, 5
      %v2461 = vsel %vm230, %v2456, %v2460
      %v2462 = vshrl.u32 %v225, 16
      %v2464 = vrot.slane %v2462, 4
      %v2465 = vor.u32 %v2464, %v2460
      %v2466 = vrot.slane %v2465, 4
      %v2468 = vshll.u32 %v226, 16
      %v2470 = vrot.slane %v2468, 5
      %v2471 = vsel %vm230, %v2466, %v2470
      %s2472 = scalar_lea.vmem %s1, 14
      %v2473 = vld [vmem:[%s2472] sm:$0x3]
      %v2474 = vunpack.c.l.b16 %v2461
      %v2475 = vunpack.c.l.b16 %v2471
      %v2476 = vpack.c.b16 %v2475, %v2474
      %v2478 = vsel %vm665, %v2476, 0
      %v2481 = vsel %vm714, %v2473, 0
      %2483 = vmatprep.subr.bf16.mxu0 0
      %2484 = vmatpush1.bf16.msra.mxu0 %v2481
      %2485 = vmatprep.subr.bf16.mxu0 0
      %2486 = vmatpush1.bf16.msra.mxu0 0
      %2487 = vmatprep.subr.bf16.mxu0 0
      %2488 = vmatpush1.bf16.msra.mxu0 0
      %2489 = vmatprep.subr.bf16.mxu0 0
      %2490 = vmatpush1.bf16.msra.mxu0 0
      %2491 = vmatprep.subr.bf16.mxu0 0
      %2492 = vmatpush1.bf16.msra.mxu0 0
      %2493 = vmatprep.subr.bf16.mxu0 0
      %2494 = vmatpush1.bf16.msra.mxu0 0
      %2495 = vmatprep.subr.bf16.mxu0 0
      %2496 = vmatpush1.bf16.msra.mxu0 0
      %2497 = vmatprep.subr.bf16.mxu0 0
      %2498 = vmatpush1.bf16.msra.mxu0 0
      %2499 = vmatprep.subr.bf16.mxu0 0
      %2500 = vmatpush1.bf16.msra.mxu0 0
      %2501 = vmatprep.subr.bf16.mxu0 0
      %2502 = vmatpush1.bf16.msra.mxu0 0
      %2503 = vmatprep.subr.bf16.mxu0 0
      %2504 = vmatpush1.bf16.msra.mxu0 0
      %2505 = vmatprep.subr.bf16.mxu0 0
      %2506 = vmatpush1.bf16.msra.mxu0 0
      %2507 = vmatprep.subr.bf16.mxu0 0
      %2508 = vmatpush1.bf16.msra.mxu0 0
      %2509 = vmatprep.subr.bf16.mxu0 0
      %2510 = vmatpush1.bf16.msra.mxu0 0
      %2511 = vmatprep.subr.bf16.mxu0 0
      %2512 = vmatpush1.bf16.msra.mxu0 0
      %2513 = vmatprep.subr.bf16.mxu0 0
      %2514 = vmatpush1.bf16.msra.mxu0 0
      %2515 = vmatprep.mubr.bf16.mxu0 0
      %2516 = vmatmul.mubr.bf16.gmra.mrb[0].mxu0 %v673
      %v2517 = vpop.f32.mrb[0].mxu0
      %v2518 = vadd.f32 0.0, %v2517
      %v2519 = vpop.f32.mrb[0].mxu0
      %v2520 = vpop.f32.mrb[0].mxu0
      %v2521 = vadd.f32 0.0, %v2520
      %v2522 = vpop.f32.mrb[0].mxu0
      %2523 = vmatprep.mubr.bf16.mxu0 0
      %2524 = vmatmul.mubr.bf16.gmra.mrb[0].mxu0 %v676
      %v2525 = vpop.f32.mrb[0].mxu0
      %v2526 = vadd.f32 0.0, %v2525
      %v2527 = vpop.f32.mrb[0].mxu0
      %v2528 = vpop.f32.mrb[0].mxu0
      %v2529 = vadd.f32 0.0, %v2528
      %v2530 = vpop.f32.mrb[0].mxu0
      %2531 = vmatprep.mubr.bf16.mxu0 0
      %2532 = vmatmul.mubr.bf16.gmra.mrb[0].mxu0 %v679
      %v2533 = vpop.f32.mrb[0].mxu0
      %v2534 = vadd.f32 0.0, %v2533
      %v2535 = vpop.f32.mrb[0].mxu0
      %v2536 = vpop.f32.mrb[0].mxu0
      %v2537 = vadd.f32 0.0, %v2536
      %v2538 = vpop.f32.mrb[0].mxu0
      %2539 = vmatprep.mubr.bf16.mxu0 0
      %2540 = vmatmul.mubr.bf16.gmra.mrb[0].mxu0 %v682
      %v2541 = vpop.f32.mrb[0].mxu0
      %v2542 = vadd.f32 0.0, %v2541
      %v2543 = vpop.f32.mrb[0].mxu0
      %v2544 = vpop.f32.mrb[0].mxu0
      %v2545 = vadd.f32 0.0, %v2544
      %v2546 = vpop.f32.mrb[0].mxu0
      %2547 = vmatprep.mubr.bf16.mxu0 0
      %2548 = vmatmul.mubr.bf16.gmra.mrb[0].mxu0 %v685
      %v2549 = vpop.f32.mrb[0].mxu0
      %v2550 = vadd.f32 0.0, %v2549
      %v2551 = vpop.f32.mrb[0].mxu0
      %v2552 = vpop.f32.mrb[0].mxu0
      %v2553 = vadd.f32 0.0, %v2552
      %v2554 = vpop.f32.mrb[0].mxu0
      %2555 = vmatprep.mubr.bf16.mxu0 0
      %2556 = vmatmul.mubr.bf16.gmra.mrb[0].mxu0 %v688
      %v2557 = vpop.f32.mrb[0].mxu0
      %v2558 = vadd.f32 0.0, %v2557
      %v2559 = vpop.f32.mrb[0].mxu0
      %v2560 = vpop.f32.mrb[0].mxu0
      %v2561 = vadd.f32 0.0, %v2560
      %v2562 = vpop.f32.mrb[0].mxu0
      %2563 = vmatprep.mubr.bf16.mxu0 0
      %2564 = vmatmul.mubr.bf16.gmra.mrb[0].mxu0 %v691
      %v2565 = vpop.f32.mrb[0].mxu0
      %v2566 = vadd.f32 0.0, %v2565
      %v2567 = vpop.f32.mrb[0].mxu0
      %v2568 = vpop.f32.mrb[0].mxu0
      %v2569 = vadd.f32 0.0, %v2568
      %v2570 = vpop.f32.mrb[0].mxu0
      %2571 = vmatprep.mubr.bf16.mxu0 0
      %2572 = vmatmul.mubr.bf16.gmra.mrb[0].mxu0 %v694
      %v2573 = vpop.f32.mrb[0].mxu0
      %v2574 = vadd.f32 0.0, %v2573
      %v2575 = vpop.f32.mrb[0].mxu0
      %v2576 = vpop.f32.mrb[0].mxu0
      %v2577 = vadd.f32 0.0, %v2576
      %v2578 = vpop.f32.mrb[0].mxu0
      %2579 = vmatprep.mubr.bf16.mxu0 0
      %2580 = vmatmul.mubr.bf16.gmra.mrb[0].mxu0 %v697
      %v2581 = vpop.f32.mrb[0].mxu0
      %v2582 = vadd.f32 0.0, %v2581
      %v2583 = vpop.f32.mrb[0].mxu0
      %v2584 = vpop.f32.mrb[0].mxu0
      %v2585 = vadd.f32 0.0, %v2584
      %v2586 = vpop.f32.mrb[0].mxu0
      %2587 = vmatprep.mubr.bf16.mxu0 0
      %2588 = vmatmul.mubr.bf16.gmra.mrb[0].mxu0 %v700
      %v2589 = vpop.f32.mrb[0].mxu0
      %v2590 = vadd.f32 0.0, %v2589
      %v2591 = vpop.f32.mrb[0].mxu0
      %v2592 = vpop.f32.mrb[0].mxu0
      %v2593 = vadd.f32 0.0, %v2592
      %v2594 = vpop.f32.mrb[0].mxu0
      %2595 = vmatprep.mubr.bf16.mxu0 0
      %2596 = vmatmul.mubr.bf16.gmra.mrb[0].mxu0 %v703
      %v2597 = vpop.f32.mrb[0].mxu0
      %v2598 = vadd.f32 0.0, %v2597
      %v2599 = vpop.f32.mrb[0].mxu0
      %v2600 = vpop.f32.mrb[0].mxu0
      %v2601 = vadd.f32 0.0, %v2600
      %v2602 = vpop.f32.mrb[0].mxu0
      %2603 = vmatprep.mubr.bf16.mxu0 0
      %2604 = vmatmul.mubr.bf16.gmra.mrb[0].mxu0 %v706
      %v2605 = vpop.f32.mrb[0].mxu0
      %v2606 = vadd.f32 0.0, %v2605
      %v2607 = vpop.f32.mrb[0].mxu0
      %v2608 = vpop.f32.mrb[0].mxu0
      %v2609 = vadd.f32 0.0, %v2608
      %v2610 = vpop.f32.mrb[0].mxu0
      %2611 = vmatprep.mubr.bf16.mxu0 0
      %2612 = vmatmul.mubr.bf16.gmra.mrb[0].mxu0 %v709
      %v2613 = vpop.f32.mrb[0].mxu0
      %v2614 = vadd.f32 0.0, %v2613
      %v2615 = vpop.f32.mrb[0].mxu0
      %v2616 = vpop.f32.mrb[0].mxu0
      %v2617 = vadd.f32 0.0, %v2616
      %v2618 = vpop.f32.mrb[0].mxu0
      %2619 = vmatprep.mubr.bf16.mxu0 0
      %2620 = vmatmul.mubr.bf16.gmra.mrb[0].mxu0 %v712
      %v2621 = vpop.f32.mrb[0].mxu0
      %v2622 = vadd.f32 0.0, %v2621
      %v2623 = vpop.f32.mrb[0].mxu0
      %v2624 = vpop.f32.mrb[0].mxu0
      %v2625 = vadd.f32 0.0, %v2624
      %v2626 = vpop.f32.mrb[0].mxu0
      %2627 = vmatprep.mubr.bf16.mxu0 0
      %2628 = vmatmul.mubr.bf16.gmra.mrb[0].mxu0 %v1832
      %v2629 = vpop.f32.mrb[0].mxu0
      %v2630 = vadd.f32 0.0, %v2629
      %v2631 = vpop.f32.mrb[0].mxu0
      %v2632 = vpop.f32.mrb[0].mxu0
      %v2633 = vadd.f32 0.0, %v2632
      %v2634 = vpop.f32.mrb[0].mxu0
      %2635 = vmatprep.mubr.bf16.mxu0 0
      %2636 = vmatmul.mubr.bf16.gmra.mrb[0].mxu0 %v2478
      %v2637 = vpop.f32.mrb[0].mxu0
      %v2638 = vadd.f32 0.0, %v2637
      %v2639 = vpop.f32.mrb[0].mxu0
      %v2640 = vpop.f32.mrb[0].mxu0
      %v2641 = vadd.f32 0.0, %v2640
      %v2642 = vpop.f32.mrb[0].mxu0
      %2643 = vdwg.mxu0
      %v2644 = vadd.f32 %v2416, %v2518
      %v2645 = vadd.f32 %v2417, %v2521
      %v2646 = vadd.f32 %v2418, %v2526
      %v2647 = vadd.f32 %v2419, %v2529
      %v2648 = vadd.f32 %v2420, %v2534
      %v2649 = vadd.f32 %v2421, %v2537
      %v2650 = vadd.f32 %v2422, %v2542
      %v2651 = vadd.f32 %v2423, %v2545
      %v2652 = vadd.f32 %v2424, %v2550
      %v2653 = vadd.f32 %v2425, %v2553
      %v2654 = vadd.f32 %v2426, %v2558
      %v2655 = vadd.f32 %v2427, %v2561
      %v2656 = vadd.f32 %v2428, %v2566
      %v2657 = vadd.f32 %v2429, %v2569
      %v2658 = vadd.f32 %v2430, %v2574
      %v2659 = vadd.f32 %v2431, %v2577
      %v2660 = vadd.f32 %v2432, %v2582
      %v2661 = vadd.f32 %v2433, %v2585
      %v2662 = vadd.f32 %v2434, %v2590
      %v2663 = vadd.f32 %v2435, %v2593
      %v2664 = vadd.f32 %v2436, %v2598
      %v2665 = vadd.f32 %v2437, %v2601
      %v2666 = vadd.f32 %v2438, %v2606
      %v2667 = vadd.f32 %v2439, %v2609
      %v2668 = vadd.f32 %v2440, %v2614
      %v2669 = vadd.f32 %v2441, %v2617
      %v2670 = vadd.f32 %v2442, %v2622
      %v2671 = vadd.f32 %v2443, %v2625
      %v2672 = vadd.f32 %v2444, %v2630
      %v2673 = vadd.f32 %v2445, %v2633
      %v2674 = vadd.f32 %v2446, %v2638
      %v2675 = vadd.f32 %v2447, %v2641
      %v2677 = vrot.slane %v224, 5
      %v2678 = vrot.slane %v2677, 4
      %v2679 = vrot.slane %v225, 5
      %v2680 = vsel %vm1189, %v2678, %v2679
      %v2681 = vrot.slane %v2679, 4
      %v2682 = vrot.slane %v226, 5
      %v2683 = vsel %vm1189, %v2681, %v2682
      %s2684 = scalar_lea.vmem %s1, 16
      %v2685 = vld [vmem:[%s2684] sm:$0x3]
      %v2686 = vunpack.c.l.b16 %v2680
      %v2687 = vunpack.c.l.b16 %v2683
      %v2688 = vpack.c.b16 %v2687, %v2686
      %v2690 = vsel %vm665, %v2688, 0
      %v2693 = vsel %vm714, %v2685, 0
      %2695 = vmatprep.subr.bf16.mxu0 0
      %2696 = vmatpush1.bf16.msra.mxu0 %v2693
      %2697 = vmatprep.subr.bf16.mxu0 0
      %2698 = vmatpush1.bf16.msra.mxu0 0
      %2699 = vmatprep.subr.bf16.mxu0 0
      %2700 = vmatpush1.bf16.msra.mxu0 0
      %2701 = vmatprep.subr.bf16.mxu0 0
      %2702 = vmatpush1.bf16.msra.mxu0 0
      %2703 = vmatprep.subr.bf16.mxu0 0
      %2704 = vmatpush1.bf16.msra.mxu0 0
      %2705 = vmatprep.subr.bf16.mxu0 0
      %2706 = vmatpush1.bf16.msra.mxu0 0
      %2707 = vmatprep.subr.bf16.mxu0 0
      %2708 = vmatpush1.bf16.msra.mxu0 0
      %2709 = vmatprep.subr.bf16.mxu0 0
      %2710 = vmatpush1.bf16.msra.mxu0 0
      %2711 = vmatprep.subr.bf16.mxu0 0
      %2712 = vmatpush1.bf16.msra.mxu0 0
      %2713 = vmatprep.subr.bf16.mxu0 0
      %2714 = vmatpush1.bf16.msra.mxu0 0
      %2715 = vmatprep.subr.bf16.mxu0 0
      %2716 = vmatpush1.bf16.msra.mxu0 0
      %2717 = vmatprep.subr.bf16.mxu0 0
      %2718 = vmatpush1.bf16.msra.mxu0 0
      %2719 = vmatprep.subr.bf16.mxu0 0
      %2720 = vmatpush1.bf16.msra.mxu0 0
      %2721 = vmatprep.subr.bf16.mxu0 0
      %2722 = vmatpush1.bf16.msra.mxu0 0
      %2723 = vmatprep.subr.bf16.mxu0 0
      %2724 = vmatpush1.bf16.msra.mxu0 0
      %2725 = vmatprep.subr.bf16.mxu0 0
      %2726 = vmatpush1.bf16.msra.mxu0 0
      %2727 = vmatprep.mubr.bf16.mxu0 0
      %2728 = vmatmul.mubr.bf16.gmra.mrb[0].mxu0 %v1359
      %v2729 = vpop.f32.mrb[0].mxu0
      %v2730 = vadd.f32 0.0, %v2729
      %v2731 = vpop.f32.mrb[0].mxu0
      %v2732 = vpop.f32.mrb[0].mxu0
      %v2733 = vadd.f32 0.0, %v2732
      %v2734 = vpop.f32.mrb[0].mxu0
      %2735 = vmatprep.mubr.bf16.mxu0 0
      %2736 = vmatmul.mubr.bf16.gmra.mrb[0].mxu0 %v1362
      %v2737 = vpop.f32.mrb[0].mxu0
      %v2738 = vadd.f32 0.0, %v2737
      %v2739 = vpop.f32.mrb[0].mxu0
      %v2740 = vpop.f32.mrb[0].mxu0
      %v2741 = vadd.f32 0.0, %v2740
      %v2742 = vpop.f32.mrb[0].mxu0
      %2743 = vmatprep.mubr.bf16.mxu0 0
      %2744 = vmatmul.mubr.bf16.gmra.mrb[0].mxu0 %v1365
      %v2745 = vpop.f32.mrb[0].mxu0
      %v2746 = vadd.f32 0.0, %v2745
      %v2747 = vpop.f32.mrb[0].mxu0
      %v2748 = vpop.f32.mrb[0].mxu0
      %v2749 = vadd.f32 0.0, %v2748
      %v2750 = vpop.f32.mrb[0].mxu0
      %2751 = vmatprep.mubr.bf16.mxu0 0
      %2752 = vmatmul.mubr.bf16.gmra.mrb[0].mxu0 %v1368
      %v2753 = vpop.f32.mrb[0].mxu0
      %v2754 = vadd.f32 0.0, %v2753
      %v2755 = vpop.f32.mrb[0].mxu0
      %v2756 = vpop.f32.mrb[0].mxu0
      %v2757 = vadd.f32 0.0, %v2756
      %v2758 = vpop.f32.mrb[0].mxu0
      %2759 = vmatprep.mubr.bf16.mxu0 0
      %2760 = vmatmul.mubr.bf16.gmra.mrb[0].mxu0 %v1371
      %v2761 = vpop.f32.mrb[0].mxu0
      %v2762 = vadd.f32 0.0, %v2761
      %v2763 = vpop.f32.mrb[0].mxu0
      %v2764 = vpop.f32.mrb[0].mxu0
      %v2765 = vadd.f32 0.0, %v2764
      %v2766 = vpop.f32.mrb[0].mxu0
      %2767 = vmatprep.mubr.bf16.mxu0 0
      %2768 = vmatmul.mubr.bf16.gmra.mrb[0].mxu0 %v1374
      %v2769 = vpop.f32.mrb[0].mxu0
      %v2770 = vadd.f32 0.0, %v2769
      %v2771 = vpop.f32.mrb[0].mxu0
      %v2772 = vpop.f32.mrb[0].mxu0
      %v2773 = vadd.f32 0.0, %v2772
      %v2774 = vpop.f32.mrb[0].mxu0
      %2775 = vmatprep.mubr.bf16.mxu0 0
      %2776 = vmatmul.mubr.bf16.gmra.mrb[0].mxu0 %v1377
      %v2777 = vpop.f32.mrb[0].mxu0
      %v2778 = vadd.f32 0.0, %v2777
      %v2779 = vpop.f32.mrb[0].mxu0
      %v2780 = vpop.f32.mrb[0].mxu0
      %v2781 = vadd.f32 0.0, %v2780
      %v2782 = vpop.f32.mrb[0].mxu0
      %2783 = vmatprep.mubr.bf16.mxu0 0
      %2784 = vmatmul.mubr.bf16.gmra.mrb[0].mxu0 %v1380
      %v2785 = vpop.f32.mrb[0].mxu0
      %v2786 = vadd.f32 0.0, %v2785
      %v2787 = vpop.f32.mrb[0].mxu0
      %v2788 = vpop.f32.mrb[0].mxu0
      %v2789 = vadd.f32 0.0, %v2788
      %v2790 = vpop.f32.mrb[0].mxu0
      %2791 = vmatprep.mubr.bf16.mxu0 0
      %2792 = vmatmul.mubr.bf16.gmra.mrb[0].mxu0 %v1383
      %v2793 = vpop.f32.mrb[0].mxu0
      %v2794 = vadd.f32 0.0, %v2793
      %v2795 = vpop.f32.mrb[0].mxu0
      %v2796 = vpop.f32.mrb[0].mxu0
      %v2797 = vadd.f32 0.0, %v2796
      %v2798 = vpop.f32.mrb[0].mxu0
      %2799 = vmatprep.mubr.bf16.mxu0 0
      %2800 = vmatmul.mubr.bf16.gmra.mrb[0].mxu0 %v1386
      %v2801 = vpop.f32.mrb[0].mxu0
      %v2802 = vadd.f32 0.0, %v2801
      %v2803 = vpop.f32.mrb[0].mxu0
      %v2804 = vpop.f32.mrb[0].mxu0
      %v2805 = vadd.f32 0.0, %v2804
      %v2806 = vpop.f32.mrb[0].mxu0
      %2807 = vmatprep.mubr.bf16.mxu0 0
      %2808 = vmatmul.mubr.bf16.gmra.mrb[0].mxu0 %v1389
      %v2809 = vpop.f32.mrb[0].mxu0
      %v2810 = vadd.f32 0.0, %v2809
      %v2811 = vpop.f32.mrb[0].mxu0
      %v2812 = vpop.f32.mrb[0].mxu0
      %v2813 = vadd.f32 0.0, %v2812
      %v2814 = vpop.f32.mrb[0].mxu0
      %2815 = vmatprep.mubr.bf16.mxu0 0
      %2816 = vmatmul.mubr.bf16.gmra.mrb[0].mxu0 %v1392
      %v2817 = vpop.f32.mrb[0].mxu0
      %v2818 = vadd.f32 0.0, %v2817
      %v2819 = vpop.f32.mrb[0].mxu0
      %v2820 = vpop.f32.mrb[0].mxu0
      %v2821 = vadd.f32 0.0, %v2820
      %v2822 = vpop.f32.mrb[0].mxu0
      %2823 = vmatprep.mubr.bf16.mxu0 0
      %2824 = vmatmul.mubr.bf16.gmra.mrb[0].mxu0 %v1395
      %v2825 = vpop.f32.mrb[0].mxu0
      %v2826 = vadd.f32 0.0, %v2825
      %v2827 = vpop.f32.mrb[0].mxu0
      %v2828 = vpop.f32.mrb[0].mxu0
      %v2829 = vadd.f32 0.0, %v2828
      %v2830 = vpop.f32.mrb[0].mxu0
      %2831 = vmatprep.mubr.bf16.mxu0 0
      %2832 = vmatmul.mubr.bf16.gmra.mrb[0].mxu0 %v1398
      %v2833 = vpop.f32.mrb[0].mxu0
      %v2834 = vadd.f32 0.0, %v2833
      %v2835 = vpop.f32.mrb[0].mxu0
      %v2836 = vpop.f32.mrb[0].mxu0
      %v2837 = vadd.f32 0.0, %v2836
      %v2838 = vpop.f32.mrb[0].mxu0
      %2839 = vmatprep.mubr.bf16.mxu0 0
      %2840 = vmatmul.mubr.bf16.gmra.mrb[0].mxu0 %v2044
      %v2841 = vpop.f32.mrb[0].mxu0
      %v2842 = vadd.f32 0.0, %v2841
      %v2843 = vpop.f32.mrb[0].mxu0
      %v2844 = vpop.f32.mrb[0].mxu0
      %v2845 = vadd.f32 0.0, %v2844
      %v2846 = vpop.f32.mrb[0].mxu0
      %2847 = vmatprep.mubr.bf16.mxu0 0
      %2848 = vmatmul.mubr.bf16.gmra.mrb[0].mxu0 %v2690
      %v2849 = vpop.f32.mrb[0].mxu0
      %v2850 = vadd.f32 0.0, %v2849
      %v2851 = vpop.f32.mrb[0].mxu0
      %v2852 = vpop.f32.mrb[0].mxu0
      %v2853 = vadd.f32 0.0, %v2852
      %v2854 = vpop.f32.mrb[0].mxu0
      %2855 = vdwg.mxu0
      %v2856 = vadd.f32 %v2644, %v2730
      %v2857 = vadd.f32 %v2645, %v2733
      %v2858 = vadd.f32 %v2646, %v2738
      %v2859 = vadd.f32 %v2647, %v2741
      %v2860 = vadd.f32 %v2648, %v2746
      %v2861 = vadd.f32 %v2649, %v2749
      %v2862 = vadd.f32 %v2650, %v2754
      %v2863 = vadd.f32 %v2651, %v2757
      %v2864 = vadd.f32 %v2652, %v2762
      %v2865 = vadd.f32 %v2653, %v2765
      %v2866 = vadd.f32 %v2654, %v2770
      %v2867 = vadd.f32 %v2655, %v2773
      %v2868 = vadd.f32 %v2656, %v2778
      %v2869 = vadd.f32 %v2657, %v2781
      %v2870 = vadd.f32 %v2658, %v2786
      %v2871 = vadd.f32 %v2659, %v2789
      %v2872 = vadd.f32 %v2660, %v2794
      %v2873 = vadd.f32 %v2661, %v2797
      %v2874 = vadd.f32 %v2662, %v2802
      %v2875 = vadd.f32 %v2663, %v2805
      %v2876 = vadd.f32 %v2664, %v2810
      %v2877 = vadd.f32 %v2665, %v2813
      %v2878 = vadd.f32 %v2666, %v2818
      %v2879 = vadd.f32 %v2667, %v2821
      %v2880 = vadd.f32 %v2668, %v2826
      %v2881 = vadd.f32 %v2669, %v2829
      %v2882 = vadd.f32 %v2670, %v2834
      %v2883 = vadd.f32 %v2671, %v2837
      %v2884 = vadd.f32 %v2672, %v2842
      %v2885 = vadd.f32 %v2673, %v2845
      %v2886 = vadd.f32 %v2674, %v2850
      %v2887 = vadd.f32 %v2675, %v2853
      %v2888 = vld [vmem:[%s2] sm:$0x1]
      %v2890 = vlaneseq
      %v2891 = vshrl.u32 %v2890, 7
      %v2892 = vsub.s32 0, %v2891
      %v2893 = vrot.slane %v2888, %v2892
      %v2895 = vadd.f32 %v2856, %v2893
      %v2896 = vadd.f32 %v2857, %v2893
      %v2897 = vadd.f32 %v2858, %v2893
      %v2898 = vadd.f32 %v2859, %v2893
      %v2899 = vadd.f32 %v2860, %v2893
      %v2900 = vadd.f32 %v2861, %v2893
      %v2901 = vadd.f32 %v2862, %v2893
      %v2902 = vadd.f32 %v2863, %v2893
      %v2903 = vadd.f32 %v2864, %v2893
      %v2904 = vadd.f32 %v2865, %v2893
      %v2905 = vadd.f32 %v2866, %v2893
      %v2906 = vadd.f32 %v2867, %v2893
      %v2907 = vadd.f32 %v2868, %v2893
      %v2908 = vadd.f32 %v2869, %v2893
      %v2909 = vadd.f32 %v2870, %v2893
      %v2910 = vadd.f32 %v2871, %v2893
      %v2911 = vadd.f32 %v2872, %v2893
      %v2912 = vadd.f32 %v2873, %v2893
      %v2913 = vadd.f32 %v2874, %v2893
      %v2914 = vadd.f32 %v2875, %v2893
      %v2915 = vadd.f32 %v2876, %v2893
      %v2916 = vadd.f32 %v2877, %v2893
      %v2917 = vadd.f32 %v2878, %v2893
      %v2918 = vadd.f32 %v2879, %v2893
      %v2919 = vadd.f32 %v2880, %v2893
      %v2920 = vadd.f32 %v2881, %v2893
      %v2921 = vadd.f32 %v2882, %v2893
      %v2922 = vadd.f32 %v2883, %v2893
      %v2923 = vadd.f32 %v2884, %v2893
      %v2924 = vadd.f32 %v2885, %v2893
      %v2925 = vadd.f32 %v2886, %v2893
      %v2926 = vadd.f32 %v2887, %v2893
      %v2927 = vxor.u32 %v2895, 2147483648
      %v2928 = vxor.u32 %v2896, 2147483648
      %v2929 = vxor.u32 %v2897, 2147483648
      %v2930 = vxor.u32 %v2898, 2147483648
      %v2931 = vxor.u32 %v2899, 2147483648
      %v2932 = vxor.u32 %v2900, 2147483648
      %v2933 = vxor.u32 %v2901, 2147483648
      %v2934 = vxor.u32 %v2902, 2147483648
      %v2935 = vxor.u32 %v2903, 2147483648
      %v2936 = vxor.u32 %v2904, 2147483648
      %v2937 = vxor.u32 %v2905, 2147483648
      %v2938 = vxor.u32 %v2906, 2147483648
      %v2939 = vxor.u32 %v2907, 2147483648
      %v2940 = vxor.u32 %v2908, 2147483648
      %v2941 = vxor.u32 %v2909, 2147483648
      %v2942 = vxor.u32 %v2910, 2147483648
      %v2943 = vxor.u32 %v2911, 2147483648
      %v2944 = vxor.u32 %v2912, 2147483648
      %v2945 = vxor.u32 %v2913, 2147483648
      %v2946 = vxor.u32 %v2914, 2147483648
      %v2947 = vxor.u32 %v2915, 2147483648
      %v2948 = vxor.u32 %v2916, 2147483648
      %v2949 = vxor.u32 %v2917, 2147483648
      %v2950 = vxor.u32 %v2918, 2147483648
      %v2951 = vxor.u32 %v2919, 2147483648
      %v2952 = vxor.u32 %v2920, 2147483648
      %v2953 = vxor.u32 %v2921, 2147483648
      %v2954 = vxor.u32 %v2922, 2147483648
      %v2955 = vxor.u32 %v2923, 2147483648
      %v2956 = vxor.u32 %v2924, 2147483648
      %v2957 = vxor.u32 %v2925, 2147483648
      %v2958 = vxor.u32 %v2926, 2147483648
      %v2959 = vmul.f32 %v2927, 1.442695
      %v2960 = vpow.pop %v2959
      %v2961 = vmul.f32 %v2928, 1.442695
      %v2962 = vpow.pop %v2961
      %v2963 = vmul.f32 %v2929, 1.442695
      %v2964 = vpow.pop %v2963
      %v2965 = vmul.f32 %v2930, 1.442695
      %v2966 = vpow.pop %v2965
      %v2967 = vmul.f32 %v2931, 1.442695
      %v2968 = vpow.pop %v2967
      %v2969 = vmul.f32 %v2932, 1.442695
      %v2970 = vpow.pop %v2969
      %v2971 = vmul.f32 %v2933, 1.442695
      %v2972 = vpow.pop %v2971
      %v2973 = vmul.f32 %v2934, 1.442695
      %v2974 = vpow.pop %v2973
      %v2975 = vmul.f32 %v2935, 1.442695
      %v2976 = vpow.pop %v2975
      %v2977 = vmul.f32 %v2936, 1.442695
      %v2978 = vpow.pop %v2977
      %v2979 = vmul.f32 %v2937, 1.442695
      %v2980 = vpow.pop %v2979
      %v2981 = vmul.f32 %v2938, 1.442695
      %v2982 = vpow.pop %v2981
      %v2983 = vmul.f32 %v2939, 1.442695
      %v2984 = vpow.pop %v2983
      %v2985 = vmul.f32 %v2940, 1.442695
      %v2986 = vpow.pop %v2985
      %v2987 = vmul.f32 %v2941, 1.442695
      %v2988 = vpow.pop %v2987
      %v2989 = vmul.f32 %v2942, 1.442695
      %v2990 = vpow.pop %v2989
      %v2991 = vmul.f32 %v2943, 1.442695
      %v2992 = vpow.pop %v2991
      %v2993 = vmul.f32 %v2944, 1.442695
      %v2994 = vpow.pop %v2993
      %v2995 = vmul.f32 %v2945, 1.442695
      %v2996 = vpow.pop %v2995
      %v2997 = vmul.f32 %v2946, 1.442695
      %v2998 = vpow.pop %v2997
      %v2999 = vmul.f32 %v2947, 1.442695
      %v3000 = vpow.pop %v2999
      %v3001 = vmul.f32 %v2948, 1.442695
      %v3002 = vpow.pop %v3001
      %v3003 = vmul.f32 %v2949, 1.442695
      %v3004 = vpow.pop %v3003
      %v3005 = vmul.f32 %v2950, 1.442695
      %v3006 = vpow.pop %v3005
      %v3007 = vmul.f32 %v2951, 1.442695
      %v3008 = vpow.pop %v3007
      %v3009 = vmul.f32 %v2952, 1.442695
      %v3010 = vpow.pop %v3009
      %v3011 = vmul.f32 %v2953, 1.442695
      %v3012 = vpow.pop %v3011
      %v3013 = vmul.f32 %v2954, 1.442695
      %v3014 = vpow.pop %v3013
      %v3015 = vmul.f32 %v2955, 1.442695
      %v3016 = vpow.pop %v3015
      %v3017 = vmul.f32 %v2956, 1.442695
      %v3018 = vpow.pop %v3017
      %v3019 = vmul.f32 %v2957, 1.442695
      %v3020 = vpow.pop %v3019
      %v3021 = vmul.f32 %v2958, 1.442695
      %v3022 = vpow.pop %v3021
      %v3023 = vadd.f32 %v2960, 1.0
      %v3024 = vadd.f32 %v2962, 1.0
      %v3025 = vadd.f32 %v2964, 1.0
      %v3026 = vadd.f32 %v2966, 1.0
      %v3027 = vadd.f32 %v2968, 1.0
      %v3028 = vadd.f32 %v2970, 1.0
      %v3029 = vadd.f32 %v2972, 1.0
      %v3030 = vadd.f32 %v2974, 1.0
      %v3031 = vadd.f32 %v2976, 1.0
      %v3032 = vadd.f32 %v2978, 1.0
      %v3033 = vadd.f32 %v2980, 1.0
      %v3034 = vadd.f32 %v2982, 1.0
      %v3035 = vadd.f32 %v2984, 1.0
      %v3036 = vadd.f32 %v2986, 1.0
      %v3037 = vadd.f32 %v2988, 1.0
      %v3038 = vadd.f32 %v2990, 1.0
      %v3039 = vadd.f32 %v2992, 1.0
      %v3040 = vadd.f32 %v2994, 1.0
      %v3041 = vadd.f32 %v2996, 1.0
      %v3042 = vadd.f32 %v2998, 1.0
      %v3043 = vadd.f32 %v3000, 1.0
      %v3044 = vadd.f32 %v3002, 1.0
      %v3045 = vadd.f32 %v3004, 1.0
      %v3046 = vadd.f32 %v3006, 1.0
      %v3047 = vadd.f32 %v3008, 1.0
      %v3048 = vadd.f32 %v3010, 1.0
      %v3049 = vadd.f32 %v3012, 1.0
      %v3050 = vadd.f32 %v3014, 1.0
      %v3051 = vadd.f32 %v3016, 1.0
      %v3052 = vadd.f32 %v3018, 1.0
      %v3053 = vadd.f32 %v3020, 1.0
      %v3054 = vadd.f32 %v3022, 1.0
      %v3055 = vrcp.pop %v3023
      %v3056 = vmul.f32 1.0, %v3055
      %v3057 = vrcp.pop %v3024
      %v3058 = vmul.f32 1.0, %v3057
      %v3059 = vrcp.pop %v3025
      %v3060 = vmul.f32 1.0, %v3059
      %v3061 = vrcp.pop %v3026
      %v3062 = vmul.f32 1.0, %v3061
      %v3063 = vrcp.pop %v3027
      %v3064 = vmul.f32 1.0, %v3063
      %v3065 = vrcp.pop %v3028
      %v3066 = vmul.f32 1.0, %v3065
      %v3067 = vrcp.pop %v3029
      %v3068 = vmul.f32 1.0, %v3067
      %v3069 = vrcp.pop %v3030
      %v3070 = vmul.f32 1.0, %v3069
      %v3071 = vrcp.pop %v3031
      %v3072 = vmul.f32 1.0, %v3071
      %v3073 = vrcp.pop %v3032
      %v3074 = vmul.f32 1.0, %v3073
      %v3075 = vrcp.pop %v3033
      %v3076 = vmul.f32 1.0, %v3075
      %v3077 = vrcp.pop %v3034
      %v3078 = vmul.f32 1.0, %v3077
      %v3079 = vrcp.pop %v3035
      %v3080 = vmul.f32 1.0, %v3079
      %v3081 = vrcp.pop %v3036
      %v3082 = vmul.f32 1.0, %v3081
      %v3083 = vrcp.pop %v3037
      %v3084 = vmul.f32 1.0, %v3083
      %v3085 = vrcp.pop %v3038
      %v3086 = vmul.f32 1.0, %v3085
      %v3087 = vrcp.pop %v3039
      %v3088 = vmul.f32 1.0, %v3087
      %v3089 = vrcp.pop %v3040
      %v3090 = vmul.f32 1.0, %v3089
      %v3091 = vrcp.pop %v3041
      %v3092 = vmul.f32 1.0, %v3091
      %v3093 = vrcp.pop %v3042
      %v3094 = vmul.f32 1.0, %v3093
      %v3095 = vrcp.pop %v3043
      %v3096 = vmul.f32 1.0, %v3095
      %v3097 = vrcp.pop %v3044
      %v3098 = vmul.f32 1.0, %v3097
      %v3099 = vrcp.pop %v3045
      %v3100 = vmul.f32 1.0, %v3099
      %v3101 = vrcp.pop %v3046
      %v3102 = vmul.f32 1.0, %v3101
      %v3103 = vrcp.pop %v3047
      %v3104 = vmul.f32 1.0, %v3103
      %v3105 = vrcp.pop %v3048
      %v3106 = vmul.f32 1.0, %v3105
      %v3107 = vrcp.pop %v3049
      %v3108 = vmul.f32 1.0, %v3107
      %v3109 = vrcp.pop %v3050
      %v3110 = vmul.f32 1.0, %v3109
      %v3111 = vrcp.pop %v3051
      %v3112 = vmul.f32 1.0, %v3111
      %v3113 = vrcp.pop %v3052
      %v3114 = vmul.f32 1.0, %v3113
      %v3115 = vrcp.pop %v3053
      %v3116 = vmul.f32 1.0, %v3115
      %v3117 = vrcp.pop %v3054
      %v3118 = vmul.f32 1.0, %v3117
      %v3119 = vmul.f32 %v2895, %v3056
      %v3120 = vmul.f32 %v2896, %v3058
      %v3121 = vmul.f32 %v2897, %v3060
      %v3122 = vmul.f32 %v2898, %v3062
      %v3123 = vmul.f32 %v2899, %v3064
      %v3124 = vmul.f32 %v2900, %v3066
      %v3125 = vmul.f32 %v2901, %v3068
      %v3126 = vmul.f32 %v2902, %v3070
      %v3127 = vmul.f32 %v2903, %v3072
      %v3128 = vmul.f32 %v2904, %v3074
      %v3129 = vmul.f32 %v2905, %v3076
      %v3130 = vmul.f32 %v2906, %v3078
      %v3131 = vmul.f32 %v2907, %v3080
      %v3132 = vmul.f32 %v2908, %v3082
      %v3133 = vmul.f32 %v2909, %v3084
      %v3134 = vmul.f32 %v2910, %v3086
      %v3135 = vmul.f32 %v2911, %v3088
      %v3136 = vmul.f32 %v2912, %v3090
      %v3137 = vmul.f32 %v2913, %v3092
      %v3138 = vmul.f32 %v2914, %v3094
      %v3139 = vmul.f32 %v2915, %v3096
      %v3140 = vmul.f32 %v2916, %v3098
      %v3141 = vmul.f32 %v2917, %v3100
      %v3142 = vmul.f32 %v2918, %v3102
      %v3143 = vmul.f32 %v2919, %v3104
      %v3144 = vmul.f32 %v2920, %v3106
      %v3145 = vmul.f32 %v2921, %v3108
      %v3146 = vmul.f32 %v2922, %v3110
      %v3147 = vmul.f32 %v2923, %v3112
      %v3148 = vmul.f32 %v2924, %v3114
      %v3149 = vmul.f32 %v2925, %v3116
      %v3150 = vmul.f32 %v2926, %v3118
      %v3151 = vpack.c.bf16 %v3120, %v3119
      %v3152 = vpack.c.bf16 %v3122, %v3121
      %v3153 = vpack.c.bf16 %v3124, %v3123
      %v3154 = vpack.c.bf16 %v3126, %v3125
      %v3155 = vpack.c.bf16 %v3128, %v3127
      %v3156 = vpack.c.bf16 %v3130, %v3129
      %v3157 = vpack.c.bf16 %v3132, %v3131
      %v3158 = vpack.c.bf16 %v3134, %v3133
      %v3159 = vpack.c.bf16 %v3136, %v3135
      %v3160 = vpack.c.bf16 %v3138, %v3137
      %v3161 = vpack.c.bf16 %v3140, %v3139
      %v3162 = vpack.c.bf16 %v3142, %v3141
      %v3163 = vpack.c.bf16 %v3144, %v3143
      %v3164 = vpack.c.bf16 %v3146, %v3145
      %v3165 = vpack.c.bf16 %v3148, %v3147
      %v3166 = vpack.c.bf16 %v3150, %v3149
      %v3183 = vunpack.c.l.b16 %v3151
      %v3184 = vunpack.c.h.b16 %v3151
      %v3185 = vunpack.c.l.b16 %v3152
      %v3186 = vunpack.c.h.b16 %v3152
      %v3187 = vunpack.c.l.b16 %v3153
      %v3188 = vunpack.c.h.b16 %v3153
      %v3189 = vunpack.c.l.b16 %v3154
      %v3190 = vunpack.c.h.b16 %v3154
      %v3191 = vunpack.c.l.b16 %v3155
      %v3192 = vunpack.c.h.b16 %v3155
      %v3193 = vunpack.c.l.b16 %v3156
      %v3194 = vunpack.c.h.b16 %v3156
      %v3195 = vunpack.c.l.b16 %v3157
      %v3196 = vunpack.c.h.b16 %v3157
      %v3197 = vunpack.c.l.b16 %v3158
      %v3198 = vunpack.c.h.b16 %v3158
      %v3199 = vunpack.c.l.b16 %v3159
      %v3200 = vunpack.c.h.b16 %v3159
      %v3201 = vunpack.c.l.b16 %v3160
      %v3202 = vunpack.c.h.b16 %v3160
      %v3203 = vunpack.c.l.b16 %v3161
      %v3204 = vunpack.c.h.b16 %v3161
      %v3205 = vunpack.c.l.b16 %v3162
      %v3206 = vunpack.c.h.b16 %v3162
      %v3207 = vunpack.c.l.b16 %v3163
      %v3208 = vunpack.c.h.b16 %v3163
      %v3209 = vunpack.c.l.b16 %v3164
      %v3210 = vunpack.c.h.b16 %v3164
      %v3211 = vunpack.c.l.b16 %v3165
      %v3212 = vunpack.c.h.b16 %v3165
      %v3213 = vunpack.c.l.b16 %v3166
      %v3214 = vunpack.c.h.b16 %v3166
      %v3215 = vpack.c.b16 %v3183, %v3183
      %v3216 = vpack.c.b16 %v3184, %v3184
      %v3217 = vpack.c.b16 %v3185, %v3185
      %v3218 = vpack.c.b16 %v3186, %v3186
      %v3219 = vpack.c.b16 %v3187, %v3187
      %v3220 = vpack.c.b16 %v3188, %v3188
      %v3221 = vpack.c.b16 %v3189, %v3189
      %v3222 = vpack.c.b16 %v3190, %v3190
      %v3223 = vpack.c.b16 %v3191, %v3191
      %v3224 = vpack.c.b16 %v3192, %v3192
      %v3225 = vpack.c.b16 %v3193, %v3193
      %v3226 = vpack.c.b16 %v3194, %v3194
      %v3227 = vpack.c.b16 %v3195, %v3195
      %v3228 = vpack.c.b16 %v3196, %v3196
      %v3229 = vpack.c.b16 %v3197, %v3197
      %v3230 = vpack.c.b16 %v3198, %v3198
      %v3231 = vpack.c.b16 %v3199, %v3199
      %v3232 = vpack.c.b16 %v3200, %v3200
      %v3233 = vpack.c.b16 %v3201, %v3201
      %v3234 = vpack.c.b16 %v3202, %v3202
      %v3235 = vpack.c.b16 %v3203, %v3203
      %v3236 = vpack.c.b16 %v3204, %v3204
      %v3237 = vpack.c.b16 %v3205, %v3205
      %v3238 = vpack.c.b16 %v3206, %v3206
      %v3239 = vpack.c.b16 %v3207, %v3207
      %v3240 = vpack.c.b16 %v3208, %v3208
      %v3241 = vpack.c.b16 %v3209, %v3209
      %v3242 = vpack.c.b16 %v3210, %v3210
      %v3243 = vpack.c.b16 %v3211, %v3211
      %v3244 = vpack.c.b16 %v3212, %v3212
      %v3245 = vpack.c.b16 %v3213, %v3213
      %v3246 = vpack.c.b16 %v3214, %v3214
      %vm3279 = vcmask 27648
      %3280 = vst.msk [vmem:[%s170] sm:$0xf] %vm3279, %v3215
      %3281 = vst.msk [vmem:[%s170 + $0x4] sm:$0xf] %vm3279, %v3216
      %3282 = vst.msk [vmem:[%s170 + $0x8] sm:$0xf] %vm3279, %v3217
      %3283 = vst.msk [vmem:[%s170 + $0xc] sm:$0xf] %vm3279, %v3218
      %3284 = vst.msk [vmem:[%s170 + $0x10] sm:$0xf] %vm3279, %v3219
      %3285 = vst.msk [vmem:[%s170 + $0x14] sm:$0xf] %vm3279, %v3220
      %3286 = vst.msk [vmem:[%s170 + $0x18] sm:$0xf] %vm3279, %v3221
      %3287 = vst.msk [vmem:[%s170 + $0x1c] sm:$0xf] %vm3279, %v3222
      %3288 = vst.msk [vmem:[%s170 + $0x20] sm:$0xf] %vm3279, %v3223
      %3289 = vst.msk [vmem:[%s170 + $0x24] sm:$0xf] %vm3279, %v3224
      %3290 = vst.msk [vmem:[%s170 + $0x28] sm:$0xf] %vm3279, %v3225
      %3291 = vst.msk [vmem:[%s170 + $0x2c] sm:$0xf] %vm3279, %v3226
      %3292 = vst.msk [vmem:[%s170 + $0x30] sm:$0xf] %vm3279, %v3227
      %3293 = vst.msk [vmem:[%s170 + $0x34] sm:$0xf] %vm3279, %v3228
      %3294 = vst.msk [vmem:[%s170 + $0x38] sm:$0xf] %vm3279, %v3229
      %3295 = vst.msk [vmem:[%s170 + $0x3c] sm:$0xf] %vm3279, %v3230
      %3296 = vst.msk [vmem:[%s170 + $0x40] sm:$0xf] %vm3279, %v3231
      %3297 = vst.msk [vmem:[%s170 + $0x44] sm:$0xf] %vm3279, %v3232
      %3298 = vst.msk [vmem:[%s170 + $0x48] sm:$0xf] %vm3279, %v3233
      %3299 = vst.msk [vmem:[%s170 + $0x4c] sm:$0xf] %vm3279, %v3234
      %3300 = vst.msk [vmem:[%s170 + $0x50] sm:$0xf] %vm3279, %v3235
      %3301 = vst.msk [vmem:[%s170 + $0x54] sm:$0xf] %vm3279, %v3236
      %3302 = vst.msk [vmem:[%s170 + $0x58] sm:$0xf] %vm3279, %v3237
      %3303 = vst.msk [vmem:[%s170 + $0x5c] sm:$0xf] %vm3279, %v3238
      %3304 = vst.msk [vmem:[%s170 + $0x60] sm:$0xf] %vm3279, %v3239
      %3305 = vst.msk [vmem:[%s170 + $0x64] sm:$0xf] %vm3279, %v3240
      %3306 = vst.msk [vmem:[%s170 + $0x68] sm:$0xf] %vm3279, %v3241
      %3307 = vst.msk [vmem:[%s170 + $0x6c] sm:$0xf] %vm3279, %v3242
      %3308 = vst.msk [vmem:[%s170 + $0x70] sm:$0xf] %vm3279, %v3243
      %3309 = vst.msk [vmem:[%s170 + $0x74] sm:$0xf] %vm3279, %v3244
      %3310 = vst.msk [vmem:[%s170 + $0x78] sm:$0xf] %vm3279, %v3245
      %3311 = vst.msk [vmem:[%s170 + $0x7c] sm:$0xf] %vm3279, %v3246
      %s3312 = smul.u32 32, %s14
      %p3313 = scmp.lt.s32.totalorder %s3312, 63
      %s3314 = scalar_select %p3313, %s3312, 63
      %s3315 = smul.addr %s3314, 4
      %s3316 = scalar_lea.vmem %s3, %s3315
      // Predicated region
      $region33: #{bottleneck_csp2_pallas.4} parent=31 // pred_check
        %p3317 = pneg %p100
      $region34: #{bottleneck_csp2_pallas.4} parent=31 // pred_check_branch
        %3319 = sbr.rel (%p3317) target = $region36
      $region35: #{bottleneck_csp2_pallas.4} parent=31 // pred_region
        %s3320 = smul.u32 32, %s14
      $region36: #{bottleneck_csp2_pallas.4} parent=31 // pred_fallthru
        _
    $region32: #{bottleneck_csp2_pallas.4} parent=5 // pred_fallthru
      _
    %p3321 = scmp.le.s32.totalorder 2, %s9
    // Predicated region
    $region37: #{bottleneck_csp2_pallas.4} parent=5 // pred_check
      %p3322 = pneg %p3321
    $region38: #{bottleneck_csp2_pallas.4} parent=5 // pred_check_branch
      %3324 = sbr.rel (%p3322) target = $region40
    $region39: #{bottleneck_csp2_pallas.4} parent=5 // pred_region
      %s3325 = ssub.s32 %s9, 2
      // Predicated region
      $region41: #{bottleneck_csp2_pallas.4} parent=39 // pred_check
        %p3326 = pneg %p106
      $region42: #{bottleneck_csp2_pallas.4} parent=39 // pred_check_branch
        %3328 = sbr.rel (%p3326) target = $region44
      $region43: #{bottleneck_csp2_pallas.4} parent=39 // pred_region
        %s3329 = smul.u32 32, %s15
        %p3330 = scmp.lt.s32.totalorder %s3329, 63
        %s3331 = scalar_select %p3330, %s3329, 63
        %s3332 = smul.addr %s3331, 4
        %s3333 = scalar_lea.vmem %s3, %s3332
      $region44: #{bottleneck_csp2_pallas.4} parent=39 // pred_fallthru
        _
    $region40: #{bottleneck_csp2_pallas.4} parent=5 // pred_fallthru
      _
  $region6: #{bottleneck_csp2_pallas.4} parent=0 // loop_footer
    %s13 = sadd.s32 1, %s9
  $region7: #{bottleneck_csp2_pallas.4} parent=0 // loop_footer_branch
    %8 = sbr.rel target = $region3
  $region8: #{bottleneck_csp2_pallas.4} parent=0 // loop_exit
    _

</llo_original>
